<compile_context>
chip_gen: v6e
topology: v6e:2x2x1
jax: 0.10.0
libtpu: 0.0.40
codegen_flags: <defaults>
</compile_context>

<pallas_src>
import functools

import jax
import jax.numpy as jnp
from jax.experimental import pallas as pl
from jax.experimental.pallas import tpu as pltpu


# ---------------------------------------------------------------------------
# attn2: ins/del ConcatAttention merged along the batch axis (single launch),
# fused with the consumers of ins_hidden/del_hidden -> outputs [gi_const|ro_const].
# ---------------------------------------------------------------------------
def _attn2_consts_kernel(q_ref, ctx_ref, mask_ref, pre_w_ref, pre_b_ref,
                         v_w_ref, w_ins_ref, w_del_ref, b_cat_ref, out_ref):
    B2, Lc, Wv = ctx_ref.shape
    B = B2 // 2
    bf16 = jnp.bfloat16

    ctx = ctx_ref[...].astype(jnp.float32)                         # (2B, L, W)
    pre = (jnp.dot(ctx.reshape(B2 * Lc, Wv).astype(bf16), pre_w_ref[...],
                   preferred_element_type=jnp.float32)
           + pre_b_ref[...]).reshape(B2, Lc, Wv)                   # linear_pre
    tmp = jnp.tanh(pre + q_ref[...][:, None, :])                   # + linear_q
    energy = jnp.sum(tmp * v_w_ref[...], axis=-1)                  # linear_v -> (2B, L)
    mask = mask_ref[...]
    energy = energy * (1.0 - mask) + mask * (-1e6)                 # applyMask
    energy = energy - jnp.max(energy, axis=-1, keepdims=True)
    e = jnp.exp(energy)
    inv = pl.reciprocal(jnp.sum(e, axis=-1, keepdims=True), approx=True)
    score = e * inv                                                # softmax
    att = jnp.sum(score[:, :, None] * ctx, axis=1)                 # (2B, W) weighted ctx

    # fold ins_hidden / del_hidden into their only consumers:
    #   const = ins_h @ [w_ins|ro_ins] + del_h @ [w_del|ro_del] + [b_ih0|ro_b]
    ins_h = att[:B].astype(bf16)
    del_h = att[B:].astype(bf16)
    const = (jnp.dot(ins_h, w_ins_ref[...], preferred_element_type=jnp.float32)
             + jnp.dot(del_h, w_del_ref[...], preferred_element_type=jnp.float32)
             + b_cat_ref[...])
    out_ref[...] = const.astype(out_ref.dtype)


def attn2_consts(q2_cat, ctx_cat, mask_cat, pre_w, pre_b, v_w,
                 w_cat_ins, w_cat_del, b_cat):
    B = ctx_cat.shape[0] // 2
    out_dim = b_cat.shape[1]
    return pl.pallas_call(
        _attn2_consts_kernel,
        out_shape=jax.ShapeDtypeStruct((B, out_dim), jnp.float32),
    )(q2_cat, ctx_cat, mask_cat, pre_w, pre_b, v_w, w_cat_ins, w_cat_del, b_cat)


# ---------------------------------------------------------------------------
# main decoder: batch-block grid (parallel), in-kernel fori_loop over target steps.
# ---------------------------------------------------------------------------
def _decoder_kernel(num_layers, dec_size, pool_size, att_size,
                    gi_base_ref, ro_base_ref, gh_ref, enc_h_ref,
                    w_ih_rest_ref, b_ih_rest_ref,
                    precomp_ref, ctx_ref, mask_ref, init_att_ref,
                    w_out_cat_ref, a_v_w_ref, w_ctx_cat_ref,
                    gout_ref, hid_ref, attn_ref, ctxout_ref):
    T = gi_base_ref.shape[0]
    Bb, S, E = ctx_ref.shape
    D = dec_size
    L = num_layers
    A = att_size
    dp = D // pool_size
    bf16 = jnp.bfloat16

    # Small step-invariant values hoisted once; the big resident tensors
    # (ctx / precomp / gh / enc_h / weights) stay behind their VMEM refs and are
    # re-read inside the loop body to keep vreg live ranges short.
    mask = mask_ref[...]
    keep = 1.0 - mask
    neg = mask * (-1e6)
    t_ids = jax.lax.broadcasted_iota(jnp.int32, (T, Bb, dp), 0)

    # step-0 ctx contribution to the layer-0 gates, through the same fused weight.
    p0 = jnp.dot(init_att_ref[...].astype(bf16), w_ctx_cat_ref[...],
                 preferred_element_type=jnp.float32)
    gi_ctx0 = p0[:, :3 * D]

    def step(t, carry):
        gi_ctx, g_acc = carry

        # --- StackedGRU: layer-0 gates = precomputed (emb/ins/del/bias) + carried ctx
        gi = gi_base_ref[t] + gi_ctx
        x = None
        hs = []
        for i in range(L):
            if i > 0:
                gi = (jnp.dot(x.astype(bf16), w_ih_rest_ref[i - 1],
                              preferred_element_type=jnp.float32)
                      + b_ih_rest_ref[i - 1])
            ghi = gh_ref[i]                 # enc_h @ W_hh + b_hh (step-invariant)
            h_prev = enc_h_ref[i]           # enc_hidden fed at EVERY step (reference)
            r = jax.nn.sigmoid(gi[:, 0:D] + ghi[:, 0:D])
            z = jax.nn.sigmoid(gi[:, D:2 * D] + ghi[:, D:2 * D])
            n = jnp.tanh(gi[:, 2 * D:3 * D] + r * ghi[:, 2 * D:3 * D])
            x = (1.0 - z) * n + z * h_prev  # inter-layer dropout = identity
            hs.append(x)
        output = x

        # --- fused [linear_q | readout_out] matmul over `output` ---
        qro = jnp.dot(output.astype(bf16), w_out_cat_ref[...],
                      preferred_element_type=jnp.float32)
        q, ro_out = qro[:, :A], qro[:, A:]

        # --- attn1 (ConcatAttention, cached precompute) ---
        tmp = jnp.tanh(precomp_ref[...] + q[:, None, :])           # (B,S,A)
        energy = jnp.sum(tmp * a_v_w_ref[...], axis=-1)            # (B,S)
        energy = energy * keep + neg
        energy = energy - jnp.max(energy, axis=-1, keepdims=True)
        e = jnp.exp(energy)
        inv = pl.reciprocal(jnp.sum(e, axis=-1, keepdims=True), approx=True)
        score = e * inv
        new_ctx = jnp.sum(score[:, :, None] * ctx_ref[...], axis=1)  # VPU, no bmm

        # --- fused [W_ih_ctx | readout_ctx] matmul over new_ctx (4D = 128 lanes):
        #     D columns feed this step's readout, 3D columns carry to next step's gates.
        pc = jnp.dot(new_ctx.astype(bf16), w_ctx_cat_ref[...],
                     preferred_element_type=jnp.float32)
        gi_ctx_next, ro_ctx = pc[:, :3 * D], pc[:, 3 * D:]

        # --- readout + maxout; accumulate g_outputs in registers (single store later)
        readout = ro_base_ref[t] + ro_out + ro_ctx
        m = readout[:, 0:dp]
        for k in range(1, pool_size):
            m = jnp.maximum(m, readout[:, k * dp:(k + 1) * dp])
        g_acc = jnp.where(t_ids == t, m[None, :, :], g_acc)

        # only the last step's hidden / attn / context are consumed -> write once
        @pl.when(t == T - 1)
        def _():
            for i in range(L):
                hid_ref[i] = hs[i].astype(hid_ref.dtype)
            attn_ref[...] = score.astype(attn_ref.dtype)
            ctxout_ref[...] = new_ctx.astype(ctxout_ref.dtype)

        return gi_ctx_next, g_acc

    unroll = T if T <= 8 else 4   # full unroll only for small static T
    init = (gi_ctx0, jnp.zeros((T, Bb, dp), jnp.float32))
    _, g_final = jax.lax.fori_loop(0, T, step, init, unroll=unroll)
    gout_ref[...] = g_final.astype(gout_ref.dtype)   # one bulk (T,B,dp) store


def decoder_steps(gi_base, ro_base, gh_all, enc_hidden, w_ih_rest, b_ih_rest,
                  precomp, ctx_bt, src_pad_mask, init_att,
                  w_out_cat, a1_v_w, w_ctx_cat, pool, att_size):
    T, B, _ = gi_base.shape
    L, _, D = enc_hidden.shape
    _, S, E = ctx_bt.shape
    A = att_size
    dp = D // pool

    # One batch block per grid step. Here b_blk == B (block == full array, so the
    # (8,128) rule is trivially met); for production B shrink b_blk (multiple of 8)
    # so the "parallel" axis shards blocks across v7x's two TensorCores.
    b_blk = B
    nb = pl.cdiv(B, b_blk)

    kernel = functools.partial(_decoder_kernel, L, D, pool, A)
    in_specs = [
        pl.BlockSpec((T, b_blk, 3 * D), lambda b: (0, b, 0)),   # gi_base
        pl.BlockSpec((T, b_blk, D), lambda b: (0, b, 0)),       # ro_base
        pl.BlockSpec((L, b_blk, 3 * D), lambda b: (0, b, 0)),   # gh
        pl.BlockSpec((L, b_blk, D), lambda b: (0, b, 0)),       # enc_hidden
        pl.BlockSpec((L - 1, D, 3 * D), lambda b: (0, 0, 0)),   # W_ih layers>0 (bf16)
        pl.BlockSpec((L - 1, 1, 3 * D), lambda b: (0, 0, 0)),   # b_ih layers>0
        pl.BlockSpec((b_blk, S, A), lambda b: (b, 0, 0)),       # attn1 precompute
        pl.BlockSpec((b_blk, S, E), lambda b: (b, 0, 0)),       # ctx
        pl.BlockSpec((b_blk, S), lambda b: (b, 0)),             # src_pad_mask
        pl.BlockSpec((b_blk, E), lambda b: (b, 0)),             # init_att
        pl.BlockSpec((D, A + D), lambda b: (0, 0)),             # [a1_q_w | ro_out] bf16
        pl.BlockSpec((1, A), lambda b: (0, 0)),                 # a1_v_w
        pl.BlockSpec((E, 4 * D), lambda b: (0, 0)),             # [w_ih_ctx|ro_ctx] bf16
    ]
    out_specs = [
        pl.BlockSpec((T, b_blk, dp), lambda b: (0, b, 0)),      # g_outputs
        pl.BlockSpec((L, b_blk, D), lambda b: (0, b, 0)),       # hidden (last step)
        pl.BlockSpec((b_blk, S), lambda b: (b, 0)),             # attn (last step)
        pl.BlockSpec((b_blk, E), lambda b: (b, 0)),             # cur_context (last step)
    ]
    out_shapes = (
        jax.ShapeDtypeStruct((T, B, dp), jnp.float32),
        jax.ShapeDtypeStruct((L, B, D), jnp.float32),
        jax.ShapeDtypeStruct((B, S), jnp.float32),
        jax.ShapeDtypeStruct((B, E), jnp.float32),
    )
    return pl.pallas_call(
        kernel,
        grid=(nb,),
        in_specs=in_specs,
        out_specs=out_specs,
        out_shape=out_shapes,
        compiler_params=pltpu.CompilerParams(
            dimension_semantics=("parallel",),
            vmem_limit_bytes=32 * 1024 * 1024),
    )(gi_base, ro_base, gh_all, enc_hidden, w_ih_rest, b_ih_rest,
      precomp, ctx_bt, src_pad_mask, init_att, w_out_cat, a1_v_w, w_ctx_cat)


# ---------------------------------------------------------------------------
# full forward (wrapper == EditAttDecoder.forward)
# ---------------------------------------------------------------------------
def edit_att_decoder_forward(params, pool, tgt, enc_hidden, src_ins, src_del,
                             context, src_pad_mask, init_att,
                             ins_pad_mask, del_pad_mask):
    emb_tbl = params['embedding']
    W = emb_tbl.shape[1]
    T, B = tgt.shape
    L, _, D = enc_hidden.shape
    S, _, E = context.shape
    A = params['a1_pre_w'].shape[1]
    bf16 = jnp.bfloat16

    emb = jnp.take(emb_tbl, tgt, axis=0)                      # [T,B,W]
    ins_embed = jnp.take(emb_tbl, src_ins, axis=0)            # [Li,B,W]
    del_embed = jnp.take(emb_tbl, src_del, axis=0)            # [Ld,B,W]
    query = context[-1]                                       # [B,E]

    # --- weight splits by concat segments (W_ih0: [emb, ctx, ins, del];
    #     readout (columns pre-permuted for maxout): [emb, output, ctx, ins, del]) ---
    w_ih0 = params['gru_w_ih0']
    w_emb, w_ctx = w_ih0[:W], w_ih0[W:W + E]
    w_ins, w_del = w_ih0[W + E:W + E + W], w_ih0[W + E + W:]
    ro_w = params['ro_w_perm']
    ro_emb, ro_out = ro_w[:W], ro_w[W:W + D]
    ro_ctx = ro_w[W + D:W + D + E]
    ro_ins, ro_del = ro_w[W + D + E:W + D + E + W], ro_w[W + D + E + W:]

    # --- attn2: both attentions stacked along batch, one launch, and the
    #     ins/del consumers fused in-kernel -> const = [gi_const | ro_const] (B,4D) ---
    ins_ctx = jnp.transpose(ins_embed, (1, 0, 2))             # [B,Li,W]
    del_ctx = jnp.transpose(del_embed, (1, 0, 2))             # [B,Ld,W]
    Lmax = max(ins_ctx.shape[1], del_ctx.shape[1])

    def pad_c(c):
        pad = Lmax - c.shape[1]
        return jnp.pad(c, ((0, 0), (0, pad), (0, 0))) if pad else c

    def pad_m(m):
        pad = Lmax - m.shape[1]
        return jnp.pad(m, ((0, 0), (0, pad)), constant_values=1.0) if pad else m

    ctx_cat = jnp.concatenate([pad_c(ins_ctx), pad_c(del_ctx)], axis=0)   # (2B,Lmax,W)
    mask_cat = jnp.concatenate([pad_m(ins_pad_mask), pad_m(del_pad_mask)], axis=0)
    q2 = jnp.dot(query, params['a2_q_w'])                     # shared linear_q
    q2_cat = jnp.concatenate([q2, q2], axis=0)                # (2B,W)

    w_cat_ins = jnp.concatenate([w_ins, ro_ins], axis=1).astype(bf16)     # (W,4D)
    w_cat_del = jnp.concatenate([w_del, ro_del], axis=1).astype(bf16)     # (W,4D)
    b_cat = jnp.concatenate([params['gru_b_ih0'], params['ro_b_perm']], axis=1)

    const = attn2_consts(q2_cat, ctx_cat, mask_cat,
                         params['a2_pre_w'].astype(bf16), params['a2_pre_b'],
                         params['a2_v_w'], w_cat_ins, w_cat_del, b_cat)
    gi_const, ro_const = const[:, :3 * D], const[:, 3 * D:]

    # --- step-invariant hoists for the decoder time loop (plain XLA) ---
    ctx_bt = jnp.transpose(context, (1, 0, 2))                # [B,S,E]
    precomp = (jnp.dot(ctx_bt.reshape(B * S, E), params['a1_pre_w'])
               + params['a1_pre_b']).reshape(B, S, A)         # attn1 linear_pre

    # hidden-side GRU gates: enc_hidden is fed at EVERY step in the reference code,
    # so gh is identical for all t -> compute once.
    gh_all = (jnp.einsum('lbd,ldk->lbk', enc_hidden, params['gru_w_hh'])
              + params['gru_b_hh'])                           # [L,B,3D]

    gi_base = (jnp.dot(emb.reshape(T * B, W), w_emb).reshape(T, B, 3 * D)
               + gi_const[None])                              # [T,B,3D]
    ro_base = (jnp.dot(emb.reshape(T * B, W), ro_emb).reshape(T, B, D)
               + ro_const[None])                              # [T,B,D]

    # fused per-step weights (bf16 operands, f32 accumulation in-kernel)
    w_out_cat = jnp.concatenate([params['a1_q_w'], ro_out], axis=1).astype(bf16)  # (D,A+D)
    w_ctx_cat = jnp.concatenate([w_ctx, ro_ctx], axis=1).astype(bf16)             # (E,4D)

    return decoder_steps(gi_base, ro_base, gh_all, enc_hidden,
                         params['gru_w_ih_rest'].astype(bf16),
                         params['gru_b_ih_rest'],
                         precomp, ctx_bt, src_pad_mask, init_att,
                         w_out_cat, params['a1_v_w'], w_ctx_cat, pool, A)


# ---------------------------------------------------------------------------
# deterministic synthetic parameters
# ---------------------------------------------------------------------------
def init_params(key, V, W, E, D, A, L, pool):
    assert L >= 2 and D % pool == 0
    ks = iter(jax.random.split(key, 24))

    def nrm(shape, scale=0.1):
        return (scale * jax.random.normal(next(ks), shape)).astype(jnp.float32)

    in0 = W + E + 2 * W          # input_feed=True: word_vec + enc_rnn + 2*word_vec
    p = {}
    emb = nrm((V, W))
    p['embedding'] = emb.at[0].set(0.0)                       # padding_idx = PAD = 0
    p['gru_w_ih0'] = nrm((in0, 3 * D))
    p['gru_b_ih0'] = nrm((1, 3 * D))
    p['gru_w_ih_rest'] = nrm((L - 1, D, 3 * D))
    p['gru_b_ih_rest'] = nrm((L - 1, 1, 3 * D))
    p['gru_w_hh'] = nrm((L, D, 3 * D))
    p['gru_b_hh'] = nrm((L, 1, 3 * D))
    # attn1: ConcatAttention(enc_rnn_size=E, dec_rnn_size=D, att_vec_size=A)
    p['a1_pre_w'] = nrm((E, A)); p['a1_pre_b'] = nrm((1, A))
    p['a1_q_w'] = nrm((D, A));   p['a1_v_w'] = nrm((1, A))
    # attn2: ConcatAttention(word_vec_size=W, enc_rnn_size=E, word_vec_size=W)
    p['a2_pre_w'] = nrm((W, W)); p['a2_pre_b'] = nrm((1, W))
    p['a2_q_w'] = nrm((E, W));   p['a2_v_w'] = nrm((1, W))
    # readout: Linear(enc + dec + 3*word_vec -> dec); columns permuted so the maxout
    # pool becomes an elementwise max over `pool` contiguous slabs of width D/pool.
    ro_w = nrm((W + D + E + 2 * W, D)); ro_b = nrm((1, D))
    dp = D // pool
    perm = jnp.array([j * pool + k for k in range(pool) for j in range(dp)],
                     dtype=jnp.int32)
    p['ro_w_perm'] = ro_w[:, perm]
    p['ro_b_perm'] = ro_b[:, perm]
    return p


if __name__ == "__main__":
    # small, module-consistent sizes
    V, W, E, D, A = 40, 16, 32, 32, 16      # vocab, word_vec, enc_rnn, dec_rnn, att_vec
    L, pool = 2, 2                          # layers, maxout_pool_size
    T, B, S, Li, Ld = 6, 8, 16, 8, 8        # tgt_len, batch, src_len, ins_len, del_len

    root = jax.random.PRNGKey(0)
    pkey, dkey = jax.random.split(root)
    params = init_params(pkey, V, W, E, D, A, L, pool)

    ks = jax.random.split(dkey, 10)
    tgt = jax.random.randint(ks[0], (T, B), 0, V)
    src_ins = jax.random.randint(ks[1], (Li, B), 0, V)
    src_del = jax.random.randint(ks[2], (Ld, B), 0, V)
    enc_hidden = 0.5 * jax.random.normal(ks[3], (L, B, D), dtype=jnp.float32)
    context = 0.5 * jax.random.normal(ks[4], (S, B, E), dtype=jnp.float32)
    init_att = 0.5 * jax.random.normal(ks[5], (B, E), dtype=jnp.float32)
    src_pad_mask = (jax.random.uniform(ks[6], (B, S)) < 0.2).astype(jnp.float32)
    ins_pad_mask = (jax.random.uniform(ks[7], (B, Li)) < 0.2).astype(jnp.float32)
    del_pad_mask = (jax.random.uniform(ks[8], (B, Ld)) < 0.2).astype(jnp.float32)

    forward = jax.jit(edit_att_decoder_forward, static_argnums=(1,))
    g_outputs, hidden, attn, cur_context = forward(
        params, pool, tgt, enc_hidden, src_ins, src_del, context,
        src_pad_mask, init_att, ins_pad_mask, del_pad_mask)

    jax.block_until_ready((g_outputs, hidden, attn, cur_context))
    assert g_outputs.shape == (T, B, D // pool)
    assert hidden.shape == (L, B, D)
    assert attn.shape == (B, S)
    assert cur_context.shape == (B, E)
    print("KERNEL_OK")
</pallas_src>

<mosaic_0001>
module attributes {stable_mosaic.version = 11 : i64} {
  func.func @_attn2_consts_kernel(%arg0: memref<16x16xf32, #tpu.memory_space<vmem>>, %arg1: memref<16x8x16xf32, #tpu.memory_space<vmem>>, %arg2: memref<16x8xf32, #tpu.memory_space<vmem>>, %arg3: memref<16x16xbf16, #tpu.memory_space<vmem>>, %arg4: memref<1x16xf32, #tpu.memory_space<vmem>>, %arg5: memref<1x16xf32, #tpu.memory_space<vmem>>, %arg6: memref<16x128xbf16, #tpu.memory_space<vmem>>, %arg7: memref<16x128xbf16, #tpu.memory_space<vmem>>, %arg8: memref<1x128xf32, #tpu.memory_space<vmem>>, %arg9: memref<8x128xf32, #tpu.memory_space<vmem>>) attributes {dimension_semantics = [], scalar_prefetch = 0 : i64, scratch_operands = 0 : i64, tpu.core_type = #tpu.core_type<tc>} {
    %c0 = arith.constant 0 : index
    %c0_0 = arith.constant 0 : index
    %c0_1 = arith.constant 0 : index
    %0 = vector.load %arg1[%c0, %c0_0, %c0_1] : memref<16x8x16xf32, #tpu.memory_space<vmem>>, vector<16x8x16xf32>
    %1 = vector.shape_cast %0 : vector<16x8x16xf32> to vector<128x16xf32>
    %2 = arith.truncf %1 : vector<128x16xf32> to vector<128x16xbf16>
    %c0_2 = arith.constant 0 : index
    %c0_3 = arith.constant 0 : index
    %3 = vector.load %arg3[%c0_2, %c0_3] : memref<16x16xbf16, #tpu.memory_space<vmem>>, vector<16x16xbf16>
    %cst = arith.constant dense<0.000000e+00> : vector<128x16xf32>
    %4 = tpu.matmul %2, %3, %cst {dimension_numbers = #tpu.dot_dimension_numbers<[1], [0], [0], [1], [0, 0, 1, 1], [], []>} : vector<128x16xbf16>, vector<16x16xbf16>, vector<128x16xf32> -> vector<128x16xf32>
    %c0_4 = arith.constant 0 : index
    %c0_5 = arith.constant 0 : index
    %5 = vector.load %arg4[%c0_4, %c0_5] : memref<1x16xf32, #tpu.memory_space<vmem>>, vector<1x16xf32>
    %6 = vector.broadcast %5 : vector<1x16xf32> to vector<128x16xf32>
    %7 = arith.addf %4, %6 : vector<128x16xf32>
    %8 = vector.shape_cast %7 : vector<128x16xf32> to vector<16x8x16xf32>
    %c0_6 = arith.constant 0 : index
    %c0_7 = arith.constant 0 : index
    %9 = vector.load %arg0[%c0_6, %c0_7] : memref<16x16xf32, #tpu.memory_space<vmem>>, vector<16x16xf32>
    %10 = vector.shape_cast %9 : vector<16x16xf32> to vector<16x1x16xf32>
    %11 = vector.broadcast %10 : vector<16x1x16xf32> to vector<16x8x16xf32>
    %12 = arith.addf %8, %11 : vector<16x8x16xf32>
    %13 = math.tanh %12 : vector<16x8x16xf32>
    %c0_8 = arith.constant 0 : index
    %c0_9 = arith.constant 0 : index
    %14 = vector.load %arg5[%c0_8, %c0_9] : memref<1x16xf32, #tpu.memory_space<vmem>>, vector<1x16xf32>
    %15 = vector.shape_cast %14 : vector<1x16xf32> to vector<1x1x16xf32>
    %16 = vector.broadcast %15 : vector<1x1x16xf32> to vector<16x8x16xf32>
    %17 = arith.mulf %13, %16 : vector<16x8x16xf32>
    %cst_10 = arith.constant dense<0.000000e+00> : vector<16x8xf32>
    %18 = vector.multi_reduction <add>, %17, %cst_10 [2] : vector<16x8x16xf32> to vector<16x8xf32>
    %c0_11 = arith.constant 0 : index
    %c0_12 = arith.constant 0 : index
    %19 = vector.load %arg2[%c0_11, %c0_12] : memref<16x8xf32, #tpu.memory_space<vmem>>, vector<16x8xf32>
    %cst_13 = arith.constant 1.000000e+00 : f32
    %20 = vector.broadcast %cst_13 : f32 to vector<16x8xf32>
    %21 = arith.subf %20, %19 : vector<16x8xf32>
    %22 = arith.mulf %18, %21 : vector<16x8xf32>
    %cst_14 = arith.constant -1.000000e+06 : f32
    %23 = vector.broadcast %cst_14 : f32 to vector<16x8xf32>
    %24 = arith.mulf %19, %23 : vector<16x8xf32>
    %25 = arith.addf %22, %24 : vector<16x8xf32>
    %cst_15 = arith.constant dense<0xFF800000> : vector<16xf32>
    %26 = vector.multi_reduction <maximumf>, %25, %cst_15 [1] : vector<16x8xf32> to vector<16xf32>
    %27 = vector.shape_cast %26 : vector<16xf32> to vector<16x1xf32>
    %28 = vector.broadcast %27 : vector<16x1xf32> to vector<16x8xf32>
    %29 = arith.subf %25, %28 : vector<16x8xf32>
    %30 = math.exp %29 : vector<16x8xf32>
    %cst_16 = arith.constant dense<0.000000e+00> : vector<16xf32>
    %31 = vector.multi_reduction <add>, %30, %cst_16 [1] : vector<16x8xf32> to vector<16xf32>
    %32 = vector.shape_cast %31 : vector<16xf32> to vector<16x1xf32>
    %33 = tpu.reciprocal %32 {approx = true} : vector<16x1xf32> -> vector<16x1xf32>
    %34 = vector.broadcast %33 : vector<16x1xf32> to vector<16x8xf32>
    %35 = arith.mulf %30, %34 : vector<16x8xf32>
    %36 = vector.shape_cast %35 : vector<16x8xf32> to vector<16x8x1xf32>
    %37 = vector.broadcast %36 : vector<16x8x1xf32> to vector<16x8x16xf32>
    %38 = arith.mulf %37, %0 : vector<16x8x16xf32>
    %cst_17 = arith.constant dense<0.000000e+00> : vector<16x16xf32>
    %39 = vector.multi_reduction <add>, %38, %cst_17 [1] : vector<16x8x16xf32> to vector<16x16xf32>
    %40 = vector.extract_strided_slice %39 {offsets = [0, 0], sizes = [8, 16], strides = [1, 1]} : vector<16x16xf32> to vector<8x16xf32>
    %41 = arith.truncf %40 : vector<8x16xf32> to vector<8x16xbf16>
    %42 = vector.extract_strided_slice %39 {offsets = [8, 0], sizes = [8, 16], strides = [1, 1]} : vector<16x16xf32> to vector<8x16xf32>
    %43 = arith.truncf %42 : vector<8x16xf32> to vector<8x16xbf16>
    %c0_18 = arith.constant 0 : index
    %c0_19 = arith.constant 0 : index
    %44 = vector.load %arg6[%c0_18, %c0_19] : memref<16x128xbf16, #tpu.memory_space<vmem>>, vector<16x128xbf16>
    %cst_20 = arith.constant dense<0.000000e+00> : vector<8x128xf32>
    %45 = tpu.matmul %41, %44, %cst_20 {dimension_numbers = #tpu.dot_dimension_numbers<[1], [0], [0], [1], [0, 0, 1, 1], [], []>} : vector<8x16xbf16>, vector<16x128xbf16>, vector<8x128xf32> -> vector<8x128xf32>
    %c0_21 = arith.constant 0 : index
    %c0_22 = arith.constant 0 : index
    %46 = vector.load %arg7[%c0_21, %c0_22] : memref<16x128xbf16, #tpu.memory_space<vmem>>, vector<16x128xbf16>
    %cst_23 = arith.constant dense<0.000000e+00> : vector<8x128xf32>
    %47 = tpu.matmul %43, %46, %cst_23 {dimension_numbers = #tpu.dot_dimension_numbers<[1], [0], [0], [1], [0, 0, 1, 1], [], []>} : vector<8x16xbf16>, vector<16x128xbf16>, vector<8x128xf32> -> vector<8x128xf32>
    %48 = arith.addf %45, %47 : vector<8x128xf32>
    %c0_24 = arith.constant 0 : index
    %c0_25 = arith.constant 0 : index
    %49 = vector.load %arg8[%c0_24, %c0_25] : memref<1x128xf32, #tpu.memory_space<vmem>>, vector<1x128xf32>
    %50 = vector.broadcast %49 : vector<1x128xf32> to vector<8x128xf32>
    %51 = arith.addf %48, %50 : vector<8x128xf32>
    %c0_26 = arith.constant 0 : index
    %c0_27 = arith.constant 0 : index
    %52 = vector.load %arg9[%c0_26, %c0_27] : memref<8x128xf32, #tpu.memory_space<vmem>>, vector<8x128xf32>
    tpu.vector_store %arg9[%c0_26, %c0_27], %51 {strides = array<i32>} : memref<8x128xf32, #tpu.memory_space<vmem>>, vector<8x128xf32>,
    return
  }
}

module attributes {stable_mosaic.version = 11 : i64} {
  func.func @_decoder_kernel(%arg0: i32, %arg1: memref<6x8x96xf32, #tpu.memory_space<vmem>>, %arg2: memref<6x8x32xf32, #tpu.memory_space<vmem>>, %arg3: memref<2x8x96xf32, #tpu.memory_space<vmem>>, %arg4: memref<2x8x32xf32, #tpu.memory_space<vmem>>, %arg5: memref<1x32x96xbf16, #tpu.memory_space<vmem>>, %arg6: memref<1x1x96xf32, #tpu.memory_space<vmem>>, %arg7: memref<8x16x16xf32, #tpu.memory_space<vmem>>, %arg8: memref<8x16x32xf32, #tpu.memory_space<vmem>>, %arg9: memref<8x16xf32, #tpu.memory_space<vmem>>, %arg10: memref<8x32xf32, #tpu.memory_space<vmem>>, %arg11: memref<32x48xbf16, #tpu.memory_space<vmem>>, %arg12: memref<1x16xf32, #tpu.memory_space<vmem>>, %arg13: memref<32x128xbf16, #tpu.memory_space<vmem>>, %arg14: memref<6x8x16xf32, #tpu.memory_space<vmem>>, %arg15: memref<2x8x32xf32, #tpu.memory_space<vmem>>, %arg16: memref<8x16xf32, #tpu.memory_space<vmem>>, %arg17: memref<8x32xf32, #tpu.memory_space<vmem>>) attributes {dimension_semantics = [#tpu.dimension_semantics<parallel>], iteration_bounds = array<i64: 1>, scalar_prefetch = 0 : i64, scratch_operands = 0 : i64, tpu.core_type = #tpu.core_type<tc>, window_params = [{transform_indices = @transform_0, window_bounds = array<i64: 6, 8, 96>}, {transform_indices = @transform_1, window_bounds = array<i64: 6, 8, 32>}, {transform_indices = @transform_2, window_bounds = array<i64: 2, 8, 96>}, {transform_indices = @transform_3, window_bounds = array<i64: 2, 8, 32>}, {pipeline_mode = #tpu.pipeline_mode<synchronous>, transform_indices = @transform_4, window_bounds = array<i64: 1, 32, 96>}, {pipeline_mode = #tpu.pipeline_mode<synchronous>, transform_indices = @transform_5, window_bounds = array<i64: 1, 1, 96>}, {transform_indices = @transform_6, window_bounds = array<i64: 8, 16, 16>}, {transform_indices = @transform_7, window_bounds = array<i64: 8, 16, 32>}, {transform_indices = @transform_8, window_bounds = array<i64: 8, 16>}, {transform_indices = @transform_9, window_bounds = array<i64: 8, 32>}, {pipeline_mode = #tpu.pipeline_mode<synchronous>, transform_indices = @transform_10, window_bounds = array<i64: 32, 48>}, {pipeline_mode = #tpu.pipeline_mode<synchronous>, transform_indices = @transform_11, window_bounds = array<i64: 1, 16>}, {pipeline_mode = #tpu.pipeline_mode<synchronous>, transform_indices = @transform_12, window_bounds = array<i64: 32, 128>}, {transform_indices = @transform_13, window_bounds = array<i64: 6, 8, 16>}, {transform_indices = @transform_14, window_bounds = array<i64: 2, 8, 32>}, {transform_indices = @transform_15, window_bounds = array<i64: 8, 16>}, {transform_indices = @transform_16, window_bounds = array<i64: 8, 32>}]} {
    %c0 = arith.constant 0 : index
    %c0_0 = arith.constant 0 : index
    %0 = vector.load %arg9[%c0, %c0_0] : memref<8x16xf32, #tpu.memory_space<vmem>>, vector<8x16xf32>
    %cst = arith.constant 1.000000e+00 : f32
    %1 = vector.broadcast %cst : f32 to vector<8x16xf32>
    %2 = arith.subf %1, %0 : vector<8x16xf32>
    %cst_1 = arith.constant -1.000000e+06 : f32
    %3 = vector.broadcast %cst_1 : f32 to vector<8x16xf32>
    %4 = arith.mulf %0, %3 : vector<8x16xf32>
    %5 = tpu.iota {dimensions = array<i32: 0>} : vector<6x8x16xi32>
    %c0_2 = arith.constant 0 : index
    %c0_3 = arith.constant 0 : index
    %6 = vector.load %arg10[%c0_2, %c0_3] : memref<8x32xf32, #tpu.memory_space<vmem>>, vector<8x32xf32>
    %7 = arith.truncf %6 : vector<8x32xf32> to vector<8x32xbf16>
    %c0_4 = arith.constant 0 : index
    %c0_5 = arith.constant 0 : index
    %8 = vector.load %arg13[%c0_4, %c0_5] : memref<32x128xbf16, #tpu.memory_space<vmem>>, vector<32x128xbf16>
    %cst_6 = arith.constant dense<0.000000e+00> : vector<8x128xf32>
    %9 = tpu.matmul %7, %8, %cst_6 {dimension_numbers = #tpu.dot_dimension_numbers<[1], [0], [0], [1], [0, 0, 1, 1], [], []>} : vector<8x32xbf16>, vector<32x128xbf16>, vector<8x128xf32> -> vector<8x128xf32>
    %10 = vector.extract_strided_slice %9 {offsets = [0, 0], sizes = [8, 96], strides = [1, 1]} : vector<8x128xf32> to vector<8x96xf32>
    %cst_7 = arith.constant 0.000000e+00 : f32
    %11 = vector.broadcast %cst_7 : f32 to vector<6x8x16xf32>
    %c0_i32 = arith.constant 0 : i32
    %12 = arith.index_cast %c0_i32 : i32 to index
    %c0_8 = arith.constant 0 : index
    %c0_9 = arith.constant 0 : index
    %13 = vector.load %arg1[%12, %c0_8, %c0_9] : memref<6x8x96xf32, #tpu.memory_space<vmem>>, vector<1x8x96xf32>
    %14 = vector.shape_cast %13 : vector<1x8x96xf32> to vector<8x96xf32>
    %15 = arith.addf %14, %10 : vector<8x96xf32>
    %c0_10 = arith.constant 0 : index
    %c0_11 = arith.constant 0 : index
    %c0_12 = arith.constant 0 : index
    %16 = vector.load %arg3[%c0_10, %c0_11, %c0_12] : memref<2x8x96xf32, #tpu.memory_space<vmem>>, vector<1x8x96xf32>
    %17 = vector.shape_cast %16 : vector<1x8x96xf32> to vector<8x96xf32>
    %c0_13 = arith.constant 0 : index
    %c0_14 = arith.constant 0 : index
    %c0_15 = arith.constant 0 : index
    %18 = vector.load %arg4[%c0_13, %c0_14, %c0_15] : memref<2x8x32xf32, #tpu.memory_space<vmem>>, vector<1x8x32xf32>
    %19 = vector.shape_cast %18 : vector<1x8x32xf32> to vector<8x32xf32>
    %20 = vector.extract_strided_slice %15 {offsets = [0, 0], sizes = [8, 32], strides = [1, 1]} : vector<8x96xf32> to vector<8x32xf32>
    %21 = vector.extract_strided_slice %17 {offsets = [0, 0], sizes = [8, 32], strides = [1, 1]} : vector<8x96xf32> to vector<8x32xf32>
    %22 = arith.addf %20, %21 : vector<8x32xf32>
    %23 = arith.negf %22 : vector<8x32xf32>
    %24 = math.exp %23 : vector<8x32xf32>
    %cst_16 = arith.constant 1.000000e+00 : f32
    %25 = vector.broadcast %cst_16 : f32 to vector<8x32xf32>
    %26 = arith.addf %25, %24 : vector<8x32xf32>
    %27 = arith.divf %25, %26 : vector<8x32xf32>
    %28 = vector.extract_strided_slice %15 {offsets = [0, 32], sizes = [8, 32], strides = [1, 1]} : vector<8x96xf32> to vector<8x32xf32>
    %29 = vector.extract_strided_slice %17 {offsets = [0, 32], sizes = [8, 32], strides = [1, 1]} : vector<8x96xf32> to vector<8x32xf32>
    %30 = arith.addf %28, %29 : vector<8x32xf32>
    %31 = arith.negf %30 : vector<8x32xf32>
    %32 = math.exp %31 : vector<8x32xf32>
    %cst_17 = arith.constant 1.000000e+00 : f32
    %33 = vector.broadcast %cst_17 : f32 to vector<8x32xf32>
    %34 = arith.addf %33, %32 : vector<8x32xf32>
    %35 = arith.divf %33, %34 : vector<8x32xf32>
    %36 = vector.extract_strided_slice %15 {offsets = [0, 64], sizes = [8, 32], strides = [1, 1]} : vector<8x96xf32> to vector<8x32xf32>
    %37 = vector.extract_strided_slice %17 {offsets = [0, 64], sizes = [8, 32], strides = [1, 1]} : vector<8x96xf32> to vector<8x32xf32>
    %38 = arith.mulf %27, %37 : vector<8x32xf32>
    %39 = arith.addf %36, %38 : vector<8x32xf32>
    %40 = math.tanh %39 : vector<8x32xf32>
    %cst_18 = arith.constant 1.000000e+00 : f32
    %41 = vector.broadcast %cst_18 : f32 to vector<8x32xf32>
    %42 = arith.subf %41, %35 : vector<8x32xf32>
    %43 = arith.mulf %42, %40 : vector<8x32xf32>
    %44 = arith.mulf %35, %19 : vector<8x32xf32>
    %45 = arith.addf %43, %44 : vector<8x32xf32>
    %46 = arith.truncf %45 : vector<8x32xf32> to vector<8x32xbf16>
    %c0_19 = arith.constant 0 : index
    %c0_20 = arith.constant 0 : index
    %c0_21 = arith.constant 0 : index
    %47 = vector.load %arg5[%c0_19, %c0_20, %c0_21] : memref<1x32x96xbf16, #tpu.memory_space<vmem>>, vector<1x32x96xbf16>
    %48 = vector.shape_cast %47 : vector<1x32x96xbf16> to vector<32x96xbf16>
    %cst_22 = arith.constant dense<0.000000e+00> : vector<8x96xf32>
    %49 = tpu.matmul %46, %48, %cst_22 {dimension_numbers = #tpu.dot_dimension_numbers<[1], [0], [0], [1], [0, 0, 1, 1], [], []>} : vector<8x32xbf16>, vector<32x96xbf16>, vector<8x96xf32> -> vector<8x96xf32>
    %c0_23 = arith.constant 0 : index
    %c0_24 = arith.constant 0 : index
    %c0_25 = arith.constant 0 : index
    %50 = vector.load %arg6[%c0_23, %c0_24, %c0_25] : memref<1x1x96xf32, #tpu.memory_space<vmem>>, vector<1x1x96xf32>
    %51 = vector.shape_cast %50 : vector<1x1x96xf32> to vector<1x96xf32>
    %52 = vector.broadcast %51 : vector<1x96xf32> to vector<8x96xf32>
    %53 = arith.addf %49, %52 : vector<8x96xf32>
    %c1 = arith.constant 1 : index
    %c0_26 = arith.constant 0 : index
    %c0_27 = arith.constant 0 : index
    %54 = vector.load %arg3[%c1, %c0_26, %c0_27] : memref<2x8x96xf32, #tpu.memory_space<vmem>>, vector<1x8x96xf32>
    %55 = vector.shape_cast %54 : vector<1x8x96xf32> to vector<8x96xf32>
    %c1_28 = arith.constant 1 : index
    %c0_29 = arith.constant 0 : index
    %c0_30 = arith.constant 0 : index
    %56 = vector.load %arg4[%c1_28, %c0_29, %c0_30] : memref<2x8x32xf32, #tpu.memory_space<vmem>>, vector<1x8x32xf32>
    %57 = vector.shape_cast %56 : vector<1x8x32xf32> to vector<8x32xf32>
    %58 = vector.extract_strided_slice %53 {offsets = [0, 0], sizes = [8, 32], strides = [1, 1]} : vector<8x96xf32> to vector<8x32xf32>
    %59 = vector.extract_strided_slice %55 {offsets = [0, 0], sizes = [8, 32], strides = [1, 1]} : vector<8x96xf32> to vector<8x32xf32>
    %60 = arith.addf %58, %59 : vector<8x32xf32>
    %61 = arith.negf %60 : vector<8x32xf32>
    %62 = math.exp %61 : vector<8x32xf32>
    %cst_31 = arith.constant 1.000000e+00 : f32
    %63 = vector.broadcast %cst_31 : f32 to vector<8x32xf32>
    %64 = arith.addf %63, %62 : vector<8x32xf32>
    %65 = arith.divf %63, %64 : vector<8x32xf32>
    %66 = vector.extract_strided_slice %53 {offsets = [0, 32], sizes = [8, 32], strides = [1, 1]} : vector<8x96xf32> to vector<8x32xf32>
    %67 = vector.extract_strided_slice %55 {offsets = [0, 32], sizes = [8, 32], strides = [1, 1]} : vector<8x96xf32> to vector<8x32xf32>
    %68 = arith.addf %66, %67 : vector<8x32xf32>
    %69 = arith.negf %68 : vector<8x32xf32>
    %70 = math.exp %69 : vector<8x32xf32>
    %cst_32 = arith.constant 1.000000e+00 : f32
    %71 = vector.broadcast %cst_32 : f32 to vector<8x32xf32>
    %72 = arith.addf %71, %70 : vector<8x32xf32>
    %73 = arith.divf %71, %72 : vector<8x32xf32>
    %74 = vector.extract_strided_slice %53 {offsets = [0, 64], sizes = [8, 32], strides = [1, 1]} : vector<8x96xf32> to vector<8x32xf32>
    %75 = vector.extract_strided_slice %55 {offsets = [0, 64], sizes = [8, 32], strides = [1, 1]} : vector<8x96xf32> to vector<8x32xf32>
    %76 = arith.mulf %65, %75 : vector<8x32xf32>
    %77 = arith.addf %74, %76 : vector<8x32xf32>
    %78 = math.tanh %77 : vector<8x32xf32>
    %cst_33 = arith.constant 1.000000e+00 : f32
    %79 = vector.broadcast %cst_33 : f32 to vector<8x32xf32>
    %80 = arith.subf %79, %73 : vector<8x32xf32>
    %81 = arith.mulf %80, %78 : vector<8x32xf32>
    %82 = arith.mulf %73, %57 : vector<8x32xf32>
    %83 = arith.addf %81, %82 : vector<8x32xf32>
    %84 = arith.truncf %83 : vector<8x32xf32> to vector<8x32xbf16>
    %c0_34 = arith.constant 0 : index
    %c0_35 = arith.constant 0 : index
    %85 = vector.load %arg11[%c0_34, %c0_35] : memref<32x48xbf16, #tpu.memory_space<vmem>>, vector<32x48xbf16>
    %cst_36 = arith.constant dense<0.000000e+00> : vector<8x48xf32>
    %86 = tpu.matmul %84, %85, %cst_36 {dimension_numbers = #tpu.dot_dimension_numbers<[1], [0], [0], [1], [0, 0, 1, 1], [], []>} : vector<8x32xbf16>, vector<32x48xbf16>, vector<8x48xf32> -> vector<8x48xf32>
    %87 = vector.extract_strided_slice %86 {offsets = [0, 0], sizes = [8, 16], strides = [1, 1]} : vector<8x48xf32> to vector<8x16xf32>
    %88 = vector.extract_strided_slice %86 {offsets = [0, 16], sizes = [8, 32], strides = [1, 1]} : vector<8x48xf32> to vector<8x32xf32>
    %c0_37 = arith.constant 0 : index
    %c0_38 = arith.constant 0 : index
    %c0_39 = arith.constant 0 : index
    %89 = vector.load %arg7[%c0_37, %c0_38, %c0_39] : memref<8x16x16xf32, #tpu.memory_space<vmem>>, vector<8x16x16xf32>
    %90 = vector.shape_cast %87 : vector<8x16xf32> to vector<8x1x16xf32>
    %91 = vector.broadcast %90 : vector<8x1x16xf32> to vector<8x16x16xf32>
    %92 = arith.addf %89, %91 : vector<8x16x16xf32>
    %93 = math.tanh %92 : vector<8x16x16xf32>
    %c0_40 = arith.constant 0 : index
    %c0_41 = arith.constant 0 : index
    %94 = vector.load %arg12[%c0_40, %c0_41] : memref<1x16xf32, #tpu.memory_space<vmem>>, vector<1x16xf32>
    %95 = vector.shape_cast %94 : vector<1x16xf32> to vector<1x1x16xf32>
    %96 = vector.broadcast %95 : vector<1x1x16xf32> to vector<8x16x16xf32>
    %97 = arith.mulf %93, %96 : vector<8x16x16xf32>
    %cst_42 = arith.constant dense<0.000000e+00> : vector<8x16xf32>
    %98 = vector.multi_reduction <add>, %97, %cst_42 [2] : vector<8x16x16xf32> to vector<8x16xf32>
    %99 = arith.mulf %98, %2 : vector<8x16xf32>
    %100 = arith.addf %99, %4 : vector<8x16xf32>
    %cst_43 = arith.constant dense<0xFF800000> : vector<8xf32>
    %101 = vector.multi_reduction <maximumf>, %100, %cst_43 [1] : vector<8x16xf32> to vector<8xf32>
    %102 = vector.shape_cast %101 : vector<8xf32> to vector<8x1xf32>
    %103 = vector.broadcast %102 : vector<8x1xf32> to vector<8x16xf32>
    %104 = arith.subf %100, %103 : vector<8x16xf32>
    %105 = math.exp %104 : vector<8x16xf32>
    %cst_44 = arith.constant dense<0.000000e+00> : vector<8xf32>
    %106 = vector.multi_reduction <add>, %105, %cst_44 [1] : vector<8x16xf32> to vector<8xf32>
    %107 = vector.shape_cast %106 : vector<8xf32> to vector<8x1xf32>
    %108 = tpu.reciprocal %107 {approx = true} : vector<8x1xf32> -> vector<8x1xf32>
    %109 = vector.broadcast %108 : vector<8x1xf32> to vector<8x16xf32>
    %110 = arith.mulf %105, %109 : vector<8x16xf32>
    %111 = vector.shape_cast %110 : vector<8x16xf32> to vector<8x16x1xf32>
    %c0_45 = arith.constant 0 : index
    %c0_46 = arith.constant 0 : index
    %c0_47 = arith.constant 0 : index
    %112 = vector.load %arg8[%c0_45, %c0_46, %c0_47] : memref<8x16x32xf32, #tpu.memory_space<vmem>>, vector<8x16x32xf32>
    %113 = vector.broadcast %111 : vector<8x16x1xf32> to vector<8x16x32xf32>
    %114 = arith.mulf %113, %112 : vector<8x16x32xf32>
    %cst_48 = arith.constant dense<0.000000e+00> : vector<8x32xf32>
    %115 = vector.multi_reduction <add>, %114, %cst_48 [1] : vector<8x16x32xf32> to vector<8x32xf32>
    %116 = arith.truncf %115 : vector<8x32xf32> to vector<8x32xbf16>
    %c0_49 = arith.constant 0 : index
    %c0_50 = arith.constant 0 : index
    %117 = vector.load %arg13[%c0_49, %c0_50] : memref<32x128xbf16, #tpu.memory_space<vmem>>, vector<32x128xbf16>
    %cst_51 = arith.constant dense<0.000000e+00> : vector<8x128xf32>
    %118 = tpu.matmul %116, %117, %cst_51 {dimension_numbers = #tpu.dot_dimension_numbers<[1], [0], [0], [1], [0, 0, 1, 1], [], []>} : vector<8x32xbf16>, vector<32x128xbf16>, vector<8x128xf32> -> vector<8x128xf32>
    %119 = vector.extract_strided_slice %118 {offsets = [0, 0], sizes = [8, 96], strides = [1, 1]} : vector<8x128xf32> to vector<8x96xf32>
    %120 = vector.extract_strided_slice %118 {offsets = [0, 96], sizes = [8, 32], strides = [1, 1]} : vector<8x128xf32> to vector<8x32xf32>
    %121 = arith.index_cast %c0_i32 : i32 to index
    %c0_52 = arith.constant 0 : index
    %c0_53 = arith.constant 0 : index
    %122 = vector.load %arg2[%121, %c0_52, %c0_53] : memref<6x8x32xf32, #tpu.memory_space<vmem>>, vector<1x8x32xf32>
    %123 = vector.shape_cast %122 : vector<1x8x32xf32> to vector<8x32xf32>
    %124 = arith.addf %123, %88 : vector<8x32xf32>
    %125 = arith.addf %124, %120 : vector<8x32xf32>
    %126 = vector.extract_strided_slice %125 {offsets = [0, 0], sizes = [8, 16], strides = [1, 1]} : vector<8x32xf32> to vector<8x16xf32>
    %127 = vector.extract_strided_slice %125 {offsets = [0, 16], sizes = [8, 16], strides = [1, 1]} : vector<8x32xf32> to vector<8x16xf32>
    %128 = arith.maximumf %126, %127 : vector<8x16xf32>
    %129 = vector.broadcast %c0_i32 : i32 to vector<6x8x16xi32>
    %130 = arith.cmpi eq, %5, %129 : vector<6x8x16xi32>
    %131 = vector.shape_cast %128 : vector<8x16xf32> to vector<1x8x16xf32>
    %132 = vector.shape_cast %131 : vector<1x8x16xf32> to vector<1x8x16xf32>
    %133 = vector.broadcast %132 : vector<1x8x16xf32> to vector<6x8x16xf32>
    %134 = arith.select %130, %133, %11 : vector<6x8x16xi1>, vector<6x8x16xf32>
    %c5_i32 = arith.constant 5 : i32
    %135 = arith.cmpi eq, %c0_i32, %c5_i32 : i32
    %136 = arith.extui %135 : i1 to i32
    %c0_i32_54 = arith.constant 0 : i32
    %137 = arith.cmpi ne, %136, %c0_i32_54 : i32
    scf.if %137 {
      %c0_304 = arith.constant 0 : index
      %c0_305 = arith.constant 0 : index
      %c0_306 = arith.constant 0 : index
      %769 = vector.load %arg15[%c0_304, %c0_305, %c0_306] : memref<2x8x32xf32, #tpu.memory_space<vmem>>, vector<1x8x32xf32>
      %770 = vector.shape_cast %769 : vector<1x8x32xf32> to vector<8x32xf32>
      %771 = vector.shape_cast %45 : vector<8x32xf32> to vector<1x8x32xf32>
      tpu.vector_store %arg15[%c0_304, %c0_305, %c0_306], %771 {strides = array<i32>} : memref<2x8x32xf32, #tpu.memory_space<vmem>>, vector<1x8x32xf32>,
      %c1_307 = arith.constant 1 : index
      %c0_308 = arith.constant 0 : index
      %c0_309 = arith.constant 0 : index
      %772 = vector.load %arg15[%c1_307, %c0_308, %c0_309] : memref<2x8x32xf32, #tpu.memory_space<vmem>>, vector<1x8x32xf32>
      %773 = vector.shape_cast %772 : vector<1x8x32xf32> to vector<8x32xf32>
      %774 = vector.shape_cast %83 : vector<8x32xf32> to vector<1x8x32xf32>
      tpu.vector_store %arg15[%c1_307, %c0_308, %c0_309], %774 {strides = array<i32>} : memref<2x8x32xf32, #tpu.memory_space<vmem>>, vector<1x8x32xf32>,
      %c0_310 = arith.constant 0 : index
      %c0_311 = arith.constant 0 : index
      %775 = vector.load %arg16[%c0_310, %c0_311] : memref<8x16xf32, #tpu.memory_space<vmem>>, vector<8x16xf32>
      tpu.vector_store %arg16[%c0_310, %c0_311], %110 {strides = array<i32>} : memref<8x16xf32, #tpu.memory_space<vmem>>, vector<8x16xf32>,
      %c0_312 = arith.constant 0 : index
      %c0_313 = arith.constant 0 : index
      %776 = vector.load %arg17[%c0_312, %c0_313] : memref<8x32xf32, #tpu.memory_space<vmem>>, vector<8x32xf32>
      tpu.vector_store %arg17[%c0_312, %c0_313], %115 {strides = array<i32>} : memref<8x32xf32, #tpu.memory_space<vmem>>, vector<8x32xf32>,
    } else {
    }
    %c1_i32 = arith.constant 1 : i32
    %138 = arith.index_cast %c1_i32 : i32 to index
    %c0_55 = arith.constant 0 : index
    %c0_56 = arith.constant 0 : index
    %139 = vector.load %arg1[%138, %c0_55, %c0_56] : memref<6x8x96xf32, #tpu.memory_space<vmem>>, vector<1x8x96xf32>
    %140 = vector.shape_cast %139 : vector<1x8x96xf32> to vector<8x96xf32>
    %141 = arith.addf %140, %119 : vector<8x96xf32>
    %c0_57 = arith.constant 0 : index
    %c0_58 = arith.constant 0 : index
    %c0_59 = arith.constant 0 : index
    %142 = vector.load %arg3[%c0_57, %c0_58, %c0_59] : memref<2x8x96xf32, #tpu.memory_space<vmem>>, vector<1x8x96xf32>
    %143 = vector.shape_cast %142 : vector<1x8x96xf32> to vector<8x96xf32>
    %c0_60 = arith.constant 0 : index
    %c0_61 = arith.constant 0 : index
    %c0_62 = arith.constant 0 : index
    %144 = vector.load %arg4[%c0_60, %c0_61, %c0_62] : memref<2x8x32xf32, #tpu.memory_space<vmem>>, vector<1x8x32xf32>
    %145 = vector.shape_cast %144 : vector<1x8x32xf32> to vector<8x32xf32>
    %146 = vector.extract_strided_slice %141 {offsets = [0, 0], sizes = [8, 32], strides = [1, 1]} : vector<8x96xf32> to vector<8x32xf32>
    %147 = vector.extract_strided_slice %143 {offsets = [0, 0], sizes = [8, 32], strides = [1, 1]} : vector<8x96xf32> to vector<8x32xf32>
    %148 = arith.addf %146, %147 : vector<8x32xf32>
    %149 = arith.negf %148 : vector<8x32xf32>
    %150 = math.exp %149 : vector<8x32xf32>
    %cst_63 = arith.constant 1.000000e+00 : f32
    %151 = vector.broadcast %cst_63 : f32 to vector<8x32xf32>
    %152 = arith.addf %151, %150 : vector<8x32xf32>
    %153 = arith.divf %151, %152 : vector<8x32xf32>
    %154 = vector.extract_strided_slice %141 {offsets = [0, 32], sizes = [8, 32], strides = [1, 1]} : vector<8x96xf32> to vector<8x32xf32>
    %155 = vector.extract_strided_slice %143 {offsets = [0, 32], sizes = [8, 32], strides = [1, 1]} : vector<8x96xf32> to vector<8x32xf32>
    %156 = arith.addf %154, %155 : vector<8x32xf32>
    %157 = arith.negf %156 : vector<8x32xf32>
    %158 = math.exp %157 : vector<8x32xf32>
    %cst_64 = arith.constant 1.000000e+00 : f32
    %159 = vector.broadcast %cst_64 : f32 to vector<8x32xf32>
    %160 = arith.addf %159, %158 : vector<8x32xf32>
    %161 = arith.divf %159, %160 : vector<8x32xf32>
    %162 = vector.extract_strided_slice %141 {offsets = [0, 64], sizes = [8, 32], strides = [1, 1]} : vector<8x96xf32> to vector<8x32xf32>
    %163 = vector.extract_strided_slice %143 {offsets = [0, 64], sizes = [8, 32], strides = [1, 1]} : vector<8x96xf32> to vector<8x32xf32>
    %164 = arith.mulf %153, %163 : vector<8x32xf32>
    %165 = arith.addf %162, %164 : vector<8x32xf32>
    %166 = math.tanh %165 : vector<8x32xf32>
    %cst_65 = arith.constant 1.000000e+00 : f32
    %167 = vector.broadcast %cst_65 : f32 to vector<8x32xf32>
    %168 = arith.subf %167, %161 : vector<8x32xf32>
    %169 = arith.mulf %168, %166 : vector<8x32xf32>
    %170 = arith.mulf %161, %145 : vector<8x32xf32>
    %171 = arith.addf %169, %170 : vector<8x32xf32>
    %172 = arith.truncf %171 : vector<8x32xf32> to vector<8x32xbf16>
    %c0_66 = arith.constant 0 : index
    %c0_67 = arith.constant 0 : index
    %c0_68 = arith.constant 0 : index
    %173 = vector.load %arg5[%c0_66, %c0_67, %c0_68] : memref<1x32x96xbf16, #tpu.memory_space<vmem>>, vector<1x32x96xbf16>
    %174 = vector.shape_cast %173 : vector<1x32x96xbf16> to vector<32x96xbf16>
    %cst_69 = arith.constant dense<0.000000e+00> : vector<8x96xf32>
    %175 = tpu.matmul %172, %174, %cst_69 {dimension_numbers = #tpu.dot_dimension_numbers<[1], [0], [0], [1], [0, 0, 1, 1], [], []>} : vector<8x32xbf16>, vector<32x96xbf16>, vector<8x96xf32> -> vector<8x96xf32>
    %c0_70 = arith.constant 0 : index
    %c0_71 = arith.constant 0 : index
    %c0_72 = arith.constant 0 : index
    %176 = vector.load %arg6[%c0_70, %c0_71, %c0_72] : memref<1x1x96xf32, #tpu.memory_space<vmem>>, vector<1x1x96xf32>
    %177 = vector.shape_cast %176 : vector<1x1x96xf32> to vector<1x96xf32>
    %178 = vector.broadcast %177 : vector<1x96xf32> to vector<8x96xf32>
    %179 = arith.addf %175, %178 : vector<8x96xf32>
    %c1_73 = arith.constant 1 : index
    %c0_74 = arith.constant 0 : index
    %c0_75 = arith.constant 0 : index
    %180 = vector.load %arg3[%c1_73, %c0_74, %c0_75] : memref<2x8x96xf32, #tpu.memory_space<vmem>>, vector<1x8x96xf32>
    %181 = vector.shape_cast %180 : vector<1x8x96xf32> to vector<8x96xf32>
    %c1_76 = arith.constant 1 : index
    %c0_77 = arith.constant 0 : index
    %c0_78 = arith.constant 0 : index
    %182 = vector.load %arg4[%c1_76, %c0_77, %c0_78] : memref<2x8x32xf32, #tpu.memory_space<vmem>>, vector<1x8x32xf32>
    %183 = vector.shape_cast %182 : vector<1x8x32xf32> to vector<8x32xf32>
    %184 = vector.extract_strided_slice %179 {offsets = [0, 0], sizes = [8, 32], strides = [1, 1]} : vector<8x96xf32> to vector<8x32xf32>
    %185 = vector.extract_strided_slice %181 {offsets = [0, 0], sizes = [8, 32], strides = [1, 1]} : vector<8x96xf32> to vector<8x32xf32>
    %186 = arith.addf %184, %185 : vector<8x32xf32>
    %187 = arith.negf %186 : vector<8x32xf32>
    %188 = math.exp %187 : vector<8x32xf32>
    %cst_79 = arith.constant 1.000000e+00 : f32
    %189 = vector.broadcast %cst_79 : f32 to vector<8x32xf32>
    %190 = arith.addf %189, %188 : vector<8x32xf32>
    %191 = arith.divf %189, %190 : vector<8x32xf32>
    %192 = vector.extract_strided_slice %179 {offsets = [0, 32], sizes = [8, 32], strides = [1, 1]} : vector<8x96xf32> to vector<8x32xf32>
    %193 = vector.extract_strided_slice %181 {offsets = [0, 32], sizes = [8, 32], strides = [1, 1]} : vector<8x96xf32> to vector<8x32xf32>
    %194 = arith.addf %192, %193 : vector<8x32xf32>
    %195 = arith.negf %194 : vector<8x32xf32>
    %196 = math.exp %195 : vector<8x32xf32>
    %cst_80 = arith.constant 1.000000e+00 : f32
    %197 = vector.broadcast %cst_80 : f32 to vector<8x32xf32>
    %198 = arith.addf %197, %196 : vector<8x32xf32>
    %199 = arith.divf %197, %198 : vector<8x32xf32>
    %200 = vector.extract_strided_slice %179 {offsets = [0, 64], sizes = [8, 32], strides = [1, 1]} : vector<8x96xf32> to vector<8x32xf32>
    %201 = vector.extract_strided_slice %181 {offsets = [0, 64], sizes = [8, 32], strides = [1, 1]} : vector<8x96xf32> to vector<8x32xf32>
    %202 = arith.mulf %191, %201 : vector<8x32xf32>
    %203 = arith.addf %200, %202 : vector<8x32xf32>
    %204 = math.tanh %203 : vector<8x32xf32>
    %cst_81 = arith.constant 1.000000e+00 : f32
    %205 = vector.broadcast %cst_81 : f32 to vector<8x32xf32>
    %206 = arith.subf %205, %199 : vector<8x32xf32>
    %207 = arith.mulf %206, %204 : vector<8x32xf32>
    %208 = arith.mulf %199, %183 : vector<8x32xf32>
    %209 = arith.addf %207, %208 : vector<8x32xf32>
    %210 = arith.truncf %209 : vector<8x32xf32> to vector<8x32xbf16>
    %c0_82 = arith.constant 0 : index
    %c0_83 = arith.constant 0 : index
    %211 = vector.load %arg11[%c0_82, %c0_83] : memref<32x48xbf16, #tpu.memory_space<vmem>>, vector<32x48xbf16>
    %cst_84 = arith.constant dense<0.000000e+00> : vector<8x48xf32>
    %212 = tpu.matmul %210, %211, %cst_84 {dimension_numbers = #tpu.dot_dimension_numbers<[1], [0], [0], [1], [0, 0, 1, 1], [], []>} : vector<8x32xbf16>, vector<32x48xbf16>, vector<8x48xf32> -> vector<8x48xf32>
    %213 = vector.extract_strided_slice %212 {offsets = [0, 0], sizes = [8, 16], strides = [1, 1]} : vector<8x48xf32> to vector<8x16xf32>
    %214 = vector.extract_strided_slice %212 {offsets = [0, 16], sizes = [8, 32], strides = [1, 1]} : vector<8x48xf32> to vector<8x32xf32>
    %c0_85 = arith.constant 0 : index
    %c0_86 = arith.constant 0 : index
    %c0_87 = arith.constant 0 : index
    %215 = vector.load %arg7[%c0_85, %c0_86, %c0_87] : memref<8x16x16xf32, #tpu.memory_space<vmem>>, vector<8x16x16xf32>
    %216 = vector.shape_cast %213 : vector<8x16xf32> to vector<8x1x16xf32>
    %217 = vector.broadcast %216 : vector<8x1x16xf32> to vector<8x16x16xf32>
    %218 = arith.addf %215, %217 : vector<8x16x16xf32>
    %219 = math.tanh %218 : vector<8x16x16xf32>
    %c0_88 = arith.constant 0 : index
    %c0_89 = arith.constant 0 : index
    %220 = vector.load %arg12[%c0_88, %c0_89] : memref<1x16xf32, #tpu.memory_space<vmem>>, vector<1x16xf32>
    %221 = vector.shape_cast %220 : vector<1x16xf32> to vector<1x1x16xf32>
    %222 = vector.broadcast %221 : vector<1x1x16xf32> to vector<8x16x16xf32>
    %223 = arith.mulf %219, %222 : vector<8x16x16xf32>
    %cst_90 = arith.constant dense<0.000000e+00> : vector<8x16xf32>
    %224 = vector.multi_reduction <add>, %223, %cst_90 [2] : vector<8x16x16xf32> to vector<8x16xf32>
    %225 = arith.mulf %224, %2 : vector<8x16xf32>
    %226 = arith.addf %225, %4 : vector<8x16xf32>
    %cst_91 = arith.constant dense<0xFF800000> : vector<8xf32>
    %227 = vector.multi_reduction <maximumf>, %226, %cst_91 [1] : vector<8x16xf32> to vector<8xf32>
    %228 = vector.shape_cast %227 : vector<8xf32> to vector<8x1xf32>
    %229 = vector.broadcast %228 : vector<8x1xf32> to vector<8x16xf32>
    %230 = arith.subf %226, %229 : vector<8x16xf32>
    %231 = math.exp %230 : vector<8x16xf32>
    %cst_92 = arith.constant dense<0.000000e+00> : vector<8xf32>
    %232 = vector.multi_reduction <add>, %231, %cst_92 [1] : vector<8x16xf32> to vector<8xf32>
    %233 = vector.shape_cast %232 : vector<8xf32> to vector<8x1xf32>
    %234 = tpu.reciprocal %233 {approx = true} : vector<8x1xf32> -> vector<8x1xf32>
    %235 = vector.broadcast %234 : vector<8x1xf32> to vector<8x16xf32>
    %236 = arith.mulf %231, %235 : vector<8x16xf32>
    %237 = vector.shape_cast %236 : vector<8x16xf32> to vector<8x16x1xf32>
    %c0_93 = arith.constant 0 : index
    %c0_94 = arith.constant 0 : index
    %c0_95 = arith.constant 0 : index
    %238 = vector.load %arg8[%c0_93, %c0_94, %c0_95] : memref<8x16x32xf32, #tpu.memory_space<vmem>>, vector<8x16x32xf32>
    %239 = vector.broadcast %237 : vector<8x16x1xf32> to vector<8x16x32xf32>
    %240 = arith.mulf %239, %238 : vector<8x16x32xf32>
    %cst_96 = arith.constant dense<0.000000e+00> : vector<8x32xf32>
    %241 = vector.multi_reduction <add>, %240, %cst_96 [1] : vector<8x16x32xf32> to vector<8x32xf32>
    %242 = arith.truncf %241 : vector<8x32xf32> to vector<8x32xbf16>
    %c0_97 = arith.constant 0 : index
    %c0_98 = arith.constant 0 : index
    %243 = vector.load %arg13[%c0_97, %c0_98] : memref<32x128xbf16, #tpu.memory_space<vmem>>, vector<32x128xbf16>
    %cst_99 = arith.constant dense<0.000000e+00> : vector<8x128xf32>
    %244 = tpu.matmul %242, %243, %cst_99 {dimension_numbers = #tpu.dot_dimension_numbers<[1], [0], [0], [1], [0, 0, 1, 1], [], []>} : vector<8x32xbf16>, vector<32x128xbf16>, vector<8x128xf32> -> vector<8x128xf32>
    %245 = vector.extract_strided_slice %244 {offsets = [0, 0], sizes = [8, 96], strides = [1, 1]} : vector<8x128xf32> to vector<8x96xf32>
    %246 = vector.extract_strided_slice %244 {offsets = [0, 96], sizes = [8, 32], strides = [1, 1]} : vector<8x128xf32> to vector<8x32xf32>
    %247 = arith.index_cast %c1_i32 : i32 to index
    %c0_100 = arith.constant 0 : index
    %c0_101 = arith.constant 0 : index
    %248 = vector.load %arg2[%247, %c0_100, %c0_101] : memref<6x8x32xf32, #tpu.memory_space<vmem>>, vector<1x8x32xf32>
    %249 = vector.shape_cast %248 : vector<1x8x32xf32> to vector<8x32xf32>
    %250 = arith.addf %249, %214 : vector<8x32xf32>
    %251 = arith.addf %250, %246 : vector<8x32xf32>
    %252 = vector.extract_strided_slice %251 {offsets = [0, 0], sizes = [8, 16], strides = [1, 1]} : vector<8x32xf32> to vector<8x16xf32>
    %253 = vector.extract_strided_slice %251 {offsets = [0, 16], sizes = [8, 16], strides = [1, 1]} : vector<8x32xf32> to vector<8x16xf32>
    %254 = arith.maximumf %252, %253 : vector<8x16xf32>
    %255 = vector.broadcast %c1_i32 : i32 to vector<6x8x16xi32>
    %256 = arith.cmpi eq, %5, %255 : vector<6x8x16xi32>
    %257 = vector.shape_cast %254 : vector<8x16xf32> to vector<1x8x16xf32>
    %258 = vector.shape_cast %257 : vector<1x8x16xf32> to vector<1x8x16xf32>
    %259 = vector.broadcast %258 : vector<1x8x16xf32> to vector<6x8x16xf32>
    %260 = arith.select %256, %259, %134 : vector<6x8x16xi1>, vector<6x8x16xf32>
    %c5_i32_102 = arith.constant 5 : i32
    %261 = arith.cmpi eq, %c1_i32, %c5_i32_102 : i32
    %262 = arith.extui %261 : i1 to i32
    %c0_i32_103 = arith.constant 0 : i32
    %263 = arith.cmpi ne, %262, %c0_i32_103 : i32
    scf.if %263 {
      %c0_304 = arith.constant 0 : index
      %c0_305 = arith.constant 0 : index
      %c0_306 = arith.constant 0 : index
      %769 = vector.load %arg15[%c0_304, %c0_305, %c0_306] : memref<2x8x32xf32, #tpu.memory_space<vmem>>, vector<1x8x32xf32>
      %770 = vector.shape_cast %769 : vector<1x8x32xf32> to vector<8x32xf32>
      %771 = vector.shape_cast %171 : vector<8x32xf32> to vector<1x8x32xf32>
      tpu.vector_store %arg15[%c0_304, %c0_305, %c0_306], %771 {strides = array<i32>} : memref<2x8x32xf32, #tpu.memory_space<vmem>>, vector<1x8x32xf32>,
      %c1_307 = arith.constant 1 : index
      %c0_308 = arith.constant 0 : index
      %c0_309 = arith.constant 0 : index
      %772 = vector.load %arg15[%c1_307, %c0_308, %c0_309] : memref<2x8x32xf32, #tpu.memory_space<vmem>>, vector<1x8x32xf32>
      %773 = vector.shape_cast %772 : vector<1x8x32xf32> to vector<8x32xf32>
      %774 = vector.shape_cast %209 : vector<8x32xf32> to vector<1x8x32xf32>
      tpu.vector_store %arg15[%c1_307, %c0_308, %c0_309], %774 {strides = array<i32>} : memref<2x8x32xf32, #tpu.memory_space<vmem>>, vector<1x8x32xf32>,
      %c0_310 = arith.constant 0 : index
      %c0_311 = arith.constant 0 : index
      %775 = vector.load %arg16[%c0_310, %c0_311] : memref<8x16xf32, #tpu.memory_space<vmem>>, vector<8x16xf32>
      tpu.vector_store %arg16[%c0_310, %c0_311], %236 {strides = array<i32>} : memref<8x16xf32, #tpu.memory_space<vmem>>, vector<8x16xf32>,
      %c0_312 = arith.constant 0 : index
      %c0_313 = arith.constant 0 : index
      %776 = vector.load %arg17[%c0_312, %c0_313] : memref<8x32xf32, #tpu.memory_space<vmem>>, vector<8x32xf32>
      tpu.vector_store %arg17[%c0_312, %c0_313], %241 {strides = array<i32>} : memref<8x32xf32, #tpu.memory_space<vmem>>, vector<8x32xf32>,
    } else {
    }
    %c2_i32 = arith.constant 2 : i32
    %264 = arith.index_cast %c2_i32 : i32 to index
    %c0_104 = arith.constant 0 : index
    %c0_105 = arith.constant 0 : index
    %265 = vector.load %arg1[%264, %c0_104, %c0_105] : memref<6x8x96xf32, #tpu.memory_space<vmem>>, vector<1x8x96xf32>
    %266 = vector.shape_cast %265 : vector<1x8x96xf32> to vector<8x96xf32>
    %267 = arith.addf %266, %245 : vector<8x96xf32>
    %c0_106 = arith.constant 0 : index
    %c0_107 = arith.constant 0 : index
    %c0_108 = arith.constant 0 : index
    %268 = vector.load %arg3[%c0_106, %c0_107, %c0_108] : memref<2x8x96xf32, #tpu.memory_space<vmem>>, vector<1x8x96xf32>
    %269 = vector.shape_cast %268 : vector<1x8x96xf32> to vector<8x96xf32>
    %c0_109 = arith.constant 0 : index
    %c0_110 = arith.constant 0 : index
    %c0_111 = arith.constant 0 : index
    %270 = vector.load %arg4[%c0_109, %c0_110, %c0_111] : memref<2x8x32xf32, #tpu.memory_space<vmem>>, vector<1x8x32xf32>
    %271 = vector.shape_cast %270 : vector<1x8x32xf32> to vector<8x32xf32>
    %272 = vector.extract_strided_slice %267 {offsets = [0, 0], sizes = [8, 32], strides = [1, 1]} : vector<8x96xf32> to vector<8x32xf32>
    %273 = vector.extract_strided_slice %269 {offsets = [0, 0], sizes = [8, 32], strides = [1, 1]} : vector<8x96xf32> to vector<8x32xf32>
    %274 = arith.addf %272, %273 : vector<8x32xf32>
    %275 = arith.negf %274 : vector<8x32xf32>
    %276 = math.exp %275 : vector<8x32xf32>
    %cst_112 = arith.constant 1.000000e+00 : f32
    %277 = vector.broadcast %cst_112 : f32 to vector<8x32xf32>
    %278 = arith.addf %277, %276 : vector<8x32xf32>
    %279 = arith.divf %277, %278 : vector<8x32xf32>
    %280 = vector.extract_strided_slice %267 {offsets = [0, 32], sizes = [8, 32], strides = [1, 1]} : vector<8x96xf32> to vector<8x32xf32>
    %281 = vector.extract_strided_slice %269 {offsets = [0, 32], sizes = [8, 32], strides = [1, 1]} : vector<8x96xf32> to vector<8x32xf32>
    %282 = arith.addf %280, %281 : vector<8x32xf32>
    %283 = arith.negf %282 : vector<8x32xf32>
    %284 = math.exp %283 : vector<8x32xf32>
    %cst_113 = arith.constant 1.000000e+00 : f32
    %285 = vector.broadcast %cst_113 : f32 to vector<8x32xf32>
    %286 = arith.addf %285, %284 : vector<8x32xf32>
    %287 = arith.divf %285, %286 : vector<8x32xf32>
    %288 = vector.extract_strided_slice %267 {offsets = [0, 64], sizes = [8, 32], strides = [1, 1]} : vector<8x96xf32> to vector<8x32xf32>
    %289 = vector.extract_strided_slice %269 {offsets = [0, 64], sizes = [8, 32], strides = [1, 1]} : vector<8x96xf32> to vector<8x32xf32>
    %290 = arith.mulf %279, %289 : vector<8x32xf32>
    %291 = arith.addf %288, %290 : vector<8x32xf32>
    %292 = math.tanh %291 : vector<8x32xf32>
    %cst_114 = arith.constant 1.000000e+00 : f32
    %293 = vector.broadcast %cst_114 : f32 to vector<8x32xf32>
    %294 = arith.subf %293, %287 : vector<8x32xf32>
    %295 = arith.mulf %294, %292 : vector<8x32xf32>
    %296 = arith.mulf %287, %271 : vector<8x32xf32>
    %297 = arith.addf %295, %296 : vector<8x32xf32>
    %298 = arith.truncf %297 : vector<8x32xf32> to vector<8x32xbf16>
    %c0_115 = arith.constant 0 : index
    %c0_116 = arith.constant 0 : index
    %c0_117 = arith.constant 0 : index
    %299 = vector.load %arg5[%c0_115, %c0_116, %c0_117] : memref<1x32x96xbf16, #tpu.memory_space<vmem>>, vector<1x32x96xbf16>
    %300 = vector.shape_cast %299 : vector<1x32x96xbf16> to vector<32x96xbf16>
    %cst_118 = arith.constant dense<0.000000e+00> : vector<8x96xf32>
    %301 = tpu.matmul %298, %300, %cst_118 {dimension_numbers = #tpu.dot_dimension_numbers<[1], [0], [0], [1], [0, 0, 1, 1], [], []>} : vector<8x32xbf16>, vector<32x96xbf16>, vector<8x96xf32> -> vector<8x96xf32>
    %c0_119 = arith.constant 0 : index
    %c0_120 = arith.constant 0 : index
    %c0_121 = arith.constant 0 : index
    %302 = vector.load %arg6[%c0_119, %c0_120, %c0_121] : memref<1x1x96xf32, #tpu.memory_space<vmem>>, vector<1x1x96xf32>
    %303 = vector.shape_cast %302 : vector<1x1x96xf32> to vector<1x96xf32>
    %304 = vector.broadcast %303 : vector<1x96xf32> to vector<8x96xf32>
    %305 = arith.addf %301, %304 : vector<8x96xf32>
    %c1_122 = arith.constant 1 : index
    %c0_123 = arith.constant 0 : index
    %c0_124 = arith.constant 0 : index
    %306 = vector.load %arg3[%c1_122, %c0_123, %c0_124] : memref<2x8x96xf32, #tpu.memory_space<vmem>>, vector<1x8x96xf32>
    %307 = vector.shape_cast %306 : vector<1x8x96xf32> to vector<8x96xf32>
    %c1_125 = arith.constant 1 : index
    %c0_126 = arith.constant 0 : index
    %c0_127 = arith.constant 0 : index
    %308 = vector.load %arg4[%c1_125, %c0_126, %c0_127] : memref<2x8x32xf32, #tpu.memory_space<vmem>>, vector<1x8x32xf32>
    %309 = vector.shape_cast %308 : vector<1x8x32xf32> to vector<8x32xf32>
    %310 = vector.extract_strided_slice %305 {offsets = [0, 0], sizes = [8, 32], strides = [1, 1]} : vector<8x96xf32> to vector<8x32xf32>
    %311 = vector.extract_strided_slice %307 {offsets = [0, 0], sizes = [8, 32], strides = [1, 1]} : vector<8x96xf32> to vector<8x32xf32>
    %312 = arith.addf %310, %311 : vector<8x32xf32>
    %313 = arith.negf %312 : vector<8x32xf32>
    %314 = math.exp %313 : vector<8x32xf32>
    %cst_128 = arith.constant 1.000000e+00 : f32
    %315 = vector.broadcast %cst_128 : f32 to vector<8x32xf32>
    %316 = arith.addf %315, %314 : vector<8x32xf32>
    %317 = arith.divf %315, %316 : vector<8x32xf32>
    %318 = vector.extract_strided_slice %305 {offsets = [0, 32], sizes = [8, 32], strides = [1, 1]} : vector<8x96xf32> to vector<8x32xf32>
    %319 = vector.extract_strided_slice %307 {offsets = [0, 32], sizes = [8, 32], strides = [1, 1]} : vector<8x96xf32> to vector<8x32xf32>
    %320 = arith.addf %318, %319 : vector<8x32xf32>
    %321 = arith.negf %320 : vector<8x32xf32>
    %322 = math.exp %321 : vector<8x32xf32>
    %cst_129 = arith.constant 1.000000e+00 : f32
    %323 = vector.broadcast %cst_129 : f32 to vector<8x32xf32>
    %324 = arith.addf %323, %322 : vector<8x32xf32>
    %325 = arith.divf %323, %324 : vector<8x32xf32>
    %326 = vector.extract_strided_slice %305 {offsets = [0, 64], sizes = [8, 32], strides = [1, 1]} : vector<8x96xf32> to vector<8x32xf32>
    %327 = vector.extract_strided_slice %307 {offsets = [0, 64], sizes = [8, 32], strides = [1, 1]} : vector<8x96xf32> to vector<8x32xf32>
    %328 = arith.mulf %317, %327 : vector<8x32xf32>
    %329 = arith.addf %326, %328 : vector<8x32xf32>
    %330 = math.tanh %329 : vector<8x32xf32>
    %cst_130 = arith.constant 1.000000e+00 : f32
    %331 = vector.broadcast %cst_130 : f32 to vector<8x32xf32>
    %332 = arith.subf %331, %325 : vector<8x32xf32>
    %333 = arith.mulf %332, %330 : vector<8x32xf32>
    %334 = arith.mulf %325, %309 : vector<8x32xf32>
    %335 = arith.addf %333, %334 : vector<8x32xf32>
    %336 = arith.truncf %335 : vector<8x32xf32> to vector<8x32xbf16>
    %c0_131 = arith.constant 0 : index
    %c0_132 = arith.constant 0 : index
    %337 = vector.load %arg11[%c0_131, %c0_132] : memref<32x48xbf16, #tpu.memory_space<vmem>>, vector<32x48xbf16>
    %cst_133 = arith.constant dense<0.000000e+00> : vector<8x48xf32>
    %338 = tpu.matmul %336, %337, %cst_133 {dimension_numbers = #tpu.dot_dimension_numbers<[1], [0], [0], [1], [0, 0, 1, 1], [], []>} : vector<8x32xbf16>, vector<32x48xbf16>, vector<8x48xf32> -> vector<8x48xf32>
    %339 = vector.extract_strided_slice %338 {offsets = [0, 0], sizes = [8, 16], strides = [1, 1]} : vector<8x48xf32> to vector<8x16xf32>
    %340 = vector.extract_strided_slice %338 {offsets = [0, 16], sizes = [8, 32], strides = [1, 1]} : vector<8x48xf32> to vector<8x32xf32>
    %c0_134 = arith.constant 0 : index
    %c0_135 = arith.constant 0 : index
    %c0_136 = arith.constant 0 : index
    %341 = vector.load %arg7[%c0_134, %c0_135, %c0_136] : memref<8x16x16xf32, #tpu.memory_space<vmem>>, vector<8x16x16xf32>
    %342 = vector.shape_cast %339 : vector<8x16xf32> to vector<8x1x16xf32>
    %343 = vector.broadcast %342 : vector<8x1x16xf32> to vector<8x16x16xf32>
    %344 = arith.addf %341, %343 : vector<8x16x16xf32>
    %345 = math.tanh %344 : vector<8x16x16xf32>
    %c0_137 = arith.constant 0 : index
    %c0_138 = arith.constant 0 : index
    %346 = vector.load %arg12[%c0_137, %c0_138] : memref<1x16xf32, #tpu.memory_space<vmem>>, vector<1x16xf32>
    %347 = vector.shape_cast %346 : vector<1x16xf32> to vector<1x1x16xf32>
    %348 = vector.broadcast %347 : vector<1x1x16xf32> to vector<8x16x16xf32>
    %349 = arith.mulf %345, %348 : vector<8x16x16xf32>
    %cst_139 = arith.constant dense<0.000000e+00> : vector<8x16xf32>
    %350 = vector.multi_reduction <add>, %349, %cst_139 [2] : vector<8x16x16xf32> to vector<8x16xf32>
    %351 = arith.mulf %350, %2 : vector<8x16xf32>
    %352 = arith.addf %351, %4 : vector<8x16xf32>
    %cst_140 = arith.constant dense<0xFF800000> : vector<8xf32>
    %353 = vector.multi_reduction <maximumf>, %352, %cst_140 [1] : vector<8x16xf32> to vector<8xf32>
    %354 = vector.shape_cast %353 : vector<8xf32> to vector<8x1xf32>
    %355 = vector.broadcast %354 : vector<8x1xf32> to vector<8x16xf32>
    %356 = arith.subf %352, %355 : vector<8x16xf32>
    %357 = math.exp %356 : vector<8x16xf32>
    %cst_141 = arith.constant dense<0.000000e+00> : vector<8xf32>
    %358 = vector.multi_reduction <add>, %357, %cst_141 [1] : vector<8x16xf32> to vector<8xf32>
    %359 = vector.shape_cast %358 : vector<8xf32> to vector<8x1xf32>
    %360 = tpu.reciprocal %359 {approx = true} : vector<8x1xf32> -> vector<8x1xf32>
    %361 = vector.broadcast %360 : vector<8x1xf32> to vector<8x16xf32>
    %362 = arith.mulf %357, %361 : vector<8x16xf32>
    %363 = vector.shape_cast %362 : vector<8x16xf32> to vector<8x16x1xf32>
    %c0_142 = arith.constant 0 : index
    %c0_143 = arith.constant 0 : index
    %c0_144 = arith.constant 0 : index
    %364 = vector.load %arg8[%c0_142, %c0_143, %c0_144] : memref<8x16x32xf32, #tpu.memory_space<vmem>>, vector<8x16x32xf32>
    %365 = vector.broadcast %363 : vector<8x16x1xf32> to vector<8x16x32xf32>
    %366 = arith.mulf %365, %364 : vector<8x16x32xf32>
    %cst_145 = arith.constant dense<0.000000e+00> : vector<8x32xf32>
    %367 = vector.multi_reduction <add>, %366, %cst_145 [1] : vector<8x16x32xf32> to vector<8x32xf32>
    %368 = arith.truncf %367 : vector<8x32xf32> to vector<8x32xbf16>
    %c0_146 = arith.constant 0 : index
    %c0_147 = arith.constant 0 : index
    %369 = vector.load %arg13[%c0_146, %c0_147] : memref<32x128xbf16, #tpu.memory_space<vmem>>, vector<32x128xbf16>
    %cst_148 = arith.constant dense<0.000000e+00> : vector<8x128xf32>
    %370 = tpu.matmul %368, %369, %cst_148 {dimension_numbers = #tpu.dot_dimension_numbers<[1], [0], [0], [1], [0, 0, 1, 1], [], []>} : vector<8x32xbf16>, vector<32x128xbf16>, vector<8x128xf32> -> vector<8x128xf32>
    %371 = vector.extract_strided_slice %370 {offsets = [0, 0], sizes = [8, 96], strides = [1, 1]} : vector<8x128xf32> to vector<8x96xf32>
    %372 = vector.extract_strided_slice %370 {offsets = [0, 96], sizes = [8, 32], strides = [1, 1]} : vector<8x128xf32> to vector<8x32xf32>
    %373 = arith.index_cast %c2_i32 : i32 to index
    %c0_149 = arith.constant 0 : index
    %c0_150 = arith.constant 0 : index
    %374 = vector.load %arg2[%373, %c0_149, %c0_150] : memref<6x8x32xf32, #tpu.memory_space<vmem>>, vector<1x8x32xf32>
    %375 = vector.shape_cast %374 : vector<1x8x32xf32> to vector<8x32xf32>
    %376 = arith.addf %375, %340 : vector<8x32xf32>
    %377 = arith.addf %376, %372 : vector<8x32xf32>
    %378 = vector.extract_strided_slice %377 {offsets = [0, 0], sizes = [8, 16], strides = [1, 1]} : vector<8x32xf32> to vector<8x16xf32>
    %379 = vector.extract_strided_slice %377 {offsets = [0, 16], sizes = [8, 16], strides = [1, 1]} : vector<8x32xf32> to vector<8x16xf32>
    %380 = arith.maximumf %378, %379 : vector<8x16xf32>
    %381 = vector.broadcast %c2_i32 : i32 to vector<6x8x16xi32>
    %382 = arith.cmpi eq, %5, %381 : vector<6x8x16xi32>
    %383 = vector.shape_cast %380 : vector<8x16xf32> to vector<1x8x16xf32>
    %384 = vector.shape_cast %383 : vector<1x8x16xf32> to vector<1x8x16xf32>
    %385 = vector.broadcast %384 : vector<1x8x16xf32> to vector<6x8x16xf32>
    %386 = arith.select %382, %385, %260 : vector<6x8x16xi1>, vector<6x8x16xf32>
    %c5_i32_151 = arith.constant 5 : i32
    %387 = arith.cmpi eq, %c2_i32, %c5_i32_151 : i32
    %388 = arith.extui %387 : i1 to i32
    %c0_i32_152 = arith.constant 0 : i32
    %389 = arith.cmpi ne, %388, %c0_i32_152 : i32
    scf.if %389 {
      %c0_304 = arith.constant 0 : index
      %c0_305 = arith.constant 0 : index
      %c0_306 = arith.constant 0 : index
      %769 = vector.load %arg15[%c0_304, %c0_305, %c0_306] : memref<2x8x32xf32, #tpu.memory_space<vmem>>, vector<1x8x32xf32>
      %770 = vector.shape_cast %769 : vector<1x8x32xf32> to vector<8x32xf32>
      %771 = vector.shape_cast %297 : vector<8x32xf32> to vector<1x8x32xf32>
      tpu.vector_store %arg15[%c0_304, %c0_305, %c0_306], %771 {strides = array<i32>} : memref<2x8x32xf32, #tpu.memory_space<vmem>>, vector<1x8x32xf32>,
      %c1_307 = arith.constant 1 : index
      %c0_308 = arith.constant 0 : index
      %c0_309 = arith.constant 0 : index
      %772 = vector.load %arg15[%c1_307, %c0_308, %c0_309] : memref<2x8x32xf32, #tpu.memory_space<vmem>>, vector<1x8x32xf32>
      %773 = vector.shape_cast %772 : vector<1x8x32xf32> to vector<8x32xf32>
      %774 = vector.shape_cast %335 : vector<8x32xf32> to vector<1x8x32xf32>
      tpu.vector_store %arg15[%c1_307, %c0_308, %c0_309], %774 {strides = array<i32>} : memref<2x8x32xf32, #tpu.memory_space<vmem>>, vector<1x8x32xf32>,
      %c0_310 = arith.constant 0 : index
      %c0_311 = arith.constant 0 : index
      %775 = vector.load %arg16[%c0_310, %c0_311] : memref<8x16xf32, #tpu.memory_space<vmem>>, vector<8x16xf32>
      tpu.vector_store %arg16[%c0_310, %c0_311], %362 {strides = array<i32>} : memref<8x16xf32, #tpu.memory_space<vmem>>, vector<8x16xf32>,
      %c0_312 = arith.constant 0 : index
      %c0_313 = arith.constant 0 : index
      %776 = vector.load %arg17[%c0_312, %c0_313] : memref<8x32xf32, #tpu.memory_space<vmem>>, vector<8x32xf32>
      tpu.vector_store %arg17[%c0_312, %c0_313], %367 {strides = array<i32>} : memref<8x32xf32, #tpu.memory_space<vmem>>, vector<8x32xf32>,
    } else {
    }
    %c3_i32 = arith.constant 3 : i32
    %390 = arith.index_cast %c3_i32 : i32 to index
    %c0_153 = arith.constant 0 : index
    %c0_154 = arith.constant 0 : index
    %391 = vector.load %arg1[%390, %c0_153, %c0_154] : memref<6x8x96xf32, #tpu.memory_space<vmem>>, vector<1x8x96xf32>
    %392 = vector.shape_cast %391 : vector<1x8x96xf32> to vector<8x96xf32>
    %393 = arith.addf %392, %371 : vector<8x96xf32>
    %c0_155 = arith.constant 0 : index
    %c0_156 = arith.constant 0 : index
    %c0_157 = arith.constant 0 : index
    %394 = vector.load %arg3[%c0_155, %c0_156, %c0_157] : memref<2x8x96xf32, #tpu.memory_space<vmem>>, vector<1x8x96xf32>
    %395 = vector.shape_cast %394 : vector<1x8x96xf32> to vector<8x96xf32>
    %c0_158 = arith.constant 0 : index
    %c0_159 = arith.constant 0 : index
    %c0_160 = arith.constant 0 : index
    %396 = vector.load %arg4[%c0_158, %c0_159, %c0_160] : memref<2x8x32xf32, #tpu.memory_space<vmem>>, vector<1x8x32xf32>
    %397 = vector.shape_cast %396 : vector<1x8x32xf32> to vector<8x32xf32>
    %398 = vector.extract_strided_slice %393 {offsets = [0, 0], sizes = [8, 32], strides = [1, 1]} : vector<8x96xf32> to vector<8x32xf32>
    %399 = vector.extract_strided_slice %395 {offsets = [0, 0], sizes = [8, 32], strides = [1, 1]} : vector<8x96xf32> to vector<8x32xf32>
    %400 = arith.addf %398, %399 : vector<8x32xf32>
    %401 = arith.negf %400 : vector<8x32xf32>
    %402 = math.exp %401 : vector<8x32xf32>
    %cst_161 = arith.constant 1.000000e+00 : f32
    %403 = vector.broadcast %cst_161 : f32 to vector<8x32xf32>
    %404 = arith.addf %403, %402 : vector<8x32xf32>
    %405 = arith.divf %403, %404 : vector<8x32xf32>
    %406 = vector.extract_strided_slice %393 {offsets = [0, 32], sizes = [8, 32], strides = [1, 1]} : vector<8x96xf32> to vector<8x32xf32>
    %407 = vector.extract_strided_slice %395 {offsets = [0, 32], sizes = [8, 32], strides = [1, 1]} : vector<8x96xf32> to vector<8x32xf32>
    %408 = arith.addf %406, %407 : vector<8x32xf32>
    %409 = arith.negf %408 : vector<8x32xf32>
    %410 = math.exp %409 : vector<8x32xf32>
    %cst_162 = arith.constant 1.000000e+00 : f32
    %411 = vector.broadcast %cst_162 : f32 to vector<8x32xf32>
    %412 = arith.addf %411, %410 : vector<8x32xf32>
    %413 = arith.divf %411, %412 : vector<8x32xf32>
    %414 = vector.extract_strided_slice %393 {offsets = [0, 64], sizes = [8, 32], strides = [1, 1]} : vector<8x96xf32> to vector<8x32xf32>
    %415 = vector.extract_strided_slice %395 {offsets = [0, 64], sizes = [8, 32], strides = [1, 1]} : vector<8x96xf32> to vector<8x32xf32>
    %416 = arith.mulf %405, %415 : vector<8x32xf32>
    %417 = arith.addf %414, %416 : vector<8x32xf32>
    %418 = math.tanh %417 : vector<8x32xf32>
    %cst_163 = arith.constant 1.000000e+00 : f32
    %419 = vector.broadcast %cst_163 : f32 to vector<8x32xf32>
    %420 = arith.subf %419, %413 : vector<8x32xf32>
    %421 = arith.mulf %420, %418 : vector<8x32xf32>
    %422 = arith.mulf %413, %397 : vector<8x32xf32>
    %423 = arith.addf %421, %422 : vector<8x32xf32>
    %424 = arith.truncf %423 : vector<8x32xf32> to vector<8x32xbf16>
    %c0_164 = arith.constant 0 : index
    %c0_165 = arith.constant 0 : index
    %c0_166 = arith.constant 0 : index
    %425 = vector.load %arg5[%c0_164, %c0_165, %c0_166] : memref<1x32x96xbf16, #tpu.memory_space<vmem>>, vector<1x32x96xbf16>
    %426 = vector.shape_cast %425 : vector<1x32x96xbf16> to vector<32x96xbf16>
    %cst_167 = arith.constant dense<0.000000e+00> : vector<8x96xf32>
    %427 = tpu.matmul %424, %426, %cst_167 {dimension_numbers = #tpu.dot_dimension_numbers<[1], [0], [0], [1], [0, 0, 1, 1], [], []>} : vector<8x32xbf16>, vector<32x96xbf16>, vector<8x96xf32> -> vector<8x96xf32>
    %c0_168 = arith.constant 0 : index
    %c0_169 = arith.constant 0 : index
    %c0_170 = arith.constant 0 : index
    %428 = vector.load %arg6[%c0_168, %c0_169, %c0_170] : memref<1x1x96xf32, #tpu.memory_space<vmem>>, vector<1x1x96xf32>
    %429 = vector.shape_cast %428 : vector<1x1x96xf32> to vector<1x96xf32>
    %430 = vector.broadcast %429 : vector<1x96xf32> to vector<8x96xf32>
    %431 = arith.addf %427, %430 : vector<8x96xf32>
    %c1_171 = arith.constant 1 : index
    %c0_172 = arith.constant 0 : index
    %c0_173 = arith.constant 0 : index
    %432 = vector.load %arg3[%c1_171, %c0_172, %c0_173] : memref<2x8x96xf32, #tpu.memory_space<vmem>>, vector<1x8x96xf32>
    %433 = vector.shape_cast %432 : vector<1x8x96xf32> to vector<8x96xf32>
    %c1_174 = arith.constant 1 : index
    %c0_175 = arith.constant 0 : index
    %c0_176 = arith.constant 0 : index
    %434 = vector.load %arg4[%c1_174, %c0_175, %c0_176] : memref<2x8x32xf32, #tpu.memory_space<vmem>>, vector<1x8x32xf32>
    %435 = vector.shape_cast %434 : vector<1x8x32xf32> to vector<8x32xf32>
    %436 = vector.extract_strided_slice %431 {offsets = [0, 0], sizes = [8, 32], strides = [1, 1]} : vector<8x96xf32> to vector<8x32xf32>
    %437 = vector.extract_strided_slice %433 {offsets = [0, 0], sizes = [8, 32], strides = [1, 1]} : vector<8x96xf32> to vector<8x32xf32>
    %438 = arith.addf %436, %437 : vector<8x32xf32>
    %439 = arith.negf %438 : vector<8x32xf32>
    %440 = math.exp %439 : vector<8x32xf32>
    %cst_177 = arith.constant 1.000000e+00 : f32
    %441 = vector.broadcast %cst_177 : f32 to vector<8x32xf32>
    %442 = arith.addf %441, %440 : vector<8x32xf32>
    %443 = arith.divf %441, %442 : vector<8x32xf32>
    %444 = vector.extract_strided_slice %431 {offsets = [0, 32], sizes = [8, 32], strides = [1, 1]} : vector<8x96xf32> to vector<8x32xf32>
    %445 = vector.extract_strided_slice %433 {offsets = [0, 32], sizes = [8, 32], strides = [1, 1]} : vector<8x96xf32> to vector<8x32xf32>
    %446 = arith.addf %444, %445 : vector<8x32xf32>
    %447 = arith.negf %446 : vector<8x32xf32>
    %448 = math.exp %447 : vector<8x32xf32>
    %cst_178 = arith.constant 1.000000e+00 : f32
    %449 = vector.broadcast %cst_178 : f32 to vector<8x32xf32>
    %450 = arith.addf %449, %448 : vector<8x32xf32>
    %451 = arith.divf %449, %450 : vector<8x32xf32>
    %452 = vector.extract_strided_slice %431 {offsets = [0, 64], sizes = [8, 32], strides = [1, 1]} : vector<8x96xf32> to vector<8x32xf32>
    %453 = vector.extract_strided_slice %433 {offsets = [0, 64], sizes = [8, 32], strides = [1, 1]} : vector<8x96xf32> to vector<8x32xf32>
    %454 = arith.mulf %443, %453 : vector<8x32xf32>
    %455 = arith.addf %452, %454 : vector<8x32xf32>
    %456 = math.tanh %455 : vector<8x32xf32>
    %cst_179 = arith.constant 1.000000e+00 : f32
    %457 = vector.broadcast %cst_179 : f32 to vector<8x32xf32>
    %458 = arith.subf %457, %451 : vector<8x32xf32>
    %459 = arith.mulf %458, %456 : vector<8x32xf32>
    %460 = arith.mulf %451, %435 : vector<8x32xf32>
    %461 = arith.addf %459, %460 : vector<8x32xf32>
    %462 = arith.truncf %461 : vector<8x32xf32> to vector<8x32xbf16>
    %c0_180 = arith.constant 0 : index
    %c0_181 = arith.constant 0 : index
    %463 = vector.load %arg11[%c0_180, %c0_181] : memref<32x48xbf16, #tpu.memory_space<vmem>>, vector<32x48xbf16>
    %cst_182 = arith.constant dense<0.000000e+00> : vector<8x48xf32>
    %464 = tpu.matmul %462, %463, %cst_182 {dimension_numbers = #tpu.dot_dimension_numbers<[1], [0], [0], [1], [0, 0, 1, 1], [], []>} : vector<8x32xbf16>, vector<32x48xbf16>, vector<8x48xf32> -> vector<8x48xf32>
    %465 = vector.extract_strided_slice %464 {offsets = [0, 0], sizes = [8, 16], strides = [1, 1]} : vector<8x48xf32> to vector<8x16xf32>
    %466 = vector.extract_strided_slice %464 {offsets = [0, 16], sizes = [8, 32], strides = [1, 1]} : vector<8x48xf32> to vector<8x32xf32>
    %c0_183 = arith.constant 0 : index
    %c0_184 = arith.constant 0 : index
    %c0_185 = arith.constant 0 : index
    %467 = vector.load %arg7[%c0_183, %c0_184, %c0_185] : memref<8x16x16xf32, #tpu.memory_space<vmem>>, vector<8x16x16xf32>
    %468 = vector.shape_cast %465 : vector<8x16xf32> to vector<8x1x16xf32>
    %469 = vector.broadcast %468 : vector<8x1x16xf32> to vector<8x16x16xf32>
    %470 = arith.addf %467, %469 : vector<8x16x16xf32>
    %471 = math.tanh %470 : vector<8x16x16xf32>
    %c0_186 = arith.constant 0 : index
    %c0_187 = arith.constant 0 : index
    %472 = vector.load %arg12[%c0_186, %c0_187] : memref<1x16xf32, #tpu.memory_space<vmem>>, vector<1x16xf32>
    %473 = vector.shape_cast %472 : vector<1x16xf32> to vector<1x1x16xf32>
    %474 = vector.broadcast %473 : vector<1x1x16xf32> to vector<8x16x16xf32>
    %475 = arith.mulf %471, %474 : vector<8x16x16xf32>
    %cst_188 = arith.constant dense<0.000000e+00> : vector<8x16xf32>
    %476 = vector.multi_reduction <add>, %475, %cst_188 [2] : vector<8x16x16xf32> to vector<8x16xf32>
    %477 = arith.mulf %476, %2 : vector<8x16xf32>
    %478 = arith.addf %477, %4 : vector<8x16xf32>
    %cst_189 = arith.constant dense<0xFF800000> : vector<8xf32>
    %479 = vector.multi_reduction <maximumf>, %478, %cst_189 [1] : vector<8x16xf32> to vector<8xf32>
    %480 = vector.shape_cast %479 : vector<8xf32> to vector<8x1xf32>
    %481 = vector.broadcast %480 : vector<8x1xf32> to vector<8x16xf32>
    %482 = arith.subf %478, %481 : vector<8x16xf32>
    %483 = math.exp %482 : vector<8x16xf32>
    %cst_190 = arith.constant dense<0.000000e+00> : vector<8xf32>
    %484 = vector.multi_reduction <add>, %483, %cst_190 [1] : vector<8x16xf32> to vector<8xf32>
    %485 = vector.shape_cast %484 : vector<8xf32> to vector<8x1xf32>
    %486 = tpu.reciprocal %485 {approx = true} : vector<8x1xf32> -> vector<8x1xf32>
    %487 = vector.broadcast %486 : vector<8x1xf32> to vector<8x16xf32>
    %488 = arith.mulf %483, %487 : vector<8x16xf32>
    %489 = vector.shape_cast %488 : vector<8x16xf32> to vector<8x16x1xf32>
    %c0_191 = arith.constant 0 : index
    %c0_192 = arith.constant 0 : index
    %c0_193 = arith.constant 0 : index
    %490 = vector.load %arg8[%c0_191, %c0_192, %c0_193] : memref<8x16x32xf32, #tpu.memory_space<vmem>>, vector<8x16x32xf32>
    %491 = vector.broadcast %489 : vector<8x16x1xf32> to vector<8x16x32xf32>
    %492 = arith.mulf %491, %490 : vector<8x16x32xf32>
    %cst_194 = arith.constant dense<0.000000e+00> : vector<8x32xf32>
    %493 = vector.multi_reduction <add>, %492, %cst_194 [1] : vector<8x16x32xf32> to vector<8x32xf32>
    %494 = arith.truncf %493 : vector<8x32xf32> to vector<8x32xbf16>
    %c0_195 = arith.constant 0 : index
    %c0_196 = arith.constant 0 : index
    %495 = vector.load %arg13[%c0_195, %c0_196] : memref<32x128xbf16, #tpu.memory_space<vmem>>, vector<32x128xbf16>
    %cst_197 = arith.constant dense<0.000000e+00> : vector<8x128xf32>
    %496 = tpu.matmul %494, %495, %cst_197 {dimension_numbers = #tpu.dot_dimension_numbers<[1], [0], [0], [1], [0, 0, 1, 1], [], []>} : vector<8x32xbf16>, vector<32x128xbf16>, vector<8x128xf32> -> vector<8x128xf32>
    %497 = vector.extract_strided_slice %496 {offsets = [0, 0], sizes = [8, 96], strides = [1, 1]} : vector<8x128xf32> to vector<8x96xf32>
    %498 = vector.extract_strided_slice %496 {offsets = [0, 96], sizes = [8, 32], strides = [1, 1]} : vector<8x128xf32> to vector<8x32xf32>
    %499 = arith.index_cast %c3_i32 : i32 to index
    %c0_198 = arith.constant 0 : index
    %c0_199 = arith.constant 0 : index
    %500 = vector.load %arg2[%499, %c0_198, %c0_199] : memref<6x8x32xf32, #tpu.memory_space<vmem>>, vector<1x8x32xf32>
    %501 = vector.shape_cast %500 : vector<1x8x32xf32> to vector<8x32xf32>
    %502 = arith.addf %501, %466 : vector<8x32xf32>
    %503 = arith.addf %502, %498 : vector<8x32xf32>
    %504 = vector.extract_strided_slice %503 {offsets = [0, 0], sizes = [8, 16], strides = [1, 1]} : vector<8x32xf32> to vector<8x16xf32>
    %505 = vector.extract_strided_slice %503 {offsets = [0, 16], sizes = [8, 16], strides = [1, 1]} : vector<8x32xf32> to vector<8x16xf32>
    %506 = arith.maximumf %504, %505 : vector<8x16xf32>
    %507 = vector.broadcast %c3_i32 : i32 to vector<6x8x16xi32>
    %508 = arith.cmpi eq, %5, %507 : vector<6x8x16xi32>
    %509 = vector.shape_cast %506 : vector<8x16xf32> to vector<1x8x16xf32>
    %510 = vector.shape_cast %509 : vector<1x8x16xf32> to vector<1x8x16xf32>
    %511 = vector.broadcast %510 : vector<1x8x16xf32> to vector<6x8x16xf32>
    %512 = arith.select %508, %511, %386 : vector<6x8x16xi1>, vector<6x8x16xf32>
    %c5_i32_200 = arith.constant 5 : i32
    %513 = arith.cmpi eq, %c3_i32, %c5_i32_200 : i32
    %514 = arith.extui %513 : i1 to i32
    %c0_i32_201 = arith.constant 0 : i32
    %515 = arith.cmpi ne, %514, %c0_i32_201 : i32
    scf.if %515 {
      %c0_304 = arith.constant 0 : index
      %c0_305 = arith.constant 0 : index
      %c0_306 = arith.constant 0 : index
      %769 = vector.load %arg15[%c0_304, %c0_305, %c0_306] : memref<2x8x32xf32, #tpu.memory_space<vmem>>, vector<1x8x32xf32>
      %770 = vector.shape_cast %769 : vector<1x8x32xf32> to vector<8x32xf32>
      %771 = vector.shape_cast %423 : vector<8x32xf32> to vector<1x8x32xf32>
      tpu.vector_store %arg15[%c0_304, %c0_305, %c0_306], %771 {strides = array<i32>} : memref<2x8x32xf32, #tpu.memory_space<vmem>>, vector<1x8x32xf32>,
      %c1_307 = arith.constant 1 : index
      %c0_308 = arith.constant 0 : index
      %c0_309 = arith.constant 0 : index
      %772 = vector.load %arg15[%c1_307, %c0_308, %c0_309] : memref<2x8x32xf32, #tpu.memory_space<vmem>>, vector<1x8x32xf32>
      %773 = vector.shape_cast %772 : vector<1x8x32xf32> to vector<8x32xf32>
      %774 = vector.shape_cast %461 : vector<8x32xf32> to vector<1x8x32xf32>
      tpu.vector_store %arg15[%c1_307, %c0_308, %c0_309], %774 {strides = array<i32>} : memref<2x8x32xf32, #tpu.memory_space<vmem>>, vector<1x8x32xf32>,
      %c0_310 = arith.constant 0 : index
      %c0_311 = arith.constant 0 : index
      %775 = vector.load %arg16[%c0_310, %c0_311] : memref<8x16xf32, #tpu.memory_space<vmem>>, vector<8x16xf32>
      tpu.vector_store %arg16[%c0_310, %c0_311], %488 {strides = array<i32>} : memref<8x16xf32, #tpu.memory_space<vmem>>, vector<8x16xf32>,
      %c0_312 = arith.constant 0 : index
      %c0_313 = arith.constant 0 : index
      %776 = vector.load %arg17[%c0_312, %c0_313] : memref<8x32xf32, #tpu.memory_space<vmem>>, vector<8x32xf32>
      tpu.vector_store %arg17[%c0_312, %c0_313], %493 {strides = array<i32>} : memref<8x32xf32, #tpu.memory_space<vmem>>, vector<8x32xf32>,
    } else {
    }
    %c4_i32 = arith.constant 4 : i32
    %516 = arith.index_cast %c4_i32 : i32 to index
    %c0_202 = arith.constant 0 : index
    %c0_203 = arith.constant 0 : index
    %517 = vector.load %arg1[%516, %c0_202, %c0_203] : memref<6x8x96xf32, #tpu.memory_space<vmem>>, vector<1x8x96xf32>
    %518 = vector.shape_cast %517 : vector<1x8x96xf32> to vector<8x96xf32>
    %519 = arith.addf %518, %497 : vector<8x96xf32>
    %c0_204 = arith.constant 0 : index
    %c0_205 = arith.constant 0 : index
    %c0_206 = arith.constant 0 : index
    %520 = vector.load %arg3[%c0_204, %c0_205, %c0_206] : memref<2x8x96xf32, #tpu.memory_space<vmem>>, vector<1x8x96xf32>
    %521 = vector.shape_cast %520 : vector<1x8x96xf32> to vector<8x96xf32>
    %c0_207 = arith.constant 0 : index
    %c0_208 = arith.constant 0 : index
    %c0_209 = arith.constant 0 : index
    %522 = vector.load %arg4[%c0_207, %c0_208, %c0_209] : memref<2x8x32xf32, #tpu.memory_space<vmem>>, vector<1x8x32xf32>
    %523 = vector.shape_cast %522 : vector<1x8x32xf32> to vector<8x32xf32>
    %524 = vector.extract_strided_slice %519 {offsets = [0, 0], sizes = [8, 32], strides = [1, 1]} : vector<8x96xf32> to vector<8x32xf32>
    %525 = vector.extract_strided_slice %521 {offsets = [0, 0], sizes = [8, 32], strides = [1, 1]} : vector<8x96xf32> to vector<8x32xf32>
    %526 = arith.addf %524, %525 : vector<8x32xf32>
    %527 = arith.negf %526 : vector<8x32xf32>
    %528 = math.exp %527 : vector<8x32xf32>
    %cst_210 = arith.constant 1.000000e+00 : f32
    %529 = vector.broadcast %cst_210 : f32 to vector<8x32xf32>
    %530 = arith.addf %529, %528 : vector<8x32xf32>
    %531 = arith.divf %529, %530 : vector<8x32xf32>
    %532 = vector.extract_strided_slice %519 {offsets = [0, 32], sizes = [8, 32], strides = [1, 1]} : vector<8x96xf32> to vector<8x32xf32>
    %533 = vector.extract_strided_slice %521 {offsets = [0, 32], sizes = [8, 32], strides = [1, 1]} : vector<8x96xf32> to vector<8x32xf32>
    %534 = arith.addf %532, %533 : vector<8x32xf32>
    %535 = arith.negf %534 : vector<8x32xf32>
    %536 = math.exp %535 : vector<8x32xf32>
    %cst_211 = arith.constant 1.000000e+00 : f32
    %537 = vector.broadcast %cst_211 : f32 to vector<8x32xf32>
    %538 = arith.addf %537, %536 : vector<8x32xf32>
    %539 = arith.divf %537, %538 : vector<8x32xf32>
    %540 = vector.extract_strided_slice %519 {offsets = [0, 64], sizes = [8, 32], strides = [1, 1]} : vector<8x96xf32> to vector<8x32xf32>
    %541 = vector.extract_strided_slice %521 {offsets = [0, 64], sizes = [8, 32], strides = [1, 1]} : vector<8x96xf32> to vector<8x32xf32>
    %542 = arith.mulf %531, %541 : vector<8x32xf32>
    %543 = arith.addf %540, %542 : vector<8x32xf32>
    %544 = math.tanh %543 : vector<8x32xf32>
    %cst_212 = arith.constant 1.000000e+00 : f32
    %545 = vector.broadcast %cst_212 : f32 to vector<8x32xf32>
    %546 = arith.subf %545, %539 : vector<8x32xf32>
    %547 = arith.mulf %546, %544 : vector<8x32xf32>
    %548 = arith.mulf %539, %523 : vector<8x32xf32>
    %549 = arith.addf %547, %548 : vector<8x32xf32>
    %550 = arith.truncf %549 : vector<8x32xf32> to vector<8x32xbf16>
    %c0_213 = arith.constant 0 : index
    %c0_214 = arith.constant 0 : index
    %c0_215 = arith.constant 0 : index
    %551 = vector.load %arg5[%c0_213, %c0_214, %c0_215] : memref<1x32x96xbf16, #tpu.memory_space<vmem>>, vector<1x32x96xbf16>
    %552 = vector.shape_cast %551 : vector<1x32x96xbf16> to vector<32x96xbf16>
    %cst_216 = arith.constant dense<0.000000e+00> : vector<8x96xf32>
    %553 = tpu.matmul %550, %552, %cst_216 {dimension_numbers = #tpu.dot_dimension_numbers<[1], [0], [0], [1], [0, 0, 1, 1], [], []>} : vector<8x32xbf16>, vector<32x96xbf16>, vector<8x96xf32> -> vector<8x96xf32>
    %c0_217 = arith.constant 0 : index
    %c0_218 = arith.constant 0 : index
    %c0_219 = arith.constant 0 : index
    %554 = vector.load %arg6[%c0_217, %c0_218, %c0_219] : memref<1x1x96xf32, #tpu.memory_space<vmem>>, vector<1x1x96xf32>
    %555 = vector.shape_cast %554 : vector<1x1x96xf32> to vector<1x96xf32>
    %556 = vector.broadcast %555 : vector<1x96xf32> to vector<8x96xf32>
    %557 = arith.addf %553, %556 : vector<8x96xf32>
    %c1_220 = arith.constant 1 : index
    %c0_221 = arith.constant 0 : index
    %c0_222 = arith.constant 0 : index
    %558 = vector.load %arg3[%c1_220, %c0_221, %c0_222] : memref<2x8x96xf32, #tpu.memory_space<vmem>>, vector<1x8x96xf32>
    %559 = vector.shape_cast %558 : vector<1x8x96xf32> to vector<8x96xf32>
    %c1_223 = arith.constant 1 : index
    %c0_224 = arith.constant 0 : index
    %c0_225 = arith.constant 0 : index
    %560 = vector.load %arg4[%c1_223, %c0_224, %c0_225] : memref<2x8x32xf32, #tpu.memory_space<vmem>>, vector<1x8x32xf32>
    %561 = vector.shape_cast %560 : vector<1x8x32xf32> to vector<8x32xf32>
    %562 = vector.extract_strided_slice %557 {offsets = [0, 0], sizes = [8, 32], strides = [1, 1]} : vector<8x96xf32> to vector<8x32xf32>
    %563 = vector.extract_strided_slice %559 {offsets = [0, 0], sizes = [8, 32], strides = [1, 1]} : vector<8x96xf32> to vector<8x32xf32>
    %564 = arith.addf %562, %563 : vector<8x32xf32>
    %565 = arith.negf %564 : vector<8x32xf32>
    %566 = math.exp %565 : vector<8x32xf32>
    %cst_226 = arith.constant 1.000000e+00 : f32
    %567 = vector.broadcast %cst_226 : f32 to vector<8x32xf32>
    %568 = arith.addf %567, %566 : vector<8x32xf32>
    %569 = arith.divf %567, %568 : vector<8x32xf32>
    %570 = vector.extract_strided_slice %557 {offsets = [0, 32], sizes = [8, 32], strides = [1, 1]} : vector<8x96xf32> to vector<8x32xf32>
    %571 = vector.extract_strided_slice %559 {offsets = [0, 32], sizes = [8, 32], strides = [1, 1]} : vector<8x96xf32> to vector<8x32xf32>
    %572 = arith.addf %570, %571 : vector<8x32xf32>
    %573 = arith.negf %572 : vector<8x32xf32>
    %574 = math.exp %573 : vector<8x32xf32>
    %cst_227 = arith.constant 1.000000e+00 : f32
    %575 = vector.broadcast %cst_227 : f32 to vector<8x32xf32>
    %576 = arith.addf %575, %574 : vector<8x32xf32>
    %577 = arith.divf %575, %576 : vector<8x32xf32>
    %578 = vector.extract_strided_slice %557 {offsets = [0, 64], sizes = [8, 32], strides = [1, 1]} : vector<8x96xf32> to vector<8x32xf32>
    %579 = vector.extract_strided_slice %559 {offsets = [0, 64], sizes = [8, 32], strides = [1, 1]} : vector<8x96xf32> to vector<8x32xf32>
    %580 = arith.mulf %569, %579 : vector<8x32xf32>
    %581 = arith.addf %578, %580 : vector<8x32xf32>
    %582 = math.tanh %581 : vector<8x32xf32>
    %cst_228 = arith.constant 1.000000e+00 : f32
    %583 = vector.broadcast %cst_228 : f32 to vector<8x32xf32>
    %584 = arith.subf %583, %577 : vector<8x32xf32>
    %585 = arith.mulf %584, %582 : vector<8x32xf32>
    %586 = arith.mulf %577, %561 : vector<8x32xf32>
    %587 = arith.addf %585, %586 : vector<8x32xf32>
    %588 = arith.truncf %587 : vector<8x32xf32> to vector<8x32xbf16>
    %c0_229 = arith.constant 0 : index
    %c0_230 = arith.constant 0 : index
    %589 = vector.load %arg11[%c0_229, %c0_230] : memref<32x48xbf16, #tpu.memory_space<vmem>>, vector<32x48xbf16>
    %cst_231 = arith.constant dense<0.000000e+00> : vector<8x48xf32>
    %590 = tpu.matmul %588, %589, %cst_231 {dimension_numbers = #tpu.dot_dimension_numbers<[1], [0], [0], [1], [0, 0, 1, 1], [], []>} : vector<8x32xbf16>, vector<32x48xbf16>, vector<8x48xf32> -> vector<8x48xf32>
    %591 = vector.extract_strided_slice %590 {offsets = [0, 0], sizes = [8, 16], strides = [1, 1]} : vector<8x48xf32> to vector<8x16xf32>
    %592 = vector.extract_strided_slice %590 {offsets = [0, 16], sizes = [8, 32], strides = [1, 1]} : vector<8x48xf32> to vector<8x32xf32>
    %c0_232 = arith.constant 0 : index
    %c0_233 = arith.constant 0 : index
    %c0_234 = arith.constant 0 : index
    %593 = vector.load %arg7[%c0_232, %c0_233, %c0_234] : memref<8x16x16xf32, #tpu.memory_space<vmem>>, vector<8x16x16xf32>
    %594 = vector.shape_cast %591 : vector<8x16xf32> to vector<8x1x16xf32>
    %595 = vector.broadcast %594 : vector<8x1x16xf32> to vector<8x16x16xf32>
    %596 = arith.addf %593, %595 : vector<8x16x16xf32>
    %597 = math.tanh %596 : vector<8x16x16xf32>
    %c0_235 = arith.constant 0 : index
    %c0_236 = arith.constant 0 : index
    %598 = vector.load %arg12[%c0_235, %c0_236] : memref<1x16xf32, #tpu.memory_space<vmem>>, vector<1x16xf32>
    %599 = vector.shape_cast %598 : vector<1x16xf32> to vector<1x1x16xf32>
    %600 = vector.broadcast %599 : vector<1x1x16xf32> to vector<8x16x16xf32>
    %601 = arith.mulf %597, %600 : vector<8x16x16xf32>
    %cst_237 = arith.constant dense<0.000000e+00> : vector<8x16xf32>
    %602 = vector.multi_reduction <add>, %601, %cst_237 [2] : vector<8x16x16xf32> to vector<8x16xf32>
    %603 = arith.mulf %602, %2 : vector<8x16xf32>
    %604 = arith.addf %603, %4 : vector<8x16xf32>
    %cst_238 = arith.constant dense<0xFF800000> : vector<8xf32>
    %605 = vector.multi_reduction <maximumf>, %604, %cst_238 [1] : vector<8x16xf32> to vector<8xf32>
    %606 = vector.shape_cast %605 : vector<8xf32> to vector<8x1xf32>
    %607 = vector.broadcast %606 : vector<8x1xf32> to vector<8x16xf32>
    %608 = arith.subf %604, %607 : vector<8x16xf32>
    %609 = math.exp %608 : vector<8x16xf32>
    %cst_239 = arith.constant dense<0.000000e+00> : vector<8xf32>
    %610 = vector.multi_reduction <add>, %609, %cst_239 [1] : vector<8x16xf32> to vector<8xf32>
    %611 = vector.shape_cast %610 : vector<8xf32> to vector<8x1xf32>
    %612 = tpu.reciprocal %611 {approx = true} : vector<8x1xf32> -> vector<8x1xf32>
    %613 = vector.broadcast %612 : vector<8x1xf32> to vector<8x16xf32>
    %614 = arith.mulf %609, %613 : vector<8x16xf32>
    %615 = vector.shape_cast %614 : vector<8x16xf32> to vector<8x16x1xf32>
    %c0_240 = arith.constant 0 : index
    %c0_241 = arith.constant 0 : index
    %c0_242 = arith.constant 0 : index
    %616 = vector.load %arg8[%c0_240, %c0_241, %c0_242] : memref<8x16x32xf32, #tpu.memory_space<vmem>>, vector<8x16x32xf32>
    %617 = vector.broadcast %615 : vector<8x16x1xf32> to vector<8x16x32xf32>
    %618 = arith.mulf %617, %616 : vector<8x16x32xf32>
    %cst_243 = arith.constant dense<0.000000e+00> : vector<8x32xf32>
    %619 = vector.multi_reduction <add>, %618, %cst_243 [1] : vector<8x16x32xf32> to vector<8x32xf32>
    %620 = arith.truncf %619 : vector<8x32xf32> to vector<8x32xbf16>
    %c0_244 = arith.constant 0 : index
    %c0_245 = arith.constant 0 : index
    %621 = vector.load %arg13[%c0_244, %c0_245] : memref<32x128xbf16, #tpu.memory_space<vmem>>, vector<32x128xbf16>
    %cst_246 = arith.constant dense<0.000000e+00> : vector<8x128xf32>
    %622 = tpu.matmul %620, %621, %cst_246 {dimension_numbers = #tpu.dot_dimension_numbers<[1], [0], [0], [1], [0, 0, 1, 1], [], []>} : vector<8x32xbf16>, vector<32x128xbf16>, vector<8x128xf32> -> vector<8x128xf32>
    %623 = vector.extract_strided_slice %622 {offsets = [0, 0], sizes = [8, 96], strides = [1, 1]} : vector<8x128xf32> to vector<8x96xf32>
    %624 = vector.extract_strided_slice %622 {offsets = [0, 96], sizes = [8, 32], strides = [1, 1]} : vector<8x128xf32> to vector<8x32xf32>
    %625 = arith.index_cast %c4_i32 : i32 to index
    %c0_247 = arith.constant 0 : index
    %c0_248 = arith.constant 0 : index
    %626 = vector.load %arg2[%625, %c0_247, %c0_248] : memref<6x8x32xf32, #tpu.memory_space<vmem>>, vector<1x8x32xf32>
    %627 = vector.shape_cast %626 : vector<1x8x32xf32> to vector<8x32xf32>
    %628 = arith.addf %627, %592 : vector<8x32xf32>
    %629 = arith.addf %628, %624 : vector<8x32xf32>
    %630 = vector.extract_strided_slice %629 {offsets = [0, 0], sizes = [8, 16], strides = [1, 1]} : vector<8x32xf32> to vector<8x16xf32>
    %631 = vector.extract_strided_slice %629 {offsets = [0, 16], sizes = [8, 16], strides = [1, 1]} : vector<8x32xf32> to vector<8x16xf32>
    %632 = arith.maximumf %630, %631 : vector<8x16xf32>
    %633 = vector.broadcast %c4_i32 : i32 to vector<6x8x16xi32>
    %634 = arith.cmpi eq, %5, %633 : vector<6x8x16xi32>
    %635 = vector.shape_cast %632 : vector<8x16xf32> to vector<1x8x16xf32>
    %636 = vector.shape_cast %635 : vector<1x8x16xf32> to vector<1x8x16xf32>
    %637 = vector.broadcast %636 : vector<1x8x16xf32> to vector<6x8x16xf32>
    %638 = arith.select %634, %637, %512 : vector<6x8x16xi1>, vector<6x8x16xf32>
    %c5_i32_249 = arith.constant 5 : i32
    %639 = arith.cmpi eq, %c4_i32, %c5_i32_249 : i32
    %640 = arith.extui %639 : i1 to i32
    %c0_i32_250 = arith.constant 0 : i32
    %641 = arith.cmpi ne, %640, %c0_i32_250 : i32
    scf.if %641 {
      %c0_304 = arith.constant 0 : index
      %c0_305 = arith.constant 0 : index
      %c0_306 = arith.constant 0 : index
      %769 = vector.load %arg15[%c0_304, %c0_305, %c0_306] : memref<2x8x32xf32, #tpu.memory_space<vmem>>, vector<1x8x32xf32>
      %770 = vector.shape_cast %769 : vector<1x8x32xf32> to vector<8x32xf32>
      %771 = vector.shape_cast %549 : vector<8x32xf32> to vector<1x8x32xf32>
      tpu.vector_store %arg15[%c0_304, %c0_305, %c0_306], %771 {strides = array<i32>} : memref<2x8x32xf32, #tpu.memory_space<vmem>>, vector<1x8x32xf32>,
      %c1_307 = arith.constant 1 : index
      %c0_308 = arith.constant 0 : index
      %c0_309 = arith.constant 0 : index
      %772 = vector.load %arg15[%c1_307, %c0_308, %c0_309] : memref<2x8x32xf32, #tpu.memory_space<vmem>>, vector<1x8x32xf32>
      %773 = vector.shape_cast %772 : vector<1x8x32xf32> to vector<8x32xf32>
      %774 = vector.shape_cast %587 : vector<8x32xf32> to vector<1x8x32xf32>
      tpu.vector_store %arg15[%c1_307, %c0_308, %c0_309], %774 {strides = array<i32>} : memref<2x8x32xf32, #tpu.memory_space<vmem>>, vector<1x8x32xf32>,
      %c0_310 = arith.constant 0 : index
      %c0_311 = arith.constant 0 : index
      %775 = vector.load %arg16[%c0_310, %c0_311] : memref<8x16xf32, #tpu.memory_space<vmem>>, vector<8x16xf32>
      tpu.vector_store %arg16[%c0_310, %c0_311], %614 {strides = array<i32>} : memref<8x16xf32, #tpu.memory_space<vmem>>, vector<8x16xf32>,
      %c0_312 = arith.constant 0 : index
      %c0_313 = arith.constant 0 : index
      %776 = vector.load %arg17[%c0_312, %c0_313] : memref<8x32xf32, #tpu.memory_space<vmem>>, vector<8x32xf32>
      tpu.vector_store %arg17[%c0_312, %c0_313], %619 {strides = array<i32>} : memref<8x32xf32, #tpu.memory_space<vmem>>, vector<8x32xf32>,
    } else {
    }
    %c5_i32_251 = arith.constant 5 : i32
    %642 = arith.index_cast %c5_i32_251 : i32 to index
    %c0_252 = arith.constant 0 : index
    %c0_253 = arith.constant 0 : index
    %643 = vector.load %arg1[%642, %c0_252, %c0_253] : memref<6x8x96xf32, #tpu.memory_space<vmem>>, vector<1x8x96xf32>
    %644 = vector.shape_cast %643 : vector<1x8x96xf32> to vector<8x96xf32>
    %645 = arith.addf %644, %623 : vector<8x96xf32>
    %c0_254 = arith.constant 0 : index
    %c0_255 = arith.constant 0 : index
    %c0_256 = arith.constant 0 : index
    %646 = vector.load %arg3[%c0_254, %c0_255, %c0_256] : memref<2x8x96xf32, #tpu.memory_space<vmem>>, vector<1x8x96xf32>
    %647 = vector.shape_cast %646 : vector<1x8x96xf32> to vector<8x96xf32>
    %c0_257 = arith.constant 0 : index
    %c0_258 = arith.constant 0 : index
    %c0_259 = arith.constant 0 : index
    %648 = vector.load %arg4[%c0_257, %c0_258, %c0_259] : memref<2x8x32xf32, #tpu.memory_space<vmem>>, vector<1x8x32xf32>
    %649 = vector.shape_cast %648 : vector<1x8x32xf32> to vector<8x32xf32>
    %650 = vector.extract_strided_slice %645 {offsets = [0, 0], sizes = [8, 32], strides = [1, 1]} : vector<8x96xf32> to vector<8x32xf32>
    %651 = vector.extract_strided_slice %647 {offsets = [0, 0], sizes = [8, 32], strides = [1, 1]} : vector<8x96xf32> to vector<8x32xf32>
    %652 = arith.addf %650, %651 : vector<8x32xf32>
    %653 = arith.negf %652 : vector<8x32xf32>
    %654 = math.exp %653 : vector<8x32xf32>
    %cst_260 = arith.constant 1.000000e+00 : f32
    %655 = vector.broadcast %cst_260 : f32 to vector<8x32xf32>
    %656 = arith.addf %655, %654 : vector<8x32xf32>
    %657 = arith.divf %655, %656 : vector<8x32xf32>
    %658 = vector.extract_strided_slice %645 {offsets = [0, 32], sizes = [8, 32], strides = [1, 1]} : vector<8x96xf32> to vector<8x32xf32>
    %659 = vector.extract_strided_slice %647 {offsets = [0, 32], sizes = [8, 32], strides = [1, 1]} : vector<8x96xf32> to vector<8x32xf32>
    %660 = arith.addf %658, %659 : vector<8x32xf32>
    %661 = arith.negf %660 : vector<8x32xf32>
    %662 = math.exp %661 : vector<8x32xf32>
    %cst_261 = arith.constant 1.000000e+00 : f32
    %663 = vector.broadcast %cst_261 : f32 to vector<8x32xf32>
    %664 = arith.addf %663, %662 : vector<8x32xf32>
    %665 = arith.divf %663, %664 : vector<8x32xf32>
    %666 = vector.extract_strided_slice %645 {offsets = [0, 64], sizes = [8, 32], strides = [1, 1]} : vector<8x96xf32> to vector<8x32xf32>
    %667 = vector.extract_strided_slice %647 {offsets = [0, 64], sizes = [8, 32], strides = [1, 1]} : vector<8x96xf32> to vector<8x32xf32>
    %668 = arith.mulf %657, %667 : vector<8x32xf32>
    %669 = arith.addf %666, %668 : vector<8x32xf32>
    %670 = math.tanh %669 : vector<8x32xf32>
    %cst_262 = arith.constant 1.000000e+00 : f32
    %671 = vector.broadcast %cst_262 : f32 to vector<8x32xf32>
    %672 = arith.subf %671, %665 : vector<8x32xf32>
    %673 = arith.mulf %672, %670 : vector<8x32xf32>
    %674 = arith.mulf %665, %649 : vector<8x32xf32>
    %675 = arith.addf %673, %674 : vector<8x32xf32>
    %676 = arith.truncf %675 : vector<8x32xf32> to vector<8x32xbf16>
    %c0_263 = arith.constant 0 : index
    %c0_264 = arith.constant 0 : index
    %c0_265 = arith.constant 0 : index
    %677 = vector.load %arg5[%c0_263, %c0_264, %c0_265] : memref<1x32x96xbf16, #tpu.memory_space<vmem>>, vector<1x32x96xbf16>
    %678 = vector.shape_cast %677 : vector<1x32x96xbf16> to vector<32x96xbf16>
    %cst_266 = arith.constant dense<0.000000e+00> : vector<8x96xf32>
    %679 = tpu.matmul %676, %678, %cst_266 {dimension_numbers = #tpu.dot_dimension_numbers<[1], [0], [0], [1], [0, 0, 1, 1], [], []>} : vector<8x32xbf16>, vector<32x96xbf16>, vector<8x96xf32> -> vector<8x96xf32>
    %c0_267 = arith.constant 0 : index
    %c0_268 = arith.constant 0 : index
    %c0_269 = arith.constant 0 : index
    %680 = vector.load %arg6[%c0_267, %c0_268, %c0_269] : memref<1x1x96xf32, #tpu.memory_space<vmem>>, vector<1x1x96xf32>
    %681 = vector.shape_cast %680 : vector<1x1x96xf32> to vector<1x96xf32>
    %682 = vector.broadcast %681 : vector<1x96xf32> to vector<8x96xf32>
    %683 = arith.addf %679, %682 : vector<8x96xf32>
    %c1_270 = arith.constant 1 : index
    %c0_271 = arith.constant 0 : index
    %c0_272 = arith.constant 0 : index
    %684 = vector.load %arg3[%c1_270, %c0_271, %c0_272] : memref<2x8x96xf32, #tpu.memory_space<vmem>>, vector<1x8x96xf32>
    %685 = vector.shape_cast %684 : vector<1x8x96xf32> to vector<8x96xf32>
    %c1_273 = arith.constant 1 : index
    %c0_274 = arith.constant 0 : index
    %c0_275 = arith.constant 0 : index
    %686 = vector.load %arg4[%c1_273, %c0_274, %c0_275] : memref<2x8x32xf32, #tpu.memory_space<vmem>>, vector<1x8x32xf32>
    %687 = vector.shape_cast %686 : vector<1x8x32xf32> to vector<8x32xf32>
    %688 = vector.extract_strided_slice %683 {offsets = [0, 0], sizes = [8, 32], strides = [1, 1]} : vector<8x96xf32> to vector<8x32xf32>
    %689 = vector.extract_strided_slice %685 {offsets = [0, 0], sizes = [8, 32], strides = [1, 1]} : vector<8x96xf32> to vector<8x32xf32>
    %690 = arith.addf %688, %689 : vector<8x32xf32>
    %691 = arith.negf %690 : vector<8x32xf32>
    %692 = math.exp %691 : vector<8x32xf32>
    %cst_276 = arith.constant 1.000000e+00 : f32
    %693 = vector.broadcast %cst_276 : f32 to vector<8x32xf32>
    %694 = arith.addf %693, %692 : vector<8x32xf32>
    %695 = arith.divf %693, %694 : vector<8x32xf32>
    %696 = vector.extract_strided_slice %683 {offsets = [0, 32], sizes = [8, 32], strides = [1, 1]} : vector<8x96xf32> to vector<8x32xf32>
    %697 = vector.extract_strided_slice %685 {offsets = [0, 32], sizes = [8, 32], strides = [1, 1]} : vector<8x96xf32> to vector<8x32xf32>
    %698 = arith.addf %696, %697 : vector<8x32xf32>
    %699 = arith.negf %698 : vector<8x32xf32>
    %700 = math.exp %699 : vector<8x32xf32>
    %cst_277 = arith.constant 1.000000e+00 : f32
    %701 = vector.broadcast %cst_277 : f32 to vector<8x32xf32>
    %702 = arith.addf %701, %700 : vector<8x32xf32>
    %703 = arith.divf %701, %702 : vector<8x32xf32>
    %704 = vector.extract_strided_slice %683 {offsets = [0, 64], sizes = [8, 32], strides = [1, 1]} : vector<8x96xf32> to vector<8x32xf32>
    %705 = vector.extract_strided_slice %685 {offsets = [0, 64], sizes = [8, 32], strides = [1, 1]} : vector<8x96xf32> to vector<8x32xf32>
    %706 = arith.mulf %695, %705 : vector<8x32xf32>
    %707 = arith.addf %704, %706 : vector<8x32xf32>
    %708 = math.tanh %707 : vector<8x32xf32>
    %cst_278 = arith.constant 1.000000e+00 : f32
    %709 = vector.broadcast %cst_278 : f32 to vector<8x32xf32>
    %710 = arith.subf %709, %703 : vector<8x32xf32>
    %711 = arith.mulf %710, %708 : vector<8x32xf32>
    %712 = arith.mulf %703, %687 : vector<8x32xf32>
    %713 = arith.addf %711, %712 : vector<8x32xf32>
    %714 = arith.truncf %713 : vector<8x32xf32> to vector<8x32xbf16>
    %c0_279 = arith.constant 0 : index
    %c0_280 = arith.constant 0 : index
    %715 = vector.load %arg11[%c0_279, %c0_280] : memref<32x48xbf16, #tpu.memory_space<vmem>>, vector<32x48xbf16>
    %cst_281 = arith.constant dense<0.000000e+00> : vector<8x48xf32>
    %716 = tpu.matmul %714, %715, %cst_281 {dimension_numbers = #tpu.dot_dimension_numbers<[1], [0], [0], [1], [0, 0, 1, 1], [], []>} : vector<8x32xbf16>, vector<32x48xbf16>, vector<8x48xf32> -> vector<8x48xf32>
    %717 = vector.extract_strided_slice %716 {offsets = [0, 0], sizes = [8, 16], strides = [1, 1]} : vector<8x48xf32> to vector<8x16xf32>
    %718 = vector.extract_strided_slice %716 {offsets = [0, 16], sizes = [8, 32], strides = [1, 1]} : vector<8x48xf32> to vector<8x32xf32>
    %c0_282 = arith.constant 0 : index
    %c0_283 = arith.constant 0 : index
    %c0_284 = arith.constant 0 : index
    %719 = vector.load %arg7[%c0_282, %c0_283, %c0_284] : memref<8x16x16xf32, #tpu.memory_space<vmem>>, vector<8x16x16xf32>
    %720 = vector.shape_cast %717 : vector<8x16xf32> to vector<8x1x16xf32>
    %721 = vector.broadcast %720 : vector<8x1x16xf32> to vector<8x16x16xf32>
    %722 = arith.addf %719, %721 : vector<8x16x16xf32>
    %723 = math.tanh %722 : vector<8x16x16xf32>
    %c0_285 = arith.constant 0 : index
    %c0_286 = arith.constant 0 : index
    %724 = vector.load %arg12[%c0_285, %c0_286] : memref<1x16xf32, #tpu.memory_space<vmem>>, vector<1x16xf32>
    %725 = vector.shape_cast %724 : vector<1x16xf32> to vector<1x1x16xf32>
    %726 = vector.broadcast %725 : vector<1x1x16xf32> to vector<8x16x16xf32>
    %727 = arith.mulf %723, %726 : vector<8x16x16xf32>
    %cst_287 = arith.constant dense<0.000000e+00> : vector<8x16xf32>
    %728 = vector.multi_reduction <add>, %727, %cst_287 [2] : vector<8x16x16xf32> to vector<8x16xf32>
    %729 = arith.mulf %728, %2 : vector<8x16xf32>
    %730 = arith.addf %729, %4 : vector<8x16xf32>
    %cst_288 = arith.constant dense<0xFF800000> : vector<8xf32>
    %731 = vector.multi_reduction <maximumf>, %730, %cst_288 [1] : vector<8x16xf32> to vector<8xf32>
    %732 = vector.shape_cast %731 : vector<8xf32> to vector<8x1xf32>
    %733 = vector.broadcast %732 : vector<8x1xf32> to vector<8x16xf32>
    %734 = arith.subf %730, %733 : vector<8x16xf32>
    %735 = math.exp %734 : vector<8x16xf32>
    %cst_289 = arith.constant dense<0.000000e+00> : vector<8xf32>
    %736 = vector.multi_reduction <add>, %735, %cst_289 [1] : vector<8x16xf32> to vector<8xf32>
    %737 = vector.shape_cast %736 : vector<8xf32> to vector<8x1xf32>
    %738 = tpu.reciprocal %737 {approx = true} : vector<8x1xf32> -> vector<8x1xf32>
    %739 = vector.broadcast %738 : vector<8x1xf32> to vector<8x16xf32>
    %740 = arith.mulf %735, %739 : vector<8x16xf32>
    %741 = vector.shape_cast %740 : vector<8x16xf32> to vector<8x16x1xf32>
    %c0_290 = arith.constant 0 : index
    %c0_291 = arith.constant 0 : index
    %c0_292 = arith.constant 0 : index
    %742 = vector.load %arg8[%c0_290, %c0_291, %c0_292] : memref<8x16x32xf32, #tpu.memory_space<vmem>>, vector<8x16x32xf32>
    %743 = vector.broadcast %741 : vector<8x16x1xf32> to vector<8x16x32xf32>
    %744 = arith.mulf %743, %742 : vector<8x16x32xf32>
    %cst_293 = arith.constant dense<0.000000e+00> : vector<8x32xf32>
    %745 = vector.multi_reduction <add>, %744, %cst_293 [1] : vector<8x16x32xf32> to vector<8x32xf32>
    %746 = arith.truncf %745 : vector<8x32xf32> to vector<8x32xbf16>
    %c0_294 = arith.constant 0 : index
    %c0_295 = arith.constant 0 : index
    %747 = vector.load %arg13[%c0_294, %c0_295] : memref<32x128xbf16, #tpu.memory_space<vmem>>, vector<32x128xbf16>
    %cst_296 = arith.constant dense<0.000000e+00> : vector<8x128xf32>
    %748 = tpu.matmul %746, %747, %cst_296 {dimension_numbers = #tpu.dot_dimension_numbers<[1], [0], [0], [1], [0, 0, 1, 1], [], []>} : vector<8x32xbf16>, vector<32x128xbf16>, vector<8x128xf32> -> vector<8x128xf32>
    %749 = vector.extract_strided_slice %748 {offsets = [0, 0], sizes = [8, 96], strides = [1, 1]} : vector<8x128xf32> to vector<8x96xf32>
    %750 = vector.extract_strided_slice %748 {offsets = [0, 96], sizes = [8, 32], strides = [1, 1]} : vector<8x128xf32> to vector<8x32xf32>
    %751 = arith.index_cast %c5_i32_251 : i32 to index
    %c0_297 = arith.constant 0 : index
    %c0_298 = arith.constant 0 : index
    %752 = vector.load %arg2[%751, %c0_297, %c0_298] : memref<6x8x32xf32, #tpu.memory_space<vmem>>, vector<1x8x32xf32>
    %753 = vector.shape_cast %752 : vector<1x8x32xf32> to vector<8x32xf32>
    %754 = arith.addf %753, %718 : vector<8x32xf32>
    %755 = arith.addf %754, %750 : vector<8x32xf32>
    %756 = vector.extract_strided_slice %755 {offsets = [0, 0], sizes = [8, 16], strides = [1, 1]} : vector<8x32xf32> to vector<8x16xf32>
    %757 = vector.extract_strided_slice %755 {offsets = [0, 16], sizes = [8, 16], strides = [1, 1]} : vector<8x32xf32> to vector<8x16xf32>
    %758 = arith.maximumf %756, %757 : vector<8x16xf32>
    %759 = vector.broadcast %c5_i32_251 : i32 to vector<6x8x16xi32>
    %760 = arith.cmpi eq, %5, %759 : vector<6x8x16xi32>
    %761 = vector.shape_cast %758 : vector<8x16xf32> to vector<1x8x16xf32>
    %762 = vector.shape_cast %761 : vector<1x8x16xf32> to vector<1x8x16xf32>
    %763 = vector.broadcast %762 : vector<1x8x16xf32> to vector<6x8x16xf32>
    %764 = arith.select %760, %763, %638 : vector<6x8x16xi1>, vector<6x8x16xf32>
    %c5_i32_299 = arith.constant 5 : i32
    %765 = arith.cmpi eq, %c5_i32_251, %c5_i32_299 : i32
    %766 = arith.extui %765 : i1 to i32
    %c0_i32_300 = arith.constant 0 : i32
    %767 = arith.cmpi ne, %766, %c0_i32_300 : i32
    scf.if %767 {
      %c0_304 = arith.constant 0 : index
      %c0_305 = arith.constant 0 : index
      %c0_306 = arith.constant 0 : index
      %769 = vector.load %arg15[%c0_304, %c0_305, %c0_306] : memref<2x8x32xf32, #tpu.memory_space<vmem>>, vector<1x8x32xf32>
      %770 = vector.shape_cast %769 : vector<1x8x32xf32> to vector<8x32xf32>
      %771 = vector.shape_cast %675 : vector<8x32xf32> to vector<1x8x32xf32>
      tpu.vector_store %arg15[%c0_304, %c0_305, %c0_306], %771 {strides = array<i32>} : memref<2x8x32xf32, #tpu.memory_space<vmem>>, vector<1x8x32xf32>,
      %c1_307 = arith.constant 1 : index
      %c0_308 = arith.constant 0 : index
      %c0_309 = arith.constant 0 : index
      %772 = vector.load %arg15[%c1_307, %c0_308, %c0_309] : memref<2x8x32xf32, #tpu.memory_space<vmem>>, vector<1x8x32xf32>
      %773 = vector.shape_cast %772 : vector<1x8x32xf32> to vector<8x32xf32>
      %774 = vector.shape_cast %713 : vector<8x32xf32> to vector<1x8x32xf32>
      tpu.vector_store %arg15[%c1_307, %c0_308, %c0_309], %774 {strides = array<i32>} : memref<2x8x32xf32, #tpu.memory_space<vmem>>, vector<1x8x32xf32>,
      %c0_310 = arith.constant 0 : index
      %c0_311 = arith.constant 0 : index
      %775 = vector.load %arg16[%c0_310, %c0_311] : memref<8x16xf32, #tpu.memory_space<vmem>>, vector<8x16xf32>
      tpu.vector_store %arg16[%c0_310, %c0_311], %740 {strides = array<i32>} : memref<8x16xf32, #tpu.memory_space<vmem>>, vector<8x16xf32>,
      %c0_312 = arith.constant 0 : index
      %c0_313 = arith.constant 0 : index
      %776 = vector.load %arg17[%c0_312, %c0_313] : memref<8x32xf32, #tpu.memory_space<vmem>>, vector<8x32xf32>
      tpu.vector_store %arg17[%c0_312, %c0_313], %745 {strides = array<i32>} : memref<8x32xf32, #tpu.memory_space<vmem>>, vector<8x32xf32>,
    } else {
    }
    %c6_i32 = arith.constant 6 : i32
    %c0_301 = arith.constant 0 : index
    %c0_302 = arith.constant 0 : index
    %c0_303 = arith.constant 0 : index
    %768 = vector.load %arg14[%c0_301, %c0_302, %c0_303] : memref<6x8x16xf32, #tpu.memory_space<vmem>>, vector<6x8x16xf32>
    tpu.vector_store %arg14[%c0_301, %c0_302, %c0_303], %764 {strides = array<i32>} : memref<6x8x16xf32, #tpu.memory_space<vmem>>, vector<6x8x16xf32>,
    return
  }
  func.func @transform_0(%arg0: i32) -> (i32, i32, i32) {
    %c0_i32 = arith.constant 0 : i32
    %c0_i32_0 = arith.constant 0 : i32
    %c0_i32_1 = arith.constant 0 : i32
    return %c0_i32, %arg0, %c0_i32_0 : i32, i32, i32
  }
  func.func @transform_1(%arg0: i32) -> (i32, i32, i32) {
    %c0_i32 = arith.constant 0 : i32
    %c0_i32_0 = arith.constant 0 : i32
    %c0_i32_1 = arith.constant 0 : i32
    return %c0_i32, %arg0, %c0_i32_0 : i32, i32, i32
  }
  func.func @transform_2(%arg0: i32) -> (i32, i32, i32) {
    %c0_i32 = arith.constant 0 : i32
    %c0_i32_0 = arith.constant 0 : i32
    %c0_i32_1 = arith.constant 0 : i32
    return %c0_i32, %arg0, %c0_i32_0 : i32, i32, i32
  }
  func.func @transform_3(%arg0: i32) -> (i32, i32, i32) {
    %c0_i32 = arith.constant 0 : i32
    %c0_i32_0 = arith.constant 0 : i32
    %c0_i32_1 = arith.constant 0 : i32
    return %c0_i32, %arg0, %c0_i32_0 : i32, i32, i32
  }
  func.func @transform_4(%arg0: i32) -> (i32, i32, i32) {
    %c0_i32 = arith.constant 0 : i32
    %c0_i32_0 = arith.constant 0 : i32
    %c0_i32_1 = arith.constant 0 : i32
    %c0_i32_2 = arith.constant 0 : i32
    return %c0_i32, %c0_i32_0, %c0_i32_1 : i32, i32, i32
  }
  func.func @transform_5(%arg0: i32) -> (i32, i32, i32) {
    %c0_i32 = arith.constant 0 : i32
    %c0_i32_0 = arith.constant 0 : i32
    %c0_i32_1 = arith.constant 0 : i32
    %c0_i32_2 = arith.constant 0 : i32
    return %c0_i32, %c0_i32_0, %c0_i32_1 : i32, i32, i32
  }
  func.func @transform_6(%arg0: i32) -> (i32, i32, i32) {
    %c0_i32 = arith.constant 0 : i32
    %c0_i32_0 = arith.constant 0 : i32
    %c0_i32_1 = arith.constant 0 : i32
    return %arg0, %c0_i32, %c0_i32_0 : i32, i32, i32
  }
  func.func @transform_7(%arg0: i32) -> (i32, i32, i32) {
    %c0_i32 = arith.constant 0 : i32
    %c0_i32_0 = arith.constant 0 : i32
    %c0_i32_1 = arith.constant 0 : i32
    return %arg0, %c0_i32, %c0_i32_0 : i32, i32, i32
  }
  func.func @transform_8(%arg0: i32) -> (i32, i32) {
    %c0_i32 = arith.constant 0 : i32
    %c0_i32_0 = arith.constant 0 : i32
    return %arg0, %c0_i32 : i32, i32
  }
  func.func @transform_9(%arg0: i32) -> (i32, i32) {
    %c0_i32 = arith.constant 0 : i32
    %c0_i32_0 = arith.constant 0 : i32
    return %arg0, %c0_i32 : i32, i32
  }
  func.func @transform_10(%arg0: i32) -> (i32, i32) {
    %c0_i32 = arith.constant 0 : i32
    %c0_i32_0 = arith.constant 0 : i32
    %c0_i32_1 = arith.constant 0 : i32
    return %c0_i32, %c0_i32_0 : i32, i32
  }
  func.func @transform_11(%arg0: i32) -> (i32, i32) {
    %c0_i32 = arith.constant 0 : i32
    %c0_i32_0 = arith.constant 0 : i32
    %c0_i32_1 = arith.constant 0 : i32
    return %c0_i32, %c0_i32_0 : i32, i32
  }
  func.func @transform_12(%arg0: i32) -> (i32, i32) {
    %c0_i32 = arith.constant 0 : i32
    %c0_i32_0 = arith.constant 0 : i32
    %c0_i32_1 = arith.constant 0 : i32
    return %c0_i32, %c0_i32_0 : i32, i32
  }
  func.func @transform_13(%arg0: i32) -> (i32, i32, i32) {
    %c0_i32 = arith.constant 0 : i32
    %c0_i32_0 = arith.constant 0 : i32
    %c0_i32_1 = arith.constant 0 : i32
    return %c0_i32, %arg0, %c0_i32_0 : i32, i32, i32
  }
  func.func @transform_14(%arg0: i32) -> (i32, i32, i32) {
    %c0_i32 = arith.constant 0 : i32
    %c0_i32_0 = arith.constant 0 : i32
    %c0_i32_1 = arith.constant 0 : i32
    return %c0_i32, %arg0, %c0_i32_0 : i32, i32, i32
  }
  func.func @transform_15(%arg0: i32) -> (i32, i32) {
    %c0_i32 = arith.constant 0 : i32
    %c0_i32_0 = arith.constant 0 : i32
    return %arg0, %c0_i32 : i32, i32
  }
  func.func @transform_16(%arg0: i32) -> (i32, i32) {
    %c0_i32 = arith.constant 0 : i32
    %c0_i32_0 = arith.constant 0 : i32
    return %arg0, %c0_i32 : i32, i32
  }
}

</mosaic_0001>

<llo_original>
// kernel: edit_att_decoder_forward.2
$region0: #{edit_att_decoder_forward.2}
  #allocation0 [shape = 'u32[]', space=smem, size = 0x4, offset = 0x4, fixed_abs, tag = 'smem constant byte address 0x4 - core index']
  #allocation1 [shape = 'u32[144,128]{1,0:T(1,128)}', space=vmem, size = 0x12000, scoped, tag = 'internal scratch']
  %s0 = inlined_call_operand.vmem [shape: f32[16,16], index: 0, kind: input, shape index: {}]
  %s1 = inlined_call_operand.vmem [shape: f32[16,8,16], index: 1, kind: input, shape index: {}]
  %s2 = inlined_call_operand.vmem [shape: f32[16,8], index: 2, kind: input, shape index: {}]
  %s3 = inlined_call_operand.vmem [shape: bf16[16,16], index: 3, kind: input, shape index: {}]
  %s4 = inlined_call_operand.vmem [shape: f32[1,16], index: 4, kind: input, shape index: {}]
  %s5 = inlined_call_operand.vmem [shape: f32[1,16], index: 5, kind: input, shape index: {}]
  %s6 = inlined_call_operand.vmem [shape: bf16[16,128], index: 6, kind: input, shape index: {}]
  %s7 = inlined_call_operand.vmem [shape: bf16[16,128], index: 7, kind: input, shape index: {}]
  %s8 = inlined_call_operand.vmem [shape: f32[1,128], index: 8, kind: input, shape index: {}]
  %s9 = inlined_call_operand.vmem [shape: f32[8,128], index: 9, kind: output, shape index: {}]
  %s10 = sld [smem:[#allocation0]]
  $region46: #{edit_att_decoder_forward.2} parent=0
    _
  %s12 = ssub.s32 1, %s10
  %s13 = scalar_select 0, %s12, %s10
  // Predicated region
  $region2: #{edit_att_decoder_forward.2} parent=0 // pred_check
    _
  $region3: #{edit_att_decoder_forward.2} parent=0 // pred_check_branch
    %15 = sbr.rel (0) target = $region5
  $region4: #{edit_att_decoder_forward.2} parent=0 // pred_region
    _
  $region5: #{edit_att_decoder_forward.2} parent=0 // pred_fallthru
    _
  // Predicated region
  $region6: #{edit_att_decoder_forward.2} parent=0 // pred_check
    _
  $region7: #{edit_att_decoder_forward.2} parent=0 // pred_check_branch
    %17 = sbr.rel (0) target = $region9
  $region8: #{edit_att_decoder_forward.2} parent=0 // pred_region
    _
  $region9: #{edit_att_decoder_forward.2} parent=0 // pred_fallthru
    _
  // Predicated region
  $region10: #{edit_att_decoder_forward.2} parent=0 // pred_check
    _
  $region11: #{edit_att_decoder_forward.2} parent=0 // pred_check_branch
    %19 = sbr.rel (0) target = $region13
  $region12: #{edit_att_decoder_forward.2} parent=0 // pred_region
    _
  $region13: #{edit_att_decoder_forward.2} parent=0 // pred_fallthru
    _
  // Predicated region
  $region14: #{edit_att_decoder_forward.2} parent=0 // pred_check
    _
  $region15: #{edit_att_decoder_forward.2} parent=0 // pred_check_branch
    %21 = sbr.rel (0) target = $region17
  $region16: #{edit_att_decoder_forward.2} parent=0 // pred_region
    _
  $region17: #{edit_att_decoder_forward.2} parent=0 // pred_fallthru
    _
  // Predicated region
  $region18: #{edit_att_decoder_forward.2} parent=0 // pred_check
    _
  $region19: #{edit_att_decoder_forward.2} parent=0 // pred_check_branch
    %23 = sbr.rel (0) target = $region21
  $region20: #{edit_att_decoder_forward.2} parent=0 // pred_region
    _
  $region21: #{edit_att_decoder_forward.2} parent=0 // pred_fallthru
    _
  // Predicated region
  $region22: #{edit_att_decoder_forward.2} parent=0 // pred_check
    _
  $region23: #{edit_att_decoder_forward.2} parent=0 // pred_check_branch
    %25 = sbr.rel (0) target = $region25
  $region24: #{edit_att_decoder_forward.2} parent=0 // pred_region
    _
  $region25: #{edit_att_decoder_forward.2} parent=0 // pred_fallthru
    _
  // Predicated region
  $region26: #{edit_att_decoder_forward.2} parent=0 // pred_check
    _
  $region27: #{edit_att_decoder_forward.2} parent=0 // pred_check_branch
    %27 = sbr.rel (0) target = $region29
  $region28: #{edit_att_decoder_forward.2} parent=0 // pred_region
    _
  $region29: #{edit_att_decoder_forward.2} parent=0 // pred_fallthru
    _
  // Predicated region
  $region30: #{edit_att_decoder_forward.2} parent=0 // pred_check
    _
  $region31: #{edit_att_decoder_forward.2} parent=0 // pred_check_branch
    %29 = sbr.rel (0) target = $region33
  $region32: #{edit_att_decoder_forward.2} parent=0 // pred_region
    _
  $region33: #{edit_att_decoder_forward.2} parent=0 // pred_fallthru
    _
  // Predicated region
  $region34: #{edit_att_decoder_forward.2} parent=0 // pred_check
    _
  $region35: #{edit_att_decoder_forward.2} parent=0 // pred_check_branch
    %31 = sbr.rel (0) target = $region37
  $region36: #{edit_att_decoder_forward.2} parent=0 // pred_region
    _
  $region37: #{edit_att_decoder_forward.2} parent=0 // pred_fallthru
    _
  %v33 = vld [vmem:[%s1] sm:$0xff]
  %v34 = vld [vmem:[%s1 + $0x8] sm:$0xff]
  %v35 = vld [vmem:[%s1 + $0x10] sm:$0xff]
  %v36 = vld [vmem:[%s1 + $0x18] sm:$0xff]
  %v37 = vld [vmem:[%s1 + $0x20] sm:$0xff]
  %v38 = vld [vmem:[%s1 + $0x28] sm:$0xff]
  %v39 = vld [vmem:[%s1 + $0x30] sm:$0xff]
  %v40 = vld [vmem:[%s1 + $0x38] sm:$0xff]
  %v41 = vld [vmem:[%s1 + $0x40] sm:$0xff]
  %v42 = vld [vmem:[%s1 + $0x48] sm:$0xff]
  %v43 = vld [vmem:[%s1 + $0x50] sm:$0xff]
  %v44 = vld [vmem:[%s1 + $0x58] sm:$0xff]
  %v45 = vld [vmem:[%s1 + $0x60] sm:$0xff]
  %v46 = vld [vmem:[%s1 + $0x68] sm:$0xff]
  %v47 = vld [vmem:[%s1 + $0x70] sm:$0xff]
  %v48 = vld [vmem:[%s1 + $0x78] sm:$0xff]
  %v49 = vpack.c.bf16 %v34, %v33
  %v50 = vpack.c.bf16 %v36, %v35
  %v51 = vpack.c.bf16 %v38, %v37
  %v52 = vpack.c.bf16 %v40, %v39
  %v53 = vpack.c.bf16 %v42, %v41
  %v54 = vpack.c.bf16 %v44, %v43
  %v55 = vpack.c.bf16 %v46, %v45
  %v56 = vpack.c.bf16 %v48, %v47
  %v57 = vld [vmem:[%s3] sm:$0xf]
  %v58 = vld [vmem:[%s3 + $0x4] sm:$0xf]
  %v59 = vld [vmem:[%s4] sm:$0x1]
  %v61 = vlaneseq
  %v62 = vshrl.u32 %v61, 7
  %v63 = vsub.s32 0, %v62
  %v64 = vrot.slane %v59, %v63
  %v68 = vunpack.c.l.b16 %v57
  %v69 = vunpack.c.l.b16 %v58
  %v70 = vpack.c.b16 %v69, %v68
  %vm72 = vcmask 130048
  %v74 = vsel %vm72, %v49, 0
  %v77 = vsel %vm72, %v50, 0
  %v80 = vsel %vm72, %v51, 0
  %v83 = vsel %vm72, %v52, 0
  %v86 = vsel %vm72, %v53, 0
  %v89 = vsel %vm72, %v54, 0
  %v92 = vsel %vm72, %v55, 0
  %v95 = vsel %vm72, %v56, 0
  %97 = vmatprep.subr.bf16.mxu0 0
  %98 = vmatpush1.bf16.msra.mxu0 0
  %99 = vmatprep.subr.bf16.mxu0 0
  %100 = vmatpush1.bf16.msra.mxu0 0
  %101 = vmatprep.subr.bf16.mxu0 0
  %102 = vmatpush1.bf16.msra.mxu0 0
  %103 = vmatprep.subr.bf16.mxu0 0
  %104 = vmatpush1.bf16.msra.mxu0 0
  %105 = vmatprep.subr.bf16.mxu0 0
  %106 = vmatpush1.bf16.msra.mxu0 0
  %107 = vmatprep.subr.bf16.mxu0 0
  %108 = vmatpush1.bf16.msra.mxu0 0
  %109 = vmatprep.subr.bf16.mxu0 0
  %110 = vmatpush1.bf16.msra.mxu0 0
  %111 = vmatprep.subr.bf16.mxu0 0
  %112 = vmatpush1.bf16.msra.mxu0 %v70
  %113 = vmatprep.subr.bf16.mxu0 0
  %114 = vmatpush2.bf16.msra.mxu0 0
  %115 = vmatprep.subr.bf16.mxu0 0
  %116 = vmatpush2.bf16.msra.mxu0 0
  %117 = vmatprep.subr.bf16.mxu0 0
  %118 = vmatpush2.bf16.msra.mxu0 0
  %119 = vmatprep.subr.bf16.mxu0 0
  %120 = vmatpush2.bf16.msra.mxu0 0
  %121 = vmatprep.subr.bf16.mxu0 0
  %122 = vmatpush2.bf16.msra.mxu0 0
  %123 = vmatprep.subr.bf16.mxu0 0
  %124 = vmatpush2.bf16.msra.mxu0 0
  %125 = vmatprep.subr.bf16.mxu0 0
  %126 = vmatpush2.bf16.msra.mxu0 0
  %127 = vmatprep.subr.bf16.mxu0 0
  %128 = vmatpush2.bf16.msra.mxu0 0
  %129 = vmatprep.mubr.bf16.mxu0 0
  %130 = vmatmul.mubr.bf16.gmra.mxu0 %v74
  %v131 = vpop.f32.mrf.mxu0
  %v132 = vadd.f32 %v64, %v131
  %v133 = vpop.f32.mrf.mxu0
  %v134 = vpop.f32.mrf.mxu0
  %v135 = vadd.f32 %v64, %v134
  %v136 = vpop.f32.mrf.mxu0
  %137 = vmatprep.mubr.bf16.mxu0 0
  %138 = vmatmul.mubr.bf16.gmra.mxu0 %v77
  %v139 = vpop.f32.mrf.mxu0
  %v140 = vadd.f32 %v64, %v139
  %v141 = vpop.f32.mrf.mxu0
  %v142 = vpop.f32.mrf.mxu0
  %v143 = vadd.f32 %v64, %v142
  %v144 = vpop.f32.mrf.mxu0
  %145 = vmatprep.mubr.bf16.mxu0 0
  %146 = vmatmul.mubr.bf16.gmra.mxu0 %v80
  %v147 = vpop.f32.mrf.mxu0
  %v148 = vadd.f32 %v64, %v147
  %v149 = vpop.f32.mrf.mxu0
  %v150 = vpop.f32.mrf.mxu0
  %v151 = vadd.f32 %v64, %v150
  %v152 = vpop.f32.mrf.mxu0
  %153 = vmatprep.mubr.bf16.mxu0 0
  %154 = vmatmul.mubr.bf16.gmra.mxu0 %v83
  %v155 = vpop.f32.mrf.mxu0
  %v156 = vadd.f32 %v64, %v155
  %v157 = vpop.f32.mrf.mxu0
  %v158 = vpop.f32.mrf.mxu0
  %v159 = vadd.f32 %v64, %v158
  %v160 = vpop.f32.mrf.mxu0
  %161 = vmatprep.mubr.bf16.mxu0 0
  %162 = vmatmul.mubr.bf16.gmra.mxu0 %v86
  %v163 = vpop.f32.mrf.mxu0
  %v164 = vadd.f32 %v64, %v163
  %v165 = vpop.f32.mrf.mxu0
  %v166 = vpop.f32.mrf.mxu0
  %v167 = vadd.f32 %v64, %v166
  %v168 = vpop.f32.mrf.mxu0
  %169 = vmatprep.mubr.bf16.mxu0 0
  %170 = vmatmul.mubr.bf16.gmra.mxu0 %v89
  %v171 = vpop.f32.mrf.mxu0
  %v172 = vadd.f32 %v64, %v171
  %v173 = vpop.f32.mrf.mxu0
  %v174 = vpop.f32.mrf.mxu0
  %v175 = vadd.f32 %v64, %v174
  %v176 = vpop.f32.mrf.mxu0
  %177 = vmatprep.mubr.bf16.mxu0 0
  %178 = vmatmul.mubr.bf16.gmra.mxu0 %v92
  %v179 = vpop.f32.mrf.mxu0
  %v180 = vadd.f32 %v64, %v179
  %v181 = vpop.f32.mrf.mxu0
  %v182 = vpop.f32.mrf.mxu0
  %v183 = vadd.f32 %v64, %v182
  %v184 = vpop.f32.mrf.mxu0
  %185 = vmatprep.mubr.bf16.mxu0 0
  %186 = vmatmul.mubr.bf16.gmra.mxu0 %v95
  %v187 = vpop.f32.mrf.mxu0
  %v188 = vadd.f32 %v64, %v187
  %v189 = vpop.f32.mrf.mxu0
  %v190 = vpop.f32.mrf.mxu0
  %v191 = vadd.f32 %v64, %v190
  %v192 = vpop.f32.mrf.mxu0
  %193 = vdwg.mxu0
  %v194 = vld [vmem:[%s0] sm:$0xff]
  %v195 = vld [vmem:[%s0 + $0x8] sm:$0xff]
  %v198 = vcombine.high %v194, %v194
  %v200 = vunpack.c.l.s4 1966171168
  %v201 = vunpack.c.0.s8 %v200
  %v202 = vlaneseq
  %v203 = vshrl.u32 %v202, 7
  %v204 = vsub.s32 %v201, %v203
  %v205 = vrot.slane %v194, %v204
  %v207 = vunpack.c.l.s4 1966171168
  %v208 = vunpack.c.0.s8 %v207
  %v209 = vlaneseq
  %v210 = vshrl.u32 %v209, 7
  %v211 = vsub.s32 %v208, %v210
  %v212 = vrot.slane %v198, %v211
  %v213 = vcombine.high %v205, %v205
  %v214 = vcombine.high %v212, %v212
  %v216 = vunpack.c.l.s4 1966171168
  %v217 = vunpack.c.0.s8 %v216
  %v218 = vlaneseq
  %v219 = vshrl.u32 %v218, 7
  %v220 = vsub.s32 %v217, %v219
  %v221 = vrot.slane %v205, %v220
  %v223 = vunpack.c.l.s4 1966171168
  %v224 = vunpack.c.0.s8 %v223
  %v225 = vlaneseq
  %v226 = vshrl.u32 %v225, 7
  %v227 = vsub.s32 %v224, %v226
  %v228 = vrot.slane %v212, %v227
  %v230 = vunpack.c.l.s4 1966171168
  %v231 = vunpack.c.0.s8 %v230
  %v232 = vlaneseq
  %v233 = vshrl.u32 %v232, 7
  %v234 = vsub.s32 %v231, %v233
  %v235 = vrot.slane %v213, %v234
  %v237 = vunpack.c.l.s4 1966171168
  %v238 = vunpack.c.0.s8 %v237
  %v239 = vlaneseq
  %v240 = vshrl.u32 %v239, 7
  %v241 = vsub.s32 %v238, %v240
  %v242 = vrot.slane %v214, %v241
  %v243 = vcombine.high %v221, %v221
  %v244 = vcombine.high %v228, %v228
  %v245 = vcombine.high %v235, %v235
  %v246 = vcombine.high %v242, %v242
  %v247 = vcombine.high %v195, %v195
  %v249 = vunpack.c.l.s4 1966171168
  %v250 = vunpack.c.0.s8 %v249
  %v251 = vlaneseq
  %v252 = vshrl.u32 %v251, 7
  %v253 = vsub.s32 %v250, %v252
  %v254 = vrot.slane %v195, %v253
  %v256 = vunpack.c.l.s4 1966171168
  %v257 = vunpack.c.0.s8 %v256
  %v258 = vlaneseq
  %v259 = vshrl.u32 %v258, 7
  %v260 = vsub.s32 %v257, %v259
  %v261 = vrot.slane %v247, %v260
  %v262 = vcombine.high %v254, %v254
  %v263 = vcombine.high %v261, %v261
  %v265 = vunpack.c.l.s4 1966171168
  %v266 = vunpack.c.0.s8 %v265
  %v267 = vlaneseq
  %v268 = vshrl.u32 %v267, 7
  %v269 = vsub.s32 %v266, %v268
  %v270 = vrot.slane %v254, %v269
  %v272 = vunpack.c.l.s4 1966171168
  %v273 = vunpack.c.0.s8 %v272
  %v274 = vlaneseq
  %v275 = vshrl.u32 %v274, 7
  %v276 = vsub.s32 %v273, %v275
  %v277 = vrot.slane %v261, %v276
  %v279 = vunpack.c.l.s4 1966171168
  %v280 = vunpack.c.0.s8 %v279
  %v281 = vlaneseq
  %v282 = vshrl.u32 %v281, 7
  %v283 = vsub.s32 %v280, %v282
  %v284 = vrot.slane %v262, %v283
  %v286 = vunpack.c.l.s4 1966171168
  %v287 = vunpack.c.0.s8 %v286
  %v288 = vlaneseq
  %v289 = vshrl.u32 %v288, 7
  %v290 = vsub.s32 %v287, %v289
  %v291 = vrot.slane %v263, %v290
  %v292 = vcombine.high %v270, %v270
  %v293 = vcombine.high %v277, %v277
  %v294 = vcombine.high %v284, %v284
  %v295 = vcombine.high %v291, %v291
  %v296 = vlaneseq
  %v297 = vshrl.u32 %v296, 7
  %v298 = vsub.s32 0, %v297
  %v299 = vrot.slane %v221, %v298
  %v300 = vlaneseq
  %v301 = vshrl.u32 %v300, 7
  %v302 = vsub.s32 0, %v301
  %v303 = vrot.slane %v235, %v302
  %v304 = vlaneseq
  %v305 = vshrl.u32 %v304, 7
  %v306 = vsub.s32 0, %v305
  %v307 = vrot.slane %v243, %v306
  %v308 = vlaneseq
  %v309 = vshrl.u32 %v308, 7
  %v310 = vsub.s32 0, %v309
  %v311 = vrot.slane %v245, %v310
  %v312 = vlaneseq
  %v313 = vshrl.u32 %v312, 7
  %v314 = vsub.s32 0, %v313
  %v315 = vrot.slane %v228, %v314
  %v316 = vlaneseq
  %v317 = vshrl.u32 %v316, 7
  %v318 = vsub.s32 0, %v317
  %v319 = vrot.slane %v242, %v318
  %v320 = vlaneseq
  %v321 = vshrl.u32 %v320, 7
  %v322 = vsub.s32 0, %v321
  %v323 = vrot.slane %v244, %v322
  %v324 = vlaneseq
  %v325 = vshrl.u32 %v324, 7
  %v326 = vsub.s32 0, %v325
  %v327 = vrot.slane %v246, %v326
  %v328 = vlaneseq
  %v329 = vshrl.u32 %v328, 7
  %v330 = vsub.s32 0, %v329
  %v331 = vrot.slane %v270, %v330
  %v332 = vlaneseq
  %v333 = vshrl.u32 %v332, 7
  %v334 = vsub.s32 0, %v333
  %v335 = vrot.slane %v284, %v334
  %v336 = vlaneseq
  %v337 = vshrl.u32 %v336, 7
  %v338 = vsub.s32 0, %v337
  %v339 = vrot.slane %v292, %v338
  %v340 = vlaneseq
  %v341 = vshrl.u32 %v340, 7
  %v342 = vsub.s32 0, %v341
  %v343 = vrot.slane %v294, %v342
  %v344 = vlaneseq
  %v345 = vshrl.u32 %v344, 7
  %v346 = vsub.s32 0, %v345
  %v347 = vrot.slane %v277, %v346
  %v348 = vlaneseq
  %v349 = vshrl.u32 %v348, 7
  %v350 = vsub.s32 0, %v349
  %v351 = vrot.slane %v291, %v350
  %v352 = vlaneseq
  %v353 = vshrl.u32 %v352, 7
  %v354 = vsub.s32 0, %v353
  %v355 = vrot.slane %v293, %v354
  %v356 = vlaneseq
  %v357 = vshrl.u32 %v356, 7
  %v358 = vsub.s32 0, %v357
  %v359 = vrot.slane %v295, %v358
  %v376 = vadd.f32 %v132, %v299
  %v377 = vadd.f32 %v135, %v303
  %v378 = vadd.f32 %v140, %v307
  %v379 = vadd.f32 %v143, %v311
  %v380 = vadd.f32 %v148, %v315
  %v381 = vadd.f32 %v151, %v319
  %v382 = vadd.f32 %v156, %v323
  %v383 = vadd.f32 %v159, %v327
  %v384 = vadd.f32 %v164, %v331
  %v385 = vadd.f32 %v167, %v335
  %v386 = vadd.f32 %v172, %v339
  %v387 = vadd.f32 %v175, %v343
  %v388 = vadd.f32 %v180, %v347
  %v389 = vadd.f32 %v183, %v351
  %v390 = vadd.f32 %v188, %v355
  %v391 = vadd.f32 %v191, %v359
  %v392 = vtanh.pop %v376
  %v393 = vtanh.pop %v377
  %v394 = vtanh.pop %v378
  %v395 = vtanh.pop %v379
  %v396 = vtanh.pop %v380
  %v397 = vtanh.pop %v381
  %v398 = vtanh.pop %v382
  %v399 = vtanh.pop %v383
  %v400 = vtanh.pop %v384
  %v401 = vtanh.pop %v385
  %v402 = vtanh.pop %v386
  %v403 = vtanh.pop %v387
  %v404 = vtanh.pop %v388
  %v405 = vtanh.pop %v389
  %v406 = vtanh.pop %v390
  %v407 = vtanh.pop %v391
  %v408 = vld [vmem:[%s5] sm:$0x1]
  %v410 = vlaneseq
  %v411 = vshrl.u32 %v410, 7
  %v412 = vsub.s32 0, %v411
  %v413 = vrot.slane %v408, %v412
  %v415 = vmul.f32 %v392, %v413
  %v416 = vmul.f32 %v393, %v413
  %v417 = vmul.f32 %v394, %v413
  %v418 = vmul.f32 %v395, %v413
  %v419 = vmul.f32 %v396, %v413
  %v420 = vmul.f32 %v397, %v413
  %v421 = vmul.f32 %v398, %v413
  %v422 = vmul.f32 %v399, %v413
  %v423 = vmul.f32 %v400, %v413
  %v424 = vmul.f32 %v401, %v413
  %v425 = vmul.f32 %v402, %v413
  %v426 = vmul.f32 %v403, %v413
  %v427 = vmul.f32 %v404, %v413
  %v428 = vmul.f32 %v405, %v413
  %v429 = vmul.f32 %v406, %v413
  %v430 = vmul.f32 %v407, %v413
  %v431 = vsel %vm72, %v415, 0.0
  %432 = vadd.xlane.f32.xlu0 %v431
  %v433 = vpop.xlane.xlu0 %432
  %v434 = vsel %vm72, %v416, 0.0
  %435 = vadd.xlane.f32.xlu0 %v434
  %v436 = vpop.xlane.xlu0 %435
  %v437 = vsel %vm72, %v417, 0.0
  %438 = vadd.xlane.f32.xlu0 %v437
  %v439 = vpop.xlane.xlu0 %438
  %v440 = vsel %vm72, %v418, 0.0
  %441 = vadd.xlane.f32.xlu0 %v440
  %v442 = vpop.xlane.xlu0 %441
  %v443 = vsel %vm72, %v419, 0.0
  %444 = vadd.xlane.f32.xlu0 %v443
  %v445 = vpop.xlane.xlu0 %444
  %v446 = vsel %vm72, %v420, 0.0
  %447 = vadd.xlane.f32.xlu0 %v446
  %v448 = vpop.xlane.xlu0 %447
  %v449 = vsel %vm72, %v421, 0.0
  %450 = vadd.xlane.f32.xlu0 %v449
  %v451 = vpop.xlane.xlu0 %450
  %v452 = vsel %vm72, %v422, 0.0
  %453 = vadd.xlane.f32.xlu0 %v452
  %v454 = vpop.xlane.xlu0 %453
  %v455 = vsel %vm72, %v423, 0.0
  %456 = vadd.xlane.f32.xlu0 %v455
  %v457 = vpop.xlane.xlu0 %456
  %v458 = vsel %vm72, %v424, 0.0
  %459 = vadd.xlane.f32.xlu0 %v458
  %v460 = vpop.xlane.xlu0 %459
  %v461 = vsel %vm72, %v425, 0.0
  %462 = vadd.xlane.f32.xlu0 %v461
  %v463 = vpop.xlane.xlu0 %462
  %v464 = vsel %vm72, %v426, 0.0
  %465 = vadd.xlane.f32.xlu0 %v464
  %v466 = vpop.xlane.xlu0 %465
  %v467 = vsel %vm72, %v427, 0.0
  %468 = vadd.xlane.f32.xlu0 %v467
  %v469 = vpop.xlane.xlu0 %468
  %v470 = vsel %vm72, %v428, 0.0
  %471 = vadd.xlane.f32.xlu0 %v470
  %v472 = vpop.xlane.xlu0 %471
  %v473 = vsel %vm72, %v429, 0.0
  %474 = vadd.xlane.f32.xlu0 %v473
  %v475 = vpop.xlane.xlu0 %474
  %v476 = vsel %vm72, %v430, 0.0
  %477 = vadd.xlane.f32.xlu0 %v476
  %v478 = vpop.xlane.xlu0 %477
  %v479 = vld [vmem:[%s2] sm:$0xff]
  %v480 = vld [vmem:[%s2 + $0x8] sm:$0xff]
  %v481 = vsub.f32 1.0, %v479
  %v482 = vsub.f32 1.0, %v480
  %v485 = vlaneseq
  %v486 = vshrl.u32 %v485, 7
  %v487 = vsub.s32 0, %v486
  %v488 = vrot.slane %v481, %v487
  %490 = vbcast.lane.b32.xlu0 %v488, 256
  %v491 = vpop.permute.xlu0 %490
  %v492 = vlaneseq
  %v493 = vshrl.u32 %v492, 7
  %v494 = vsub.s32 1, %v493
  %v495 = vrot.slane %v481, %v494
  %497 = vbcast.lane.b32.xlu0 %v495, 256
  %v498 = vpop.permute.xlu0 %497
  %v499 = vlaneseq
  %v500 = vshrl.u32 %v499, 7
  %v501 = vsub.s32 2, %v500
  %v502 = vrot.slane %v481, %v501
  %504 = vbcast.lane.b32.xlu0 %v502, 256
  %v505 = vpop.permute.xlu0 %504
  %v506 = vlaneseq
  %v507 = vshrl.u32 %v506, 7
  %v508 = vsub.s32 3, %v507
  %v509 = vrot.slane %v481, %v508
  %511 = vbcast.lane.b32.xlu0 %v509, 256
  %v512 = vpop.permute.xlu0 %511
  %v513 = vlaneseq
  %v514 = vshrl.u32 %v513, 7
  %v515 = vsub.s32 4, %v514
  %v516 = vrot.slane %v481, %v515
  %518 = vbcast.lane.b32.xlu0 %v516, 256
  %v519 = vpop.permute.xlu0 %518
  %v520 = vlaneseq
  %v521 = vshrl.u32 %v520, 7
  %v522 = vsub.s32 5, %v521
  %v523 = vrot.slane %v481, %v522
  %525 = vbcast.lane.b32.xlu0 %v523, 256
  %v526 = vpop.permute.xlu0 %525
  %v527 = vlaneseq
  %v528 = vshrl.u32 %v527, 7
  %v529 = vsub.s32 6, %v528
  %v530 = vrot.slane %v481, %v529
  %532 = vbcast.lane.b32.xlu0 %v530, 256
  %v533 = vpop.permute.xlu0 %532
  %v534 = vlaneseq
  %v535 = vshrl.u32 %v534, 7
  %v536 = vsub.s32 7, %v535
  %v537 = vrot.slane %v481, %v536
  %539 = vbcast.lane.b32.xlu0 %v537, 256
  %v540 = vpop.permute.xlu0 %539
  %v541 = vlaneseq
  %v542 = vshrl.u32 %v541, 7
  %v543 = vsub.s32 0, %v542
  %v544 = vrot.slane %v482, %v543
  %546 = vbcast.lane.b32.xlu0 %v544, 256
  %v547 = vpop.permute.xlu0 %546
  %v548 = vlaneseq
  %v549 = vshrl.u32 %v548, 7
  %v550 = vsub.s32 1, %v549
  %v551 = vrot.slane %v482, %v550
  %553 = vbcast.lane.b32.xlu0 %v551, 256
  %v554 = vpop.permute.xlu0 %553
  %v555 = vlaneseq
  %v556 = vshrl.u32 %v555, 7
  %v557 = vsub.s32 2, %v556
  %v558 = vrot.slane %v482, %v557
  %560 = vbcast.lane.b32.xlu0 %v558, 256
  %v561 = vpop.permute.xlu0 %560
  %v562 = vlaneseq
  %v563 = vshrl.u32 %v562, 7
  %v564 = vsub.s32 3, %v563
  %v565 = vrot.slane %v482, %v564
  %567 = vbcast.lane.b32.xlu0 %v565, 256
  %v568 = vpop.permute.xlu0 %567
  %v569 = vlaneseq
  %v570 = vshrl.u32 %v569, 7
  %v571 = vsub.s32 4, %v570
  %v572 = vrot.slane %v482, %v571
  %574 = vbcast.lane.b32.xlu0 %v572, 256
  %v575 = vpop.permute.xlu0 %574
  %v576 = vlaneseq
  %v577 = vshrl.u32 %v576, 7
  %v578 = vsub.s32 5, %v577
  %v579 = vrot.slane %v482, %v578
  %581 = vbcast.lane.b32.xlu0 %v579, 256
  %v582 = vpop.permute.xlu0 %581
  %v583 = vlaneseq
  %v584 = vshrl.u32 %v583, 7
  %v585 = vsub.s32 6, %v584
  %v586 = vrot.slane %v482, %v585
  %588 = vbcast.lane.b32.xlu0 %v586, 256
  %v589 = vpop.permute.xlu0 %588
  %v590 = vlaneseq
  %v591 = vshrl.u32 %v590, 7
  %v592 = vsub.s32 7, %v591
  %v593 = vrot.slane %v482, %v592
  %595 = vbcast.lane.b32.xlu0 %v593, 256
  %v596 = vpop.permute.xlu0 %595
  %v613 = vmul.f32 %v433, %v491
  %v614 = vmul.f32 %v436, %v498
  %v615 = vmul.f32 %v439, %v505
  %v616 = vmul.f32 %v442, %v512
  %v617 = vmul.f32 %v445, %v519
  %v618 = vmul.f32 %v448, %v526
  %v619 = vmul.f32 %v451, %v533
  %v620 = vmul.f32 %v454, %v540
  %v621 = vmul.f32 %v457, %v547
  %v622 = vmul.f32 %v460, %v554
  %v623 = vmul.f32 %v463, %v561
  %v624 = vmul.f32 %v466, %v568
  %v625 = vmul.f32 %v469, %v575
  %v626 = vmul.f32 %v472, %v582
  %v627 = vmul.f32 %v475, %v589
  %v628 = vmul.f32 %v478, %v596
  %v629 = vmul.f32 %v479, -1000000.0
  %v630 = vmul.f32 %v480, -1000000.0
  %v633 = vlaneseq
  %v634 = vshrl.u32 %v633, 7
  %v635 = vsub.s32 0, %v634
  %v636 = vrot.slane %v629, %v635
  %638 = vbcast.lane.b32.xlu0 %v636, 256
  %v639 = vpop.permute.xlu0 %638
  %v640 = vlaneseq
  %v641 = vshrl.u32 %v640, 7
  %v642 = vsub.s32 1, %v641
  %v643 = vrot.slane %v629, %v642
  %645 = vbcast.lane.b32.xlu0 %v643, 256
  %v646 = vpop.permute.xlu0 %645
  %v647 = vlaneseq
  %v648 = vshrl.u32 %v647, 7
  %v649 = vsub.s32 2, %v648
  %v650 = vrot.slane %v629, %v649
  %652 = vbcast.lane.b32.xlu0 %v650, 256
  %v653 = vpop.permute.xlu0 %652
  %v654 = vlaneseq
  %v655 = vshrl.u32 %v654, 7
  %v656 = vsub.s32 3, %v655
  %v657 = vrot.slane %v629, %v656
  %659 = vbcast.lane.b32.xlu0 %v657, 256
  %v660 = vpop.permute.xlu0 %659
  %v661 = vlaneseq
  %v662 = vshrl.u32 %v661, 7
  %v663 = vsub.s32 4, %v662
  %v664 = vrot.slane %v629, %v663
  %666 = vbcast.lane.b32.xlu0 %v664, 256
  %v667 = vpop.permute.xlu0 %666
  %v668 = vlaneseq
  %v669 = vshrl.u32 %v668, 7
  %v670 = vsub.s32 5, %v669
  %v671 = vrot.slane %v629, %v670
  %673 = vbcast.lane.b32.xlu0 %v671, 256
  %v674 = vpop.permute.xlu0 %673
  %v675 = vlaneseq
  %v676 = vshrl.u32 %v675, 7
  %v677 = vsub.s32 6, %v676
  %v678 = vrot.slane %v629, %v677
  %680 = vbcast.lane.b32.xlu0 %v678, 256
  %v681 = vpop.permute.xlu0 %680
  %v682 = vlaneseq
  %v683 = vshrl.u32 %v682, 7
  %v684 = vsub.s32 7, %v683
  %v685 = vrot.slane %v629, %v684
  %687 = vbcast.lane.b32.xlu0 %v685, 256
  %v688 = vpop.permute.xlu0 %687
  %v689 = vlaneseq
  %v690 = vshrl.u32 %v689, 7
  %v691 = vsub.s32 0, %v690
  %v692 = vrot.slane %v630, %v691
  %694 = vbcast.lane.b32.xlu0 %v692, 256
  %v695 = vpop.permute.xlu0 %694
  %v696 = vlaneseq
  %v697 = vshrl.u32 %v696, 7
  %v698 = vsub.s32 1, %v697
  %v699 = vrot.slane %v630, %v698
  %701 = vbcast.lane.b32.xlu0 %v699, 256
  %v702 = vpop.permute.xlu0 %701
  %v703 = vlaneseq
  %v704 = vshrl.u32 %v703, 7
  %v705 = vsub.s32 2, %v704
  %v706 = vrot.slane %v630, %v705
  %708 = vbcast.lane.b32.xlu0 %v706, 256
  %v709 = vpop.permute.xlu0 %708
  %v710 = vlaneseq
  %v711 = vshrl.u32 %v710, 7
  %v712 = vsub.s32 3, %v711
  %v713 = vrot.slane %v630, %v712
  %715 = vbcast.lane.b32.xlu0 %v713, 256
  %v716 = vpop.permute.xlu0 %715
  %v717 = vlaneseq
  %v718 = vshrl.u32 %v717, 7
  %v719 = vsub.s32 4, %v718
  %v720 = vrot.slane %v630, %v719
  %722 = vbcast.lane.b32.xlu0 %v720, 256
  %v723 = vpop.permute.xlu0 %722
  %v724 = vlaneseq
  %v725 = vshrl.u32 %v724, 7
  %v726 = vsub.s32 5, %v725
  %v727 = vrot.slane %v630, %v726
  %729 = vbcast.lane.b32.xlu0 %v727, 256
  %v730 = vpop.permute.xlu0 %729
  %v731 = vlaneseq
  %v732 = vshrl.u32 %v731, 7
  %v733 = vsub.s32 6, %v732
  %v734 = vrot.slane %v630, %v733
  %736 = vbcast.lane.b32.xlu0 %v734, 256
  %v737 = vpop.permute.xlu0 %736
  %v738 = vlaneseq
  %v739 = vshrl.u32 %v738, 7
  %v740 = vsub.s32 7, %v739
  %v741 = vrot.slane %v630, %v740
  %743 = vbcast.lane.b32.xlu0 %v741, 256
  %v744 = vpop.permute.xlu0 %743
  %v761 = vadd.f32 %v613, %v639
  %v762 = vadd.f32 %v614, %v646
  %v763 = vadd.f32 %v615, %v653
  %v764 = vadd.f32 %v616, %v660
  %v765 = vadd.f32 %v617, %v667
  %v766 = vadd.f32 %v618, %v674
  %v767 = vadd.f32 %v619, %v681
  %v768 = vadd.f32 %v620, %v688
  %v769 = vadd.f32 %v621, %v695
  %v770 = vadd.f32 %v622, %v702
  %v771 = vadd.f32 %v623, %v709
  %v772 = vadd.f32 %v624, %v716
  %v773 = vadd.f32 %v625, %v723
  %v774 = vadd.f32 %v626, %v730
  %v775 = vadd.f32 %v627, %v737
  %v776 = vadd.f32 %v628, %v744
  %793 = vset.pattern.permute.xlu0 0
  %794 = vperm.xlu0 %793, %v761
  %v795 = vpop.permute.xlu0 %794
  %796 = vset.pattern.permute.xlu0 0
  %797 = vperm.xlu0 %796, %v762
  %v798 = vpop.permute.xlu0 %797
  %799 = vset.pattern.permute.xlu0 0
  %800 = vperm.xlu0 %799, %v763
  %v801 = vpop.permute.xlu0 %800
  %802 = vset.pattern.permute.xlu0 0
  %803 = vperm.xlu0 %802, %v764
  %v804 = vpop.permute.xlu0 %803
  %805 = vset.pattern.permute.xlu0 0
  %806 = vperm.xlu0 %805, %v765
  %v807 = vpop.permute.xlu0 %806
  %808 = vset.pattern.permute.xlu0 0
  %809 = vperm.xlu0 %808, %v766
  %v810 = vpop.permute.xlu0 %809
  %811 = vset.pattern.permute.xlu0 0
  %812 = vperm.xlu0 %811, %v767
  %v813 = vpop.permute.xlu0 %812
  %814 = vset.pattern.permute.xlu0 0
  %815 = vperm.xlu0 %814, %v768
  %v816 = vpop.permute.xlu0 %815
  %817 = vset.pattern.permute.xlu0 0
  %818 = vperm.xlu0 %817, %v769
  %v819 = vpop.permute.xlu0 %818
  %820 = vset.pattern.permute.xlu0 0
  %821 = vperm.xlu0 %820, %v770
  %v822 = vpop.permute.xlu0 %821
  %823 = vset.pattern.permute.xlu0 0
  %824 = vperm.xlu0 %823, %v771
  %v825 = vpop.permute.xlu0 %824
  %826 = vset.pattern.permute.xlu0 0
  %827 = vperm.xlu0 %826, %v772
  %v828 = vpop.permute.xlu0 %827
  %829 = vset.pattern.permute.xlu0 0
  %830 = vperm.xlu0 %829, %v773
  %v831 = vpop.permute.xlu0 %830
  %832 = vset.pattern.permute.xlu0 0
  %833 = vperm.xlu0 %832, %v774
  %v834 = vpop.permute.xlu0 %833
  %835 = vset.pattern.permute.xlu0 0
  %836 = vperm.xlu0 %835, %v775
  %v837 = vpop.permute.xlu0 %836
  %838 = vset.pattern.permute.xlu0 0
  %839 = vperm.xlu0 %838, %v776
  %v840 = vpop.permute.xlu0 %839
  %v841 = vlaneseq
  %v842 = vand.u32 %v841, 127
  %v843 = vlaneseq
  %v844 = vshrl.u32 %v843, 7
  %v845 = vsub.s32 %v842, %v844
  %v846 = vrot.slane %v795, %v845
  %v847 = vlaneseq
  %v848 = vshrl.u32 %v847, 7
  %v849 = vsub.s32 %v842, %v848
  %v850 = vrot.slane %v798, %v849
  %v851 = vlaneseq
  %v852 = vshrl.u32 %v851, 7
  %v853 = vsub.s32 %v842, %v852
  %v854 = vrot.slane %v801, %v853
  %v855 = vlaneseq
  %v856 = vshrl.u32 %v855, 7
  %v857 = vsub.s32 %v842, %v856
  %v858 = vrot.slane %v804, %v857
  %v859 = vlaneseq
  %v860 = vshrl.u32 %v859, 7
  %v861 = vsub.s32 %v842, %v860
  %v862 = vrot.slane %v807, %v861
  %v863 = vlaneseq
  %v864 = vshrl.u32 %v863, 7
  %v865 = vsub.s32 %v842, %v864
  %v866 = vrot.slane %v810, %v865
  %v867 = vlaneseq
  %v868 = vshrl.u32 %v867, 7
  %v869 = vsub.s32 %v842, %v868
  %v870 = vrot.slane %v813, %v869
  %v871 = vlaneseq
  %v872 = vshrl.u32 %v871, 7
  %v873 = vsub.s32 %v842, %v872
  %v874 = vrot.slane %v816, %v873
  %v875 = vlaneseq
  %v876 = vshrl.u32 %v875, 7
  %v877 = vsub.s32 %v842, %v876
  %v878 = vrot.slane %v819, %v877
  %v879 = vlaneseq
  %v880 = vshrl.u32 %v879, 7
  %v881 = vsub.s32 %v842, %v880
  %v882 = vrot.slane %v822, %v881
  %v883 = vlaneseq
  %v884 = vshrl.u32 %v883, 7
  %v885 = vsub.s32 %v842, %v884
  %v886 = vrot.slane %v825, %v885
  %v887 = vlaneseq
  %v888 = vshrl.u32 %v887, 7
  %v889 = vsub.s32 %v842, %v888
  %v890 = vrot.slane %v828, %v889
  %v891 = vlaneseq
  %v892 = vshrl.u32 %v891, 7
  %v893 = vsub.s32 %v842, %v892
  %v894 = vrot.slane %v831, %v893
  %v895 = vlaneseq
  %v896 = vshrl.u32 %v895, 7
  %v897 = vsub.s32 %v842, %v896
  %v898 = vrot.slane %v834, %v897
  %v899 = vlaneseq
  %v900 = vshrl.u32 %v899, 7
  %v901 = vsub.s32 %v842, %v900
  %v902 = vrot.slane %v837, %v901
  %v903 = vlaneseq
  %v904 = vshrl.u32 %v903, 7
  %v905 = vsub.s32 %v842, %v904
  %v906 = vrot.slane %v840, %v905
  %vm907 = vcmask 1041409
  %v908 = vsel %vm907, %v850, %v846
  %vm909 = vcmask 1042434
  %v910 = vsel %vm909, %v854, %v908
  %vm911 = vcmask 1043459
  %v912 = vsel %vm911, %v858, %v910
  %vm913 = vcmask 1044484
  %v914 = vsel %vm913, %v862, %v912
  %vm915 = vcmask 1045509
  %v916 = vsel %vm915, %v866, %v914
  %vm917 = vcmask 1046534
  %v918 = vsel %vm917, %v870, %v916
  %vm919 = vcmask 1047559
  %v920 = vsel %vm919, %v874, %v918
  %v921 = vsel %vm907, %v882, %v878
  %v922 = vsel %vm909, %v886, %v921
  %v923 = vsel %vm911, %v890, %v922
  %v924 = vsel %vm913, %v894, %v923
  %v925 = vsel %vm915, %v898, %v924
  %v926 = vsel %vm917, %v902, %v925
  %v927 = vsel %vm919, %v906, %v926
  %vm930 = vcmask 64512
  %v931 = vsel %vm930, %v920, -inf
  %932 = vmax.xlane.f32.xlu0 %v931
  %v933 = vpop.xlane.xlu0 %932
  %v934 = vsel %vm930, %v927, -inf
  %935 = vmax.xlane.f32.xlu0 %v934
  %v936 = vpop.xlane.xlu0 %935
  %v939 = vlaneseq
  %v940 = vshrl.u32 %v939, 7
  %v941 = vsub.s32 0, %v940
  %v942 = vrot.slane %v933, %v941
  %v943 = vlaneseq
  %v944 = vshrl.u32 %v943, 7
  %v945 = vsub.s32 1, %v944
  %v946 = vrot.slane %v933, %v945
  %v947 = vlaneseq
  %v948 = vshrl.u32 %v947, 7
  %v949 = vsub.s32 2, %v948
  %v950 = vrot.slane %v933, %v949
  %v951 = vlaneseq
  %v952 = vshrl.u32 %v951, 7
  %v953 = vsub.s32 3, %v952
  %v954 = vrot.slane %v933, %v953
  %v955 = vlaneseq
  %v956 = vshrl.u32 %v955, 7
  %v957 = vsub.s32 4, %v956
  %v958 = vrot.slane %v933, %v957
  %v959 = vlaneseq
  %v960 = vshrl.u32 %v959, 7
  %v961 = vsub.s32 5, %v960
  %v962 = vrot.slane %v933, %v961
  %v963 = vlaneseq
  %v964 = vshrl.u32 %v963, 7
  %v965 = vsub.s32 6, %v964
  %v966 = vrot.slane %v933, %v965
  %v967 = vlaneseq
  %v968 = vshrl.u32 %v967, 7
  %v969 = vsub.s32 7, %v968
  %v970 = vrot.slane %v933, %v969
  %v971 = vlaneseq
  %v972 = vshrl.u32 %v971, 7
  %v973 = vsub.s32 0, %v972
  %v974 = vrot.slane %v936, %v973
  %v975 = vlaneseq
  %v976 = vshrl.u32 %v975, 7
  %v977 = vsub.s32 1, %v976
  %v978 = vrot.slane %v936, %v977
  %v979 = vlaneseq
  %v980 = vshrl.u32 %v979, 7
  %v981 = vsub.s32 2, %v980
  %v982 = vrot.slane %v936, %v981
  %v983 = vlaneseq
  %v984 = vshrl.u32 %v983, 7
  %v985 = vsub.s32 3, %v984
  %v986 = vrot.slane %v936, %v985
  %v987 = vlaneseq
  %v988 = vshrl.u32 %v987, 7
  %v989 = vsub.s32 4, %v988
  %v990 = vrot.slane %v936, %v989
  %v991 = vlaneseq
  %v992 = vshrl.u32 %v991, 7
  %v993 = vsub.s32 5, %v992
  %v994 = vrot.slane %v936, %v993
  %v995 = vlaneseq
  %v996 = vshrl.u32 %v995, 7
  %v997 = vsub.s32 6, %v996
  %v998 = vrot.slane %v936, %v997
  %v999 = vlaneseq
  %v1000 = vshrl.u32 %v999, 7
  %v1001 = vsub.s32 7, %v1000
  %v1002 = vrot.slane %v936, %v1001
  %v1019 = vsub.f32 %v761, %v942
  %v1020 = vsub.f32 %v762, %v946
  %v1021 = vsub.f32 %v763, %v950
  %v1022 = vsub.f32 %v764, %v954
  %v1023 = vsub.f32 %v765, %v958
  %v1024 = vsub.f32 %v766, %v962
  %v1025 = vsub.f32 %v767, %v966
  %v1026 = vsub.f32 %v768, %v970
  %v1027 = vsub.f32 %v769, %v974
  %v1028 = vsub.f32 %v770, %v978
  %v1029 = vsub.f32 %v771, %v982
  %v1030 = vsub.f32 %v772, %v986
  %v1031 = vsub.f32 %v773, %v990
  %v1032 = vsub.f32 %v774, %v994
  %v1033 = vsub.f32 %v775, %v998
  %v1034 = vsub.f32 %v776, %v1002
  %v1035 = vmul.f32 %v1019, 1.442695
  %v1036 = vpow.pop %v1035
  %v1037 = vmul.f32 %v1020, 1.442695
  %v1038 = vpow.pop %v1037
  %v1039 = vmul.f32 %v1021, 1.442695
  %v1040 = vpow.pop %v1039
  %v1041 = vmul.f32 %v1022, 1.442695
  %v1042 = vpow.pop %v1041
  %v1043 = vmul.f32 %v1023, 1.442695
  %v1044 = vpow.pop %v1043
  %v1045 = vmul.f32 %v1024, 1.442695
  %v1046 = vpow.pop %v1045
  %v1047 = vmul.f32 %v1025, 1.442695
  %v1048 = vpow.pop %v1047
  %v1049 = vmul.f32 %v1026, 1.442695
  %v1050 = vpow.pop %v1049
  %v1051 = vmul.f32 %v1027, 1.442695
  %v1052 = vpow.pop %v1051
  %v1053 = vmul.f32 %v1028, 1.442695
  %v1054 = vpow.pop %v1053
  %v1055 = vmul.f32 %v1029, 1.442695
  %v1056 = vpow.pop %v1055
  %v1057 = vmul.f32 %v1030, 1.442695
  %v1058 = vpow.pop %v1057
  %v1059 = vmul.f32 %v1031, 1.442695
  %v1060 = vpow.pop %v1059
  %v1061 = vmul.f32 %v1032, 1.442695
  %v1062 = vpow.pop %v1061
  %v1063 = vmul.f32 %v1033, 1.442695
  %v1064 = vpow.pop %v1063
  %v1065 = vmul.f32 %v1034, 1.442695
  %v1066 = vpow.pop %v1065
  %1083 = vset.pattern.permute.xlu0 0
  %1084 = vperm.xlu0 %1083, %v1036
  %v1085 = vpop.permute.xlu0 %1084
  %1086 = vset.pattern.permute.xlu0 0
  %1087 = vperm.xlu0 %1086, %v1038
  %v1088 = vpop.permute.xlu0 %1087
  %1089 = vset.pattern.permute.xlu0 0
  %1090 = vperm.xlu0 %1089, %v1040
  %v1091 = vpop.permute.xlu0 %1090
  %1092 = vset.pattern.permute.xlu0 0
  %1093 = vperm.xlu0 %1092, %v1042
  %v1094 = vpop.permute.xlu0 %1093
  %1095 = vset.pattern.permute.xlu0 0
  %1096 = vperm.xlu0 %1095, %v1044
  %v1097 = vpop.permute.xlu0 %1096
  %1098 = vset.pattern.permute.xlu0 0
  %1099 = vperm.xlu0 %1098, %v1046
  %v1100 = vpop.permute.xlu0 %1099
  %1101 = vset.pattern.permute.xlu0 0
  %1102 = vperm.xlu0 %1101, %v1048
  %v1103 = vpop.permute.xlu0 %1102
  %1104 = vset.pattern.permute.xlu0 0
  %1105 = vperm.xlu0 %1104, %v1050
  %v1106 = vpop.permute.xlu0 %1105
  %1107 = vset.pattern.permute.xlu0 0
  %1108 = vperm.xlu0 %1107, %v1052
  %v1109 = vpop.permute.xlu0 %1108
  %1110 = vset.pattern.permute.xlu0 0
  %1111 = vperm.xlu0 %1110, %v1054
  %v1112 = vpop.permute.xlu0 %1111
  %1113 = vset.pattern.permute.xlu0 0
  %1114 = vperm.xlu0 %1113, %v1056
  %v1115 = vpop.permute.xlu0 %1114
  %1116 = vset.pattern.permute.xlu0 0
  %1117 = vperm.xlu0 %1116, %v1058
  %v1118 = vpop.permute.xlu0 %1117
  %1119 = vset.pattern.permute.xlu0 0
  %1120 = vperm.xlu0 %1119, %v1060
  %v1121 = vpop.permute.xlu0 %1120
  %1122 = vset.pattern.permute.xlu0 0
  %1123 = vperm.xlu0 %1122, %v1062
  %v1124 = vpop.permute.xlu0 %1123
  %1125 = vset.pattern.permute.xlu0 0
  %1126 = vperm.xlu0 %1125, %v1064
  %v1127 = vpop.permute.xlu0 %1126
  %1128 = vset.pattern.permute.xlu0 0
  %1129 = vperm.xlu0 %1128, %v1066
  %v1130 = vpop.permute.xlu0 %1129
  %v1131 = vlaneseq
  %v1132 = vshrl.u32 %v1131, 7
  %v1133 = vsub.s32 %v842, %v1132
  %v1134 = vrot.slane %v1085, %v1133
  %v1135 = vlaneseq
  %v1136 = vshrl.u32 %v1135, 7
  %v1137 = vsub.s32 %v842, %v1136
  %v1138 = vrot.slane %v1088, %v1137
  %v1139 = vlaneseq
  %v1140 = vshrl.u32 %v1139, 7
  %v1141 = vsub.s32 %v842, %v1140
  %v1142 = vrot.slane %v1091, %v1141
  %v1143 = vlaneseq
  %v1144 = vshrl.u32 %v1143, 7
  %v1145 = vsub.s32 %v842, %v1144
  %v1146 = vrot.slane %v1094, %v1145
  %v1147 = vlaneseq
  %v1148 = vshrl.u32 %v1147, 7
  %v1149 = vsub.s32 %v842, %v1148
  %v1150 = vrot.slane %v1097, %v1149
  %v1151 = vlaneseq
  %v1152 = vshrl.u32 %v1151, 7
  %v1153 = vsub.s32 %v842, %v1152
  %v1154 = vrot.slane %v1100, %v1153
  %v1155 = vlaneseq
  %v1156 = vshrl.u32 %v1155, 7
  %v1157 = vsub.s32 %v842, %v1156
  %v1158 = vrot.slane %v1103, %v1157
  %v1159 = vlaneseq
  %v1160 = vshrl.u32 %v1159, 7
  %v1161 = vsub.s32 %v842, %v1160
  %v1162 = vrot.slane %v1106, %v1161
  %v1163 = vlaneseq
  %v1164 = vshrl.u32 %v1163, 7
  %v1165 = vsub.s32 %v842, %v1164
  %v1166 = vrot.slane %v1109, %v1165
  %v1167 = vlaneseq
  %v1168 = vshrl.u32 %v1167, 7
  %v1169 = vsub.s32 %v842, %v1168
  %v1170 = vrot.slane %v1112, %v1169
  %v1171 = vlaneseq
  %v1172 = vshrl.u32 %v1171, 7
  %v1173 = vsub.s32 %v842, %v1172
  %v1174 = vrot.slane %v1115, %v1173
  %v1175 = vlaneseq
  %v1176 = vshrl.u32 %v1175, 7
  %v1177 = vsub.s32 %v842, %v1176
  %v1178 = vrot.slane %v1118, %v1177
  %v1179 = vlaneseq
  %v1180 = vshrl.u32 %v1179, 7
  %v1181 = vsub.s32 %v842, %v1180
  %v1182 = vrot.slane %v1121, %v1181
  %v1183 = vlaneseq
  %v1184 = vshrl.u32 %v1183, 7
  %v1185 = vsub.s32 %v842, %v1184
  %v1186 = vrot.slane %v1124, %v1185
  %v1187 = vlaneseq
  %v1188 = vshrl.u32 %v1187, 7
  %v1189 = vsub.s32 %v842, %v1188
  %v1190 = vrot.slane %v1127, %v1189
  %v1191 = vlaneseq
  %v1192 = vshrl.u32 %v1191, 7
  %v1193 = vsub.s32 %v842, %v1192
  %v1194 = vrot.slane %v1130, %v1193
  %v1195 = vsel %vm907, %v1138, %v1134
  %v1196 = vsel %vm909, %v1142, %v1195
  %v1197 = vsel %vm911, %v1146, %v1196
  %v1198 = vsel %vm913, %v1150, %v1197
  %v1199 = vsel %vm915, %v1154, %v1198
  %v1200 = vsel %vm917, %v1158, %v1199
  %v1201 = vsel %vm919, %v1162, %v1200
  %v1202 = vsel %vm907, %v1170, %v1166
  %v1203 = vsel %vm909, %v1174, %v1202
  %v1204 = vsel %vm911, %v1178, %v1203
  %v1205 = vsel %vm913, %v1182, %v1204
  %v1206 = vsel %vm915, %v1186, %v1205
  %v1207 = vsel %vm917, %v1190, %v1206
  %v1208 = vsel %vm919, %v1194, %v1207
  %v1211 = vsel %vm930, %v1201, 0.0
  %1212 = vadd.xlane.f32.xlu0 %v1211
  %v1213 = vpop.xlane.xlu0 %1212
  %v1214 = vsel %vm930, %v1208, 0.0
  %1215 = vadd.xlane.f32.xlu0 %v1214
  %v1216 = vpop.xlane.xlu0 %1215
  %v1217 = vrcp.pop %v1213
  %v1218 = vrcp.pop %v1216
  %v1221 = vlaneseq
  %v1222 = vshrl.u32 %v1221, 7
  %v1223 = vsub.s32 0, %v1222
  %v1224 = vrot.slane %v1217, %v1223
  %v1225 = vlaneseq
  %v1226 = vshrl.u32 %v1225, 7
  %v1227 = vsub.s32 1, %v1226
  %v1228 = vrot.slane %v1217, %v1227
  %v1229 = vlaneseq
  %v1230 = vshrl.u32 %v1229, 7
  %v1231 = vsub.s32 2, %v1230
  %v1232 = vrot.slane %v1217, %v1231
  %v1233 = vlaneseq
  %v1234 = vshrl.u32 %v1233, 7
  %v1235 = vsub.s32 3, %v1234
  %v1236 = vrot.slane %v1217, %v1235
  %v1237 = vlaneseq
  %v1238 = vshrl.u32 %v1237, 7
  %v1239 = vsub.s32 4, %v1238
  %v1240 = vrot.slane %v1217, %v1239
  %v1241 = vlaneseq
  %v1242 = vshrl.u32 %v1241, 7
  %v1243 = vsub.s32 5, %v1242
  %v1244 = vrot.slane %v1217, %v1243
  %v1245 = vlaneseq
  %v1246 = vshrl.u32 %v1245, 7
  %v1247 = vsub.s32 6, %v1246
  %v1248 = vrot.slane %v1217, %v1247
  %v1249 = vlaneseq
  %v1250 = vshrl.u32 %v1249, 7
  %v1251 = vsub.s32 7, %v1250
  %v1252 = vrot.slane %v1217, %v1251
  %v1253 = vlaneseq
  %v1254 = vshrl.u32 %v1253, 7
  %v1255 = vsub.s32 0, %v1254
  %v1256 = vrot.slane %v1218, %v1255
  %v1257 = vlaneseq
  %v1258 = vshrl.u32 %v1257, 7
  %v1259 = vsub.s32 1, %v1258
  %v1260 = vrot.slane %v1218, %v1259
  %v1261 = vlaneseq
  %v1262 = vshrl.u32 %v1261, 7
  %v1263 = vsub.s32 2, %v1262
  %v1264 = vrot.slane %v1218, %v1263
  %v1265 = vlaneseq
  %v1266 = vshrl.u32 %v1265, 7
  %v1267 = vsub.s32 3, %v1266
  %v1268 = vrot.slane %v1218, %v1267
  %v1269 = vlaneseq
  %v1270 = vshrl.u32 %v1269, 7
  %v1271 = vsub.s32 4, %v1270
  %v1272 = vrot.slane %v1218, %v1271
  %v1273 = vlaneseq
  %v1274 = vshrl.u32 %v1273, 7
  %v1275 = vsub.s32 5, %v1274
  %v1276 = vrot.slane %v1218, %v1275
  %v1277 = vlaneseq
  %v1278 = vshrl.u32 %v1277, 7
  %v1279 = vsub.s32 6, %v1278
  %v1280 = vrot.slane %v1218, %v1279
  %v1281 = vlaneseq
  %v1282 = vshrl.u32 %v1281, 7
  %v1283 = vsub.s32 7, %v1282
  %v1284 = vrot.slane %v1218, %v1283
  %v1301 = vmul.f32 %v1036, %v1224
  %v1302 = vmul.f32 %v1038, %v1228
  %v1303 = vmul.f32 %v1040, %v1232
  %v1304 = vmul.f32 %v1042, %v1236
  %v1305 = vmul.f32 %v1044, %v1240
  %v1306 = vmul.f32 %v1046, %v1244
  %v1307 = vmul.f32 %v1048, %v1248
  %v1308 = vmul.f32 %v1050, %v1252
  %v1309 = vmul.f32 %v1052, %v1256
  %v1310 = vmul.f32 %v1054, %v1260
  %v1311 = vmul.f32 %v1056, %v1264
  %v1312 = vmul.f32 %v1058, %v1268
  %v1313 = vmul.f32 %v1060, %v1272
  %v1314 = vmul.f32 %v1062, %v1276
  %v1315 = vmul.f32 %v1064, %v1280
  %v1316 = vmul.f32 %v1066, %v1284
  %1318 = vset.pattern.permute.xlu0 0
  %1319 = vperm.xlu0 %1318, %v1301
  %v1320 = vpop.permute.xlu0 %1319
  %1323 = vset.pattern.permute.xlu0 0
  %1324 = vperm.xlu0 %1323, %v1302
  %v1325 = vpop.permute.xlu0 %1324
  %1328 = vset.pattern.permute.xlu0 0
  %1329 = vperm.xlu0 %1328, %v1303
  %v1330 = vpop.permute.xlu0 %1329
  %1333 = vset.pattern.permute.xlu0 0
  %1334 = vperm.xlu0 %1333, %v1304
  %v1335 = vpop.permute.xlu0 %1334
  %1338 = vset.pattern.permute.xlu0 0
  %1339 = vperm.xlu0 %1338, %v1305
  %v1340 = vpop.permute.xlu0 %1339
  %1343 = vset.pattern.permute.xlu0 0
  %1344 = vperm.xlu0 %1343, %v1306
  %v1345 = vpop.permute.xlu0 %1344
  %1348 = vset.pattern.permute.xlu0 0
  %1349 = vperm.xlu0 %1348, %v1307
  %v1350 = vpop.permute.xlu0 %1349
  %1353 = vset.pattern.permute.xlu0 0
  %1354 = vperm.xlu0 %1353, %v1308
  %v1355 = vpop.permute.xlu0 %1354
  %1358 = vset.pattern.permute.xlu0 0
  %1359 = vperm.xlu0 %1358, %v1309
  %v1360 = vpop.permute.xlu0 %1359
  %1363 = vset.pattern.permute.xlu0 0
  %1364 = vperm.xlu0 %1363, %v1310
  %v1365 = vpop.permute.xlu0 %1364
  %1368 = vset.pattern.permute.xlu0 0
  %1369 = vperm.xlu0 %1368, %v1311
  %v1370 = vpop.permute.xlu0 %1369
  %1373 = vset.pattern.permute.xlu0 0
  %1374 = vperm.xlu0 %1373, %v1312
  %v1375 = vpop.permute.xlu0 %1374
  %1378 = vset.pattern.permute.xlu0 0
  %1379 = vperm.xlu0 %1378, %v1313
  %v1380 = vpop.permute.xlu0 %1379
  %1383 = vset.pattern.permute.xlu0 0
  %1384 = vperm.xlu0 %1383, %v1314
  %v1385 = vpop.permute.xlu0 %1384
  %1388 = vset.pattern.permute.xlu0 0
  %1389 = vperm.xlu0 %1388, %v1315
  %v1390 = vpop.permute.xlu0 %1389
  %1393 = vset.pattern.permute.xlu0 0
  %1394 = vperm.xlu0 %1393, %v1316
  %v1395 = vpop.permute.xlu0 %1394
  %v1397 = vmul.f32 %v1320, %v33
  %v1398 = vmul.f32 %v1325, %v34
  %v1399 = vmul.f32 %v1330, %v35
  %v1400 = vmul.f32 %v1335, %v36
  %v1401 = vmul.f32 %v1340, %v37
  %v1402 = vmul.f32 %v1345, %v38
  %v1403 = vmul.f32 %v1350, %v39
  %v1404 = vmul.f32 %v1355, %v40
  %v1405 = vmul.f32 %v1360, %v41
  %v1406 = vmul.f32 %v1365, %v42
  %v1407 = vmul.f32 %v1370, %v43
  %v1408 = vmul.f32 %v1375, %v44
  %v1409 = vmul.f32 %v1380, %v45
  %v1410 = vmul.f32 %v1385, %v46
  %v1411 = vmul.f32 %v1390, %v47
  %v1412 = vmul.f32 %v1395, %v48
  %v1413 = vsel %vm72, %v1397, 0.0
  %v1414 = vrot.slane %v1413, 4
  %v1415 = vadd.f32 %v1413, %v1414
  %v1416 = vrot.slane %v1415, 2
  %v1417 = vadd.f32 %v1415, %v1416
  %v1418 = vrot.slane %v1417, 1
  %v1419 = vadd.f32 %v1417, %v1418
  %v1420 = vsel %vm72, %v1398, 0.0
  %v1421 = vrot.slane %v1420, 4
  %v1422 = vadd.f32 %v1420, %v1421
  %v1423 = vrot.slane %v1422, 2
  %v1424 = vadd.f32 %v1422, %v1423
  %v1425 = vrot.slane %v1424, 1
  %v1426 = vadd.f32 %v1424, %v1425
  %v1427 = vsel %vm72, %v1399, 0.0
  %v1428 = vrot.slane %v1427, 4
  %v1429 = vadd.f32 %v1427, %v1428
  %v1430 = vrot.slane %v1429, 2
  %v1431 = vadd.f32 %v1429, %v1430
  %v1432 = vrot.slane %v1431, 1
  %v1433 = vadd.f32 %v1431, %v1432
  %v1434 = vsel %vm72, %v1400, 0.0
  %v1435 = vrot.slane %v1434, 4
  %v1436 = vadd.f32 %v1434, %v1435
  %v1437 = vrot.slane %v1436, 2
  %v1438 = vadd.f32 %v1436, %v1437
  %v1439 = vrot.slane %v1438, 1
  %v1440 = vadd.f32 %v1438, %v1439
  %v1441 = vsel %vm72, %v1401, 0.0
  %v1442 = vrot.slane %v1441, 4
  %v1443 = vadd.f32 %v1441, %v1442
  %v1444 = vrot.slane %v1443, 2
  %v1445 = vadd.f32 %v1443, %v1444
  %v1446 = vrot.slane %v1445, 1
  %v1447 = vadd.f32 %v1445, %v1446
  %v1448 = vsel %vm72, %v1402, 0.0
  %v1449 = vrot.slane %v1448, 4
  %v1450 = vadd.f32 %v1448, %v1449
  %v1451 = vrot.slane %v1450, 2
  %v1452 = vadd.f32 %v1450, %v1451
  %v1453 = vrot.slane %v1452, 1
  %v1454 = vadd.f32 %v1452, %v1453
  %v1455 = vsel %vm72, %v1403, 0.0
  %v1456 = vrot.slane %v1455, 4
  %v1457 = vadd.f32 %v1455, %v1456
  %v1458 = vrot.slane %v1457, 2
  %v1459 = vadd.f32 %v1457, %v1458
  %v1460 = vrot.slane %v1459, 1
  %v1461 = vadd.f32 %v1459, %v1460
  %v1462 = vsel %vm72, %v1404, 0.0
  %v1463 = vrot.slane %v1462, 4
  %v1464 = vadd.f32 %v1462, %v1463
  %v1465 = vrot.slane %v1464, 2
  %v1466 = vadd.f32 %v1464, %v1465
  %v1467 = vrot.slane %v1466, 1
  %v1468 = vadd.f32 %v1466, %v1467
  %v1469 = vsel %vm72, %v1405, 0.0
  %v1470 = vrot.slane %v1469, 4
  %v1471 = vadd.f32 %v1469, %v1470
  %v1472 = vrot.slane %v1471, 2
  %v1473 = vadd.f32 %v1471, %v1472
  %v1474 = vrot.slane %v1473, 1
  %v1475 = vadd.f32 %v1473, %v1474
  %v1476 = vsel %vm72, %v1406, 0.0
  %v1477 = vrot.slane %v1476, 4
  %v1478 = vadd.f32 %v1476, %v1477
  %v1479 = vrot.slane %v1478, 2
  %v1480 = vadd.f32 %v1478, %v1479
  %v1481 = vrot.slane %v1480, 1
  %v1482 = vadd.f32 %v1480, %v1481
  %v1483 = vsel %vm72, %v1407, 0.0
  %v1484 = vrot.slane %v1483, 4
  %v1485 = vadd.f32 %v1483, %v1484
  %v1486 = vrot.slane %v1485, 2
  %v1487 = vadd.f32 %v1485, %v1486
  %v1488 = vrot.slane %v1487, 1
  %v1489 = vadd.f32 %v1487, %v1488
  %v1490 = vsel %vm72, %v1408, 0.0
  %v1491 = vrot.slane %v1490, 4
  %v1492 = vadd.f32 %v1490, %v1491
  %v1493 = vrot.slane %v1492, 2
  %v1494 = vadd.f32 %v1492, %v1493
  %v1495 = vrot.slane %v1494, 1
  %v1496 = vadd.f32 %v1494, %v1495
  %v1497 = vsel %vm72, %v1409, 0.0
  %v1498 = vrot.slane %v1497, 4
  %v1499 = vadd.f32 %v1497, %v1498
  %v1500 = vrot.slane %v1499, 2
  %v1501 = vadd.f32 %v1499, %v1500
  %v1502 = vrot.slane %v1501, 1
  %v1503 = vadd.f32 %v1501, %v1502
  %v1504 = vsel %vm72, %v1410, 0.0
  %v1505 = vrot.slane %v1504, 4
  %v1506 = vadd.f32 %v1504, %v1505
  %v1507 = vrot.slane %v1506, 2
  %v1508 = vadd.f32 %v1506, %v1507
  %v1509 = vrot.slane %v1508, 1
  %v1510 = vadd.f32 %v1508, %v1509
  %v1511 = vsel %vm72, %v1411, 0.0
  %v1512 = vrot.slane %v1511, 4
  %v1513 = vadd.f32 %v1511, %v1512
  %v1514 = vrot.slane %v1513, 2
  %v1515 = vadd.f32 %v1513, %v1514
  %v1516 = vrot.slane %v1515, 1
  %v1517 = vadd.f32 %v1515, %v1516
  %v1518 = vsel %vm72, %v1412, 0.0
  %v1519 = vrot.slane %v1518, 4
  %v1520 = vadd.f32 %v1518, %v1519
  %v1521 = vrot.slane %v1520, 2
  %v1522 = vadd.f32 %v1520, %v1521
  %v1523 = vrot.slane %v1522, 1
  %v1524 = vadd.f32 %v1522, %v1523
  %v1525 = vpack.c.bf16 %v1419, %v1419
  %v1526 = vpack.c.bf16 %v1426, %v1426
  %v1527 = vpack.c.bf16 %v1433, %v1433
  %v1528 = vpack.c.bf16 %v1440, %v1440
  %v1529 = vpack.c.bf16 %v1447, %v1447
  %v1530 = vpack.c.bf16 %v1454, %v1454
  %v1531 = vpack.c.bf16 %v1461, %v1461
  %v1532 = vpack.c.bf16 %v1468, %v1468
  %v1533 = vpack.c.bf16 %v1475, %v1475
  %v1534 = vpack.c.bf16 %v1482, %v1482
  %v1535 = vpack.c.bf16 %v1489, %v1489
  %v1536 = vpack.c.bf16 %v1496, %v1496
  %v1537 = vpack.c.bf16 %v1503, %v1503
  %v1538 = vpack.c.bf16 %v1510, %v1510
  %v1539 = vpack.c.bf16 %v1517, %v1517
  %v1540 = vpack.c.bf16 %v1524, %v1524
  %v1541 = vld [vmem:[%s6] sm:$0xf]
  %v1542 = vld [vmem:[%s6 + $0x4] sm:$0xf]
  %v1543 = vld [vmem:[%s7] sm:$0xf]
  %v1544 = vld [vmem:[%s7 + $0x4] sm:$0xf]
  %v1553 = vunpack.c.l.b16 %v1533
  %v1554 = vunpack.c.l.b16 %v1534
  %v1555 = vunpack.c.l.b16 %v1535
  %v1556 = vunpack.c.l.b16 %v1536
  %v1557 = vunpack.c.l.b16 %v1537
  %v1558 = vunpack.c.l.b16 %v1538
  %v1559 = vunpack.c.l.b16 %v1539
  %v1560 = vunpack.c.l.b16 %v1540
  %v1561 = vsel %vm907, %v1554, %v1553
  %v1562 = vsel %vm909, %v1555, %v1561
  %v1563 = vsel %vm911, %v1556, %v1562
  %v1564 = vsel %vm913, %v1557, %v1563
  %v1565 = vsel %vm915, %v1558, %v1564
  %v1566 = vsel %vm917, %v1559, %v1565
  %v1567 = vsel %vm919, %v1560, %v1566
  %v1568 = vpack.c.b16 %v1567, %v1567
  %v1571 = vunpack.c.l.b16 %v1543
  %v1572 = vunpack.c.l.b16 %v1544
  %v1573 = vpack.c.b16 %v1572, %v1571
  %v1576 = vsel %vm72, %v1568, 0
  %1578 = vmatprep.subr.bf16.mxu0 0
  %1579 = vmatpush1.bf16.msra.mxu0 0
  %1580 = vmatprep.subr.bf16.mxu0 0
  %1581 = vmatpush1.bf16.msra.mxu0 0
  %1582 = vmatprep.subr.bf16.mxu0 0
  %1583 = vmatpush1.bf16.msra.mxu0 0
  %1584 = vmatprep.subr.bf16.mxu0 0
  %1585 = vmatpush1.bf16.msra.mxu0 0
  %1586 = vmatprep.subr.bf16.mxu0 0
  %1587 = vmatpush1.bf16.msra.mxu0 0
  %1588 = vmatprep.subr.bf16.mxu0 0
  %1589 = vmatpush1.bf16.msra.mxu0 0
  %1590 = vmatprep.subr.bf16.mxu0 0
  %1591 = vmatpush1.bf16.msra.mxu0 0
  %1592 = vmatprep.subr.bf16.mxu0 0
  %1593 = vmatpush1.bf16.msra.mxu0 %v1573
  %1594 = vmatprep.subr.bf16.mxu0 0
  %1595 = vmatpush2.bf16.msra.mxu0 0
  %1596 = vmatprep.subr.bf16.mxu0 0
  %1597 = vmatpush2.bf16.msra.mxu0 0
  %1598 = vmatprep.subr.bf16.mxu0 0
  %1599 = vmatpush2.bf16.msra.mxu0 0
  %1600 = vmatprep.subr.bf16.mxu0 0
  %1601 = vmatpush2.bf16.msra.mxu0 0
  %1602 = vmatprep.subr.bf16.mxu0 0
  %1603 = vmatpush2.bf16.msra.mxu0 0
  %1604 = vmatprep.subr.bf16.mxu0 0
  %1605 = vmatpush2.bf16.msra.mxu0 0
  %1606 = vmatprep.subr.bf16.mxu0 0
  %1607 = vmatpush2.bf16.msra.mxu0 0
  %1608 = vmatprep.subr.bf16.mxu0 0
  %1609 = vmatpush2.bf16.msra.mxu0 0
  %1610 = vmatprep.mubr.bf16.mxu0 0
  %1611 = vmatmul.mubr.bf16.gmra.mxu0 %v1576
  %v1612 = vpop.f32.mrf.mxu0
  %v1613 = vadd.f32 0.0, %v1612
  %v1614 = vpop.f32.mrf.mxu0
  %v1615 = vpop.f32.mrf.mxu0
  %v1616 = vpop.f32.mrf.mxu0
  %1617 = vdwg.mxu0
  %v1626 = vunpack.c.l.b16 %v1525
  %v1627 = vunpack.c.l.b16 %v1526
  %v1628 = vunpack.c.l.b16 %v1527
  %v1629 = vunpack.c.l.b16 %v1528
  %v1630 = vunpack.c.l.b16 %v1529
  %v1631 = vunpack.c.l.b16 %v1530
  %v1632 = vunpack.c.l.b16 %v1531
  %v1633 = vunpack.c.l.b16 %v1532
  %v1634 = vsel %vm907, %v1627, %v1626
  %v1635 = vsel %vm909, %v1628, %v1634
  %v1636 = vsel %vm911, %v1629, %v1635
  %v1637 = vsel %vm913, %v1630, %v1636
  %v1638 = vsel %vm915, %v1631, %v1637
  %v1639 = vsel %vm917, %v1632, %v1638
  %v1640 = vsel %vm919, %v1633, %v1639
  %v1641 = vpack.c.b16 %v1640, %v1640
  %v1644 = vunpack.c.l.b16 %v1541
  %v1645 = vunpack.c.l.b16 %v1542
  %v1646 = vpack.c.b16 %v1645, %v1644
  %v1649 = vsel %vm72, %v1641, 0
  %1651 = vmatprep.subr.bf16.mxu0 0
  %1652 = vmatpush1.bf16.msra.mxu0 0
  %1653 = vmatprep.subr.bf16.mxu0 0
  %1654 = vmatpush1.bf16.msra.mxu0 0
  %1655 = vmatprep.subr.bf16.mxu0 0
  %1656 = vmatpush1.bf16.msra.mxu0 0
  %1657 = vmatprep.subr.bf16.mxu0 0
  %1658 = vmatpush1.bf16.msra.mxu0 0
  %1659 = vmatprep.subr.bf16.mxu0 0
  %1660 = vmatpush1.bf16.msra.mxu0 0
  %1661 = vmatprep.subr.bf16.mxu0 0
  %1662 = vmatpush1.bf16.msra.mxu0 0
  %1663 = vmatprep.subr.bf16.mxu0 0
  %1664 = vmatpush1.bf16.msra.mxu0 0
  %1665 = vmatprep.subr.bf16.mxu0 0
  %1666 = vmatpush1.bf16.msra.mxu0 %v1646
  %1667 = vmatprep.subr.bf16.mxu0 0
  %1668 = vmatpush2.bf16.msra.mxu0 0
  %1669 = vmatprep.subr.bf16.mxu0 0
  %1670 = vmatpush2.bf16.msra.mxu0 0
  %1671 = vmatprep.subr.bf16.mxu0 0
  %1672 = vmatpush2.bf16.msra.mxu0 0
  %1673 = vmatprep.subr.bf16.mxu0 0
  %1674 = vmatpush2.bf16.msra.mxu0 0
  %1675 = vmatprep.subr.bf16.mxu0 0
  %1676 = vmatpush2.bf16.msra.mxu0 0
  %1677 = vmatprep.subr.bf16.mxu0 0
  %1678 = vmatpush2.bf16.msra.mxu0 0
  %1679 = vmatprep.subr.bf16.mxu0 0
  %1680 = vmatpush2.bf16.msra.mxu0 0
  %1681 = vmatprep.subr.bf16.mxu0 0
  %1682 = vmatpush2.bf16.msra.mxu0 0
  %1683 = vmatprep.mubr.bf16.mxu0 0
  %1684 = vmatmul.mubr.bf16.gmra.mxu0 %v1649
  %v1685 = vpop.f32.mrf.mxu0
  %v1686 = vadd.f32 %v1613, %v1685
  %v1687 = vpop.f32.mrf.mxu0
  %v1688 = vpop.f32.mrf.mxu0
  %v1689 = vpop.f32.mrf.mxu0
  %1690 = vdwg.mxu0
  %v1691 = vld [vmem:[%s8] sm:$0x1]
  %v1693 = vlaneseq
  %v1694 = vshrl.u32 %v1693, 7
  %v1695 = vsub.s32 0, %v1694
  %v1696 = vrot.slane %v1691, %v1695
  %v1698 = vadd.f32 %v1686, %v1696
  %1699 = vst [vmem:[%s9] sm:$0xff] %v1698
  // Predicated region
  $region38: #{edit_att_decoder_forward.2} parent=0 // pred_check
    _
  $region39: #{edit_att_decoder_forward.2} parent=0 // pred_check_branch
    %1701 = sbr.rel (0) target = $region41
  $region40: #{edit_att_decoder_forward.2} parent=0 // pred_region
    _
  $region41: #{edit_att_decoder_forward.2} parent=0 // pred_fallthru
    _
  // Predicated region
  $region42: #{edit_att_decoder_forward.2} parent=0 // pred_check
    _
  $region43: #{edit_att_decoder_forward.2} parent=0 // pred_check_branch
    %1703 = sbr.rel (0) target = $region45
  $region44: #{edit_att_decoder_forward.2} parent=0 // pred_region
    _
  $region45: #{edit_att_decoder_forward.2} parent=0 // pred_fallthru
    _

// kernel: edit_att_decoder_forward.3
$region0: #{edit_att_decoder_forward.3}
  #allocation0 [shape = 'u32[]', space=smem, size = 0x4, offset = 0x4, fixed_abs, tag = 'smem constant byte address 0x4 - core index']
  #allocation1 [shape = 'u32[144,128]{1,0:T(1,128)}', space=vmem, size = 0x12000, scoped, tag = 'internal scratch']
  %s0 = inlined_call_operand.vmem [shape: f32[6,8,96], index: 0, kind: input, shape index: {}]
  %s1 = inlined_call_operand.vmem [shape: f32[6,8,32], index: 1, kind: input, shape index: {}]
  %s2 = inlined_call_operand.vmem [shape: f32[2,8,96], index: 2, kind: input, shape index: {}]
  %s3 = inlined_call_operand.vmem [shape: f32[2,8,32], index: 3, kind: input, shape index: {}]
  %s4 = inlined_call_operand.vmem [shape: bf16[1,32,96], index: 4, kind: input, shape index: {}]
  %s5 = inlined_call_operand.vmem [shape: f32[1,1,96], index: 5, kind: input, shape index: {}]
  %s6 = inlined_call_operand.vmem [shape: f32[8,16,16], index: 6, kind: input, shape index: {}]
  %s7 = inlined_call_operand.vmem [shape: f32[8,16,32], index: 7, kind: input, shape index: {}]
  %s8 = inlined_call_operand.vmem [shape: f32[8,16], index: 8, kind: input, shape index: {}]
  %s9 = inlined_call_operand.vmem [shape: f32[8,32], index: 9, kind: input, shape index: {}]
  %s10 = inlined_call_operand.vmem [shape: bf16[32,48], index: 10, kind: input, shape index: {}]
  %s11 = inlined_call_operand.vmem [shape: f32[1,16], index: 11, kind: input, shape index: {}]
  %s12 = inlined_call_operand.vmem [shape: bf16[32,128], index: 12, kind: input, shape index: {}]
  %s13 = inlined_call_operand.hbm [shape: f32[6,8,16], index: 13, kind: output, shape index: {0}]
  %s14 = inlined_call_operand.hbm [shape: f32[2,8,32], index: 14, kind: output, shape index: {1}]
  %s15 = inlined_call_operand.hbm [shape: f32[8,16], index: 15, kind: output, shape index: {2}]
  %s16 = inlined_call_operand.hbm [shape: f32[8,32], index: 16, kind: output, shape index: {3}]
  %17 = xla_tuple %s13, %s14, %s15, %s16
  %s18 = sld [smem:[#allocation0]]
  $region86: #{edit_att_decoder_forward.3} parent=0
    _
  %s20 = ssub.s32 1, %s18
  %s21 = scalar_select 0, %s20, %s18
  $region1: #{edit_att_decoder_forward.3} parent=0
    #allocation2 [shape = 'u8[24576]{0}', space=vmem, size = 0x6000, scoped, tag = 'output window, operand 0, single buffered']
    #allocation3 [shape = 's32[1]{0}', space=sflag, size = 0x4, scoped, tag = 'scoped memory for edit_att_decoder_forward.3']
    #allocation4 [shape = 'u8[8192]{0}', space=vmem, size = 0x2000, scoped, tag = 'output window, operand 1, single buffered']
    #allocation5 [shape = 's32[1]{0}', space=sflag, size = 0x4, scoped, tag = 'scoped memory for edit_att_decoder_forward.3']
    #allocation6 [shape = 'u8[4096]{0}', space=vmem, size = 0x1000, scoped, tag = 'output window, operand 2, single buffered']
    #allocation7 [shape = 'u8[4096]{0}', space=vmem, size = 0x1000, scoped, tag = 'output window, operand 3, single buffered']
    #allocation8 [shape = 's32[1]{0}', space=sflag, size = 0x4, scoped, tag = 'scoped memory for edit_att_decoder_forward.3']
    %22 = vsyncpa [#allocation3], 0
    %23 = vsyncpa [#allocation5], 0
    %24 = vsyncpa [#allocation8], 0
    // Predicated region
    $region2: #{edit_att_decoder_forward.3} parent=1 // pred_check
      _
    $region3: #{edit_att_decoder_forward.3} parent=1 // pred_check_branch
      %26 = sbr.rel (0) target = $region5
    $region4: #{edit_att_decoder_forward.3} parent=1 // pred_region
      _
    $region5: #{edit_att_decoder_forward.3} parent=1 // pred_fallthru
      _
    // Predicated region
    $region6: #{edit_att_decoder_forward.3} parent=1 // pred_check
      _
    $region7: #{edit_att_decoder_forward.3} parent=1 // pred_check_branch
      %28 = sbr.rel (0) target = $region9
    $region8: #{edit_att_decoder_forward.3} parent=1 // pred_region
      _
    $region9: #{edit_att_decoder_forward.3} parent=1 // pred_fallthru
      _
    // Predicated region
    $region10: #{edit_att_decoder_forward.3} parent=1 // pred_check
      _
    $region11: #{edit_att_decoder_forward.3} parent=1 // pred_check_branch
      %30 = sbr.rel (0) target = $region13
    $region12: #{edit_att_decoder_forward.3} parent=1 // pred_region
      _
    $region13: #{edit_att_decoder_forward.3} parent=1 // pred_fallthru
      _
    // Predicated region
    $region14: #{edit_att_decoder_forward.3} parent=1 // pred_check
      _
    $region15: #{edit_att_decoder_forward.3} parent=1 // pred_check_branch
      %32 = sbr.rel (0) target = $region17
    $region16: #{edit_att_decoder_forward.3} parent=1 // pred_region
      _
    $region17: #{edit_att_decoder_forward.3} parent=1 // pred_fallthru
      _
    // Predicated region
    $region18: #{edit_att_decoder_forward.3} parent=1 // pred_check
      _
    $region19: #{edit_att_decoder_forward.3} parent=1 // pred_check_branch
      %34 = sbr.rel (0) target = $region21
    $region20: #{edit_att_decoder_forward.3} parent=1 // pred_region
      _
    $region21: #{edit_att_decoder_forward.3} parent=1 // pred_fallthru
      _
    // Predicated region
    $region22: #{edit_att_decoder_forward.3} parent=1 // pred_check
      _
    $region23: #{edit_att_decoder_forward.3} parent=1 // pred_check_branch
      %36 = sbr.rel (0) target = $region25
    $region24: #{edit_att_decoder_forward.3} parent=1 // pred_region
      _
    $region25: #{edit_att_decoder_forward.3} parent=1 // pred_fallthru
      _
    // Predicated region
    $region26: #{edit_att_decoder_forward.3} parent=1 // pred_check
      _
    $region27: #{edit_att_decoder_forward.3} parent=1 // pred_check_branch
      %38 = sbr.rel (0) target = $region29
    $region28: #{edit_att_decoder_forward.3} parent=1 // pred_region
      _
    $region29: #{edit_att_decoder_forward.3} parent=1 // pred_fallthru
      _
    // Predicated region
    $region30: #{edit_att_decoder_forward.3} parent=1 // pred_check
      _
    $region31: #{edit_att_decoder_forward.3} parent=1 // pred_check_branch
      %40 = sbr.rel (0) target = $region33
    $region32: #{edit_att_decoder_forward.3} parent=1 // pred_region
      _
    $region33: #{edit_att_decoder_forward.3} parent=1 // pred_fallthru
      _
    // Predicated region
    $region34: #{edit_att_decoder_forward.3} parent=1 // pred_check
      _
    $region35: #{edit_att_decoder_forward.3} parent=1 // pred_check_branch
      %42 = sbr.rel (0) target = $region37
    $region36: #{edit_att_decoder_forward.3} parent=1 // pred_region
      _
    $region37: #{edit_att_decoder_forward.3} parent=1 // pred_fallthru
      _
    // Predicated region
    $region38: #{edit_att_decoder_forward.3} parent=1 // pred_check
      _
    $region39: #{edit_att_decoder_forward.3} parent=1 // pred_check_branch
      %44 = sbr.rel (0) target = $region41
    $region40: #{edit_att_decoder_forward.3} parent=1 // pred_region
      _
    $region41: #{edit_att_decoder_forward.3} parent=1 // pred_fallthru
      _
    // Predicated region
    $region42: #{edit_att_decoder_forward.3} parent=1 // pred_check
      _
    $region43: #{edit_att_decoder_forward.3} parent=1 // pred_check_branch
      %46 = sbr.rel (0) target = $region45
    $region44: #{edit_att_decoder_forward.3} parent=1 // pred_region
      _
    $region45: #{edit_att_decoder_forward.3} parent=1 // pred_fallthru
      _
    // Predicated region
    $region46: #{edit_att_decoder_forward.3} parent=1 // pred_check
      _
    $region47: #{edit_att_decoder_forward.3} parent=1 // pred_check_branch
      %48 = sbr.rel (0) target = $region49
    $region48: #{edit_att_decoder_forward.3} parent=1 // pred_region
      _
    $region49: #{edit_att_decoder_forward.3} parent=1 // pred_fallthru
      _
    // Predicated region
    $region50: #{edit_att_decoder_forward.3} parent=1 // pred_check
      _
    $region51: #{edit_att_decoder_forward.3} parent=1 // pred_check_branch
      %50 = sbr.rel (0) target = $region53
    $region52: #{edit_att_decoder_forward.3} parent=1 // pred_region
      _
    $region53: #{edit_att_decoder_forward.3} parent=1 // pred_fallthru
      _
    %v52 = vld [vmem:[%s8] sm:$0xff]
    %v53 = vsub.f32 1.0, %v52
    %v54 = vmul.f32 %v52, -1000000.0
    %v55 = vld [vmem:[%s9] sm:$0xff]
    %v56 = vpack.c.bf16 %v55, %v55
    %v57 = vld [vmem:[%s12] sm:$0xf]
    %v58 = vld [vmem:[%s12 + $0x4] sm:$0xf]
    %v59 = vld [vmem:[%s12 + $0x8] sm:$0xf]
    %v60 = vld [vmem:[%s12 + $0xc] sm:$0xf]
    %v65 = vunpack.c.l.b16 %v57
    %v66 = vunpack.c.l.b16 %v58
    %v67 = vunpack.c.l.b16 %v59
    %v68 = vunpack.c.l.b16 %v60
    %v69 = vpack.c.b16 %v66, %v65
    %v70 = vpack.c.b16 %v68, %v67
    %vm73 = vcmask 261120
    %v75 = vsel %vm73, %v56, 0
    %77 = vmatprep.subr.bf16.mxu0 0
    %78 = vmatpush1.bf16.msra.mxu0 0
    %79 = vmatprep.subr.bf16.mxu0 0
    %80 = vmatpush1.bf16.msra.mxu0 0
    %81 = vmatprep.subr.bf16.mxu0 0
    %82 = vmatpush1.bf16.msra.mxu0 0
    %83 = vmatprep.subr.bf16.mxu0 0
    %84 = vmatpush1.bf16.msra.mxu0 0
    %85 = vmatprep.subr.bf16.mxu0 0
    %86 = vmatpush1.bf16.msra.mxu0 0
    %87 = vmatprep.subr.bf16.mxu0 0
    %88 = vmatpush1.bf16.msra.mxu0 0
    %89 = vmatprep.subr.bf16.mxu0 0
    %90 = vmatpush1.bf16.msra.mxu0 %v70
    %91 = vmatprep.subr.bf16.mxu0 0
    %92 = vmatpush1.bf16.msra.mxu0 %v69
    %93 = vmatprep.subr.bf16.mxu0 0
    %94 = vmatpush2.bf16.msra.mxu0 0
    %95 = vmatprep.subr.bf16.mxu0 0
    %96 = vmatpush2.bf16.msra.mxu0 0
    %97 = vmatprep.subr.bf16.mxu0 0
    %98 = vmatpush2.bf16.msra.mxu0 0
    %99 = vmatprep.subr.bf16.mxu0 0
    %100 = vmatpush2.bf16.msra.mxu0 0
    %101 = vmatprep.subr.bf16.mxu0 0
    %102 = vmatpush2.bf16.msra.mxu0 0
    %103 = vmatprep.subr.bf16.mxu0 0
    %104 = vmatpush2.bf16.msra.mxu0 0
    %105 = vmatprep.subr.bf16.mxu0 0
    %106 = vmatpush2.bf16.msra.mxu0 0
    %107 = vmatprep.subr.bf16.mxu0 0
    %108 = vmatpush2.bf16.msra.mxu0 0
    %109 = vmatprep.mubr.bf16.mxu0 0
    %110 = vmatmul.mubr.bf16.gmra.mxu0 %v75
    %v111 = vpop.f32.mrf.mxu0
    %v112 = vadd.f32 0.0, %v111
    %v113 = vpop.f32.mrf.mxu0
    %v114 = vpop.f32.mrf.mxu0
    %v115 = vpop.f32.mrf.mxu0
    %116 = vdwg.mxu0
    %v117 = vld [vmem:[%s0] sm:$0xff]
    %v118 = vadd.f32 %v117, %v112
    %v119 = vld [vmem:[%s2] sm:$0xff]
    %v120 = vld [vmem:[%s3] sm:$0xff]
    %v121 = vadd.f32 %v118, %v119
    %v122 = vxor.u32 %v121, 2147483648
    %v123 = vmul.f32 %v122, 1.442695
    %v124 = vpow.pop %v123
    %v125 = vadd.f32 %v124, 1.0
    %v126 = vrcp.pop %v125
    %v127 = vmul.f32 1.0, %v126
    %129 = vrot.lane.b32.xlu0 %v119, 64
    %v130 = vpop.permute.xlu0 %129
    %v132 = vmul.f32 %v127, %v130
    %134 = vrot.lane.b32.xlu0 %v132, 64
    %v135 = vpop.permute.xlu0 %134
    %v137 = vadd.f32 %v118, %v135
    %v138 = vtanh.pop %v137
    %v139 = vsub.f32 1.0, %v127
    %141 = vrot.lane.b32.xlu0 %v138, 96
    %v142 = vpop.permute.xlu0 %141
    %v144 = vmul.f32 %v139, %v142
    %146 = vrot.lane.b32.xlu0 %v120, 32
    %v147 = vpop.permute.xlu0 %146
    %v149 = vmul.f32 %v127, %v147
    %v150 = vadd.f32 %v144, %v149
    %v151 = vpack.c.bf16 %v150, %v150
    %v152 = vld [vmem:[%s4] sm:$0xf]
    %v153 = vld [vmem:[%s4 + $0x4] sm:$0xf]
    %v154 = vld [vmem:[%s4 + $0x8] sm:$0xf]
    %v155 = vld [vmem:[%s4 + $0xc] sm:$0xf]
    %v156 = vld [vmem:[%s5] sm:$0x1]
    %v158 = vlaneseq
    %v159 = vshrl.u32 %v158, 7
    %v160 = vsub.s32 0, %v159
    %v161 = vrot.slane %v156, %v160
    %164 = vrot.lane.b32.xlu0 %v151, 96
    %v165 = vpop.permute.xlu0 %164
    %v170 = vunpack.c.l.b16 %v152
    %v171 = vunpack.c.l.b16 %v153
    %v172 = vunpack.c.l.b16 %v154
    %v173 = vunpack.c.l.b16 %v155
    %v174 = vpack.c.b16 %v171, %v170
    %v175 = vpack.c.b16 %v173, %v172
    %v179 = vsel %vm73, %v165, 0
    %181 = vmatprep.subr.bf16.mxu0 0
    %182 = vmatpush1.bf16.msra.mxu0 0
    %183 = vmatprep.subr.bf16.mxu0 0
    %184 = vmatpush1.bf16.msra.mxu0 0
    %185 = vmatprep.subr.bf16.mxu0 0
    %186 = vmatpush1.bf16.msra.mxu0 0
    %187 = vmatprep.subr.bf16.mxu0 0
    %188 = vmatpush1.bf16.msra.mxu0 0
    %189 = vmatprep.subr.bf16.mxu0 0
    %190 = vmatpush1.bf16.msra.mxu0 0
    %191 = vmatprep.subr.bf16.mxu0 0
    %192 = vmatpush1.bf16.msra.mxu0 0
    %193 = vmatprep.subr.bf16.mxu0 0
    %194 = vmatpush1.bf16.msra.mxu0 %v175
    %195 = vmatprep.subr.bf16.mxu0 0
    %196 = vmatpush1.bf16.msra.mxu0 %v174
    %197 = vmatprep.subr.bf16.mxu0 0
    %198 = vmatpush2.bf16.msra.mxu0 0
    %199 = vmatprep.subr.bf16.mxu0 0
    %200 = vmatpush2.bf16.msra.mxu0 0
    %201 = vmatprep.subr.bf16.mxu0 0
    %202 = vmatpush2.bf16.msra.mxu0 0
    %203 = vmatprep.subr.bf16.mxu0 0
    %204 = vmatpush2.bf16.msra.mxu0 0
    %205 = vmatprep.subr.bf16.mxu0 0
    %206 = vmatpush2.bf16.msra.mxu0 0
    %207 = vmatprep.subr.bf16.mxu0 0
    %208 = vmatpush2.bf16.msra.mxu0 0
    %209 = vmatprep.subr.bf16.mxu0 0
    %210 = vmatpush2.bf16.msra.mxu0 0
    %211 = vmatprep.subr.bf16.mxu0 0
    %212 = vmatpush2.bf16.msra.mxu0 0
    %213 = vmatprep.mubr.bf16.mxu0 0
    %214 = vmatmul.mubr.bf16.gmra.mxu0 %v179
    %v215 = vpop.f32.mrf.mxu0
    %v216 = vadd.f32 %v161, %v215
    %v217 = vpop.f32.mrf.mxu0
    %v218 = vpop.f32.mrf.mxu0
    %v219 = vpop.f32.mrf.mxu0
    %220 = vdwg.mxu0
    %s221 = scalar_lea.vmem %s2, 8
    %v222 = vld [vmem:[%s221] sm:$0xff]
    %s223 = scalar_lea.vmem %s3, 8
    %v224 = vld [vmem:[%s223] sm:$0xff]
    %v225 = vadd.f32 %v216, %v222
    %v226 = vxor.u32 %v225, 2147483648
    %v227 = vmul.f32 %v226, 1.442695
    %v228 = vpow.pop %v227
    %v229 = vadd.f32 %v228, 1.0
    %v230 = vrcp.pop %v229
    %v231 = vmul.f32 1.0, %v230
    %233 = vrot.lane.b32.xlu0 %v222, 64
    %v234 = vpop.permute.xlu0 %233
    %v236 = vmul.f32 %v231, %v234
    %238 = vrot.lane.b32.xlu0 %v236, 64
    %v239 = vpop.permute.xlu0 %238
    %v241 = vadd.f32 %v216, %v239
    %v242 = vtanh.pop %v241
    %v243 = vsub.f32 1.0, %v231
    %245 = vrot.lane.b32.xlu0 %v242, 96
    %v246 = vpop.permute.xlu0 %245
    %v248 = vmul.f32 %v243, %v246
    %250 = vrot.lane.b32.xlu0 %v224, 32
    %v251 = vpop.permute.xlu0 %250
    %v253 = vmul.f32 %v231, %v251
    %v254 = vadd.f32 %v248, %v253
    %v255 = vpack.c.bf16 %v254, %v254
    %v256 = vld [vmem:[%s10] sm:$0xf]
    %v257 = vld [vmem:[%s10 + $0x4] sm:$0xf]
    %v258 = vld [vmem:[%s10 + $0x8] sm:$0xf]
    %v259 = vld [vmem:[%s10 + $0xc] sm:$0xf]
    %261 = vrot.lane.b32.xlu0 %v255, 96
    %v262 = vpop.permute.xlu0 %261
    %v267 = vunpack.c.l.b16 %v256
    %v268 = vunpack.c.l.b16 %v257
    %v269 = vunpack.c.l.b16 %v258
    %v270 = vunpack.c.l.b16 %v259
    %v271 = vpack.c.b16 %v268, %v267
    %v272 = vpack.c.b16 %v270, %v269
    %v276 = vsel %vm73, %v262, 0
    %278 = vmatprep.subr.bf16.mxu0 0
    %279 = vmatpush1.bf16.msra.mxu0 0
    %280 = vmatprep.subr.bf16.mxu0 0
    %281 = vmatpush1.bf16.msra.mxu0 0
    %282 = vmatprep.subr.bf16.mxu0 0
    %283 = vmatpush1.bf16.msra.mxu0 0
    %284 = vmatprep.subr.bf16.mxu0 0
    %285 = vmatpush1.bf16.msra.mxu0 0
    %286 = vmatprep.subr.bf16.mxu0 0
    %287 = vmatpush1.bf16.msra.mxu0 0
    %288 = vmatprep.subr.bf16.mxu0 0
    %289 = vmatpush1.bf16.msra.mxu0 0
    %290 = vmatprep.subr.bf16.mxu0 0
    %291 = vmatpush1.bf16.msra.mxu0 %v272
    %292 = vmatprep.subr.bf16.mxu0 0
    %293 = vmatpush1.bf16.msra.mxu0 %v271
    %294 = vmatprep.subr.bf16.mxu0 0
    %295 = vmatpush2.bf16.msra.mxu0 0
    %296 = vmatprep.subr.bf16.mxu0 0
    %297 = vmatpush2.bf16.msra.mxu0 0
    %298 = vmatprep.subr.bf16.mxu0 0
    %299 = vmatpush2.bf16.msra.mxu0 0
    %300 = vmatprep.subr.bf16.mxu0 0
    %301 = vmatpush2.bf16.msra.mxu0 0
    %302 = vmatprep.subr.bf16.mxu0 0
    %303 = vmatpush2.bf16.msra.mxu0 0
    %304 = vmatprep.subr.bf16.mxu0 0
    %305 = vmatpush2.bf16.msra.mxu0 0
    %306 = vmatprep.subr.bf16.mxu0 0
    %307 = vmatpush2.bf16.msra.mxu0 0
    %308 = vmatprep.subr.bf16.mxu0 0
    %309 = vmatpush2.bf16.msra.mxu0 0
    %310 = vmatprep.mubr.bf16.mxu0 0
    %311 = vmatmul.mubr.bf16.gmra.mxu0 %v276
    %v312 = vpop.f32.mrf.mxu0
    %v313 = vadd.f32 0.0, %v312
    %v314 = vpop.f32.mrf.mxu0
    %v315 = vpop.f32.mrf.mxu0
    %v316 = vpop.f32.mrf.mxu0
    %317 = vdwg.mxu0
    %v318 = vld [vmem:[%s6] sm:$0xff]
    %v319 = vld [vmem:[%s6 + $0x8] sm:$0xff]
    %v320 = vld [vmem:[%s6 + $0x10] sm:$0xff]
    %v321 = vld [vmem:[%s6 + $0x18] sm:$0xff]
    %v322 = vld [vmem:[%s6 + $0x20] sm:$0xff]
    %v323 = vld [vmem:[%s6 + $0x28] sm:$0xff]
    %v324 = vld [vmem:[%s6 + $0x30] sm:$0xff]
    %v325 = vld [vmem:[%s6 + $0x38] sm:$0xff]
    %v326 = vld [vmem:[%s6 + $0x40] sm:$0xff]
    %v327 = vld [vmem:[%s6 + $0x48] sm:$0xff]
    %v328 = vld [vmem:[%s6 + $0x50] sm:$0xff]
    %v329 = vld [vmem:[%s6 + $0x58] sm:$0xff]
    %v330 = vld [vmem:[%s6 + $0x60] sm:$0xff]
    %v331 = vld [vmem:[%s6 + $0x68] sm:$0xff]
    %v332 = vld [vmem:[%s6 + $0x70] sm:$0xff]
    %v333 = vld [vmem:[%s6 + $0x78] sm:$0xff]
    %v335 = vcombine.high %v313, %v313
    %v337 = vunpack.c.l.s4 1966171168
    %v338 = vunpack.c.0.s8 %v337
    %v339 = vlaneseq
    %v340 = vshrl.u32 %v339, 7
    %v341 = vsub.s32 %v338, %v340
    %v342 = vrot.slane %v313, %v341
    %v344 = vunpack.c.l.s4 1966171168
    %v345 = vunpack.c.0.s8 %v344
    %v346 = vlaneseq
    %v347 = vshrl.u32 %v346, 7
    %v348 = vsub.s32 %v345, %v347
    %v349 = vrot.slane %v335, %v348
    %v350 = vcombine.high %v342, %v342
    %v351 = vcombine.high %v349, %v349
    %v353 = vunpack.c.l.s4 1966171168
    %v354 = vunpack.c.0.s8 %v353
    %v355 = vlaneseq
    %v356 = vshrl.u32 %v355, 7
    %v357 = vsub.s32 %v354, %v356
    %v358 = vrot.slane %v342, %v357
    %v360 = vunpack.c.l.s4 1966171168
    %v361 = vunpack.c.0.s8 %v360
    %v362 = vlaneseq
    %v363 = vshrl.u32 %v362, 7
    %v364 = vsub.s32 %v361, %v363
    %v365 = vrot.slane %v349, %v364
    %v367 = vunpack.c.l.s4 1966171168
    %v368 = vunpack.c.0.s8 %v367
    %v369 = vlaneseq
    %v370 = vshrl.u32 %v369, 7
    %v371 = vsub.s32 %v368, %v370
    %v372 = vrot.slane %v350, %v371
    %v374 = vunpack.c.l.s4 1966171168
    %v375 = vunpack.c.0.s8 %v374
    %v376 = vlaneseq
    %v377 = vshrl.u32 %v376, 7
    %v378 = vsub.s32 %v375, %v377
    %v379 = vrot.slane %v351, %v378
    %v380 = vcombine.high %v358, %v358
    %v381 = vcombine.high %v365, %v365
    %v382 = vcombine.high %v372, %v372
    %v383 = vcombine.high %v379, %v379
    %v384 = vlaneseq
    %v385 = vshrl.u32 %v384, 7
    %v386 = vsub.s32 0, %v385
    %v387 = vrot.slane %v358, %v386
    %v388 = vlaneseq
    %v389 = vshrl.u32 %v388, 7
    %v390 = vsub.s32 0, %v389
    %v391 = vrot.slane %v372, %v390
    %v392 = vlaneseq
    %v393 = vshrl.u32 %v392, 7
    %v394 = vsub.s32 0, %v393
    %v395 = vrot.slane %v380, %v394
    %v396 = vlaneseq
    %v397 = vshrl.u32 %v396, 7
    %v398 = vsub.s32 0, %v397
    %v399 = vrot.slane %v382, %v398
    %v400 = vlaneseq
    %v401 = vshrl.u32 %v400, 7
    %v402 = vsub.s32 0, %v401
    %v403 = vrot.slane %v365, %v402
    %v404 = vlaneseq
    %v405 = vshrl.u32 %v404, 7
    %v406 = vsub.s32 0, %v405
    %v407 = vrot.slane %v379, %v406
    %v408 = vlaneseq
    %v409 = vshrl.u32 %v408, 7
    %v410 = vsub.s32 0, %v409
    %v411 = vrot.slane %v381, %v410
    %v412 = vlaneseq
    %v413 = vshrl.u32 %v412, 7
    %v414 = vsub.s32 0, %v413
    %v415 = vrot.slane %v383, %v414
    %v424 = vadd.f32 %v318, %v387
    %v425 = vadd.f32 %v319, %v387
    %v426 = vadd.f32 %v320, %v391
    %v427 = vadd.f32 %v321, %v391
    %v428 = vadd.f32 %v322, %v395
    %v429 = vadd.f32 %v323, %v395
    %v430 = vadd.f32 %v324, %v399
    %v431 = vadd.f32 %v325, %v399
    %v432 = vadd.f32 %v326, %v403
    %v433 = vadd.f32 %v327, %v403
    %v434 = vadd.f32 %v328, %v407
    %v435 = vadd.f32 %v329, %v407
    %v436 = vadd.f32 %v330, %v411
    %v437 = vadd.f32 %v331, %v411
    %v438 = vadd.f32 %v332, %v415
    %v439 = vadd.f32 %v333, %v415
    %v440 = vtanh.pop %v424
    %v441 = vtanh.pop %v425
    %v442 = vtanh.pop %v426
    %v443 = vtanh.pop %v427
    %v444 = vtanh.pop %v428
    %v445 = vtanh.pop %v429
    %v446 = vtanh.pop %v430
    %v447 = vtanh.pop %v431
    %v448 = vtanh.pop %v432
    %v449 = vtanh.pop %v433
    %v450 = vtanh.pop %v434
    %v451 = vtanh.pop %v435
    %v452 = vtanh.pop %v436
    %v453 = vtanh.pop %v437
    %v454 = vtanh.pop %v438
    %v455 = vtanh.pop %v439
    %v456 = vld [vmem:[%s11] sm:$0x1]
    %v458 = vlaneseq
    %v459 = vshrl.u32 %v458, 7
    %v460 = vsub.s32 0, %v459
    %v461 = vrot.slane %v456, %v460
    %v463 = vmul.f32 %v440, %v461
    %v464 = vmul.f32 %v441, %v461
    %v465 = vmul.f32 %v442, %v461
    %v466 = vmul.f32 %v443, %v461
    %v467 = vmul.f32 %v444, %v461
    %v468 = vmul.f32 %v445, %v461
    %v469 = vmul.f32 %v446, %v461
    %v470 = vmul.f32 %v447, %v461
    %v471 = vmul.f32 %v448, %v461
    %v472 = vmul.f32 %v449, %v461
    %v473 = vmul.f32 %v450, %v461
    %v474 = vmul.f32 %v451, %v461
    %v475 = vmul.f32 %v452, %v461
    %v476 = vmul.f32 %v453, %v461
    %v477 = vmul.f32 %v454, %v461
    %v478 = vmul.f32 %v455, %v461
    %vm479 = vcmask 130048
    %v480 = vsel %vm479, %v463, 0.0
    %481 = vadd.xlane.f32.xlu0 %v480
    %v482 = vpop.xlane.xlu0 %481
    %v483 = vsel %vm479, %v464, 0.0
    %484 = vadd.xlane.f32.xlu0 %v483
    %v485 = vpop.xlane.xlu0 %484
    %v486 = vsel %vm479, %v465, 0.0
    %487 = vadd.xlane.f32.xlu0 %v486
    %v488 = vpop.xlane.xlu0 %487
    %v489 = vsel %vm479, %v466, 0.0
    %490 = vadd.xlane.f32.xlu0 %v489
    %v491 = vpop.xlane.xlu0 %490
    %v492 = vsel %vm479, %v467, 0.0
    %493 = vadd.xlane.f32.xlu0 %v492
    %v494 = vpop.xlane.xlu0 %493
    %v495 = vsel %vm479, %v468, 0.0
    %496 = vadd.xlane.f32.xlu0 %v495
    %v497 = vpop.xlane.xlu0 %496
    %v498 = vsel %vm479, %v469, 0.0
    %499 = vadd.xlane.f32.xlu0 %v498
    %v500 = vpop.xlane.xlu0 %499
    %v501 = vsel %vm479, %v470, 0.0
    %502 = vadd.xlane.f32.xlu0 %v501
    %v503 = vpop.xlane.xlu0 %502
    %v504 = vsel %vm479, %v471, 0.0
    %505 = vadd.xlane.f32.xlu0 %v504
    %v506 = vpop.xlane.xlu0 %505
    %v507 = vsel %vm479, %v472, 0.0
    %508 = vadd.xlane.f32.xlu0 %v507
    %v509 = vpop.xlane.xlu0 %508
    %v510 = vsel %vm479, %v473, 0.0
    %511 = vadd.xlane.f32.xlu0 %v510
    %v512 = vpop.xlane.xlu0 %511
    %v513 = vsel %vm479, %v474, 0.0
    %514 = vadd.xlane.f32.xlu0 %v513
    %v515 = vpop.xlane.xlu0 %514
    %v516 = vsel %vm479, %v475, 0.0
    %517 = vadd.xlane.f32.xlu0 %v516
    %v518 = vpop.xlane.xlu0 %517
    %v519 = vsel %vm479, %v476, 0.0
    %520 = vadd.xlane.f32.xlu0 %v519
    %v521 = vpop.xlane.xlu0 %520
    %v522 = vsel %vm479, %v477, 0.0
    %523 = vadd.xlane.f32.xlu0 %v522
    %v524 = vpop.xlane.xlu0 %523
    %v525 = vsel %vm479, %v478, 0.0
    %526 = vadd.xlane.f32.xlu0 %v525
    %v527 = vpop.xlane.xlu0 %526
    %v529 = vlaneseq
    %v530 = vshrl.u32 %v529, 7
    %v531 = vsub.s32 0, %v530
    %v532 = vrot.slane %v53, %v531
    %534 = vbcast.lane.b32.xlu0 %v532, 256
    %v535 = vpop.permute.xlu0 %534
    %s537 = sor.u32 256, 8
    %538 = vbcast.lane.b32.xlu0 %v532, %s537
    %v539 = vpop.permute.xlu0 %538
    %v540 = vlaneseq
    %v541 = vshrl.u32 %v540, 7
    %v542 = vsub.s32 1, %v541
    %v543 = vrot.slane %v53, %v542
    %545 = vbcast.lane.b32.xlu0 %v543, 256
    %v546 = vpop.permute.xlu0 %545
    %s548 = sor.u32 256, 8
    %549 = vbcast.lane.b32.xlu0 %v543, %s548
    %v550 = vpop.permute.xlu0 %549
    %v551 = vlaneseq
    %v552 = vshrl.u32 %v551, 7
    %v553 = vsub.s32 2, %v552
    %v554 = vrot.slane %v53, %v553
    %556 = vbcast.lane.b32.xlu0 %v554, 256
    %v557 = vpop.permute.xlu0 %556
    %s559 = sor.u32 256, 8
    %560 = vbcast.lane.b32.xlu0 %v554, %s559
    %v561 = vpop.permute.xlu0 %560
    %v562 = vlaneseq
    %v563 = vshrl.u32 %v562, 7
    %v564 = vsub.s32 3, %v563
    %v565 = vrot.slane %v53, %v564
    %567 = vbcast.lane.b32.xlu0 %v565, 256
    %v568 = vpop.permute.xlu0 %567
    %s570 = sor.u32 256, 8
    %571 = vbcast.lane.b32.xlu0 %v565, %s570
    %v572 = vpop.permute.xlu0 %571
    %v573 = vlaneseq
    %v574 = vshrl.u32 %v573, 7
    %v575 = vsub.s32 4, %v574
    %v576 = vrot.slane %v53, %v575
    %578 = vbcast.lane.b32.xlu0 %v576, 256
    %v579 = vpop.permute.xlu0 %578
    %s581 = sor.u32 256, 8
    %582 = vbcast.lane.b32.xlu0 %v576, %s581
    %v583 = vpop.permute.xlu0 %582
    %v584 = vlaneseq
    %v585 = vshrl.u32 %v584, 7
    %v586 = vsub.s32 5, %v585
    %v587 = vrot.slane %v53, %v586
    %589 = vbcast.lane.b32.xlu0 %v587, 256
    %v590 = vpop.permute.xlu0 %589
    %s592 = sor.u32 256, 8
    %593 = vbcast.lane.b32.xlu0 %v587, %s592
    %v594 = vpop.permute.xlu0 %593
    %v595 = vlaneseq
    %v596 = vshrl.u32 %v595, 7
    %v597 = vsub.s32 6, %v596
    %v598 = vrot.slane %v53, %v597
    %600 = vbcast.lane.b32.xlu0 %v598, 256
    %v601 = vpop.permute.xlu0 %600
    %s603 = sor.u32 256, 8
    %604 = vbcast.lane.b32.xlu0 %v598, %s603
    %v605 = vpop.permute.xlu0 %604
    %v606 = vlaneseq
    %v607 = vshrl.u32 %v606, 7
    %v608 = vsub.s32 7, %v607
    %v609 = vrot.slane %v53, %v608
    %611 = vbcast.lane.b32.xlu0 %v609, 256
    %v612 = vpop.permute.xlu0 %611
    %s614 = sor.u32 256, 8
    %615 = vbcast.lane.b32.xlu0 %v609, %s614
    %v616 = vpop.permute.xlu0 %615
    %v633 = vmul.f32 %v482, %v535
    %v634 = vmul.f32 %v485, %v539
    %v635 = vmul.f32 %v488, %v546
    %v636 = vmul.f32 %v491, %v550
    %v637 = vmul.f32 %v494, %v557
    %v638 = vmul.f32 %v497, %v561
    %v639 = vmul.f32 %v500, %v568
    %v640 = vmul.f32 %v503, %v572
    %v641 = vmul.f32 %v506, %v579
    %v642 = vmul.f32 %v509, %v583
    %v643 = vmul.f32 %v512, %v590
    %v644 = vmul.f32 %v515, %v594
    %v645 = vmul.f32 %v518, %v601
    %v646 = vmul.f32 %v521, %v605
    %v647 = vmul.f32 %v524, %v612
    %v648 = vmul.f32 %v527, %v616
    %v650 = vlaneseq
    %v651 = vshrl.u32 %v650, 7
    %v652 = vsub.s32 0, %v651
    %v653 = vrot.slane %v54, %v652
    %655 = vbcast.lane.b32.xlu0 %v653, 256
    %v656 = vpop.permute.xlu0 %655
    %s658 = sor.u32 256, 8
    %659 = vbcast.lane.b32.xlu0 %v653, %s658
    %v660 = vpop.permute.xlu0 %659
    %v661 = vlaneseq
    %v662 = vshrl.u32 %v661, 7
    %v663 = vsub.s32 1, %v662
    %v664 = vrot.slane %v54, %v663
    %666 = vbcast.lane.b32.xlu0 %v664, 256
    %v667 = vpop.permute.xlu0 %666
    %s669 = sor.u32 256, 8
    %670 = vbcast.lane.b32.xlu0 %v664, %s669
    %v671 = vpop.permute.xlu0 %670
    %v672 = vlaneseq
    %v673 = vshrl.u32 %v672, 7
    %v674 = vsub.s32 2, %v673
    %v675 = vrot.slane %v54, %v674
    %677 = vbcast.lane.b32.xlu0 %v675, 256
    %v678 = vpop.permute.xlu0 %677
    %s680 = sor.u32 256, 8
    %681 = vbcast.lane.b32.xlu0 %v675, %s680
    %v682 = vpop.permute.xlu0 %681
    %v683 = vlaneseq
    %v684 = vshrl.u32 %v683, 7
    %v685 = vsub.s32 3, %v684
    %v686 = vrot.slane %v54, %v685
    %688 = vbcast.lane.b32.xlu0 %v686, 256
    %v689 = vpop.permute.xlu0 %688
    %s691 = sor.u32 256, 8
    %692 = vbcast.lane.b32.xlu0 %v686, %s691
    %v693 = vpop.permute.xlu0 %692
    %v694 = vlaneseq
    %v695 = vshrl.u32 %v694, 7
    %v696 = vsub.s32 4, %v695
    %v697 = vrot.slane %v54, %v696
    %699 = vbcast.lane.b32.xlu0 %v697, 256
    %v700 = vpop.permute.xlu0 %699
    %s702 = sor.u32 256, 8
    %703 = vbcast.lane.b32.xlu0 %v697, %s702
    %v704 = vpop.permute.xlu0 %703
    %v705 = vlaneseq
    %v706 = vshrl.u32 %v705, 7
    %v707 = vsub.s32 5, %v706
    %v708 = vrot.slane %v54, %v707
    %710 = vbcast.lane.b32.xlu0 %v708, 256
    %v711 = vpop.permute.xlu0 %710
    %s713 = sor.u32 256, 8
    %714 = vbcast.lane.b32.xlu0 %v708, %s713
    %v715 = vpop.permute.xlu0 %714
    %v716 = vlaneseq
    %v717 = vshrl.u32 %v716, 7
    %v718 = vsub.s32 6, %v717
    %v719 = vrot.slane %v54, %v718
    %721 = vbcast.lane.b32.xlu0 %v719, 256
    %v722 = vpop.permute.xlu0 %721
    %s724 = sor.u32 256, 8
    %725 = vbcast.lane.b32.xlu0 %v719, %s724
    %v726 = vpop.permute.xlu0 %725
    %v727 = vlaneseq
    %v728 = vshrl.u32 %v727, 7
    %v729 = vsub.s32 7, %v728
    %v730 = vrot.slane %v54, %v729
    %732 = vbcast.lane.b32.xlu0 %v730, 256
    %v733 = vpop.permute.xlu0 %732
    %s735 = sor.u32 256, 8
    %736 = vbcast.lane.b32.xlu0 %v730, %s735
    %v737 = vpop.permute.xlu0 %736
    %v754 = vadd.f32 %v633, %v656
    %v755 = vadd.f32 %v634, %v660
    %v756 = vadd.f32 %v635, %v667
    %v757 = vadd.f32 %v636, %v671
    %v758 = vadd.f32 %v637, %v678
    %v759 = vadd.f32 %v638, %v682
    %v760 = vadd.f32 %v639, %v689
    %v761 = vadd.f32 %v640, %v693
    %v762 = vadd.f32 %v641, %v700
    %v763 = vadd.f32 %v642, %v704
    %v764 = vadd.f32 %v643, %v711
    %v765 = vadd.f32 %v644, %v715
    %v766 = vadd.f32 %v645, %v722
    %v767 = vadd.f32 %v646, %v726
    %v768 = vadd.f32 %v647, %v733
    %v769 = vadd.f32 %v648, %v737
    %786 = vset.pattern.permute.xlu0 0
    %787 = vperm.xlu0 %786, %v754
    %v788 = vpop.permute.xlu0 %787
    %789 = vset.pattern.permute.xlu0 0
    %790 = vperm.xlu0 %789, %v755
    %v791 = vpop.permute.xlu0 %790
    %792 = vset.pattern.permute.xlu0 0
    %793 = vperm.xlu0 %792, %v756
    %v794 = vpop.permute.xlu0 %793
    %795 = vset.pattern.permute.xlu0 0
    %796 = vperm.xlu0 %795, %v757
    %v797 = vpop.permute.xlu0 %796
    %798 = vset.pattern.permute.xlu0 0
    %799 = vperm.xlu0 %798, %v758
    %v800 = vpop.permute.xlu0 %799
    %801 = vset.pattern.permute.xlu0 0
    %802 = vperm.xlu0 %801, %v759
    %v803 = vpop.permute.xlu0 %802
    %804 = vset.pattern.permute.xlu0 0
    %805 = vperm.xlu0 %804, %v760
    %v806 = vpop.permute.xlu0 %805
    %807 = vset.pattern.permute.xlu0 0
    %808 = vperm.xlu0 %807, %v761
    %v809 = vpop.permute.xlu0 %808
    %810 = vset.pattern.permute.xlu0 0
    %811 = vperm.xlu0 %810, %v762
    %v812 = vpop.permute.xlu0 %811
    %813 = vset.pattern.permute.xlu0 0
    %814 = vperm.xlu0 %813, %v763
    %v815 = vpop.permute.xlu0 %814
    %816 = vset.pattern.permute.xlu0 0
    %817 = vperm.xlu0 %816, %v764
    %v818 = vpop.permute.xlu0 %817
    %819 = vset.pattern.permute.xlu0 0
    %820 = vperm.xlu0 %819, %v765
    %v821 = vpop.permute.xlu0 %820
    %822 = vset.pattern.permute.xlu0 0
    %823 = vperm.xlu0 %822, %v766
    %v824 = vpop.permute.xlu0 %823
    %825 = vset.pattern.permute.xlu0 0
    %826 = vperm.xlu0 %825, %v767
    %v827 = vpop.permute.xlu0 %826
    %828 = vset.pattern.permute.xlu0 0
    %829 = vperm.xlu0 %828, %v768
    %v830 = vpop.permute.xlu0 %829
    %831 = vset.pattern.permute.xlu0 0
    %832 = vperm.xlu0 %831, %v769
    %v833 = vpop.permute.xlu0 %832
    %v834 = vlaneseq
    %v835 = vand.u32 %v834, 127
    %v836 = vlaneseq
    %v837 = vshrl.u32 %v836, 7
    %v838 = vsub.s32 %v835, %v837
    %v839 = vrot.slane %v788, %v838
    %v840 = vadd.s32 %v835, 4294967288
    %v841 = vlaneseq
    %v842 = vshrl.u32 %v841, 7
    %v843 = vsub.s32 %v840, %v842
    %v844 = vrot.slane %v791, %v843
    %vm845 = vcmask 130112
    %v846 = vsel %vm845, %v844, %v839
    %v847 = vlaneseq
    %v848 = vshrl.u32 %v847, 7
    %v849 = vsub.s32 %v835, %v848
    %v850 = vrot.slane %v794, %v849
    %v851 = vlaneseq
    %v852 = vshrl.u32 %v851, 7
    %v853 = vsub.s32 %v840, %v852
    %v854 = vrot.slane %v797, %v853
    %v855 = vsel %vm845, %v854, %v850
    %v856 = vlaneseq
    %v857 = vshrl.u32 %v856, 7
    %v858 = vsub.s32 %v835, %v857
    %v859 = vrot.slane %v800, %v858
    %v860 = vlaneseq
    %v861 = vshrl.u32 %v860, 7
    %v862 = vsub.s32 %v840, %v861
    %v863 = vrot.slane %v803, %v862
    %v864 = vsel %vm845, %v863, %v859
    %v865 = vlaneseq
    %v866 = vshrl.u32 %v865, 7
    %v867 = vsub.s32 %v835, %v866
    %v868 = vrot.slane %v806, %v867
    %v869 = vlaneseq
    %v870 = vshrl.u32 %v869, 7
    %v871 = vsub.s32 %v840, %v870
    %v872 = vrot.slane %v809, %v871
    %v873 = vsel %vm845, %v872, %v868
    %v874 = vlaneseq
    %v875 = vshrl.u32 %v874, 7
    %v876 = vsub.s32 %v835, %v875
    %v877 = vrot.slane %v812, %v876
    %v878 = vlaneseq
    %v879 = vshrl.u32 %v878, 7
    %v880 = vsub.s32 %v840, %v879
    %v881 = vrot.slane %v815, %v880
    %v882 = vsel %vm845, %v881, %v877
    %v883 = vlaneseq
    %v884 = vshrl.u32 %v883, 7
    %v885 = vsub.s32 %v835, %v884
    %v886 = vrot.slane %v818, %v885
    %v887 = vlaneseq
    %v888 = vshrl.u32 %v887, 7
    %v889 = vsub.s32 %v840, %v888
    %v890 = vrot.slane %v821, %v889
    %v891 = vsel %vm845, %v890, %v886
    %v892 = vlaneseq
    %v893 = vshrl.u32 %v892, 7
    %v894 = vsub.s32 %v835, %v893
    %v895 = vrot.slane %v824, %v894
    %v896 = vlaneseq
    %v897 = vshrl.u32 %v896, 7
    %v898 = vsub.s32 %v840, %v897
    %v899 = vrot.slane %v827, %v898
    %v900 = vsel %vm845, %v899, %v895
    %v901 = vlaneseq
    %v902 = vshrl.u32 %v901, 7
    %v903 = vsub.s32 %v835, %v902
    %v904 = vrot.slane %v830, %v903
    %v905 = vlaneseq
    %v906 = vshrl.u32 %v905, 7
    %v907 = vsub.s32 %v840, %v906
    %v908 = vrot.slane %v833, %v907
    %v909 = vsel %vm845, %v908, %v904
    %vm910 = vcmask 1041409
    %v911 = vsel %vm910, %v855, %v846
    %vm912 = vcmask 1042434
    %v913 = vsel %vm912, %v864, %v911
    %vm914 = vcmask 1043459
    %v915 = vsel %vm914, %v873, %v913
    %vm916 = vcmask 1044484
    %v917 = vsel %vm916, %v882, %v915
    %vm918 = vcmask 1045509
    %v919 = vsel %vm918, %v891, %v917
    %vm920 = vcmask 1046534
    %v921 = vsel %vm920, %v900, %v919
    %vm922 = vcmask 1047559
    %v923 = vsel %vm922, %v909, %v921
    %v925 = vsel %vm479, %v923, -inf
    %926 = vmax.xlane.f32.xlu0 %v925
    %v927 = vpop.xlane.xlu0 %926
    %v929 = vlaneseq
    %v930 = vshrl.u32 %v929, 7
    %v931 = vsub.s32 0, %v930
    %v932 = vrot.slane %v927, %v931
    %v933 = vlaneseq
    %v934 = vshrl.u32 %v933, 7
    %v935 = vsub.s32 1, %v934
    %v936 = vrot.slane %v927, %v935
    %v937 = vlaneseq
    %v938 = vshrl.u32 %v937, 7
    %v939 = vsub.s32 2, %v938
    %v940 = vrot.slane %v927, %v939
    %v941 = vlaneseq
    %v942 = vshrl.u32 %v941, 7
    %v943 = vsub.s32 3, %v942
    %v944 = vrot.slane %v927, %v943
    %v945 = vlaneseq
    %v946 = vshrl.u32 %v945, 7
    %v947 = vsub.s32 4, %v946
    %v948 = vrot.slane %v927, %v947
    %v949 = vlaneseq
    %v950 = vshrl.u32 %v949, 7
    %v951 = vsub.s32 5, %v950
    %v952 = vrot.slane %v927, %v951
    %v953 = vlaneseq
    %v954 = vshrl.u32 %v953, 7
    %v955 = vsub.s32 6, %v954
    %v956 = vrot.slane %v927, %v955
    %v957 = vlaneseq
    %v958 = vshrl.u32 %v957, 7
    %v959 = vsub.s32 7, %v958
    %v960 = vrot.slane %v927, %v959
    %v969 = vsub.f32 %v754, %v932
    %v970 = vsub.f32 %v755, %v932
    %v971 = vsub.f32 %v756, %v936
    %v972 = vsub.f32 %v757, %v936
    %v973 = vsub.f32 %v758, %v940
    %v974 = vsub.f32 %v759, %v940
    %v975 = vsub.f32 %v760, %v944
    %v976 = vsub.f32 %v761, %v944
    %v977 = vsub.f32 %v762, %v948
    %v978 = vsub.f32 %v763, %v948
    %v979 = vsub.f32 %v764, %v952
    %v980 = vsub.f32 %v765, %v952
    %v981 = vsub.f32 %v766, %v956
    %v982 = vsub.f32 %v767, %v956
    %v983 = vsub.f32 %v768, %v960
    %v984 = vsub.f32 %v769, %v960
    %v985 = vmul.f32 %v969, 1.442695
    %v986 = vpow.pop %v985
    %v987 = vmul.f32 %v970, 1.442695
    %v988 = vpow.pop %v987
    %v989 = vmul.f32 %v971, 1.442695
    %v990 = vpow.pop %v989
    %v991 = vmul.f32 %v972, 1.442695
    %v992 = vpow.pop %v991
    %v993 = vmul.f32 %v973, 1.442695
    %v994 = vpow.pop %v993
    %v995 = vmul.f32 %v974, 1.442695
    %v996 = vpow.pop %v995
    %v997 = vmul.f32 %v975, 1.442695
    %v998 = vpow.pop %v997
    %v999 = vmul.f32 %v976, 1.442695
    %v1000 = vpow.pop %v999
    %v1001 = vmul.f32 %v977, 1.442695
    %v1002 = vpow.pop %v1001
    %v1003 = vmul.f32 %v978, 1.442695
    %v1004 = vpow.pop %v1003
    %v1005 = vmul.f32 %v979, 1.442695
    %v1006 = vpow.pop %v1005
    %v1007 = vmul.f32 %v980, 1.442695
    %v1008 = vpow.pop %v1007
    %v1009 = vmul.f32 %v981, 1.442695
    %v1010 = vpow.pop %v1009
    %v1011 = vmul.f32 %v982, 1.442695
    %v1012 = vpow.pop %v1011
    %v1013 = vmul.f32 %v983, 1.442695
    %v1014 = vpow.pop %v1013
    %v1015 = vmul.f32 %v984, 1.442695
    %v1016 = vpow.pop %v1015
    %1033 = vset.pattern.permute.xlu0 0
    %1034 = vperm.xlu0 %1033, %v986
    %v1035 = vpop.permute.xlu0 %1034
    %1036 = vset.pattern.permute.xlu0 0
    %1037 = vperm.xlu0 %1036, %v988
    %v1038 = vpop.permute.xlu0 %1037
    %1039 = vset.pattern.permute.xlu0 0
    %1040 = vperm.xlu0 %1039, %v990
    %v1041 = vpop.permute.xlu0 %1040
    %1042 = vset.pattern.permute.xlu0 0
    %1043 = vperm.xlu0 %1042, %v992
    %v1044 = vpop.permute.xlu0 %1043
    %1045 = vset.pattern.permute.xlu0 0
    %1046 = vperm.xlu0 %1045, %v994
    %v1047 = vpop.permute.xlu0 %1046
    %1048 = vset.pattern.permute.xlu0 0
    %1049 = vperm.xlu0 %1048, %v996
    %v1050 = vpop.permute.xlu0 %1049
    %1051 = vset.pattern.permute.xlu0 0
    %1052 = vperm.xlu0 %1051, %v998
    %v1053 = vpop.permute.xlu0 %1052
    %1054 = vset.pattern.permute.xlu0 0
    %1055 = vperm.xlu0 %1054, %v1000
    %v1056 = vpop.permute.xlu0 %1055
    %1057 = vset.pattern.permute.xlu0 0
    %1058 = vperm.xlu0 %1057, %v1002
    %v1059 = vpop.permute.xlu0 %1058
    %1060 = vset.pattern.permute.xlu0 0
    %1061 = vperm.xlu0 %1060, %v1004
    %v1062 = vpop.permute.xlu0 %1061
    %1063 = vset.pattern.permute.xlu0 0
    %1064 = vperm.xlu0 %1063, %v1006
    %v1065 = vpop.permute.xlu0 %1064
    %1066 = vset.pattern.permute.xlu0 0
    %1067 = vperm.xlu0 %1066, %v1008
    %v1068 = vpop.permute.xlu0 %1067
    %1069 = vset.pattern.permute.xlu0 0
    %1070 = vperm.xlu0 %1069, %v1010
    %v1071 = vpop.permute.xlu0 %1070
    %1072 = vset.pattern.permute.xlu0 0
    %1073 = vperm.xlu0 %1072, %v1012
    %v1074 = vpop.permute.xlu0 %1073
    %1075 = vset.pattern.permute.xlu0 0
    %1076 = vperm.xlu0 %1075, %v1014
    %v1077 = vpop.permute.xlu0 %1076
    %1078 = vset.pattern.permute.xlu0 0
    %1079 = vperm.xlu0 %1078, %v1016
    %v1080 = vpop.permute.xlu0 %1079
    %v1081 = vlaneseq
    %v1082 = vshrl.u32 %v1081, 7
    %v1083 = vsub.s32 %v835, %v1082
    %v1084 = vrot.slane %v1035, %v1083
    %v1085 = vlaneseq
    %v1086 = vshrl.u32 %v1085, 7
    %v1087 = vsub.s32 %v840, %v1086
    %v1088 = vrot.slane %v1038, %v1087
    %v1089 = vsel %vm845, %v1088, %v1084
    %v1090 = vlaneseq
    %v1091 = vshrl.u32 %v1090, 7
    %v1092 = vsub.s32 %v835, %v1091
    %v1093 = vrot.slane %v1041, %v1092
    %v1094 = vlaneseq
    %v1095 = vshrl.u32 %v1094, 7
    %v1096 = vsub.s32 %v840, %v1095
    %v1097 = vrot.slane %v1044, %v1096
    %v1098 = vsel %vm845, %v1097, %v1093
    %v1099 = vlaneseq
    %v1100 = vshrl.u32 %v1099, 7
    %v1101 = vsub.s32 %v835, %v1100
    %v1102 = vrot.slane %v1047, %v1101
    %v1103 = vlaneseq
    %v1104 = vshrl.u32 %v1103, 7
    %v1105 = vsub.s32 %v840, %v1104
    %v1106 = vrot.slane %v1050, %v1105
    %v1107 = vsel %vm845, %v1106, %v1102
    %v1108 = vlaneseq
    %v1109 = vshrl.u32 %v1108, 7
    %v1110 = vsub.s32 %v835, %v1109
    %v1111 = vrot.slane %v1053, %v1110
    %v1112 = vlaneseq
    %v1113 = vshrl.u32 %v1112, 7
    %v1114 = vsub.s32 %v840, %v1113
    %v1115 = vrot.slane %v1056, %v1114
    %v1116 = vsel %vm845, %v1115, %v1111
    %v1117 = vlaneseq
    %v1118 = vshrl.u32 %v1117, 7
    %v1119 = vsub.s32 %v835, %v1118
    %v1120 = vrot.slane %v1059, %v1119
    %v1121 = vlaneseq
    %v1122 = vshrl.u32 %v1121, 7
    %v1123 = vsub.s32 %v840, %v1122
    %v1124 = vrot.slane %v1062, %v1123
    %v1125 = vsel %vm845, %v1124, %v1120
    %v1126 = vlaneseq
    %v1127 = vshrl.u32 %v1126, 7
    %v1128 = vsub.s32 %v835, %v1127
    %v1129 = vrot.slane %v1065, %v1128
    %v1130 = vlaneseq
    %v1131 = vshrl.u32 %v1130, 7
    %v1132 = vsub.s32 %v840, %v1131
    %v1133 = vrot.slane %v1068, %v1132
    %v1134 = vsel %vm845, %v1133, %v1129
    %v1135 = vlaneseq
    %v1136 = vshrl.u32 %v1135, 7
    %v1137 = vsub.s32 %v835, %v1136
    %v1138 = vrot.slane %v1071, %v1137
    %v1139 = vlaneseq
    %v1140 = vshrl.u32 %v1139, 7
    %v1141 = vsub.s32 %v840, %v1140
    %v1142 = vrot.slane %v1074, %v1141
    %v1143 = vsel %vm845, %v1142, %v1138
    %v1144 = vlaneseq
    %v1145 = vshrl.u32 %v1144, 7
    %v1146 = vsub.s32 %v835, %v1145
    %v1147 = vrot.slane %v1077, %v1146
    %v1148 = vlaneseq
    %v1149 = vshrl.u32 %v1148, 7
    %v1150 = vsub.s32 %v840, %v1149
    %v1151 = vrot.slane %v1080, %v1150
    %v1152 = vsel %vm845, %v1151, %v1147
    %v1153 = vsel %vm910, %v1098, %v1089
    %v1154 = vsel %vm912, %v1107, %v1153
    %v1155 = vsel %vm914, %v1116, %v1154
    %v1156 = vsel %vm916, %v1125, %v1155
    %v1157 = vsel %vm918, %v1134, %v1156
    %v1158 = vsel %vm920, %v1143, %v1157
    %v1159 = vsel %vm922, %v1152, %v1158
    %v1161 = vsel %vm479, %v1159, 0.0
    %1162 = vadd.xlane.f32.xlu0 %v1161
    %v1163 = vpop.xlane.xlu0 %1162
    %v1164 = vrcp.pop %v1163
    %v1166 = vlaneseq
    %v1167 = vshrl.u32 %v1166, 7
    %v1168 = vsub.s32 0, %v1167
    %v1169 = vrot.slane %v1164, %v1168
    %v1170 = vlaneseq
    %v1171 = vshrl.u32 %v1170, 7
    %v1172 = vsub.s32 1, %v1171
    %v1173 = vrot.slane %v1164, %v1172
    %v1174 = vlaneseq
    %v1175 = vshrl.u32 %v1174, 7
    %v1176 = vsub.s32 2, %v1175
    %v1177 = vrot.slane %v1164, %v1176
    %v1178 = vlaneseq
    %v1179 = vshrl.u32 %v1178, 7
    %v1180 = vsub.s32 3, %v1179
    %v1181 = vrot.slane %v1164, %v1180
    %v1182 = vlaneseq
    %v1183 = vshrl.u32 %v1182, 7
    %v1184 = vsub.s32 4, %v1183
    %v1185 = vrot.slane %v1164, %v1184
    %v1186 = vlaneseq
    %v1187 = vshrl.u32 %v1186, 7
    %v1188 = vsub.s32 5, %v1187
    %v1189 = vrot.slane %v1164, %v1188
    %v1190 = vlaneseq
    %v1191 = vshrl.u32 %v1190, 7
    %v1192 = vsub.s32 6, %v1191
    %v1193 = vrot.slane %v1164, %v1192
    %v1194 = vlaneseq
    %v1195 = vshrl.u32 %v1194, 7
    %v1196 = vsub.s32 7, %v1195
    %v1197 = vrot.slane %v1164, %v1196
    %v1206 = vmul.f32 %v986, %v1169
    %v1207 = vmul.f32 %v988, %v1169
    %v1208 = vmul.f32 %v990, %v1173
    %v1209 = vmul.f32 %v992, %v1173
    %v1210 = vmul.f32 %v994, %v1177
    %v1211 = vmul.f32 %v996, %v1177
    %v1212 = vmul.f32 %v998, %v1181
    %v1213 = vmul.f32 %v1000, %v1181
    %v1214 = vmul.f32 %v1002, %v1185
    %v1215 = vmul.f32 %v1004, %v1185
    %v1216 = vmul.f32 %v1006, %v1189
    %v1217 = vmul.f32 %v1008, %v1189
    %v1218 = vmul.f32 %v1010, %v1193
    %v1219 = vmul.f32 %v1012, %v1193
    %v1220 = vmul.f32 %v1014, %v1197
    %v1221 = vmul.f32 %v1016, %v1197
    %v1222 = vld [vmem:[%s7] sm:$0xff]
    %v1223 = vld [vmem:[%s7 + $0x8] sm:$0xff]
    %v1224 = vld [vmem:[%s7 + $0x10] sm:$0xff]
    %v1225 = vld [vmem:[%s7 + $0x18] sm:$0xff]
    %v1226 = vld [vmem:[%s7 + $0x20] sm:$0xff]
    %v1227 = vld [vmem:[%s7 + $0x28] sm:$0xff]
    %v1228 = vld [vmem:[%s7 + $0x30] sm:$0xff]
    %v1229 = vld [vmem:[%s7 + $0x38] sm:$0xff]
    %v1230 = vld [vmem:[%s7 + $0x40] sm:$0xff]
    %v1231 = vld [vmem:[%s7 + $0x48] sm:$0xff]
    %v1232 = vld [vmem:[%s7 + $0x50] sm:$0xff]
    %v1233 = vld [vmem:[%s7 + $0x58] sm:$0xff]
    %v1234 = vld [vmem:[%s7 + $0x60] sm:$0xff]
    %v1235 = vld [vmem:[%s7 + $0x68] sm:$0xff]
    %v1236 = vld [vmem:[%s7 + $0x70] sm:$0xff]
    %v1237 = vld [vmem:[%s7 + $0x78] sm:$0xff]
    %1239 = vset.pattern.permute.xlu0 0
    %1240 = vperm.xlu0 %1239, %v1206
    %v1241 = vpop.permute.xlu0 %1240
    %1244 = vset.pattern.permute.xlu0 0
    %1245 = vperm.xlu0 %1244, %v1207
    %v1246 = vpop.permute.xlu0 %1245
    %1249 = vset.pattern.permute.xlu0 0
    %1250 = vperm.xlu0 %1249, %v1208
    %v1251 = vpop.permute.xlu0 %1250
    %1254 = vset.pattern.permute.xlu0 0
    %1255 = vperm.xlu0 %1254, %v1209
    %v1256 = vpop.permute.xlu0 %1255
    %1259 = vset.pattern.permute.xlu0 0
    %1260 = vperm.xlu0 %1259, %v1210
    %v1261 = vpop.permute.xlu0 %1260
    %1264 = vset.pattern.permute.xlu0 0
    %1265 = vperm.xlu0 %1264, %v1211
    %v1266 = vpop.permute.xlu0 %1265
    %1269 = vset.pattern.permute.xlu0 0
    %1270 = vperm.xlu0 %1269, %v1212
    %v1271 = vpop.permute.xlu0 %1270
    %1274 = vset.pattern.permute.xlu0 0
    %1275 = vperm.xlu0 %1274, %v1213
    %v1276 = vpop.permute.xlu0 %1275
    %1279 = vset.pattern.permute.xlu0 0
    %1280 = vperm.xlu0 %1279, %v1214
    %v1281 = vpop.permute.xlu0 %1280
    %1284 = vset.pattern.permute.xlu0 0
    %1285 = vperm.xlu0 %1284, %v1215
    %v1286 = vpop.permute.xlu0 %1285
    %1289 = vset.pattern.permute.xlu0 0
    %1290 = vperm.xlu0 %1289, %v1216
    %v1291 = vpop.permute.xlu0 %1290
    %1294 = vset.pattern.permute.xlu0 0
    %1295 = vperm.xlu0 %1294, %v1217
    %v1296 = vpop.permute.xlu0 %1295
    %1299 = vset.pattern.permute.xlu0 0
    %1300 = vperm.xlu0 %1299, %v1218
    %v1301 = vpop.permute.xlu0 %1300
    %1304 = vset.pattern.permute.xlu0 0
    %1305 = vperm.xlu0 %1304, %v1219
    %v1306 = vpop.permute.xlu0 %1305
    %1309 = vset.pattern.permute.xlu0 0
    %1310 = vperm.xlu0 %1309, %v1220
    %v1311 = vpop.permute.xlu0 %1310
    %1314 = vset.pattern.permute.xlu0 0
    %1315 = vperm.xlu0 %1314, %v1221
    %v1316 = vpop.permute.xlu0 %1315
    %v1318 = vmul.f32 %v1241, %v1222
    %v1319 = vmul.f32 %v1246, %v1223
    %v1320 = vmul.f32 %v1251, %v1224
    %v1321 = vmul.f32 %v1256, %v1225
    %v1322 = vmul.f32 %v1261, %v1226
    %v1323 = vmul.f32 %v1266, %v1227
    %v1324 = vmul.f32 %v1271, %v1228
    %v1325 = vmul.f32 %v1276, %v1229
    %v1326 = vmul.f32 %v1281, %v1230
    %v1327 = vmul.f32 %v1286, %v1231
    %v1328 = vmul.f32 %v1291, %v1232
    %v1329 = vmul.f32 %v1296, %v1233
    %v1330 = vmul.f32 %v1301, %v1234
    %v1331 = vmul.f32 %v1306, %v1235
    %v1332 = vmul.f32 %v1311, %v1236
    %v1333 = vmul.f32 %v1316, %v1237
    %v1334 = vsel %vm73, %v1318, 0.0
    %v1335 = vsel %vm73, %v1319, 0.0
    %v1336 = vadd.f32 %v1334, %v1335
    %v1337 = vrot.slane %v1336, 4
    %v1338 = vadd.f32 %v1336, %v1337
    %v1339 = vrot.slane %v1338, 2
    %v1340 = vadd.f32 %v1338, %v1339
    %v1341 = vrot.slane %v1340, 1
    %v1342 = vadd.f32 %v1340, %v1341
    %v1343 = vsel %vm73, %v1320, 0.0
    %v1344 = vsel %vm73, %v1321, 0.0
    %v1345 = vadd.f32 %v1343, %v1344
    %v1346 = vrot.slane %v1345, 4
    %v1347 = vadd.f32 %v1345, %v1346
    %v1348 = vrot.slane %v1347, 2
    %v1349 = vadd.f32 %v1347, %v1348
    %v1350 = vrot.slane %v1349, 1
    %v1351 = vadd.f32 %v1349, %v1350
    %v1352 = vsel %vm73, %v1322, 0.0
    %v1353 = vsel %vm73, %v1323, 0.0
    %v1354 = vadd.f32 %v1352, %v1353
    %v1355 = vrot.slane %v1354, 4
    %v1356 = vadd.f32 %v1354, %v1355
    %v1357 = vrot.slane %v1356, 2
    %v1358 = vadd.f32 %v1356, %v1357
    %v1359 = vrot.slane %v1358, 1
    %v1360 = vadd.f32 %v1358, %v1359
    %v1361 = vsel %vm73, %v1324, 0.0
    %v1362 = vsel %vm73, %v1325, 0.0
    %v1363 = vadd.f32 %v1361, %v1362
    %v1364 = vrot.slane %v1363, 4
    %v1365 = vadd.f32 %v1363, %v1364
    %v1366 = vrot.slane %v1365, 2
    %v1367 = vadd.f32 %v1365, %v1366
    %v1368 = vrot.slane %v1367, 1
    %v1369 = vadd.f32 %v1367, %v1368
    %v1370 = vsel %vm73, %v1326, 0.0
    %v1371 = vsel %vm73, %v1327, 0.0
    %v1372 = vadd.f32 %v1370, %v1371
    %v1373 = vrot.slane %v1372, 4
    %v1374 = vadd.f32 %v1372, %v1373
    %v1375 = vrot.slane %v1374, 2
    %v1376 = vadd.f32 %v1374, %v1375
    %v1377 = vrot.slane %v1376, 1
    %v1378 = vadd.f32 %v1376, %v1377
    %v1379 = vsel %vm73, %v1328, 0.0
    %v1380 = vsel %vm73, %v1329, 0.0
    %v1381 = vadd.f32 %v1379, %v1380
    %v1382 = vrot.slane %v1381, 4
    %v1383 = vadd.f32 %v1381, %v1382
    %v1384 = vrot.slane %v1383, 2
    %v1385 = vadd.f32 %v1383, %v1384
    %v1386 = vrot.slane %v1385, 1
    %v1387 = vadd.f32 %v1385, %v1386
    %v1388 = vsel %vm73, %v1330, 0.0
    %v1389 = vsel %vm73, %v1331, 0.0
    %v1390 = vadd.f32 %v1388, %v1389
    %v1391 = vrot.slane %v1390, 4
    %v1392 = vadd.f32 %v1390, %v1391
    %v1393 = vrot.slane %v1392, 2
    %v1394 = vadd.f32 %v1392, %v1393
    %v1395 = vrot.slane %v1394, 1
    %v1396 = vadd.f32 %v1394, %v1395
    %v1397 = vsel %vm73, %v1332, 0.0
    %v1398 = vsel %vm73, %v1333, 0.0
    %v1399 = vadd.f32 %v1397, %v1398
    %v1400 = vrot.slane %v1399, 4
    %v1401 = vadd.f32 %v1399, %v1400
    %v1402 = vrot.slane %v1401, 2
    %v1403 = vadd.f32 %v1401, %v1402
    %v1404 = vrot.slane %v1403, 1
    %v1405 = vadd.f32 %v1403, %v1404
    %v1406 = vpack.c.bf16 %v1342, %v1342
    %v1407 = vpack.c.bf16 %v1351, %v1351
    %v1408 = vpack.c.bf16 %v1360, %v1360
    %v1409 = vpack.c.bf16 %v1369, %v1369
    %v1410 = vpack.c.bf16 %v1378, %v1378
    %v1411 = vpack.c.bf16 %v1387, %v1387
    %v1412 = vpack.c.bf16 %v1396, %v1396
    %v1413 = vpack.c.bf16 %v1405, %v1405
    %v1422 = vunpack.c.l.b16 %v1406
    %v1423 = vunpack.c.l.b16 %v1407
    %v1424 = vunpack.c.l.b16 %v1408
    %v1425 = vunpack.c.l.b16 %v1409
    %v1426 = vunpack.c.l.b16 %v1410
    %v1427 = vunpack.c.l.b16 %v1411
    %v1428 = vunpack.c.l.b16 %v1412
    %v1429 = vunpack.c.l.b16 %v1413
    %v1430 = vsel %vm910, %v1423, %v1422
    %v1431 = vsel %vm912, %v1424, %v1430
    %v1432 = vsel %vm914, %v1425, %v1431
    %v1433 = vsel %vm916, %v1426, %v1432
    %v1434 = vsel %vm918, %v1427, %v1433
    %v1435 = vsel %vm920, %v1428, %v1434
    %v1436 = vsel %vm922, %v1429, %v1435
    %v1437 = vpack.c.b16 %v1436, %v1436
    %v1439 = vsel %vm73, %v1437, 0
    %1441 = vmatprep.subr.bf16.mxu0 0
    %1442 = vmatpush1.bf16.msra.mxu0 0
    %1443 = vmatprep.subr.bf16.mxu0 0
    %1444 = vmatpush1.bf16.msra.mxu0 0
    %1445 = vmatprep.subr.bf16.mxu0 0
    %1446 = vmatpush1.bf16.msra.mxu0 0
    %1447 = vmatprep.subr.bf16.mxu0 0
    %1448 = vmatpush1.bf16.msra.mxu0 0
    %1449 = vmatprep.subr.bf16.mxu0 0
    %1450 = vmatpush1.bf16.msra.mxu0 0
    %1451 = vmatprep.subr.bf16.mxu0 0
    %1452 = vmatpush1.bf16.msra.mxu0 0
    %1453 = vmatprep.subr.bf16.mxu0 0
    %1454 = vmatpush1.bf16.msra.mxu0 %v70
    %1455 = vmatprep.subr.bf16.mxu0 0
    %1456 = vmatpush1.bf16.msra.mxu0 %v69
    %1457 = vmatprep.subr.bf16.mxu0 0
    %1458 = vmatpush2.bf16.msra.mxu0 0
    %1459 = vmatprep.subr.bf16.mxu0 0
    %1460 = vmatpush2.bf16.msra.mxu0 0
    %1461 = vmatprep.subr.bf16.mxu0 0
    %1462 = vmatpush2.bf16.msra.mxu0 0
    %1463 = vmatprep.subr.bf16.mxu0 0
    %1464 = vmatpush2.bf16.msra.mxu0 0
    %1465 = vmatprep.subr.bf16.mxu0 0
    %1466 = vmatpush2.bf16.msra.mxu0 0
    %1467 = vmatprep.subr.bf16.mxu0 0
    %1468 = vmatpush2.bf16.msra.mxu0 0
    %1469 = vmatprep.subr.bf16.mxu0 0
    %1470 = vmatpush2.bf16.msra.mxu0 0
    %1471 = vmatprep.subr.bf16.mxu0 0
    %1472 = vmatpush2.bf16.msra.mxu0 0
    %1473 = vmatprep.mubr.bf16.mxu0 0
    %1474 = vmatmul.mubr.bf16.gmra.mxu0 %v1439
    %v1475 = vpop.f32.mrf.mxu0
    %v1476 = vadd.f32 0.0, %v1475
    %v1477 = vpop.f32.mrf.mxu0
    %v1478 = vpop.f32.mrf.mxu0
    %v1479 = vpop.f32.mrf.mxu0
    %1480 = vdwg.mxu0
    %v1481 = vld [vmem:[%s1] sm:$0xff]
    %1482 = vrot.lane.b32.xlu0 %v313, 112
    %v1483 = vpop.permute.xlu0 %1482
    %v1485 = vadd.f32 %v1481, %v1483
    %1487 = vrot.lane.b32.xlu0 %v1476, 32
    %v1488 = vpop.permute.xlu0 %1487
    %v1490 = vadd.f32 %v1485, %v1488
    %1492 = vrot.lane.b32.xlu0 %v1490, 112
    %v1493 = vpop.permute.xlu0 %1492
    %v1495 = vmax.f32 %v1490, %v1493
    %v1496 = vsel 1, %v1495, 0.0
    %v1497 = vsel 0, %v1495, 0.0
    %s1498 = scalar_lea.vmem %s0, 8
    %v1499 = vld [vmem:[%s1498] sm:$0xff]
    %v1500 = vadd.f32 %v1499, %v1476
    %v1501 = vadd.f32 %v1500, %v119
    %v1502 = vxor.u32 %v1501, 2147483648
    %v1503 = vmul.f32 %v1502, 1.442695
    %v1504 = vpow.pop %v1503
    %v1505 = vadd.f32 %v1504, 1.0
    %v1506 = vrcp.pop %v1505
    %v1507 = vmul.f32 1.0, %v1506
    %v1508 = vmul.f32 %v1507, %v130
    %1510 = vrot.lane.b32.xlu0 %v1508, 64
    %v1511 = vpop.permute.xlu0 %1510
    %v1513 = vadd.f32 %v1500, %v1511
    %v1514 = vtanh.pop %v1513
    %v1515 = vsub.f32 1.0, %v1507
    %1517 = vrot.lane.b32.xlu0 %v1514, 96
    %v1518 = vpop.permute.xlu0 %1517
    %v1520 = vmul.f32 %v1515, %v1518
    %v1521 = vmul.f32 %v1507, %v147
    %v1522 = vadd.f32 %v1520, %v1521
    %v1523 = vpack.c.bf16 %v1522, %v1522
    %1525 = vrot.lane.b32.xlu0 %v1523, 96
    %v1526 = vpop.permute.xlu0 %1525
    %v1528 = vsel %vm73, %v1526, 0
    %1530 = vmatprep.subr.bf16.mxu0 0
    %1531 = vmatpush1.bf16.msra.mxu0 0
    %1532 = vmatprep.subr.bf16.mxu0 0
    %1533 = vmatpush1.bf16.msra.mxu0 0
    %1534 = vmatprep.subr.bf16.mxu0 0
    %1535 = vmatpush1.bf16.msra.mxu0 0
    %1536 = vmatprep.subr.bf16.mxu0 0
    %1537 = vmatpush1.bf16.msra.mxu0 0
    %1538 = vmatprep.subr.bf16.mxu0 0
    %1539 = vmatpush1.bf16.msra.mxu0 0
    %1540 = vmatprep.subr.bf16.mxu0 0
    %1541 = vmatpush1.bf16.msra.mxu0 0
    %1542 = vmatprep.subr.bf16.mxu0 0
    %1543 = vmatpush1.bf16.msra.mxu0 %v175
    %1544 = vmatprep.subr.bf16.mxu0 0
    %1545 = vmatpush1.bf16.msra.mxu0 %v174
    %1546 = vmatprep.subr.bf16.mxu0 0
    %1547 = vmatpush2.bf16.msra.mxu0 0
    %1548 = vmatprep.subr.bf16.mxu0 0
    %1549 = vmatpush2.bf16.msra.mxu0 0
    %1550 = vmatprep.subr.bf16.mxu0 0
    %1551 = vmatpush2.bf16.msra.mxu0 0
    %1552 = vmatprep.subr.bf16.mxu0 0
    %1553 = vmatpush2.bf16.msra.mxu0 0
    %1554 = vmatprep.subr.bf16.mxu0 0
    %1555 = vmatpush2.bf16.msra.mxu0 0
    %1556 = vmatprep.subr.bf16.mxu0 0
    %1557 = vmatpush2.bf16.msra.mxu0 0
    %1558 = vmatprep.subr.bf16.mxu0 0
    %1559 = vmatpush2.bf16.msra.mxu0 0
    %1560 = vmatprep.subr.bf16.mxu0 0
    %1561 = vmatpush2.bf16.msra.mxu0 0
    %1562 = vmatprep.mubr.bf16.mxu0 0
    %1563 = vmatmul.mubr.bf16.gmra.mxu0 %v1528
    %v1564 = vpop.f32.mrf.mxu0
    %v1565 = vadd.f32 %v161, %v1564
    %v1566 = vpop.f32.mrf.mxu0
    %v1567 = vpop.f32.mrf.mxu0
    %v1568 = vpop.f32.mrf.mxu0
    %1569 = vdwg.mxu0
    %v1570 = vadd.f32 %v1565, %v222
    %v1571 = vxor.u32 %v1570, 2147483648
    %v1572 = vmul.f32 %v1571, 1.442695
    %v1573 = vpow.pop %v1572
    %v1574 = vadd.f32 %v1573, 1.0
    %v1575 = vrcp.pop %v1574
    %v1576 = vmul.f32 1.0, %v1575
    %v1577 = vmul.f32 %v1576, %v234
    %1579 = vrot.lane.b32.xlu0 %v1577, 64
    %v1580 = vpop.permute.xlu0 %1579
    %v1582 = vadd.f32 %v1565, %v1580
    %v1583 = vtanh.pop %v1582
    %v1584 = vsub.f32 1.0, %v1576
    %1586 = vrot.lane.b32.xlu0 %v1583, 96
    %v1587 = vpop.permute.xlu0 %1586
    %v1589 = vmul.f32 %v1584, %v1587
    %v1590 = vmul.f32 %v1576, %v251
    %v1591 = vadd.f32 %v1589, %v1590
    %v1592 = vpack.c.bf16 %v1591, %v1591
    %1594 = vrot.lane.b32.xlu0 %v1592, 96
    %v1595 = vpop.permute.xlu0 %1594
    %v1597 = vsel %vm73, %v1595, 0
    %1599 = vmatprep.subr.bf16.mxu0 0
    %1600 = vmatpush1.bf16.msra.mxu0 0
    %1601 = vmatprep.subr.bf16.mxu0 0
    %1602 = vmatpush1.bf16.msra.mxu0 0
    %1603 = vmatprep.subr.bf16.mxu0 0
    %1604 = vmatpush1.bf16.msra.mxu0 0
    %1605 = vmatprep.subr.bf16.mxu0 0
    %1606 = vmatpush1.bf16.msra.mxu0 0
    %1607 = vmatprep.subr.bf16.mxu0 0
    %1608 = vmatpush1.bf16.msra.mxu0 0
    %1609 = vmatprep.subr.bf16.mxu0 0
    %1610 = vmatpush1.bf16.msra.mxu0 0
    %1611 = vmatprep.subr.bf16.mxu0 0
    %1612 = vmatpush1.bf16.msra.mxu0 %v272
    %1613 = vmatprep.subr.bf16.mxu0 0
    %1614 = vmatpush1.bf16.msra.mxu0 %v271
    %1615 = vmatprep.subr.bf16.mxu0 0
    %1616 = vmatpush2.bf16.msra.mxu0 0
    %1617 = vmatprep.subr.bf16.mxu0 0
    %1618 = vmatpush2.bf16.msra.mxu0 0
    %1619 = vmatprep.subr.bf16.mxu0 0
    %1620 = vmatpush2.bf16.msra.mxu0 0
    %1621 = vmatprep.subr.bf16.mxu0 0
    %1622 = vmatpush2.bf16.msra.mxu0 0
    %1623 = vmatprep.subr.bf16.mxu0 0
    %1624 = vmatpush2.bf16.msra.mxu0 0
    %1625 = vmatprep.subr.bf16.mxu0 0
    %1626 = vmatpush2.bf16.msra.mxu0 0
    %1627 = vmatprep.subr.bf16.mxu0 0
    %1628 = vmatpush2.bf16.msra.mxu0 0
    %1629 = vmatprep.subr.bf16.mxu0 0
    %1630 = vmatpush2.bf16.msra.mxu0 0
    %1631 = vmatprep.mubr.bf16.mxu0 0
    %1632 = vmatmul.mubr.bf16.gmra.mxu0 %v1597
    %v1633 = vpop.f32.mrf.mxu0
    %v1634 = vadd.f32 0.0, %v1633
    %v1635 = vpop.f32.mrf.mxu0
    %v1636 = vpop.f32.mrf.mxu0
    %v1637 = vpop.f32.mrf.mxu0
    %1638 = vdwg.mxu0
    %v1640 = vcombine.high %v1634, %v1634
    %v1642 = vunpack.c.l.s4 1966171168
    %v1643 = vunpack.c.0.s8 %v1642
    %v1644 = vlaneseq
    %v1645 = vshrl.u32 %v1644, 7
    %v1646 = vsub.s32 %v1643, %v1645
    %v1647 = vrot.slane %v1634, %v1646
    %v1649 = vunpack.c.l.s4 1966171168
    %v1650 = vunpack.c.0.s8 %v1649
    %v1651 = vlaneseq
    %v1652 = vshrl.u32 %v1651, 7
    %v1653 = vsub.s32 %v1650, %v1652
    %v1654 = vrot.slane %v1640, %v1653
    %v1655 = vcombine.high %v1647, %v1647
    %v1656 = vcombine.high %v1654, %v1654
    %v1658 = vunpack.c.l.s4 1966171168
    %v1659 = vunpack.c.0.s8 %v1658
    %v1660 = vlaneseq
    %v1661 = vshrl.u32 %v1660, 7
    %v1662 = vsub.s32 %v1659, %v1661
    %v1663 = vrot.slane %v1647, %v1662
    %v1665 = vunpack.c.l.s4 1966171168
    %v1666 = vunpack.c.0.s8 %v1665
    %v1667 = vlaneseq
    %v1668 = vshrl.u32 %v1667, 7
    %v1669 = vsub.s32 %v1666, %v1668
    %v1670 = vrot.slane %v1654, %v1669
    %v1672 = vunpack.c.l.s4 1966171168
    %v1673 = vunpack.c.0.s8 %v1672
    %v1674 = vlaneseq
    %v1675 = vshrl.u32 %v1674, 7
    %v1676 = vsub.s32 %v1673, %v1675
    %v1677 = vrot.slane %v1655, %v1676
    %v1679 = vunpack.c.l.s4 1966171168
    %v1680 = vunpack.c.0.s8 %v1679
    %v1681 = vlaneseq
    %v1682 = vshrl.u32 %v1681, 7
    %v1683 = vsub.s32 %v1680, %v1682
    %v1684 = vrot.slane %v1656, %v1683
    %v1685 = vcombine.high %v1663, %v1663
    %v1686 = vcombine.high %v1670, %v1670
    %v1687 = vcombine.high %v1677, %v1677
    %v1688 = vcombine.high %v1684, %v1684
    %v1689 = vlaneseq
    %v1690 = vshrl.u32 %v1689, 7
    %v1691 = vsub.s32 0, %v1690
    %v1692 = vrot.slane %v1663, %v1691
    %v1693 = vlaneseq
    %v1694 = vshrl.u32 %v1693, 7
    %v1695 = vsub.s32 0, %v1694
    %v1696 = vrot.slane %v1677, %v1695
    %v1697 = vlaneseq
    %v1698 = vshrl.u32 %v1697, 7
    %v1699 = vsub.s32 0, %v1698
    %v1700 = vrot.slane %v1685, %v1699
    %v1701 = vlaneseq
    %v1702 = vshrl.u32 %v1701, 7
    %v1703 = vsub.s32 0, %v1702
    %v1704 = vrot.slane %v1687, %v1703
    %v1705 = vlaneseq
    %v1706 = vshrl.u32 %v1705, 7
    %v1707 = vsub.s32 0, %v1706
    %v1708 = vrot.slane %v1670, %v1707
    %v1709 = vlaneseq
    %v1710 = vshrl.u32 %v1709, 7
    %v1711 = vsub.s32 0, %v1710
    %v1712 = vrot.slane %v1684, %v1711
    %v1713 = vlaneseq
    %v1714 = vshrl.u32 %v1713, 7
    %v1715 = vsub.s32 0, %v1714
    %v1716 = vrot.slane %v1686, %v1715
    %v1717 = vlaneseq
    %v1718 = vshrl.u32 %v1717, 7
    %v1719 = vsub.s32 0, %v1718
    %v1720 = vrot.slane %v1688, %v1719
    %v1729 = vadd.f32 %v318, %v1692
    %v1730 = vadd.f32 %v319, %v1692
    %v1731 = vadd.f32 %v320, %v1696
    %v1732 = vadd.f32 %v321, %v1696
    %v1733 = vadd.f32 %v322, %v1700
    %v1734 = vadd.f32 %v323, %v1700
    %v1735 = vadd.f32 %v324, %v1704
    %v1736 = vadd.f32 %v325, %v1704
    %v1737 = vadd.f32 %v326, %v1708
    %v1738 = vadd.f32 %v327, %v1708
    %v1739 = vadd.f32 %v328, %v1712
    %v1740 = vadd.f32 %v329, %v1712
    %v1741 = vadd.f32 %v330, %v1716
    %v1742 = vadd.f32 %v331, %v1716
    %v1743 = vadd.f32 %v332, %v1720
    %v1744 = vadd.f32 %v333, %v1720
    %v1745 = vtanh.pop %v1729
    %v1746 = vtanh.pop %v1730
    %v1747 = vtanh.pop %v1731
    %v1748 = vtanh.pop %v1732
    %v1749 = vtanh.pop %v1733
    %v1750 = vtanh.pop %v1734
    %v1751 = vtanh.pop %v1735
    %v1752 = vtanh.pop %v1736
    %v1753 = vtanh.pop %v1737
    %v1754 = vtanh.pop %v1738
    %v1755 = vtanh.pop %v1739
    %v1756 = vtanh.pop %v1740
    %v1757 = vtanh.pop %v1741
    %v1758 = vtanh.pop %v1742
    %v1759 = vtanh.pop %v1743
    %v1760 = vtanh.pop %v1744
    %v1761 = vmul.f32 %v1745, %v461
    %v1762 = vmul.f32 %v1746, %v461
    %v1763 = vmul.f32 %v1747, %v461
    %v1764 = vmul.f32 %v1748, %v461
    %v1765 = vmul.f32 %v1749, %v461
    %v1766 = vmul.f32 %v1750, %v461
    %v1767 = vmul.f32 %v1751, %v461
    %v1768 = vmul.f32 %v1752, %v461
    %v1769 = vmul.f32 %v1753, %v461
    %v1770 = vmul.f32 %v1754, %v461
    %v1771 = vmul.f32 %v1755, %v461
    %v1772 = vmul.f32 %v1756, %v461
    %v1773 = vmul.f32 %v1757, %v461
    %v1774 = vmul.f32 %v1758, %v461
    %v1775 = vmul.f32 %v1759, %v461
    %v1776 = vmul.f32 %v1760, %v461
    %v1777 = vsel %vm479, %v1761, 0.0
    %1778 = vadd.xlane.f32.xlu0 %v1777
    %v1779 = vpop.xlane.xlu0 %1778
    %v1780 = vsel %vm479, %v1762, 0.0
    %1781 = vadd.xlane.f32.xlu0 %v1780
    %v1782 = vpop.xlane.xlu0 %1781
    %v1783 = vsel %vm479, %v1763, 0.0
    %1784 = vadd.xlane.f32.xlu0 %v1783
    %v1785 = vpop.xlane.xlu0 %1784
    %v1786 = vsel %vm479, %v1764, 0.0
    %1787 = vadd.xlane.f32.xlu0 %v1786
    %v1788 = vpop.xlane.xlu0 %1787
    %v1789 = vsel %vm479, %v1765, 0.0
    %1790 = vadd.xlane.f32.xlu0 %v1789
    %v1791 = vpop.xlane.xlu0 %1790
    %v1792 = vsel %vm479, %v1766, 0.0
    %1793 = vadd.xlane.f32.xlu0 %v1792
    %v1794 = vpop.xlane.xlu0 %1793
    %v1795 = vsel %vm479, %v1767, 0.0
    %1796 = vadd.xlane.f32.xlu0 %v1795
    %v1797 = vpop.xlane.xlu0 %1796
    %v1798 = vsel %vm479, %v1768, 0.0
    %1799 = vadd.xlane.f32.xlu0 %v1798
    %v1800 = vpop.xlane.xlu0 %1799
    %v1801 = vsel %vm479, %v1769, 0.0
    %1802 = vadd.xlane.f32.xlu0 %v1801
    %v1803 = vpop.xlane.xlu0 %1802
    %v1804 = vsel %vm479, %v1770, 0.0
    %1805 = vadd.xlane.f32.xlu0 %v1804
    %v1806 = vpop.xlane.xlu0 %1805
    %v1807 = vsel %vm479, %v1771, 0.0
    %1808 = vadd.xlane.f32.xlu0 %v1807
    %v1809 = vpop.xlane.xlu0 %1808
    %v1810 = vsel %vm479, %v1772, 0.0
    %1811 = vadd.xlane.f32.xlu0 %v1810
    %v1812 = vpop.xlane.xlu0 %1811
    %v1813 = vsel %vm479, %v1773, 0.0
    %1814 = vadd.xlane.f32.xlu0 %v1813
    %v1815 = vpop.xlane.xlu0 %1814
    %v1816 = vsel %vm479, %v1774, 0.0
    %1817 = vadd.xlane.f32.xlu0 %v1816
    %v1818 = vpop.xlane.xlu0 %1817
    %v1819 = vsel %vm479, %v1775, 0.0
    %1820 = vadd.xlane.f32.xlu0 %v1819
    %v1821 = vpop.xlane.xlu0 %1820
    %v1822 = vsel %vm479, %v1776, 0.0
    %1823 = vadd.xlane.f32.xlu0 %v1822
    %v1824 = vpop.xlane.xlu0 %1823
    %v1825 = vmul.f32 %v1779, %v535
    %v1826 = vmul.f32 %v1782, %v539
    %v1827 = vmul.f32 %v1785, %v546
    %v1828 = vmul.f32 %v1788, %v550
    %v1829 = vmul.f32 %v1791, %v557
    %v1830 = vmul.f32 %v1794, %v561
    %v1831 = vmul.f32 %v1797, %v568
    %v1832 = vmul.f32 %v1800, %v572
    %v1833 = vmul.f32 %v1803, %v579
    %v1834 = vmul.f32 %v1806, %v583
    %v1835 = vmul.f32 %v1809, %v590
    %v1836 = vmul.f32 %v1812, %v594
    %v1837 = vmul.f32 %v1815, %v601
    %v1838 = vmul.f32 %v1818, %v605
    %v1839 = vmul.f32 %v1821, %v612
    %v1840 = vmul.f32 %v1824, %v616
    %v1841 = vadd.f32 %v1825, %v656
    %v1842 = vadd.f32 %v1826, %v660
    %v1843 = vadd.f32 %v1827, %v667
    %v1844 = vadd.f32 %v1828, %v671
    %v1845 = vadd.f32 %v1829, %v678
    %v1846 = vadd.f32 %v1830, %v682
    %v1847 = vadd.f32 %v1831, %v689
    %v1848 = vadd.f32 %v1832, %v693
    %v1849 = vadd.f32 %v1833, %v700
    %v1850 = vadd.f32 %v1834, %v704
    %v1851 = vadd.f32 %v1835, %v711
    %v1852 = vadd.f32 %v1836, %v715
    %v1853 = vadd.f32 %v1837, %v722
    %v1854 = vadd.f32 %v1838, %v726
    %v1855 = vadd.f32 %v1839, %v733
    %v1856 = vadd.f32 %v1840, %v737
    %1873 = vset.pattern.permute.xlu0 0
    %1874 = vperm.xlu0 %1873, %v1841
    %v1875 = vpop.permute.xlu0 %1874
    %1876 = vset.pattern.permute.xlu0 0
    %1877 = vperm.xlu0 %1876, %v1842
    %v1878 = vpop.permute.xlu0 %1877
    %1879 = vset.pattern.permute.xlu0 0
    %1880 = vperm.xlu0 %1879, %v1843
    %v1881 = vpop.permute.xlu0 %1880
    %1882 = vset.pattern.permute.xlu0 0
    %1883 = vperm.xlu0 %1882, %v1844
    %v1884 = vpop.permute.xlu0 %1883
    %1885 = vset.pattern.permute.xlu0 0
    %1886 = vperm.xlu0 %1885, %v1845
    %v1887 = vpop.permute.xlu0 %1886
    %1888 = vset.pattern.permute.xlu0 0
    %1889 = vperm.xlu0 %1888, %v1846
    %v1890 = vpop.permute.xlu0 %1889
    %1891 = vset.pattern.permute.xlu0 0
    %1892 = vperm.xlu0 %1891, %v1847
    %v1893 = vpop.permute.xlu0 %1892
    %1894 = vset.pattern.permute.xlu0 0
    %1895 = vperm.xlu0 %1894, %v1848
    %v1896 = vpop.permute.xlu0 %1895
    %1897 = vset.pattern.permute.xlu0 0
    %1898 = vperm.xlu0 %1897, %v1849
    %v1899 = vpop.permute.xlu0 %1898
    %1900 = vset.pattern.permute.xlu0 0
    %1901 = vperm.xlu0 %1900, %v1850
    %v1902 = vpop.permute.xlu0 %1901
    %1903 = vset.pattern.permute.xlu0 0
    %1904 = vperm.xlu0 %1903, %v1851
    %v1905 = vpop.permute.xlu0 %1904
    %1906 = vset.pattern.permute.xlu0 0
    %1907 = vperm.xlu0 %1906, %v1852
    %v1908 = vpop.permute.xlu0 %1907
    %1909 = vset.pattern.permute.xlu0 0
    %1910 = vperm.xlu0 %1909, %v1853
    %v1911 = vpop.permute.xlu0 %1910
    %1912 = vset.pattern.permute.xlu0 0
    %1913 = vperm.xlu0 %1912, %v1854
    %v1914 = vpop.permute.xlu0 %1913
    %1915 = vset.pattern.permute.xlu0 0
    %1916 = vperm.xlu0 %1915, %v1855
    %v1917 = vpop.permute.xlu0 %1916
    %1918 = vset.pattern.permute.xlu0 0
    %1919 = vperm.xlu0 %1918, %v1856
    %v1920 = vpop.permute.xlu0 %1919
    %v1921 = vlaneseq
    %v1922 = vshrl.u32 %v1921, 7
    %v1923 = vsub.s32 %v835, %v1922
    %v1924 = vrot.slane %v1875, %v1923
    %v1925 = vlaneseq
    %v1926 = vshrl.u32 %v1925, 7
    %v1927 = vsub.s32 %v840, %v1926
    %v1928 = vrot.slane %v1878, %v1927
    %v1929 = vsel %vm845, %v1928, %v1924
    %v1930 = vlaneseq
    %v1931 = vshrl.u32 %v1930, 7
    %v1932 = vsub.s32 %v835, %v1931
    %v1933 = vrot.slane %v1881, %v1932
    %v1934 = vlaneseq
    %v1935 = vshrl.u32 %v1934, 7
    %v1936 = vsub.s32 %v840, %v1935
    %v1937 = vrot.slane %v1884, %v1936
    %v1938 = vsel %vm845, %v1937, %v1933
    %v1939 = vlaneseq
    %v1940 = vshrl.u32 %v1939, 7
    %v1941 = vsub.s32 %v835, %v1940
    %v1942 = vrot.slane %v1887, %v1941
    %v1943 = vlaneseq
    %v1944 = vshrl.u32 %v1943, 7
    %v1945 = vsub.s32 %v840, %v1944
    %v1946 = vrot.slane %v1890, %v1945
    %v1947 = vsel %vm845, %v1946, %v1942
    %v1948 = vlaneseq
    %v1949 = vshrl.u32 %v1948, 7
    %v1950 = vsub.s32 %v835, %v1949
    %v1951 = vrot.slane %v1893, %v1950
    %v1952 = vlaneseq
    %v1953 = vshrl.u32 %v1952, 7
    %v1954 = vsub.s32 %v840, %v1953
    %v1955 = vrot.slane %v1896, %v1954
    %v1956 = vsel %vm845, %v1955, %v1951
    %v1957 = vlaneseq
    %v1958 = vshrl.u32 %v1957, 7
    %v1959 = vsub.s32 %v835, %v1958
    %v1960 = vrot.slane %v1899, %v1959
    %v1961 = vlaneseq
    %v1962 = vshrl.u32 %v1961, 7
    %v1963 = vsub.s32 %v840, %v1962
    %v1964 = vrot.slane %v1902, %v1963
    %v1965 = vsel %vm845, %v1964, %v1960
    %v1966 = vlaneseq
    %v1967 = vshrl.u32 %v1966, 7
    %v1968 = vsub.s32 %v835, %v1967
    %v1969 = vrot.slane %v1905, %v1968
    %v1970 = vlaneseq
    %v1971 = vshrl.u32 %v1970, 7
    %v1972 = vsub.s32 %v840, %v1971
    %v1973 = vrot.slane %v1908, %v1972
    %v1974 = vsel %vm845, %v1973, %v1969
    %v1975 = vlaneseq
    %v1976 = vshrl.u32 %v1975, 7
    %v1977 = vsub.s32 %v835, %v1976
    %v1978 = vrot.slane %v1911, %v1977
    %v1979 = vlaneseq
    %v1980 = vshrl.u32 %v1979, 7
    %v1981 = vsub.s32 %v840, %v1980
    %v1982 = vrot.slane %v1914, %v1981
    %v1983 = vsel %vm845, %v1982, %v1978
    %v1984 = vlaneseq
    %v1985 = vshrl.u32 %v1984, 7
    %v1986 = vsub.s32 %v835, %v1985
    %v1987 = vrot.slane %v1917, %v1986
    %v1988 = vlaneseq
    %v1989 = vshrl.u32 %v1988, 7
    %v1990 = vsub.s32 %v840, %v1989
    %v1991 = vrot.slane %v1920, %v1990
    %v1992 = vsel %vm845, %v1991, %v1987
    %v1993 = vsel %vm910, %v1938, %v1929
    %v1994 = vsel %vm912, %v1947, %v1993
    %v1995 = vsel %vm914, %v1956, %v1994
    %v1996 = vsel %vm916, %v1965, %v1995
    %v1997 = vsel %vm918, %v1974, %v1996
    %v1998 = vsel %vm920, %v1983, %v1997
    %v1999 = vsel %vm922, %v1992, %v1998
    %v2001 = vsel %vm479, %v1999, -inf
    %2002 = vmax.xlane.f32.xlu0 %v2001
    %v2003 = vpop.xlane.xlu0 %2002
    %v2005 = vlaneseq
    %v2006 = vshrl.u32 %v2005, 7
    %v2007 = vsub.s32 0, %v2006
    %v2008 = vrot.slane %v2003, %v2007
    %v2009 = vlaneseq
    %v2010 = vshrl.u32 %v2009, 7
    %v2011 = vsub.s32 1, %v2010
    %v2012 = vrot.slane %v2003, %v2011
    %v2013 = vlaneseq
    %v2014 = vshrl.u32 %v2013, 7
    %v2015 = vsub.s32 2, %v2014
    %v2016 = vrot.slane %v2003, %v2015
    %v2017 = vlaneseq
    %v2018 = vshrl.u32 %v2017, 7
    %v2019 = vsub.s32 3, %v2018
    %v2020 = vrot.slane %v2003, %v2019
    %v2021 = vlaneseq
    %v2022 = vshrl.u32 %v2021, 7
    %v2023 = vsub.s32 4, %v2022
    %v2024 = vrot.slane %v2003, %v2023
    %v2025 = vlaneseq
    %v2026 = vshrl.u32 %v2025, 7
    %v2027 = vsub.s32 5, %v2026
    %v2028 = vrot.slane %v2003, %v2027
    %v2029 = vlaneseq
    %v2030 = vshrl.u32 %v2029, 7
    %v2031 = vsub.s32 6, %v2030
    %v2032 = vrot.slane %v2003, %v2031
    %v2033 = vlaneseq
    %v2034 = vshrl.u32 %v2033, 7
    %v2035 = vsub.s32 7, %v2034
    %v2036 = vrot.slane %v2003, %v2035
    %v2045 = vsub.f32 %v1841, %v2008
    %v2046 = vsub.f32 %v1842, %v2008
    %v2047 = vsub.f32 %v1843, %v2012
    %v2048 = vsub.f32 %v1844, %v2012
    %v2049 = vsub.f32 %v1845, %v2016
    %v2050 = vsub.f32 %v1846, %v2016
    %v2051 = vsub.f32 %v1847, %v2020
    %v2052 = vsub.f32 %v1848, %v2020
    %v2053 = vsub.f32 %v1849, %v2024
    %v2054 = vsub.f32 %v1850, %v2024
    %v2055 = vsub.f32 %v1851, %v2028
    %v2056 = vsub.f32 %v1852, %v2028
    %v2057 = vsub.f32 %v1853, %v2032
    %v2058 = vsub.f32 %v1854, %v2032
    %v2059 = vsub.f32 %v1855, %v2036
    %v2060 = vsub.f32 %v1856, %v2036
    %v2061 = vmul.f32 %v2045, 1.442695
    %v2062 = vpow.pop %v2061
    %v2063 = vmul.f32 %v2046, 1.442695
    %v2064 = vpow.pop %v2063
    %v2065 = vmul.f32 %v2047, 1.442695
    %v2066 = vpow.pop %v2065
    %v2067 = vmul.f32 %v2048, 1.442695
    %v2068 = vpow.pop %v2067
    %v2069 = vmul.f32 %v2049, 1.442695
    %v2070 = vpow.pop %v2069
    %v2071 = vmul.f32 %v2050, 1.442695
    %v2072 = vpow.pop %v2071
    %v2073 = vmul.f32 %v2051, 1.442695
    %v2074 = vpow.pop %v2073
    %v2075 = vmul.f32 %v2052, 1.442695
    %v2076 = vpow.pop %v2075
    %v2077 = vmul.f32 %v2053, 1.442695
    %v2078 = vpow.pop %v2077
    %v2079 = vmul.f32 %v2054, 1.442695
    %v2080 = vpow.pop %v2079
    %v2081 = vmul.f32 %v2055, 1.442695
    %v2082 = vpow.pop %v2081
    %v2083 = vmul.f32 %v2056, 1.442695
    %v2084 = vpow.pop %v2083
    %v2085 = vmul.f32 %v2057, 1.442695
    %v2086 = vpow.pop %v2085
    %v2087 = vmul.f32 %v2058, 1.442695
    %v2088 = vpow.pop %v2087
    %v2089 = vmul.f32 %v2059, 1.442695
    %v2090 = vpow.pop %v2089
    %v2091 = vmul.f32 %v2060, 1.442695
    %v2092 = vpow.pop %v2091
    %2109 = vset.pattern.permute.xlu0 0
    %2110 = vperm.xlu0 %2109, %v2062
    %v2111 = vpop.permute.xlu0 %2110
    %2112 = vset.pattern.permute.xlu0 0
    %2113 = vperm.xlu0 %2112, %v2064
    %v2114 = vpop.permute.xlu0 %2113
    %2115 = vset.pattern.permute.xlu0 0
    %2116 = vperm.xlu0 %2115, %v2066
    %v2117 = vpop.permute.xlu0 %2116
    %2118 = vset.pattern.permute.xlu0 0
    %2119 = vperm.xlu0 %2118, %v2068
    %v2120 = vpop.permute.xlu0 %2119
    %2121 = vset.pattern.permute.xlu0 0
    %2122 = vperm.xlu0 %2121, %v2070
    %v2123 = vpop.permute.xlu0 %2122
    %2124 = vset.pattern.permute.xlu0 0
    %2125 = vperm.xlu0 %2124, %v2072
    %v2126 = vpop.permute.xlu0 %2125
    %2127 = vset.pattern.permute.xlu0 0
    %2128 = vperm.xlu0 %2127, %v2074
    %v2129 = vpop.permute.xlu0 %2128
    %2130 = vset.pattern.permute.xlu0 0
    %2131 = vperm.xlu0 %2130, %v2076
    %v2132 = vpop.permute.xlu0 %2131
    %2133 = vset.pattern.permute.xlu0 0
    %2134 = vperm.xlu0 %2133, %v2078
    %v2135 = vpop.permute.xlu0 %2134
    %2136 = vset.pattern.permute.xlu0 0
    %2137 = vperm.xlu0 %2136, %v2080
    %v2138 = vpop.permute.xlu0 %2137
    %2139 = vset.pattern.permute.xlu0 0
    %2140 = vperm.xlu0 %2139, %v2082
    %v2141 = vpop.permute.xlu0 %2140
    %2142 = vset.pattern.permute.xlu0 0
    %2143 = vperm.xlu0 %2142, %v2084
    %v2144 = vpop.permute.xlu0 %2143
    %2145 = vset.pattern.permute.xlu0 0
    %2146 = vperm.xlu0 %2145, %v2086
    %v2147 = vpop.permute.xlu0 %2146
    %2148 = vset.pattern.permute.xlu0 0
    %2149 = vperm.xlu0 %2148, %v2088
    %v2150 = vpop.permute.xlu0 %2149
    %2151 = vset.pattern.permute.xlu0 0
    %2152 = vperm.xlu0 %2151, %v2090
    %v2153 = vpop.permute.xlu0 %2152
    %2154 = vset.pattern.permute.xlu0 0
    %2155 = vperm.xlu0 %2154, %v2092
    %v2156 = vpop.permute.xlu0 %2155
    %v2157 = vlaneseq
    %v2158 = vshrl.u32 %v2157, 7
    %v2159 = vsub.s32 %v835, %v2158
    %v2160 = vrot.slane %v2111, %v2159
    %v2161 = vlaneseq
    %v2162 = vshrl.u32 %v2161, 7
    %v2163 = vsub.s32 %v840, %v2162
    %v2164 = vrot.slane %v2114, %v2163
    %v2165 = vsel %vm845, %v2164, %v2160
    %v2166 = vlaneseq
    %v2167 = vshrl.u32 %v2166, 7
    %v2168 = vsub.s32 %v835, %v2167
    %v2169 = vrot.slane %v2117, %v2168
    %v2170 = vlaneseq
    %v2171 = vshrl.u32 %v2170, 7
    %v2172 = vsub.s32 %v840, %v2171
    %v2173 = vrot.slane %v2120, %v2172
    %v2174 = vsel %vm845, %v2173, %v2169
    %v2175 = vlaneseq
    %v2176 = vshrl.u32 %v2175, 7
    %v2177 = vsub.s32 %v835, %v2176
    %v2178 = vrot.slane %v2123, %v2177
    %v2179 = vlaneseq
    %v2180 = vshrl.u32 %v2179, 7
    %v2181 = vsub.s32 %v840, %v2180
    %v2182 = vrot.slane %v2126, %v2181
    %v2183 = vsel %vm845, %v2182, %v2178
    %v2184 = vlaneseq
    %v2185 = vshrl.u32 %v2184, 7
    %v2186 = vsub.s32 %v835, %v2185
    %v2187 = vrot.slane %v2129, %v2186
    %v2188 = vlaneseq
    %v2189 = vshrl.u32 %v2188, 7
    %v2190 = vsub.s32 %v840, %v2189
    %v2191 = vrot.slane %v2132, %v2190
    %v2192 = vsel %vm845, %v2191, %v2187
    %v2193 = vlaneseq
    %v2194 = vshrl.u32 %v2193, 7
    %v2195 = vsub.s32 %v835, %v2194
    %v2196 = vrot.slane %v2135, %v2195
    %v2197 = vlaneseq
    %v2198 = vshrl.u32 %v2197, 7
    %v2199 = vsub.s32 %v840, %v2198
    %v2200 = vrot.slane %v2138, %v2199
    %v2201 = vsel %vm845, %v2200, %v2196
    %v2202 = vlaneseq
    %v2203 = vshrl.u32 %v2202, 7
    %v2204 = vsub.s32 %v835, %v2203
    %v2205 = vrot.slane %v2141, %v2204
    %v2206 = vlaneseq
    %v2207 = vshrl.u32 %v2206, 7
    %v2208 = vsub.s32 %v840, %v2207
    %v2209 = vrot.slane %v2144, %v2208
    %v2210 = vsel %vm845, %v2209, %v2205
    %v2211 = vlaneseq
    %v2212 = vshrl.u32 %v2211, 7
    %v2213 = vsub.s32 %v835, %v2212
    %v2214 = vrot.slane %v2147, %v2213
    %v2215 = vlaneseq
    %v2216 = vshrl.u32 %v2215, 7
    %v2217 = vsub.s32 %v840, %v2216
    %v2218 = vrot.slane %v2150, %v2217
    %v2219 = vsel %vm845, %v2218, %v2214
    %v2220 = vlaneseq
    %v2221 = vshrl.u32 %v2220, 7
    %v2222 = vsub.s32 %v835, %v2221
    %v2223 = vrot.slane %v2153, %v2222
    %v2224 = vlaneseq
    %v2225 = vshrl.u32 %v2224, 7
    %v2226 = vsub.s32 %v840, %v2225
    %v2227 = vrot.slane %v2156, %v2226
    %v2228 = vsel %vm845, %v2227, %v2223
    %v2229 = vsel %vm910, %v2174, %v2165
    %v2230 = vsel %vm912, %v2183, %v2229
    %v2231 = vsel %vm914, %v2192, %v2230
    %v2232 = vsel %vm916, %v2201, %v2231
    %v2233 = vsel %vm918, %v2210, %v2232
    %v2234 = vsel %vm920, %v2219, %v2233
    %v2235 = vsel %vm922, %v2228, %v2234
    %v2237 = vsel %vm479, %v2235, 0.0
    %2238 = vadd.xlane.f32.xlu0 %v2237
    %v2239 = vpop.xlane.xlu0 %2238
    %v2240 = vrcp.pop %v2239
    %v2242 = vlaneseq
    %v2243 = vshrl.u32 %v2242, 7
    %v2244 = vsub.s32 0, %v2243
    %v2245 = vrot.slane %v2240, %v2244
    %v2246 = vlaneseq
    %v2247 = vshrl.u32 %v2246, 7
    %v2248 = vsub.s32 1, %v2247
    %v2249 = vrot.slane %v2240, %v2248
    %v2250 = vlaneseq
    %v2251 = vshrl.u32 %v2250, 7
    %v2252 = vsub.s32 2, %v2251
    %v2253 = vrot.slane %v2240, %v2252
    %v2254 = vlaneseq
    %v2255 = vshrl.u32 %v2254, 7
    %v2256 = vsub.s32 3, %v2255
    %v2257 = vrot.slane %v2240, %v2256
    %v2258 = vlaneseq
    %v2259 = vshrl.u32 %v2258, 7
    %v2260 = vsub.s32 4, %v2259
    %v2261 = vrot.slane %v2240, %v2260
    %v2262 = vlaneseq
    %v2263 = vshrl.u32 %v2262, 7
    %v2264 = vsub.s32 5, %v2263
    %v2265 = vrot.slane %v2240, %v2264
    %v2266 = vlaneseq
    %v2267 = vshrl.u32 %v2266, 7
    %v2268 = vsub.s32 6, %v2267
    %v2269 = vrot.slane %v2240, %v2268
    %v2270 = vlaneseq
    %v2271 = vshrl.u32 %v2270, 7
    %v2272 = vsub.s32 7, %v2271
    %v2273 = vrot.slane %v2240, %v2272
    %v2282 = vmul.f32 %v2062, %v2245
    %v2283 = vmul.f32 %v2064, %v2245
    %v2284 = vmul.f32 %v2066, %v2249
    %v2285 = vmul.f32 %v2068, %v2249
    %v2286 = vmul.f32 %v2070, %v2253
    %v2287 = vmul.f32 %v2072, %v2253
    %v2288 = vmul.f32 %v2074, %v2257
    %v2289 = vmul.f32 %v2076, %v2257
    %v2290 = vmul.f32 %v2078, %v2261
    %v2291 = vmul.f32 %v2080, %v2261
    %v2292 = vmul.f32 %v2082, %v2265
    %v2293 = vmul.f32 %v2084, %v2265
    %v2294 = vmul.f32 %v2086, %v2269
    %v2295 = vmul.f32 %v2088, %v2269
    %v2296 = vmul.f32 %v2090, %v2273
    %v2297 = vmul.f32 %v2092, %v2273
    %2299 = vset.pattern.permute.xlu0 0
    %2300 = vperm.xlu0 %2299, %v2282
    %v2301 = vpop.permute.xlu0 %2300
    %2304 = vset.pattern.permute.xlu0 0
    %2305 = vperm.xlu0 %2304, %v2283
    %v2306 = vpop.permute.xlu0 %2305
    %2309 = vset.pattern.permute.xlu0 0
    %2310 = vperm.xlu0 %2309, %v2284
    %v2311 = vpop.permute.xlu0 %2310
    %2314 = vset.pattern.permute.xlu0 0
    %2315 = vperm.xlu0 %2314, %v2285
    %v2316 = vpop.permute.xlu0 %2315
    %2319 = vset.pattern.permute.xlu0 0
    %2320 = vperm.xlu0 %2319, %v2286
    %v2321 = vpop.permute.xlu0 %2320
    %2324 = vset.pattern.permute.xlu0 0
    %2325 = vperm.xlu0 %2324, %v2287
    %v2326 = vpop.permute.xlu0 %2325
    %2329 = vset.pattern.permute.xlu0 0
    %2330 = vperm.xlu0 %2329, %v2288
    %v2331 = vpop.permute.xlu0 %2330
    %2334 = vset.pattern.permute.xlu0 0
    %2335 = vperm.xlu0 %2334, %v2289
    %v2336 = vpop.permute.xlu0 %2335
    %2339 = vset.pattern.permute.xlu0 0
    %2340 = vperm.xlu0 %2339, %v2290
    %v2341 = vpop.permute.xlu0 %2340
    %2344 = vset.pattern.permute.xlu0 0
    %2345 = vperm.xlu0 %2344, %v2291
    %v2346 = vpop.permute.xlu0 %2345
    %2349 = vset.pattern.permute.xlu0 0
    %2350 = vperm.xlu0 %2349, %v2292
    %v2351 = vpop.permute.xlu0 %2350
    %2354 = vset.pattern.permute.xlu0 0
    %2355 = vperm.xlu0 %2354, %v2293
    %v2356 = vpop.permute.xlu0 %2355
    %2359 = vset.pattern.permute.xlu0 0
    %2360 = vperm.xlu0 %2359, %v2294
    %v2361 = vpop.permute.xlu0 %2360
    %2364 = vset.pattern.permute.xlu0 0
    %2365 = vperm.xlu0 %2364, %v2295
    %v2366 = vpop.permute.xlu0 %2365
    %2369 = vset.pattern.permute.xlu0 0
    %2370 = vperm.xlu0 %2369, %v2296
    %v2371 = vpop.permute.xlu0 %2370
    %2374 = vset.pattern.permute.xlu0 0
    %2375 = vperm.xlu0 %2374, %v2297
    %v2376 = vpop.permute.xlu0 %2375
    %v2378 = vmul.f32 %v2301, %v1222
    %v2379 = vmul.f32 %v2306, %v1223
    %v2380 = vmul.f32 %v2311, %v1224
    %v2381 = vmul.f32 %v2316, %v1225
    %v2382 = vmul.f32 %v2321, %v1226
    %v2383 = vmul.f32 %v2326, %v1227
    %v2384 = vmul.f32 %v2331, %v1228
    %v2385 = vmul.f32 %v2336, %v1229
    %v2386 = vmul.f32 %v2341, %v1230
    %v2387 = vmul.f32 %v2346, %v1231
    %v2388 = vmul.f32 %v2351, %v1232
    %v2389 = vmul.f32 %v2356, %v1233
    %v2390 = vmul.f32 %v2361, %v1234
    %v2391 = vmul.f32 %v2366, %v1235
    %v2392 = vmul.f32 %v2371, %v1236
    %v2393 = vmul.f32 %v2376, %v1237
    %v2394 = vsel %vm73, %v2378, 0.0
    %v2395 = vsel %vm73, %v2379, 0.0
    %v2396 = vadd.f32 %v2394, %v2395
    %v2397 = vrot.slane %v2396, 4
    %v2398 = vadd.f32 %v2396, %v2397
    %v2399 = vrot.slane %v2398, 2
    %v2400 = vadd.f32 %v2398, %v2399
    %v2401 = vrot.slane %v2400, 1
    %v2402 = vadd.f32 %v2400, %v2401
    %v2403 = vsel %vm73, %v2380, 0.0
    %v2404 = vsel %vm73, %v2381, 0.0
    %v2405 = vadd.f32 %v2403, %v2404
    %v2406 = vrot.slane %v2405, 4
    %v2407 = vadd.f32 %v2405, %v2406
    %v2408 = vrot.slane %v2407, 2
    %v2409 = vadd.f32 %v2407, %v2408
    %v2410 = vrot.slane %v2409, 1
    %v2411 = vadd.f32 %v2409, %v2410
    %v2412 = vsel %vm73, %v2382, 0.0
    %v2413 = vsel %vm73, %v2383, 0.0
    %v2414 = vadd.f32 %v2412, %v2413
    %v2415 = vrot.slane %v2414, 4
    %v2416 = vadd.f32 %v2414, %v2415
    %v2417 = vrot.slane %v2416, 2
    %v2418 = vadd.f32 %v2416, %v2417
    %v2419 = vrot.slane %v2418, 1
    %v2420 = vadd.f32 %v2418, %v2419
    %v2421 = vsel %vm73, %v2384, 0.0
    %v2422 = vsel %vm73, %v2385, 0.0
    %v2423 = vadd.f32 %v2421, %v2422
    %v2424 = vrot.slane %v2423, 4
    %v2425 = vadd.f32 %v2423, %v2424
    %v2426 = vrot.slane %v2425, 2
    %v2427 = vadd.f32 %v2425, %v2426
    %v2428 = vrot.slane %v2427, 1
    %v2429 = vadd.f32 %v2427, %v2428
    %v2430 = vsel %vm73, %v2386, 0.0
    %v2431 = vsel %vm73, %v2387, 0.0
    %v2432 = vadd.f32 %v2430, %v2431
    %v2433 = vrot.slane %v2432, 4
    %v2434 = vadd.f32 %v2432, %v2433
    %v2435 = vrot.slane %v2434, 2
    %v2436 = vadd.f32 %v2434, %v2435
    %v2437 = vrot.slane %v2436, 1
    %v2438 = vadd.f32 %v2436, %v2437
    %v2439 = vsel %vm73, %v2388, 0.0
    %v2440 = vsel %vm73, %v2389, 0.0
    %v2441 = vadd.f32 %v2439, %v2440
    %v2442 = vrot.slane %v2441, 4
    %v2443 = vadd.f32 %v2441, %v2442
    %v2444 = vrot.slane %v2443, 2
    %v2445 = vadd.f32 %v2443, %v2444
    %v2446 = vrot.slane %v2445, 1
    %v2447 = vadd.f32 %v2445, %v2446
    %v2448 = vsel %vm73, %v2390, 0.0
    %v2449 = vsel %vm73, %v2391, 0.0
    %v2450 = vadd.f32 %v2448, %v2449
    %v2451 = vrot.slane %v2450, 4
    %v2452 = vadd.f32 %v2450, %v2451
    %v2453 = vrot.slane %v2452, 2
    %v2454 = vadd.f32 %v2452, %v2453
    %v2455 = vrot.slane %v2454, 1
    %v2456 = vadd.f32 %v2454, %v2455
    %v2457 = vsel %vm73, %v2392, 0.0
    %v2458 = vsel %vm73, %v2393, 0.0
    %v2459 = vadd.f32 %v2457, %v2458
    %v2460 = vrot.slane %v2459, 4
    %v2461 = vadd.f32 %v2459, %v2460
    %v2462 = vrot.slane %v2461, 2
    %v2463 = vadd.f32 %v2461, %v2462
    %v2464 = vrot.slane %v2463, 1
    %v2465 = vadd.f32 %v2463, %v2464
    %v2466 = vpack.c.bf16 %v2402, %v2402
    %v2467 = vpack.c.bf16 %v2411, %v2411
    %v2468 = vpack.c.bf16 %v2420, %v2420
    %v2469 = vpack.c.bf16 %v2429, %v2429
    %v2470 = vpack.c.bf16 %v2438, %v2438
    %v2471 = vpack.c.bf16 %v2447, %v2447
    %v2472 = vpack.c.bf16 %v2456, %v2456
    %v2473 = vpack.c.bf16 %v2465, %v2465
    %v2482 = vunpack.c.l.b16 %v2466
    %v2483 = vunpack.c.l.b16 %v2467
    %v2484 = vunpack.c.l.b16 %v2468
    %v2485 = vunpack.c.l.b16 %v2469
    %v2486 = vunpack.c.l.b16 %v2470
    %v2487 = vunpack.c.l.b16 %v2471
    %v2488 = vunpack.c.l.b16 %v2472
    %v2489 = vunpack.c.l.b16 %v2473
    %v2490 = vsel %vm910, %v2483, %v2482
    %v2491 = vsel %vm912, %v2484, %v2490
    %v2492 = vsel %vm914, %v2485, %v2491
    %v2493 = vsel %vm916, %v2486, %v2492
    %v2494 = vsel %vm918, %v2487, %v2493
    %v2495 = vsel %vm920, %v2488, %v2494
    %v2496 = vsel %vm922, %v2489, %v2495
    %v2497 = vpack.c.b16 %v2496, %v2496
    %v2499 = vsel %vm73, %v2497, 0
    %2501 = vmatprep.subr.bf16.mxu0 0
    %2502 = vmatpush1.bf16.msra.mxu0 0
    %2503 = vmatprep.subr.bf16.mxu0 0
    %2504 = vmatpush1.bf16.msra.mxu0 0
    %2505 = vmatprep.subr.bf16.mxu0 0
    %2506 = vmatpush1.bf16.msra.mxu0 0
    %2507 = vmatprep.subr.bf16.mxu0 0
    %2508 = vmatpush1.bf16.msra.mxu0 0
    %2509 = vmatprep.subr.bf16.mxu0 0
    %2510 = vmatpush1.bf16.msra.mxu0 0
    %2511 = vmatprep.subr.bf16.mxu0 0
    %2512 = vmatpush1.bf16.msra.mxu0 0
    %2513 = vmatprep.subr.bf16.mxu0 0
    %2514 = vmatpush1.bf16.msra.mxu0 %v70
    %2515 = vmatprep.subr.bf16.mxu0 0
    %2516 = vmatpush1.bf16.msra.mxu0 %v69
    %2517 = vmatprep.subr.bf16.mxu0 0
    %2518 = vmatpush2.bf16.msra.mxu0 0
    %2519 = vmatprep.subr.bf16.mxu0 0
    %2520 = vmatpush2.bf16.msra.mxu0 0
    %2521 = vmatprep.subr.bf16.mxu0 0
    %2522 = vmatpush2.bf16.msra.mxu0 0
    %2523 = vmatprep.subr.bf16.mxu0 0
    %2524 = vmatpush2.bf16.msra.mxu0 0
    %2525 = vmatprep.subr.bf16.mxu0 0
    %2526 = vmatpush2.bf16.msra.mxu0 0
    %2527 = vmatprep.subr.bf16.mxu0 0
    %2528 = vmatpush2.bf16.msra.mxu0 0
    %2529 = vmatprep.subr.bf16.mxu0 0
    %2530 = vmatpush2.bf16.msra.mxu0 0
    %2531 = vmatprep.subr.bf16.mxu0 0
    %2532 = vmatpush2.bf16.msra.mxu0 0
    %2533 = vmatprep.mubr.bf16.mxu0 0
    %2534 = vmatmul.mubr.bf16.gmra.mxu0 %v2499
    %v2535 = vpop.f32.mrf.mxu0
    %v2536 = vadd.f32 0.0, %v2535
    %v2537 = vpop.f32.mrf.mxu0
    %v2538 = vpop.f32.mrf.mxu0
    %v2539 = vpop.f32.mrf.mxu0
    %2540 = vdwg.mxu0
    %s2541 = scalar_lea.vmem %s1, 8
    %v2542 = vld [vmem:[%s2541] sm:$0xff]
    %2543 = vrot.lane.b32.xlu0 %v1634, 112
    %v2544 = vpop.permute.xlu0 %2543
    %v2546 = vadd.f32 %v2542, %v2544
    %2548 = vrot.lane.b32.xlu0 %v2536, 32
    %v2549 = vpop.permute.xlu0 %2548
    %v2551 = vadd.f32 %v2546, %v2549
    %2553 = vrot.lane.b32.xlu0 %v2551, 112
    %v2554 = vpop.permute.xlu0 %2553
    %v2556 = vmax.f32 %v2551, %v2554
    %v2557 = vsel 0, %v2556, %v1496
    %v2558 = vsel 1, %v2556, %v1497
    %v2559 = vsel 0, %v2556, %v1497
    %s2560 = scalar_lea.vmem %s0, 16
    %v2561 = vld [vmem:[%s2560] sm:$0xff]
    %v2562 = vadd.f32 %v2561, %v2536
    %v2563 = vadd.f32 %v2562, %v119
    %v2564 = vxor.u32 %v2563, 2147483648
    %v2565 = vmul.f32 %v2564, 1.442695
    %v2566 = vpow.pop %v2565
    %v2567 = vadd.f32 %v2566, 1.0
    %v2568 = vrcp.pop %v2567
    %v2569 = vmul.f32 1.0, %v2568
    %v2570 = vmul.f32 %v2569, %v130
    %2572 = vrot.lane.b32.xlu0 %v2570, 64
    %v2573 = vpop.permute.xlu0 %2572
    %v2575 = vadd.f32 %v2562, %v2573
    %v2576 = vtanh.pop %v2575
    %v2577 = vsub.f32 1.0, %v2569
    %2579 = vrot.lane.b32.xlu0 %v2576, 96
    %v2580 = vpop.permute.xlu0 %2579
    %v2582 = vmul.f32 %v2577, %v2580
    %v2583 = vmul.f32 %v2569, %v147
    %v2584 = vadd.f32 %v2582, %v2583
    %v2585 = vpack.c.bf16 %v2584, %v2584
    %2587 = vrot.lane.b32.xlu0 %v2585, 96
    %v2588 = vpop.permute.xlu0 %2587
    %v2590 = vsel %vm73, %v2588, 0
    %2592 = vmatprep.subr.bf16.mxu0 0
    %2593 = vmatpush1.bf16.msra.mxu0 0
    %2594 = vmatprep.subr.bf16.mxu0 0
    %2595 = vmatpush1.bf16.msra.mxu0 0
    %2596 = vmatprep.subr.bf16.mxu0 0
    %2597 = vmatpush1.bf16.msra.mxu0 0
    %2598 = vmatprep.subr.bf16.mxu0 0
    %2599 = vmatpush1.bf16.msra.mxu0 0
    %2600 = vmatprep.subr.bf16.mxu0 0
    %2601 = vmatpush1.bf16.msra.mxu0 0
    %2602 = vmatprep.subr.bf16.mxu0 0
    %2603 = vmatpush1.bf16.msra.mxu0 0
    %2604 = vmatprep.subr.bf16.mxu0 0
    %2605 = vmatpush1.bf16.msra.mxu0 %v175
    %2606 = vmatprep.subr.bf16.mxu0 0
    %2607 = vmatpush1.bf16.msra.mxu0 %v174
    %2608 = vmatprep.subr.bf16.mxu0 0
    %2609 = vmatpush2.bf16.msra.mxu0 0
    %2610 = vmatprep.subr.bf16.mxu0 0
    %2611 = vmatpush2.bf16.msra.mxu0 0
    %2612 = vmatprep.subr.bf16.mxu0 0
    %2613 = vmatpush2.bf16.msra.mxu0 0
    %2614 = vmatprep.subr.bf16.mxu0 0
    %2615 = vmatpush2.bf16.msra.mxu0 0
    %2616 = vmatprep.subr.bf16.mxu0 0
    %2617 = vmatpush2.bf16.msra.mxu0 0
    %2618 = vmatprep.subr.bf16.mxu0 0
    %2619 = vmatpush2.bf16.msra.mxu0 0
    %2620 = vmatprep.subr.bf16.mxu0 0
    %2621 = vmatpush2.bf16.msra.mxu0 0
    %2622 = vmatprep.subr.bf16.mxu0 0
    %2623 = vmatpush2.bf16.msra.mxu0 0
    %2624 = vmatprep.mubr.bf16.mxu0 0
    %2625 = vmatmul.mubr.bf16.gmra.mxu0 %v2590
    %v2626 = vpop.f32.mrf.mxu0
    %v2627 = vadd.f32 %v161, %v2626
    %v2628 = vpop.f32.mrf.mxu0
    %v2629 = vpop.f32.mrf.mxu0
    %v2630 = vpop.f32.mrf.mxu0
    %2631 = vdwg.mxu0
    %v2632 = vadd.f32 %v2627, %v222
    %v2633 = vxor.u32 %v2632, 2147483648
    %v2634 = vmul.f32 %v2633, 1.442695
    %v2635 = vpow.pop %v2634
    %v2636 = vadd.f32 %v2635, 1.0
    %v2637 = vrcp.pop %v2636
    %v2638 = vmul.f32 1.0, %v2637
    %v2639 = vmul.f32 %v2638, %v234
    %2641 = vrot.lane.b32.xlu0 %v2639, 64
    %v2642 = vpop.permute.xlu0 %2641
    %v2644 = vadd.f32 %v2627, %v2642
    %v2645 = vtanh.pop %v2644
    %v2646 = vsub.f32 1.0, %v2638
    %2648 = vrot.lane.b32.xlu0 %v2645, 96
    %v2649 = vpop.permute.xlu0 %2648
    %v2651 = vmul.f32 %v2646, %v2649
    %v2652 = vmul.f32 %v2638, %v251
    %v2653 = vadd.f32 %v2651, %v2652
    %v2654 = vpack.c.bf16 %v2653, %v2653
    %2656 = vrot.lane.b32.xlu0 %v2654, 96
    %v2657 = vpop.permute.xlu0 %2656
    %v2659 = vsel %vm73, %v2657, 0
    %2661 = vmatprep.subr.bf16.mxu0 0
    %2662 = vmatpush1.bf16.msra.mxu0 0
    %2663 = vmatprep.subr.bf16.mxu0 0
    %2664 = vmatpush1.bf16.msra.mxu0 0
    %2665 = vmatprep.subr.bf16.mxu0 0
    %2666 = vmatpush1.bf16.msra.mxu0 0
    %2667 = vmatprep.subr.bf16.mxu0 0
    %2668 = vmatpush1.bf16.msra.mxu0 0
    %2669 = vmatprep.subr.bf16.mxu0 0
    %2670 = vmatpush1.bf16.msra.mxu0 0
    %2671 = vmatprep.subr.bf16.mxu0 0
    %2672 = vmatpush1.bf16.msra.mxu0 0
    %2673 = vmatprep.subr.bf16.mxu0 0
    %2674 = vmatpush1.bf16.msra.mxu0 %v272
    %2675 = vmatprep.subr.bf16.mxu0 0
    %2676 = vmatpush1.bf16.msra.mxu0 %v271
    %2677 = vmatprep.subr.bf16.mxu0 0
    %2678 = vmatpush2.bf16.msra.mxu0 0
    %2679 = vmatprep.subr.bf16.mxu0 0
    %2680 = vmatpush2.bf16.msra.mxu0 0
    %2681 = vmatprep.subr.bf16.mxu0 0
    %2682 = vmatpush2.bf16.msra.mxu0 0
    %2683 = vmatprep.subr.bf16.mxu0 0
    %2684 = vmatpush2.bf16.msra.mxu0 0
    %2685 = vmatprep.subr.bf16.mxu0 0
    %2686 = vmatpush2.bf16.msra.mxu0 0
    %2687 = vmatprep.subr.bf16.mxu0 0
    %2688 = vmatpush2.bf16.msra.mxu0 0
    %2689 = vmatprep.subr.bf16.mxu0 0
    %2690 = vmatpush2.bf16.msra.mxu0 0
    %2691 = vmatprep.subr.bf16.mxu0 0
    %2692 = vmatpush2.bf16.msra.mxu0 0
    %2693 = vmatprep.mubr.bf16.mxu0 0
    %2694 = vmatmul.mubr.bf16.gmra.mxu0 %v2659
    %v2695 = vpop.f32.mrf.mxu0
    %v2696 = vadd.f32 0.0, %v2695
    %v2697 = vpop.f32.mrf.mxu0
    %v2698 = vpop.f32.mrf.mxu0
    %v2699 = vpop.f32.mrf.mxu0
    %2700 = vdwg.mxu0
    %v2702 = vcombine.high %v2696, %v2696
    %v2704 = vunpack.c.l.s4 1966171168
    %v2705 = vunpack.c.0.s8 %v2704
    %v2706 = vlaneseq
    %v2707 = vshrl.u32 %v2706, 7
    %v2708 = vsub.s32 %v2705, %v2707
    %v2709 = vrot.slane %v2696, %v2708
    %v2711 = vunpack.c.l.s4 1966171168
    %v2712 = vunpack.c.0.s8 %v2711
    %v2713 = vlaneseq
    %v2714 = vshrl.u32 %v2713, 7
    %v2715 = vsub.s32 %v2712, %v2714
    %v2716 = vrot.slane %v2702, %v2715
    %v2717 = vcombine.high %v2709, %v2709
    %v2718 = vcombine.high %v2716, %v2716
    %v2720 = vunpack.c.l.s4 1966171168
    %v2721 = vunpack.c.0.s8 %v2720
    %v2722 = vlaneseq
    %v2723 = vshrl.u32 %v2722, 7
    %v2724 = vsub.s32 %v2721, %v2723
    %v2725 = vrot.slane %v2709, %v2724
    %v2727 = vunpack.c.l.s4 1966171168
    %v2728 = vunpack.c.0.s8 %v2727
    %v2729 = vlaneseq
    %v2730 = vshrl.u32 %v2729, 7
    %v2731 = vsub.s32 %v2728, %v2730
    %v2732 = vrot.slane %v2716, %v2731
    %v2734 = vunpack.c.l.s4 1966171168
    %v2735 = vunpack.c.0.s8 %v2734
    %v2736 = vlaneseq
    %v2737 = vshrl.u32 %v2736, 7
    %v2738 = vsub.s32 %v2735, %v2737
    %v2739 = vrot.slane %v2717, %v2738
    %v2741 = vunpack.c.l.s4 1966171168
    %v2742 = vunpack.c.0.s8 %v2741
    %v2743 = vlaneseq
    %v2744 = vshrl.u32 %v2743, 7
    %v2745 = vsub.s32 %v2742, %v2744
    %v2746 = vrot.slane %v2718, %v2745
    %v2747 = vcombine.high %v2725, %v2725
    %v2748 = vcombine.high %v2732, %v2732
    %v2749 = vcombine.high %v2739, %v2739
    %v2750 = vcombine.high %v2746, %v2746
    %v2751 = vlaneseq
    %v2752 = vshrl.u32 %v2751, 7
    %v2753 = vsub.s32 0, %v2752
    %v2754 = vrot.slane %v2725, %v2753
    %v2755 = vlaneseq
    %v2756 = vshrl.u32 %v2755, 7
    %v2757 = vsub.s32 0, %v2756
    %v2758 = vrot.slane %v2739, %v2757
    %v2759 = vlaneseq
    %v2760 = vshrl.u32 %v2759, 7
    %v2761 = vsub.s32 0, %v2760
    %v2762 = vrot.slane %v2747, %v2761
    %v2763 = vlaneseq
    %v2764 = vshrl.u32 %v2763, 7
    %v2765 = vsub.s32 0, %v2764
    %v2766 = vrot.slane %v2749, %v2765
    %v2767 = vlaneseq
    %v2768 = vshrl.u32 %v2767, 7
    %v2769 = vsub.s32 0, %v2768
    %v2770 = vrot.slane %v2732, %v2769
    %v2771 = vlaneseq
    %v2772 = vshrl.u32 %v2771, 7
    %v2773 = vsub.s32 0, %v2772
    %v2774 = vrot.slane %v2746, %v2773
    %v2775 = vlaneseq
    %v2776 = vshrl.u32 %v2775, 7
    %v2777 = vsub.s32 0, %v2776
    %v2778 = vrot.slane %v2748, %v2777
    %v2779 = vlaneseq
    %v2780 = vshrl.u32 %v2779, 7
    %v2781 = vsub.s32 0, %v2780
    %v2782 = vrot.slane %v2750, %v2781
    %v2791 = vadd.f32 %v318, %v2754
    %v2792 = vadd.f32 %v319, %v2754
    %v2793 = vadd.f32 %v320, %v2758
    %v2794 = vadd.f32 %v321, %v2758
    %v2795 = vadd.f32 %v322, %v2762
    %v2796 = vadd.f32 %v323, %v2762
    %v2797 = vadd.f32 %v324, %v2766
    %v2798 = vadd.f32 %v325, %v2766
    %v2799 = vadd.f32 %v326, %v2770
    %v2800 = vadd.f32 %v327, %v2770
    %v2801 = vadd.f32 %v328, %v2774
    %v2802 = vadd.f32 %v329, %v2774
    %v2803 = vadd.f32 %v330, %v2778
    %v2804 = vadd.f32 %v331, %v2778
    %v2805 = vadd.f32 %v332, %v2782
    %v2806 = vadd.f32 %v333, %v2782
    %v2807 = vtanh.pop %v2791
    %v2808 = vtanh.pop %v2792
    %v2809 = vtanh.pop %v2793
    %v2810 = vtanh.pop %v2794
    %v2811 = vtanh.pop %v2795
    %v2812 = vtanh.pop %v2796
    %v2813 = vtanh.pop %v2797
    %v2814 = vtanh.pop %v2798
    %v2815 = vtanh.pop %v2799
    %v2816 = vtanh.pop %v2800
    %v2817 = vtanh.pop %v2801
    %v2818 = vtanh.pop %v2802
    %v2819 = vtanh.pop %v2803
    %v2820 = vtanh.pop %v2804
    %v2821 = vtanh.pop %v2805
    %v2822 = vtanh.pop %v2806
    %v2823 = vmul.f32 %v2807, %v461
    %v2824 = vmul.f32 %v2808, %v461
    %v2825 = vmul.f32 %v2809, %v461
    %v2826 = vmul.f32 %v2810, %v461
    %v2827 = vmul.f32 %v2811, %v461
    %v2828 = vmul.f32 %v2812, %v461
    %v2829 = vmul.f32 %v2813, %v461
    %v2830 = vmul.f32 %v2814, %v461
    %v2831 = vmul.f32 %v2815, %v461
    %v2832 = vmul.f32 %v2816, %v461
    %v2833 = vmul.f32 %v2817, %v461
    %v2834 = vmul.f32 %v2818, %v461
    %v2835 = vmul.f32 %v2819, %v461
    %v2836 = vmul.f32 %v2820, %v461
    %v2837 = vmul.f32 %v2821, %v461
    %v2838 = vmul.f32 %v2822, %v461
    %v2839 = vsel %vm479, %v2823, 0.0
    %2840 = vadd.xlane.f32.xlu0 %v2839
    %v2841 = vpop.xlane.xlu0 %2840
    %v2842 = vsel %vm479, %v2824, 0.0
    %2843 = vadd.xlane.f32.xlu0 %v2842
    %v2844 = vpop.xlane.xlu0 %2843
    %v2845 = vsel %vm479, %v2825, 0.0
    %2846 = vadd.xlane.f32.xlu0 %v2845
    %v2847 = vpop.xlane.xlu0 %2846
    %v2848 = vsel %vm479, %v2826, 0.0
    %2849 = vadd.xlane.f32.xlu0 %v2848
    %v2850 = vpop.xlane.xlu0 %2849
    %v2851 = vsel %vm479, %v2827, 0.0
    %2852 = vadd.xlane.f32.xlu0 %v2851
    %v2853 = vpop.xlane.xlu0 %2852
    %v2854 = vsel %vm479, %v2828, 0.0
    %2855 = vadd.xlane.f32.xlu0 %v2854
    %v2856 = vpop.xlane.xlu0 %2855
    %v2857 = vsel %vm479, %v2829, 0.0
    %2858 = vadd.xlane.f32.xlu0 %v2857
    %v2859 = vpop.xlane.xlu0 %2858
    %v2860 = vsel %vm479, %v2830, 0.0
    %2861 = vadd.xlane.f32.xlu0 %v2860
    %v2862 = vpop.xlane.xlu0 %2861
    %v2863 = vsel %vm479, %v2831, 0.0
    %2864 = vadd.xlane.f32.xlu0 %v2863
    %v2865 = vpop.xlane.xlu0 %2864
    %v2866 = vsel %vm479, %v2832, 0.0
    %2867 = vadd.xlane.f32.xlu0 %v2866
    %v2868 = vpop.xlane.xlu0 %2867
    %v2869 = vsel %vm479, %v2833, 0.0
    %2870 = vadd.xlane.f32.xlu0 %v2869
    %v2871 = vpop.xlane.xlu0 %2870
    %v2872 = vsel %vm479, %v2834, 0.0
    %2873 = vadd.xlane.f32.xlu0 %v2872
    %v2874 = vpop.xlane.xlu0 %2873
    %v2875 = vsel %vm479, %v2835, 0.0
    %2876 = vadd.xlane.f32.xlu0 %v2875
    %v2877 = vpop.xlane.xlu0 %2876
    %v2878 = vsel %vm479, %v2836, 0.0
    %2879 = vadd.xlane.f32.xlu0 %v2878
    %v2880 = vpop.xlane.xlu0 %2879
    %v2881 = vsel %vm479, %v2837, 0.0
    %2882 = vadd.xlane.f32.xlu0 %v2881
    %v2883 = vpop.xlane.xlu0 %2882
    %v2884 = vsel %vm479, %v2838, 0.0
    %2885 = vadd.xlane.f32.xlu0 %v2884
    %v2886 = vpop.xlane.xlu0 %2885
    %v2887 = vmul.f32 %v2841, %v535
    %v2888 = vmul.f32 %v2844, %v539
    %v2889 = vmul.f32 %v2847, %v546
    %v2890 = vmul.f32 %v2850, %v550
    %v2891 = vmul.f32 %v2853, %v557
    %v2892 = vmul.f32 %v2856, %v561
    %v2893 = vmul.f32 %v2859, %v568
    %v2894 = vmul.f32 %v2862, %v572
    %v2895 = vmul.f32 %v2865, %v579
    %v2896 = vmul.f32 %v2868, %v583
    %v2897 = vmul.f32 %v2871, %v590
    %v2898 = vmul.f32 %v2874, %v594
    %v2899 = vmul.f32 %v2877, %v601
    %v2900 = vmul.f32 %v2880, %v605
    %v2901 = vmul.f32 %v2883, %v612
    %v2902 = vmul.f32 %v2886, %v616
    %v2903 = vadd.f32 %v2887, %v656
    %v2904 = vadd.f32 %v2888, %v660
    %v2905 = vadd.f32 %v2889, %v667
    %v2906 = vadd.f32 %v2890, %v671
    %v2907 = vadd.f32 %v2891, %v678
    %v2908 = vadd.f32 %v2892, %v682
    %v2909 = vadd.f32 %v2893, %v689
    %v2910 = vadd.f32 %v2894, %v693
    %v2911 = vadd.f32 %v2895, %v700
    %v2912 = vadd.f32 %v2896, %v704
    %v2913 = vadd.f32 %v2897, %v711
    %v2914 = vadd.f32 %v2898, %v715
    %v2915 = vadd.f32 %v2899, %v722
    %v2916 = vadd.f32 %v2900, %v726
    %v2917 = vadd.f32 %v2901, %v733
    %v2918 = vadd.f32 %v2902, %v737
    %2935 = vset.pattern.permute.xlu0 0
    %2936 = vperm.xlu0 %2935, %v2903
    %v2937 = vpop.permute.xlu0 %2936
    %2938 = vset.pattern.permute.xlu0 0
    %2939 = vperm.xlu0 %2938, %v2904
    %v2940 = vpop.permute.xlu0 %2939
    %2941 = vset.pattern.permute.xlu0 0
    %2942 = vperm.xlu0 %2941, %v2905
    %v2943 = vpop.permute.xlu0 %2942
    %2944 = vset.pattern.permute.xlu0 0
    %2945 = vperm.xlu0 %2944, %v2906
    %v2946 = vpop.permute.xlu0 %2945
    %2947 = vset.pattern.permute.xlu0 0
    %2948 = vperm.xlu0 %2947, %v2907
    %v2949 = vpop.permute.xlu0 %2948
    %2950 = vset.pattern.permute.xlu0 0
    %2951 = vperm.xlu0 %2950, %v2908
    %v2952 = vpop.permute.xlu0 %2951
    %2953 = vset.pattern.permute.xlu0 0
    %2954 = vperm.xlu0 %2953, %v2909
    %v2955 = vpop.permute.xlu0 %2954
    %2956 = vset.pattern.permute.xlu0 0
    %2957 = vperm.xlu0 %2956, %v2910
    %v2958 = vpop.permute.xlu0 %2957
    %2959 = vset.pattern.permute.xlu0 0
    %2960 = vperm.xlu0 %2959, %v2911
    %v2961 = vpop.permute.xlu0 %2960
    %2962 = vset.pattern.permute.xlu0 0
    %2963 = vperm.xlu0 %2962, %v2912
    %v2964 = vpop.permute.xlu0 %2963
    %2965 = vset.pattern.permute.xlu0 0
    %2966 = vperm.xlu0 %2965, %v2913
    %v2967 = vpop.permute.xlu0 %2966
    %2968 = vset.pattern.permute.xlu0 0
    %2969 = vperm.xlu0 %2968, %v2914
    %v2970 = vpop.permute.xlu0 %2969
    %2971 = vset.pattern.permute.xlu0 0
    %2972 = vperm.xlu0 %2971, %v2915
    %v2973 = vpop.permute.xlu0 %2972
    %2974 = vset.pattern.permute.xlu0 0
    %2975 = vperm.xlu0 %2974, %v2916
    %v2976 = vpop.permute.xlu0 %2975
    %2977 = vset.pattern.permute.xlu0 0
    %2978 = vperm.xlu0 %2977, %v2917
    %v2979 = vpop.permute.xlu0 %2978
    %2980 = vset.pattern.permute.xlu0 0
    %2981 = vperm.xlu0 %2980, %v2918
    %v2982 = vpop.permute.xlu0 %2981
    %v2983 = vlaneseq
    %v2984 = vshrl.u32 %v2983, 7
    %v2985 = vsub.s32 %v835, %v2984
    %v2986 = vrot.slane %v2937, %v2985
    %v2987 = vlaneseq
    %v2988 = vshrl.u32 %v2987, 7
    %v2989 = vsub.s32 %v840, %v2988
    %v2990 = vrot.slane %v2940, %v2989
    %v2991 = vsel %vm845, %v2990, %v2986
    %v2992 = vlaneseq
    %v2993 = vshrl.u32 %v2992, 7
    %v2994 = vsub.s32 %v835, %v2993
    %v2995 = vrot.slane %v2943, %v2994
    %v2996 = vlaneseq
    %v2997 = vshrl.u32 %v2996, 7
    %v2998 = vsub.s32 %v840, %v2997
    %v2999 = vrot.slane %v2946, %v2998
    %v3000 = vsel %vm845, %v2999, %v2995
    %v3001 = vlaneseq
    %v3002 = vshrl.u32 %v3001, 7
    %v3003 = vsub.s32 %v835, %v3002
    %v3004 = vrot.slane %v2949, %v3003
    %v3005 = vlaneseq
    %v3006 = vshrl.u32 %v3005, 7
    %v3007 = vsub.s32 %v840, %v3006
    %v3008 = vrot.slane %v2952, %v3007
    %v3009 = vsel %vm845, %v3008, %v3004
    %v3010 = vlaneseq
    %v3011 = vshrl.u32 %v3010, 7
    %v3012 = vsub.s32 %v835, %v3011
    %v3013 = vrot.slane %v2955, %v3012
    %v3014 = vlaneseq
    %v3015 = vshrl.u32 %v3014, 7
    %v3016 = vsub.s32 %v840, %v3015
    %v3017 = vrot.slane %v2958, %v3016
    %v3018 = vsel %vm845, %v3017, %v3013
    %v3019 = vlaneseq
    %v3020 = vshrl.u32 %v3019, 7
    %v3021 = vsub.s32 %v835, %v3020
    %v3022 = vrot.slane %v2961, %v3021
    %v3023 = vlaneseq
    %v3024 = vshrl.u32 %v3023, 7
    %v3025 = vsub.s32 %v840, %v3024
    %v3026 = vrot.slane %v2964, %v3025
    %v3027 = vsel %vm845, %v3026, %v3022
    %v3028 = vlaneseq
    %v3029 = vshrl.u32 %v3028, 7
    %v3030 = vsub.s32 %v835, %v3029
    %v3031 = vrot.slane %v2967, %v3030
    %v3032 = vlaneseq
    %v3033 = vshrl.u32 %v3032, 7
    %v3034 = vsub.s32 %v840, %v3033
    %v3035 = vrot.slane %v2970, %v3034
    %v3036 = vsel %vm845, %v3035, %v3031
    %v3037 = vlaneseq
    %v3038 = vshrl.u32 %v3037, 7
    %v3039 = vsub.s32 %v835, %v3038
    %v3040 = vrot.slane %v2973, %v3039
    %v3041 = vlaneseq
    %v3042 = vshrl.u32 %v3041, 7
    %v3043 = vsub.s32 %v840, %v3042
    %v3044 = vrot.slane %v2976, %v3043
    %v3045 = vsel %vm845, %v3044, %v3040
    %v3046 = vlaneseq
    %v3047 = vshrl.u32 %v3046, 7
    %v3048 = vsub.s32 %v835, %v3047
    %v3049 = vrot.slane %v2979, %v3048
    %v3050 = vlaneseq
    %v3051 = vshrl.u32 %v3050, 7
    %v3052 = vsub.s32 %v840, %v3051
    %v3053 = vrot.slane %v2982, %v3052
    %v3054 = vsel %vm845, %v3053, %v3049
    %v3055 = vsel %vm910, %v3000, %v2991
    %v3056 = vsel %vm912, %v3009, %v3055
    %v3057 = vsel %vm914, %v3018, %v3056
    %v3058 = vsel %vm916, %v3027, %v3057
    %v3059 = vsel %vm918, %v3036, %v3058
    %v3060 = vsel %vm920, %v3045, %v3059
    %v3061 = vsel %vm922, %v3054, %v3060
    %v3063 = vsel %vm479, %v3061, -inf
    %3064 = vmax.xlane.f32.xlu0 %v3063
    %v3065 = vpop.xlane.xlu0 %3064
    %v3067 = vlaneseq
    %v3068 = vshrl.u32 %v3067, 7
    %v3069 = vsub.s32 0, %v3068
    %v3070 = vrot.slane %v3065, %v3069
    %v3071 = vlaneseq
    %v3072 = vshrl.u32 %v3071, 7
    %v3073 = vsub.s32 1, %v3072
    %v3074 = vrot.slane %v3065, %v3073
    %v3075 = vlaneseq
    %v3076 = vshrl.u32 %v3075, 7
    %v3077 = vsub.s32 2, %v3076
    %v3078 = vrot.slane %v3065, %v3077
    %v3079 = vlaneseq
    %v3080 = vshrl.u32 %v3079, 7
    %v3081 = vsub.s32 3, %v3080
    %v3082 = vrot.slane %v3065, %v3081
    %v3083 = vlaneseq
    %v3084 = vshrl.u32 %v3083, 7
    %v3085 = vsub.s32 4, %v3084
    %v3086 = vrot.slane %v3065, %v3085
    %v3087 = vlaneseq
    %v3088 = vshrl.u32 %v3087, 7
    %v3089 = vsub.s32 5, %v3088
    %v3090 = vrot.slane %v3065, %v3089
    %v3091 = vlaneseq
    %v3092 = vshrl.u32 %v3091, 7
    %v3093 = vsub.s32 6, %v3092
    %v3094 = vrot.slane %v3065, %v3093
    %v3095 = vlaneseq
    %v3096 = vshrl.u32 %v3095, 7
    %v3097 = vsub.s32 7, %v3096
    %v3098 = vrot.slane %v3065, %v3097
    %v3107 = vsub.f32 %v2903, %v3070
    %v3108 = vsub.f32 %v2904, %v3070
    %v3109 = vsub.f32 %v2905, %v3074
    %v3110 = vsub.f32 %v2906, %v3074
    %v3111 = vsub.f32 %v2907, %v3078
    %v3112 = vsub.f32 %v2908, %v3078
    %v3113 = vsub.f32 %v2909, %v3082
    %v3114 = vsub.f32 %v2910, %v3082
    %v3115 = vsub.f32 %v2911, %v3086
    %v3116 = vsub.f32 %v2912, %v3086
    %v3117 = vsub.f32 %v2913, %v3090
    %v3118 = vsub.f32 %v2914, %v3090
    %v3119 = vsub.f32 %v2915, %v3094
    %v3120 = vsub.f32 %v2916, %v3094
    %v3121 = vsub.f32 %v2917, %v3098
    %v3122 = vsub.f32 %v2918, %v3098
    %v3123 = vmul.f32 %v3107, 1.442695
    %v3124 = vpow.pop %v3123
    %v3125 = vmul.f32 %v3108, 1.442695
    %v3126 = vpow.pop %v3125
    %v3127 = vmul.f32 %v3109, 1.442695
    %v3128 = vpow.pop %v3127
    %v3129 = vmul.f32 %v3110, 1.442695
    %v3130 = vpow.pop %v3129
    %v3131 = vmul.f32 %v3111, 1.442695
    %v3132 = vpow.pop %v3131
    %v3133 = vmul.f32 %v3112, 1.442695
    %v3134 = vpow.pop %v3133
    %v3135 = vmul.f32 %v3113, 1.442695
    %v3136 = vpow.pop %v3135
    %v3137 = vmul.f32 %v3114, 1.442695
    %v3138 = vpow.pop %v3137
    %v3139 = vmul.f32 %v3115, 1.442695
    %v3140 = vpow.pop %v3139
    %v3141 = vmul.f32 %v3116, 1.442695
    %v3142 = vpow.pop %v3141
    %v3143 = vmul.f32 %v3117, 1.442695
    %v3144 = vpow.pop %v3143
    %v3145 = vmul.f32 %v3118, 1.442695
    %v3146 = vpow.pop %v3145
    %v3147 = vmul.f32 %v3119, 1.442695
    %v3148 = vpow.pop %v3147
    %v3149 = vmul.f32 %v3120, 1.442695
    %v3150 = vpow.pop %v3149
    %v3151 = vmul.f32 %v3121, 1.442695
    %v3152 = vpow.pop %v3151
    %v3153 = vmul.f32 %v3122, 1.442695
    %v3154 = vpow.pop %v3153
    %3171 = vset.pattern.permute.xlu0 0
    %3172 = vperm.xlu0 %3171, %v3124
    %v3173 = vpop.permute.xlu0 %3172
    %3174 = vset.pattern.permute.xlu0 0
    %3175 = vperm.xlu0 %3174, %v3126
    %v3176 = vpop.permute.xlu0 %3175
    %3177 = vset.pattern.permute.xlu0 0
    %3178 = vperm.xlu0 %3177, %v3128
    %v3179 = vpop.permute.xlu0 %3178
    %3180 = vset.pattern.permute.xlu0 0
    %3181 = vperm.xlu0 %3180, %v3130
    %v3182 = vpop.permute.xlu0 %3181
    %3183 = vset.pattern.permute.xlu0 0
    %3184 = vperm.xlu0 %3183, %v3132
    %v3185 = vpop.permute.xlu0 %3184
    %3186 = vset.pattern.permute.xlu0 0
    %3187 = vperm.xlu0 %3186, %v3134
    %v3188 = vpop.permute.xlu0 %3187
    %3189 = vset.pattern.permute.xlu0 0
    %3190 = vperm.xlu0 %3189, %v3136
    %v3191 = vpop.permute.xlu0 %3190
    %3192 = vset.pattern.permute.xlu0 0
    %3193 = vperm.xlu0 %3192, %v3138
    %v3194 = vpop.permute.xlu0 %3193
    %3195 = vset.pattern.permute.xlu0 0
    %3196 = vperm.xlu0 %3195, %v3140
    %v3197 = vpop.permute.xlu0 %3196
    %3198 = vset.pattern.permute.xlu0 0
    %3199 = vperm.xlu0 %3198, %v3142
    %v3200 = vpop.permute.xlu0 %3199
    %3201 = vset.pattern.permute.xlu0 0
    %3202 = vperm.xlu0 %3201, %v3144
    %v3203 = vpop.permute.xlu0 %3202
    %3204 = vset.pattern.permute.xlu0 0
    %3205 = vperm.xlu0 %3204, %v3146
    %v3206 = vpop.permute.xlu0 %3205
    %3207 = vset.pattern.permute.xlu0 0
    %3208 = vperm.xlu0 %3207, %v3148
    %v3209 = vpop.permute.xlu0 %3208
    %3210 = vset.pattern.permute.xlu0 0
    %3211 = vperm.xlu0 %3210, %v3150
    %v3212 = vpop.permute.xlu0 %3211
    %3213 = vset.pattern.permute.xlu0 0
    %3214 = vperm.xlu0 %3213, %v3152
    %v3215 = vpop.permute.xlu0 %3214
    %3216 = vset.pattern.permute.xlu0 0
    %3217 = vperm.xlu0 %3216, %v3154
    %v3218 = vpop.permute.xlu0 %3217
    %v3219 = vlaneseq
    %v3220 = vshrl.u32 %v3219, 7
    %v3221 = vsub.s32 %v835, %v3220
    %v3222 = vrot.slane %v3173, %v3221
    %v3223 = vlaneseq
    %v3224 = vshrl.u32 %v3223, 7
    %v3225 = vsub.s32 %v840, %v3224
    %v3226 = vrot.slane %v3176, %v3225
    %v3227 = vsel %vm845, %v3226, %v3222
    %v3228 = vlaneseq
    %v3229 = vshrl.u32 %v3228, 7
    %v3230 = vsub.s32 %v835, %v3229
    %v3231 = vrot.slane %v3179, %v3230
    %v3232 = vlaneseq
    %v3233 = vshrl.u32 %v3232, 7
    %v3234 = vsub.s32 %v840, %v3233
    %v3235 = vrot.slane %v3182, %v3234
    %v3236 = vsel %vm845, %v3235, %v3231
    %v3237 = vlaneseq
    %v3238 = vshrl.u32 %v3237, 7
    %v3239 = vsub.s32 %v835, %v3238
    %v3240 = vrot.slane %v3185, %v3239
    %v3241 = vlaneseq
    %v3242 = vshrl.u32 %v3241, 7
    %v3243 = vsub.s32 %v840, %v3242
    %v3244 = vrot.slane %v3188, %v3243
    %v3245 = vsel %vm845, %v3244, %v3240
    %v3246 = vlaneseq
    %v3247 = vshrl.u32 %v3246, 7
    %v3248 = vsub.s32 %v835, %v3247
    %v3249 = vrot.slane %v3191, %v3248
    %v3250 = vlaneseq
    %v3251 = vshrl.u32 %v3250, 7
    %v3252 = vsub.s32 %v840, %v3251
    %v3253 = vrot.slane %v3194, %v3252
    %v3254 = vsel %vm845, %v3253, %v3249
    %v3255 = vlaneseq
    %v3256 = vshrl.u32 %v3255, 7
    %v3257 = vsub.s32 %v835, %v3256
    %v3258 = vrot.slane %v3197, %v3257
    %v3259 = vlaneseq
    %v3260 = vshrl.u32 %v3259, 7
    %v3261 = vsub.s32 %v840, %v3260
    %v3262 = vrot.slane %v3200, %v3261
    %v3263 = vsel %vm845, %v3262, %v3258
    %v3264 = vlaneseq
    %v3265 = vshrl.u32 %v3264, 7
    %v3266 = vsub.s32 %v835, %v3265
    %v3267 = vrot.slane %v3203, %v3266
    %v3268 = vlaneseq
    %v3269 = vshrl.u32 %v3268, 7
    %v3270 = vsub.s32 %v840, %v3269
    %v3271 = vrot.slane %v3206, %v3270
    %v3272 = vsel %vm845, %v3271, %v3267
    %v3273 = vlaneseq
    %v3274 = vshrl.u32 %v3273, 7
    %v3275 = vsub.s32 %v835, %v3274
    %v3276 = vrot.slane %v3209, %v3275
    %v3277 = vlaneseq
    %v3278 = vshrl.u32 %v3277, 7
    %v3279 = vsub.s32 %v840, %v3278
    %v3280 = vrot.slane %v3212, %v3279
    %v3281 = vsel %vm845, %v3280, %v3276
    %v3282 = vlaneseq
    %v3283 = vshrl.u32 %v3282, 7
    %v3284 = vsub.s32 %v835, %v3283
    %v3285 = vrot.slane %v3215, %v3284
    %v3286 = vlaneseq
    %v3287 = vshrl.u32 %v3286, 7
    %v3288 = vsub.s32 %v840, %v3287
    %v3289 = vrot.slane %v3218, %v3288
    %v3290 = vsel %vm845, %v3289, %v3285
    %v3291 = vsel %vm910, %v3236, %v3227
    %v3292 = vsel %vm912, %v3245, %v3291
    %v3293 = vsel %vm914, %v3254, %v3292
    %v3294 = vsel %vm916, %v3263, %v3293
    %v3295 = vsel %vm918, %v3272, %v3294
    %v3296 = vsel %vm920, %v3281, %v3295
    %v3297 = vsel %vm922, %v3290, %v3296
    %v3299 = vsel %vm479, %v3297, 0.0
    %3300 = vadd.xlane.f32.xlu0 %v3299
    %v3301 = vpop.xlane.xlu0 %3300
    %v3302 = vrcp.pop %v3301
    %v3304 = vlaneseq
    %v3305 = vshrl.u32 %v3304, 7
    %v3306 = vsub.s32 0, %v3305
    %v3307 = vrot.slane %v3302, %v3306
    %v3308 = vlaneseq
    %v3309 = vshrl.u32 %v3308, 7
    %v3310 = vsub.s32 1, %v3309
    %v3311 = vrot.slane %v3302, %v3310
    %v3312 = vlaneseq
    %v3313 = vshrl.u32 %v3312, 7
    %v3314 = vsub.s32 2, %v3313
    %v3315 = vrot.slane %v3302, %v3314
    %v3316 = vlaneseq
    %v3317 = vshrl.u32 %v3316, 7
    %v3318 = vsub.s32 3, %v3317
    %v3319 = vrot.slane %v3302, %v3318
    %v3320 = vlaneseq
    %v3321 = vshrl.u32 %v3320, 7
    %v3322 = vsub.s32 4, %v3321
    %v3323 = vrot.slane %v3302, %v3322
    %v3324 = vlaneseq
    %v3325 = vshrl.u32 %v3324, 7
    %v3326 = vsub.s32 5, %v3325
    %v3327 = vrot.slane %v3302, %v3326
    %v3328 = vlaneseq
    %v3329 = vshrl.u32 %v3328, 7
    %v3330 = vsub.s32 6, %v3329
    %v3331 = vrot.slane %v3302, %v3330
    %v3332 = vlaneseq
    %v3333 = vshrl.u32 %v3332, 7
    %v3334 = vsub.s32 7, %v3333
    %v3335 = vrot.slane %v3302, %v3334
    %v3344 = vmul.f32 %v3124, %v3307
    %v3345 = vmul.f32 %v3126, %v3307
    %v3346 = vmul.f32 %v3128, %v3311
    %v3347 = vmul.f32 %v3130, %v3311
    %v3348 = vmul.f32 %v3132, %v3315
    %v3349 = vmul.f32 %v3134, %v3315
    %v3350 = vmul.f32 %v3136, %v3319
    %v3351 = vmul.f32 %v3138, %v3319
    %v3352 = vmul.f32 %v3140, %v3323
    %v3353 = vmul.f32 %v3142, %v3323
    %v3354 = vmul.f32 %v3144, %v3327
    %v3355 = vmul.f32 %v3146, %v3327
    %v3356 = vmul.f32 %v3148, %v3331
    %v3357 = vmul.f32 %v3150, %v3331
    %v3358 = vmul.f32 %v3152, %v3335
    %v3359 = vmul.f32 %v3154, %v3335
    %3361 = vset.pattern.permute.xlu0 0
    %3362 = vperm.xlu0 %3361, %v3344
    %v3363 = vpop.permute.xlu0 %3362
    %3366 = vset.pattern.permute.xlu0 0
    %3367 = vperm.xlu0 %3366, %v3345
    %v3368 = vpop.permute.xlu0 %3367
    %3371 = vset.pattern.permute.xlu0 0
    %3372 = vperm.xlu0 %3371, %v3346
    %v3373 = vpop.permute.xlu0 %3372
    %3376 = vset.pattern.permute.xlu0 0
    %3377 = vperm.xlu0 %3376, %v3347
    %v3378 = vpop.permute.xlu0 %3377
    %3381 = vset.pattern.permute.xlu0 0
    %3382 = vperm.xlu0 %3381, %v3348
    %v3383 = vpop.permute.xlu0 %3382
    %3386 = vset.pattern.permute.xlu0 0
    %3387 = vperm.xlu0 %3386, %v3349
    %v3388 = vpop.permute.xlu0 %3387
    %3391 = vset.pattern.permute.xlu0 0
    %3392 = vperm.xlu0 %3391, %v3350
    %v3393 = vpop.permute.xlu0 %3392
    %3396 = vset.pattern.permute.xlu0 0
    %3397 = vperm.xlu0 %3396, %v3351
    %v3398 = vpop.permute.xlu0 %3397
    %3401 = vset.pattern.permute.xlu0 0
    %3402 = vperm.xlu0 %3401, %v3352
    %v3403 = vpop.permute.xlu0 %3402
    %3406 = vset.pattern.permute.xlu0 0
    %3407 = vperm.xlu0 %3406, %v3353
    %v3408 = vpop.permute.xlu0 %3407
    %3411 = vset.pattern.permute.xlu0 0
    %3412 = vperm.xlu0 %3411, %v3354
    %v3413 = vpop.permute.xlu0 %3412
    %3416 = vset.pattern.permute.xlu0 0
    %3417 = vperm.xlu0 %3416, %v3355
    %v3418 = vpop.permute.xlu0 %3417
    %3421 = vset.pattern.permute.xlu0 0
    %3422 = vperm.xlu0 %3421, %v3356
    %v3423 = vpop.permute.xlu0 %3422
    %3426 = vset.pattern.permute.xlu0 0
    %3427 = vperm.xlu0 %3426, %v3357
    %v3428 = vpop.permute.xlu0 %3427
    %3431 = vset.pattern.permute.xlu0 0
    %3432 = vperm.xlu0 %3431, %v3358
    %v3433 = vpop.permute.xlu0 %3432
    %3436 = vset.pattern.permute.xlu0 0
    %3437 = vperm.xlu0 %3436, %v3359
    %v3438 = vpop.permute.xlu0 %3437
    %v3440 = vmul.f32 %v3363, %v1222
    %v3441 = vmul.f32 %v3368, %v1223
    %v3442 = vmul.f32 %v3373, %v1224
    %v3443 = vmul.f32 %v3378, %v1225
    %v3444 = vmul.f32 %v3383, %v1226
    %v3445 = vmul.f32 %v3388, %v1227
    %v3446 = vmul.f32 %v3393, %v1228
    %v3447 = vmul.f32 %v3398, %v1229
    %v3448 = vmul.f32 %v3403, %v1230
    %v3449 = vmul.f32 %v3408, %v1231
    %v3450 = vmul.f32 %v3413, %v1232
    %v3451 = vmul.f32 %v3418, %v1233
    %v3452 = vmul.f32 %v3423, %v1234
    %v3453 = vmul.f32 %v3428, %v1235
    %v3454 = vmul.f32 %v3433, %v1236
    %v3455 = vmul.f32 %v3438, %v1237
    %v3456 = vsel %vm73, %v3440, 0.0
    %v3457 = vsel %vm73, %v3441, 0.0
    %v3458 = vadd.f32 %v3456, %v3457
    %v3459 = vrot.slane %v3458, 4
    %v3460 = vadd.f32 %v3458, %v3459
    %v3461 = vrot.slane %v3460, 2
    %v3462 = vadd.f32 %v3460, %v3461
    %v3463 = vrot.slane %v3462, 1
    %v3464 = vadd.f32 %v3462, %v3463
    %v3465 = vsel %vm73, %v3442, 0.0
    %v3466 = vsel %vm73, %v3443, 0.0
    %v3467 = vadd.f32 %v3465, %v3466
    %v3468 = vrot.slane %v3467, 4
    %v3469 = vadd.f32 %v3467, %v3468
    %v3470 = vrot.slane %v3469, 2
    %v3471 = vadd.f32 %v3469, %v3470
    %v3472 = vrot.slane %v3471, 1
    %v3473 = vadd.f32 %v3471, %v3472
    %v3474 = vsel %vm73, %v3444, 0.0
    %v3475 = vsel %vm73, %v3445, 0.0
    %v3476 = vadd.f32 %v3474, %v3475
    %v3477 = vrot.slane %v3476, 4
    %v3478 = vadd.f32 %v3476, %v3477
    %v3479 = vrot.slane %v3478, 2
    %v3480 = vadd.f32 %v3478, %v3479
    %v3481 = vrot.slane %v3480, 1
    %v3482 = vadd.f32 %v3480, %v3481
    %v3483 = vsel %vm73, %v3446, 0.0
    %v3484 = vsel %vm73, %v3447, 0.0
    %v3485 = vadd.f32 %v3483, %v3484
    %v3486 = vrot.slane %v3485, 4
    %v3487 = vadd.f32 %v3485, %v3486
    %v3488 = vrot.slane %v3487, 2
    %v3489 = vadd.f32 %v3487, %v3488
    %v3490 = vrot.slane %v3489, 1
    %v3491 = vadd.f32 %v3489, %v3490
    %v3492 = vsel %vm73, %v3448, 0.0
    %v3493 = vsel %vm73, %v3449, 0.0
    %v3494 = vadd.f32 %v3492, %v3493
    %v3495 = vrot.slane %v3494, 4
    %v3496 = vadd.f32 %v3494, %v3495
    %v3497 = vrot.slane %v3496, 2
    %v3498 = vadd.f32 %v3496, %v3497
    %v3499 = vrot.slane %v3498, 1
    %v3500 = vadd.f32 %v3498, %v3499
    %v3501 = vsel %vm73, %v3450, 0.0
    %v3502 = vsel %vm73, %v3451, 0.0
    %v3503 = vadd.f32 %v3501, %v3502
    %v3504 = vrot.slane %v3503, 4
    %v3505 = vadd.f32 %v3503, %v3504
    %v3506 = vrot.slane %v3505, 2
    %v3507 = vadd.f32 %v3505, %v3506
    %v3508 = vrot.slane %v3507, 1
    %v3509 = vadd.f32 %v3507, %v3508
    %v3510 = vsel %vm73, %v3452, 0.0
    %v3511 = vsel %vm73, %v3453, 0.0
    %v3512 = vadd.f32 %v3510, %v3511
    %v3513 = vrot.slane %v3512, 4
    %v3514 = vadd.f32 %v3512, %v3513
    %v3515 = vrot.slane %v3514, 2
    %v3516 = vadd.f32 %v3514, %v3515
    %v3517 = vrot.slane %v3516, 1
    %v3518 = vadd.f32 %v3516, %v3517
    %v3519 = vsel %vm73, %v3454, 0.0
    %v3520 = vsel %vm73, %v3455, 0.0
    %v3521 = vadd.f32 %v3519, %v3520
    %v3522 = vrot.slane %v3521, 4
    %v3523 = vadd.f32 %v3521, %v3522
    %v3524 = vrot.slane %v3523, 2
    %v3525 = vadd.f32 %v3523, %v3524
    %v3526 = vrot.slane %v3525, 1
    %v3527 = vadd.f32 %v3525, %v3526
    %v3528 = vpack.c.bf16 %v3464, %v3464
    %v3529 = vpack.c.bf16 %v3473, %v3473
    %v3530 = vpack.c.bf16 %v3482, %v3482
    %v3531 = vpack.c.bf16 %v3491, %v3491
    %v3532 = vpack.c.bf16 %v3500, %v3500
    %v3533 = vpack.c.bf16 %v3509, %v3509
    %v3534 = vpack.c.bf16 %v3518, %v3518
    %v3535 = vpack.c.bf16 %v3527, %v3527
    %v3544 = vunpack.c.l.b16 %v3528
    %v3545 = vunpack.c.l.b16 %v3529
    %v3546 = vunpack.c.l.b16 %v3530
    %v3547 = vunpack.c.l.b16 %v3531
    %v3548 = vunpack.c.l.b16 %v3532
    %v3549 = vunpack.c.l.b16 %v3533
    %v3550 = vunpack.c.l.b16 %v3534
    %v3551 = vunpack.c.l.b16 %v3535
    %v3552 = vsel %vm910, %v3545, %v3544
    %v3553 = vsel %vm912, %v3546, %v3552
    %v3554 = vsel %vm914, %v3547, %v3553
    %v3555 = vsel %vm916, %v3548, %v3554
    %v3556 = vsel %vm918, %v3549, %v3555
    %v3557 = vsel %vm920, %v3550, %v3556
    %v3558 = vsel %vm922, %v3551, %v3557
    %v3559 = vpack.c.b16 %v3558, %v3558
    %v3561 = vsel %vm73, %v3559, 0
    %3563 = vmatprep.subr.bf16.mxu0 0
    %3564 = vmatpush1.bf16.msra.mxu0 0
    %3565 = vmatprep.subr.bf16.mxu0 0
    %3566 = vmatpush1.bf16.msra.mxu0 0
    %3567 = vmatprep.subr.bf16.mxu0 0
    %3568 = vmatpush1.bf16.msra.mxu0 0
    %3569 = vmatprep.subr.bf16.mxu0 0
    %3570 = vmatpush1.bf16.msra.mxu0 0
    %3571 = vmatprep.subr.bf16.mxu0 0
    %3572 = vmatpush1.bf16.msra.mxu0 0
    %3573 = vmatprep.subr.bf16.mxu0 0
    %3574 = vmatpush1.bf16.msra.mxu0 0
    %3575 = vmatprep.subr.bf16.mxu0 0
    %3576 = vmatpush1.bf16.msra.mxu0 %v70
    %3577 = vmatprep.subr.bf16.mxu0 0
    %3578 = vmatpush1.bf16.msra.mxu0 %v69
    %3579 = vmatprep.subr.bf16.mxu0 0
    %3580 = vmatpush2.bf16.msra.mxu0 0
    %3581 = vmatprep.subr.bf16.mxu0 0
    %3582 = vmatpush2.bf16.msra.mxu0 0
    %3583 = vmatprep.subr.bf16.mxu0 0
    %3584 = vmatpush2.bf16.msra.mxu0 0
    %3585 = vmatprep.subr.bf16.mxu0 0
    %3586 = vmatpush2.bf16.msra.mxu0 0
    %3587 = vmatprep.subr.bf16.mxu0 0
    %3588 = vmatpush2.bf16.msra.mxu0 0
    %3589 = vmatprep.subr.bf16.mxu0 0
    %3590 = vmatpush2.bf16.msra.mxu0 0
    %3591 = vmatprep.subr.bf16.mxu0 0
    %3592 = vmatpush2.bf16.msra.mxu0 0
    %3593 = vmatprep.subr.bf16.mxu0 0
    %3594 = vmatpush2.bf16.msra.mxu0 0
    %3595 = vmatprep.mubr.bf16.mxu0 0
    %3596 = vmatmul.mubr.bf16.gmra.mxu0 %v3561
    %v3597 = vpop.f32.mrf.mxu0
    %v3598 = vadd.f32 0.0, %v3597
    %v3599 = vpop.f32.mrf.mxu0
    %v3600 = vpop.f32.mrf.mxu0
    %v3601 = vpop.f32.mrf.mxu0
    %3602 = vdwg.mxu0
    %s3603 = scalar_lea.vmem %s1, 16
    %v3604 = vld [vmem:[%s3603] sm:$0xff]
    %3605 = vrot.lane.b32.xlu0 %v2696, 112
    %v3606 = vpop.permute.xlu0 %3605
    %v3608 = vadd.f32 %v3604, %v3606
    %3610 = vrot.lane.b32.xlu0 %v3598, 32
    %v3611 = vpop.permute.xlu0 %3610
    %v3613 = vadd.f32 %v3608, %v3611
    %3615 = vrot.lane.b32.xlu0 %v3613, 112
    %v3616 = vpop.permute.xlu0 %3615
    %v3618 = vmax.f32 %v3613, %v3616
    %v3619 = vsel 0, %v3618, %v2557
    %v3620 = vsel 0, %v3618, %v2558
    %v3621 = vsel 1, %v3618, %v2559
    %v3622 = vsel 0, %v3618, %v2559
    %s3623 = scalar_lea.vmem %s0, 24
    %v3624 = vld [vmem:[%s3623] sm:$0xff]
    %v3625 = vadd.f32 %v3624, %v3598
    %v3626 = vadd.f32 %v3625, %v119
    %v3627 = vxor.u32 %v3626, 2147483648
    %v3628 = vmul.f32 %v3627, 1.442695
    %v3629 = vpow.pop %v3628
    %v3630 = vadd.f32 %v3629, 1.0
    %v3631 = vrcp.pop %v3630
    %v3632 = vmul.f32 1.0, %v3631
    %v3633 = vmul.f32 %v3632, %v130
    %3635 = vrot.lane.b32.xlu0 %v3633, 64
    %v3636 = vpop.permute.xlu0 %3635
    %v3638 = vadd.f32 %v3625, %v3636
    %v3639 = vtanh.pop %v3638
    %v3640 = vsub.f32 1.0, %v3632
    %3642 = vrot.lane.b32.xlu0 %v3639, 96
    %v3643 = vpop.permute.xlu0 %3642
    %v3645 = vmul.f32 %v3640, %v3643
    %v3646 = vmul.f32 %v3632, %v147
    %v3647 = vadd.f32 %v3645, %v3646
    %v3648 = vpack.c.bf16 %v3647, %v3647
    %3650 = vrot.lane.b32.xlu0 %v3648, 96
    %v3651 = vpop.permute.xlu0 %3650
    %v3653 = vsel %vm73, %v3651, 0
    %3655 = vmatprep.subr.bf16.mxu0 0
    %3656 = vmatpush1.bf16.msra.mxu0 0
    %3657 = vmatprep.subr.bf16.mxu0 0
    %3658 = vmatpush1.bf16.msra.mxu0 0
    %3659 = vmatprep.subr.bf16.mxu0 0
    %3660 = vmatpush1.bf16.msra.mxu0 0
    %3661 = vmatprep.subr.bf16.mxu0 0
    %3662 = vmatpush1.bf16.msra.mxu0 0
    %3663 = vmatprep.subr.bf16.mxu0 0
    %3664 = vmatpush1.bf16.msra.mxu0 0
    %3665 = vmatprep.subr.bf16.mxu0 0
    %3666 = vmatpush1.bf16.msra.mxu0 0
    %3667 = vmatprep.subr.bf16.mxu0 0
    %3668 = vmatpush1.bf16.msra.mxu0 %v175
    %3669 = vmatprep.subr.bf16.mxu0 0
    %3670 = vmatpush1.bf16.msra.mxu0 %v174
    %3671 = vmatprep.subr.bf16.mxu0 0
    %3672 = vmatpush2.bf16.msra.mxu0 0
    %3673 = vmatprep.subr.bf16.mxu0 0
    %3674 = vmatpush2.bf16.msra.mxu0 0
    %3675 = vmatprep.subr.bf16.mxu0 0
    %3676 = vmatpush2.bf16.msra.mxu0 0
    %3677 = vmatprep.subr.bf16.mxu0 0
    %3678 = vmatpush2.bf16.msra.mxu0 0
    %3679 = vmatprep.subr.bf16.mxu0 0
    %3680 = vmatpush2.bf16.msra.mxu0 0
    %3681 = vmatprep.subr.bf16.mxu0 0
    %3682 = vmatpush2.bf16.msra.mxu0 0
    %3683 = vmatprep.subr.bf16.mxu0 0
    %3684 = vmatpush2.bf16.msra.mxu0 0
    %3685 = vmatprep.subr.bf16.mxu0 0
    %3686 = vmatpush2.bf16.msra.mxu0 0
    %3687 = vmatprep.mubr.bf16.mxu0 0
    %3688 = vmatmul.mubr.bf16.gmra.mxu0 %v3653
    %v3689 = vpop.f32.mrf.mxu0
    %v3690 = vadd.f32 %v161, %v3689
    %v3691 = vpop.f32.mrf.mxu0
    %v3692 = vpop.f32.mrf.mxu0
    %v3693 = vpop.f32.mrf.mxu0
    %3694 = vdwg.mxu0
    %v3695 = vadd.f32 %v3690, %v222
    %v3696 = vxor.u32 %v3695, 2147483648
    %v3697 = vmul.f32 %v3696, 1.442695
    %v3698 = vpow.pop %v3697
    %v3699 = vadd.f32 %v3698, 1.0
    %v3700 = vrcp.pop %v3699
    %v3701 = vmul.f32 1.0, %v3700
    %v3702 = vmul.f32 %v3701, %v234
    %3704 = vrot.lane.b32.xlu0 %v3702, 64
    %v3705 = vpop.permute.xlu0 %3704
    %v3707 = vadd.f32 %v3690, %v3705
    %v3708 = vtanh.pop %v3707
    %v3709 = vsub.f32 1.0, %v3701
    %3711 = vrot.lane.b32.xlu0 %v3708, 96
    %v3712 = vpop.permute.xlu0 %3711
    %v3714 = vmul.f32 %v3709, %v3712
    %v3715 = vmul.f32 %v3701, %v251
    %v3716 = vadd.f32 %v3714, %v3715
    %v3717 = vpack.c.bf16 %v3716, %v3716
    %3719 = vrot.lane.b32.xlu0 %v3717, 96
    %v3720 = vpop.permute.xlu0 %3719
    %v3722 = vsel %vm73, %v3720, 0
    %3724 = vmatprep.subr.bf16.mxu0 0
    %3725 = vmatpush1.bf16.msra.mxu0 0
    %3726 = vmatprep.subr.bf16.mxu0 0
    %3727 = vmatpush1.bf16.msra.mxu0 0
    %3728 = vmatprep.subr.bf16.mxu0 0
    %3729 = vmatpush1.bf16.msra.mxu0 0
    %3730 = vmatprep.subr.bf16.mxu0 0
    %3731 = vmatpush1.bf16.msra.mxu0 0
    %3732 = vmatprep.subr.bf16.mxu0 0
    %3733 = vmatpush1.bf16.msra.mxu0 0
    %3734 = vmatprep.subr.bf16.mxu0 0
    %3735 = vmatpush1.bf16.msra.mxu0 0
    %3736 = vmatprep.subr.bf16.mxu0 0
    %3737 = vmatpush1.bf16.msra.mxu0 %v272
    %3738 = vmatprep.subr.bf16.mxu0 0
    %3739 = vmatpush1.bf16.msra.mxu0 %v271
    %3740 = vmatprep.subr.bf16.mxu0 0
    %3741 = vmatpush2.bf16.msra.mxu0 0
    %3742 = vmatprep.subr.bf16.mxu0 0
    %3743 = vmatpush2.bf16.msra.mxu0 0
    %3744 = vmatprep.subr.bf16.mxu0 0
    %3745 = vmatpush2.bf16.msra.mxu0 0
    %3746 = vmatprep.subr.bf16.mxu0 0
    %3747 = vmatpush2.bf16.msra.mxu0 0
    %3748 = vmatprep.subr.bf16.mxu0 0
    %3749 = vmatpush2.bf16.msra.mxu0 0
    %3750 = vmatprep.subr.bf16.mxu0 0
    %3751 = vmatpush2.bf16.msra.mxu0 0
    %3752 = vmatprep.subr.bf16.mxu0 0
    %3753 = vmatpush2.bf16.msra.mxu0 0
    %3754 = vmatprep.subr.bf16.mxu0 0
    %3755 = vmatpush2.bf16.msra.mxu0 0
    %3756 = vmatprep.mubr.bf16.mxu0 0
    %3757 = vmatmul.mubr.bf16.gmra.mxu0 %v3722
    %v3758 = vpop.f32.mrf.mxu0
    %v3759 = vadd.f32 0.0, %v3758
    %v3760 = vpop.f32.mrf.mxu0
    %v3761 = vpop.f32.mrf.mxu0
    %v3762 = vpop.f32.mrf.mxu0
    %3763 = vdwg.mxu0
    %v3765 = vcombine.high %v3759, %v3759
    %v3767 = vunpack.c.l.s4 1966171168
    %v3768 = vunpack.c.0.s8 %v3767
    %v3769 = vlaneseq
    %v3770 = vshrl.u32 %v3769, 7
    %v3771 = vsub.s32 %v3768, %v3770
    %v3772 = vrot.slane %v3759, %v3771
    %v3774 = vunpack.c.l.s4 1966171168
    %v3775 = vunpack.c.0.s8 %v3774
    %v3776 = vlaneseq
    %v3777 = vshrl.u32 %v3776, 7
    %v3778 = vsub.s32 %v3775, %v3777
    %v3779 = vrot.slane %v3765, %v3778
    %v3780 = vcombine.high %v3772, %v3772
    %v3781 = vcombine.high %v3779, %v3779
    %v3783 = vunpack.c.l.s4 1966171168
    %v3784 = vunpack.c.0.s8 %v3783
    %v3785 = vlaneseq
    %v3786 = vshrl.u32 %v3785, 7
    %v3787 = vsub.s32 %v3784, %v3786
    %v3788 = vrot.slane %v3772, %v3787
    %v3790 = vunpack.c.l.s4 1966171168
    %v3791 = vunpack.c.0.s8 %v3790
    %v3792 = vlaneseq
    %v3793 = vshrl.u32 %v3792, 7
    %v3794 = vsub.s32 %v3791, %v3793
    %v3795 = vrot.slane %v3779, %v3794
    %v3797 = vunpack.c.l.s4 1966171168
    %v3798 = vunpack.c.0.s8 %v3797
    %v3799 = vlaneseq
    %v3800 = vshrl.u32 %v3799, 7
    %v3801 = vsub.s32 %v3798, %v3800
    %v3802 = vrot.slane %v3780, %v3801
    %v3804 = vunpack.c.l.s4 1966171168
    %v3805 = vunpack.c.0.s8 %v3804
    %v3806 = vlaneseq
    %v3807 = vshrl.u32 %v3806, 7
    %v3808 = vsub.s32 %v3805, %v3807
    %v3809 = vrot.slane %v3781, %v3808
    %v3810 = vcombine.high %v3788, %v3788
    %v3811 = vcombine.high %v3795, %v3795
    %v3812 = vcombine.high %v3802, %v3802
    %v3813 = vcombine.high %v3809, %v3809
    %v3814 = vlaneseq
    %v3815 = vshrl.u32 %v3814, 7
    %v3816 = vsub.s32 0, %v3815
    %v3817 = vrot.slane %v3788, %v3816
    %v3818 = vlaneseq
    %v3819 = vshrl.u32 %v3818, 7
    %v3820 = vsub.s32 0, %v3819
    %v3821 = vrot.slane %v3802, %v3820
    %v3822 = vlaneseq
    %v3823 = vshrl.u32 %v3822, 7
    %v3824 = vsub.s32 0, %v3823
    %v3825 = vrot.slane %v3810, %v3824
    %v3826 = vlaneseq
    %v3827 = vshrl.u32 %v3826, 7
    %v3828 = vsub.s32 0, %v3827
    %v3829 = vrot.slane %v3812, %v3828
    %v3830 = vlaneseq
    %v3831 = vshrl.u32 %v3830, 7
    %v3832 = vsub.s32 0, %v3831
    %v3833 = vrot.slane %v3795, %v3832
    %v3834 = vlaneseq
    %v3835 = vshrl.u32 %v3834, 7
    %v3836 = vsub.s32 0, %v3835
    %v3837 = vrot.slane %v3809, %v3836
    %v3838 = vlaneseq
    %v3839 = vshrl.u32 %v3838, 7
    %v3840 = vsub.s32 0, %v3839
    %v3841 = vrot.slane %v3811, %v3840
    %v3842 = vlaneseq
    %v3843 = vshrl.u32 %v3842, 7
    %v3844 = vsub.s32 0, %v3843
    %v3845 = vrot.slane %v3813, %v3844
    %v3854 = vadd.f32 %v318, %v3817
    %v3855 = vadd.f32 %v319, %v3817
    %v3856 = vadd.f32 %v320, %v3821
    %v3857 = vadd.f32 %v321, %v3821
    %v3858 = vadd.f32 %v322, %v3825
    %v3859 = vadd.f32 %v323, %v3825
    %v3860 = vadd.f32 %v324, %v3829
    %v3861 = vadd.f32 %v325, %v3829
    %v3862 = vadd.f32 %v326, %v3833
    %v3863 = vadd.f32 %v327, %v3833
    %v3864 = vadd.f32 %v328, %v3837
    %v3865 = vadd.f32 %v329, %v3837
    %v3866 = vadd.f32 %v330, %v3841
    %v3867 = vadd.f32 %v331, %v3841
    %v3868 = vadd.f32 %v332, %v3845
    %v3869 = vadd.f32 %v333, %v3845
    %v3870 = vtanh.pop %v3854
    %v3871 = vtanh.pop %v3855
    %v3872 = vtanh.pop %v3856
    %v3873 = vtanh.pop %v3857
    %v3874 = vtanh.pop %v3858
    %v3875 = vtanh.pop %v3859
    %v3876 = vtanh.pop %v3860
    %v3877 = vtanh.pop %v3861
    %v3878 = vtanh.pop %v3862
    %v3879 = vtanh.pop %v3863
    %v3880 = vtanh.pop %v3864
    %v3881 = vtanh.pop %v3865
    %v3882 = vtanh.pop %v3866
    %v3883 = vtanh.pop %v3867
    %v3884 = vtanh.pop %v3868
    %v3885 = vtanh.pop %v3869
    %v3886 = vmul.f32 %v3870, %v461
    %v3887 = vmul.f32 %v3871, %v461
    %v3888 = vmul.f32 %v3872, %v461
    %v3889 = vmul.f32 %v3873, %v461
    %v3890 = vmul.f32 %v3874, %v461
    %v3891 = vmul.f32 %v3875, %v461
    %v3892 = vmul.f32 %v3876, %v461
    %v3893 = vmul.f32 %v3877, %v461
    %v3894 = vmul.f32 %v3878, %v461
    %v3895 = vmul.f32 %v3879, %v461
    %v3896 = vmul.f32 %v3880, %v461
    %v3897 = vmul.f32 %v3881, %v461
    %v3898 = vmul.f32 %v3882, %v461
    %v3899 = vmul.f32 %v3883, %v461
    %v3900 = vmul.f32 %v3884, %v461
    %v3901 = vmul.f32 %v3885, %v461
    %v3902 = vsel %vm479, %v3886, 0.0
    %3903 = vadd.xlane.f32.xlu0 %v3902
    %v3904 = vpop.xlane.xlu0 %3903
    %v3905 = vsel %vm479, %v3887, 0.0
    %3906 = vadd.xlane.f32.xlu0 %v3905
    %v3907 = vpop.xlane.xlu0 %3906
    %v3908 = vsel %vm479, %v3888, 0.0
    %3909 = vadd.xlane.f32.xlu0 %v3908
    %v3910 = vpop.xlane.xlu0 %3909
    %v3911 = vsel %vm479, %v3889, 0.0
    %3912 = vadd.xlane.f32.xlu0 %v3911
    %v3913 = vpop.xlane.xlu0 %3912
    %v3914 = vsel %vm479, %v3890, 0.0
    %3915 = vadd.xlane.f32.xlu0 %v3914
    %v3916 = vpop.xlane.xlu0 %3915
    %v3917 = vsel %vm479, %v3891, 0.0
    %3918 = vadd.xlane.f32.xlu0 %v3917
    %v3919 = vpop.xlane.xlu0 %3918
    %v3920 = vsel %vm479, %v3892, 0.0
    %3921 = vadd.xlane.f32.xlu0 %v3920
    %v3922 = vpop.xlane.xlu0 %3921
    %v3923 = vsel %vm479, %v3893, 0.0
    %3924 = vadd.xlane.f32.xlu0 %v3923
    %v3925 = vpop.xlane.xlu0 %3924
    %v3926 = vsel %vm479, %v3894, 0.0
    %3927 = vadd.xlane.f32.xlu0 %v3926
    %v3928 = vpop.xlane.xlu0 %3927
    %v3929 = vsel %vm479, %v3895, 0.0
    %3930 = vadd.xlane.f32.xlu0 %v3929
    %v3931 = vpop.xlane.xlu0 %3930
    %v3932 = vsel %vm479, %v3896, 0.0
    %3933 = vadd.xlane.f32.xlu0 %v3932
    %v3934 = vpop.xlane.xlu0 %3933
    %v3935 = vsel %vm479, %v3897, 0.0
    %3936 = vadd.xlane.f32.xlu0 %v3935
    %v3937 = vpop.xlane.xlu0 %3936
    %v3938 = vsel %vm479, %v3898, 0.0
    %3939 = vadd.xlane.f32.xlu0 %v3938
    %v3940 = vpop.xlane.xlu0 %3939
    %v3941 = vsel %vm479, %v3899, 0.0
    %3942 = vadd.xlane.f32.xlu0 %v3941
    %v3943 = vpop.xlane.xlu0 %3942
    %v3944 = vsel %vm479, %v3900, 0.0
    %3945 = vadd.xlane.f32.xlu0 %v3944
    %v3946 = vpop.xlane.xlu0 %3945
    %v3947 = vsel %vm479, %v3901, 0.0
    %3948 = vadd.xlane.f32.xlu0 %v3947
    %v3949 = vpop.xlane.xlu0 %3948
    %v3950 = vmul.f32 %v3904, %v535
    %v3951 = vmul.f32 %v3907, %v539
    %v3952 = vmul.f32 %v3910, %v546
    %v3953 = vmul.f32 %v3913, %v550
    %v3954 = vmul.f32 %v3916, %v557
    %v3955 = vmul.f32 %v3919, %v561
    %v3956 = vmul.f32 %v3922, %v568
    %v3957 = vmul.f32 %v3925, %v572
    %v3958 = vmul.f32 %v3928, %v579
    %v3959 = vmul.f32 %v3931, %v583
    %v3960 = vmul.f32 %v3934, %v590
    %v3961 = vmul.f32 %v3937, %v594
    %v3962 = vmul.f32 %v3940, %v601
    %v3963 = vmul.f32 %v3943, %v605
    %v3964 = vmul.f32 %v3946, %v612
    %v3965 = vmul.f32 %v3949, %v616
    %v3966 = vadd.f32 %v3950, %v656
    %v3967 = vadd.f32 %v3951, %v660
    %v3968 = vadd.f32 %v3952, %v667
    %v3969 = vadd.f32 %v3953, %v671
    %v3970 = vadd.f32 %v3954, %v678
    %v3971 = vadd.f32 %v3955, %v682
    %v3972 = vadd.f32 %v3956, %v689
    %v3973 = vadd.f32 %v3957, %v693
    %v3974 = vadd.f32 %v3958, %v700
    %v3975 = vadd.f32 %v3959, %v704
    %v3976 = vadd.f32 %v3960, %v711
    %v3977 = vadd.f32 %v3961, %v715
    %v3978 = vadd.f32 %v3962, %v722
    %v3979 = vadd.f32 %v3963, %v726
    %v3980 = vadd.f32 %v3964, %v733
    %v3981 = vadd.f32 %v3965, %v737
    %3998 = vset.pattern.permute.xlu0 0
    %3999 = vperm.xlu0 %3998, %v3966
    %v4000 = vpop.permute.xlu0 %3999
    %4001 = vset.pattern.permute.xlu0 0
    %4002 = vperm.xlu0 %4001, %v3967
    %v4003 = vpop.permute.xlu0 %4002
    %4004 = vset.pattern.permute.xlu0 0
    %4005 = vperm.xlu0 %4004, %v3968
    %v4006 = vpop.permute.xlu0 %4005
    %4007 = vset.pattern.permute.xlu0 0
    %4008 = vperm.xlu0 %4007, %v3969
    %v4009 = vpop.permute.xlu0 %4008
    %4010 = vset.pattern.permute.xlu0 0
    %4011 = vperm.xlu0 %4010, %v3970
    %v4012 = vpop.permute.xlu0 %4011
    %4013 = vset.pattern.permute.xlu0 0
    %4014 = vperm.xlu0 %4013, %v3971
    %v4015 = vpop.permute.xlu0 %4014
    %4016 = vset.pattern.permute.xlu0 0
    %4017 = vperm.xlu0 %4016, %v3972
    %v4018 = vpop.permute.xlu0 %4017
    %4019 = vset.pattern.permute.xlu0 0
    %4020 = vperm.xlu0 %4019, %v3973
    %v4021 = vpop.permute.xlu0 %4020
    %4022 = vset.pattern.permute.xlu0 0
    %4023 = vperm.xlu0 %4022, %v3974
    %v4024 = vpop.permute.xlu0 %4023
    %4025 = vset.pattern.permute.xlu0 0
    %4026 = vperm.xlu0 %4025, %v3975
    %v4027 = vpop.permute.xlu0 %4026
    %4028 = vset.pattern.permute.xlu0 0
    %4029 = vperm.xlu0 %4028, %v3976
    %v4030 = vpop.permute.xlu0 %4029
    %4031 = vset.pattern.permute.xlu0 0
    %4032 = vperm.xlu0 %4031, %v3977
    %v4033 = vpop.permute.xlu0 %4032
    %4034 = vset.pattern.permute.xlu0 0
    %4035 = vperm.xlu0 %4034, %v3978
    %v4036 = vpop.permute.xlu0 %4035
    %4037 = vset.pattern.permute.xlu0 0
    %4038 = vperm.xlu0 %4037, %v3979
    %v4039 = vpop.permute.xlu0 %4038
    %4040 = vset.pattern.permute.xlu0 0
    %4041 = vperm.xlu0 %4040, %v3980
    %v4042 = vpop.permute.xlu0 %4041
    %4043 = vset.pattern.permute.xlu0 0
    %4044 = vperm.xlu0 %4043, %v3981
    %v4045 = vpop.permute.xlu0 %4044
    %v4046 = vlaneseq
    %v4047 = vshrl.u32 %v4046, 7
    %v4048 = vsub.s32 %v835, %v4047
    %v4049 = vrot.slane %v4000, %v4048
    %v4050 = vlaneseq
    %v4051 = vshrl.u32 %v4050, 7
    %v4052 = vsub.s32 %v840, %v4051
    %v4053 = vrot.slane %v4003, %v4052
    %v4054 = vsel %vm845, %v4053, %v4049
    %v4055 = vlaneseq
    %v4056 = vshrl.u32 %v4055, 7
    %v4057 = vsub.s32 %v835, %v4056
    %v4058 = vrot.slane %v4006, %v4057
    %v4059 = vlaneseq
    %v4060 = vshrl.u32 %v4059, 7
    %v4061 = vsub.s32 %v840, %v4060
    %v4062 = vrot.slane %v4009, %v4061
    %v4063 = vsel %vm845, %v4062, %v4058
    %v4064 = vlaneseq
    %v4065 = vshrl.u32 %v4064, 7
    %v4066 = vsub.s32 %v835, %v4065
    %v4067 = vrot.slane %v4012, %v4066
    %v4068 = vlaneseq
    %v4069 = vshrl.u32 %v4068, 7
    %v4070 = vsub.s32 %v840, %v4069
    %v4071 = vrot.slane %v4015, %v4070
    %v4072 = vsel %vm845, %v4071, %v4067
    %v4073 = vlaneseq
    %v4074 = vshrl.u32 %v4073, 7
    %v4075 = vsub.s32 %v835, %v4074
    %v4076 = vrot.slane %v4018, %v4075
    %v4077 = vlaneseq
    %v4078 = vshrl.u32 %v4077, 7
    %v4079 = vsub.s32 %v840, %v4078
    %v4080 = vrot.slane %v4021, %v4079
    %v4081 = vsel %vm845, %v4080, %v4076
    %v4082 = vlaneseq
    %v4083 = vshrl.u32 %v4082, 7
    %v4084 = vsub.s32 %v835, %v4083
    %v4085 = vrot.slane %v4024, %v4084
    %v4086 = vlaneseq
    %v4087 = vshrl.u32 %v4086, 7
    %v4088 = vsub.s32 %v840, %v4087
    %v4089 = vrot.slane %v4027, %v4088
    %v4090 = vsel %vm845, %v4089, %v4085
    %v4091 = vlaneseq
    %v4092 = vshrl.u32 %v4091, 7
    %v4093 = vsub.s32 %v835, %v4092
    %v4094 = vrot.slane %v4030, %v4093
    %v4095 = vlaneseq
    %v4096 = vshrl.u32 %v4095, 7
    %v4097 = vsub.s32 %v840, %v4096
    %v4098 = vrot.slane %v4033, %v4097
    %v4099 = vsel %vm845, %v4098, %v4094
    %v4100 = vlaneseq
    %v4101 = vshrl.u32 %v4100, 7
    %v4102 = vsub.s32 %v835, %v4101
    %v4103 = vrot.slane %v4036, %v4102
    %v4104 = vlaneseq
    %v4105 = vshrl.u32 %v4104, 7
    %v4106 = vsub.s32 %v840, %v4105
    %v4107 = vrot.slane %v4039, %v4106
    %v4108 = vsel %vm845, %v4107, %v4103
    %v4109 = vlaneseq
    %v4110 = vshrl.u32 %v4109, 7
    %v4111 = vsub.s32 %v835, %v4110
    %v4112 = vrot.slane %v4042, %v4111
    %v4113 = vlaneseq
    %v4114 = vshrl.u32 %v4113, 7
    %v4115 = vsub.s32 %v840, %v4114
    %v4116 = vrot.slane %v4045, %v4115
    %v4117 = vsel %vm845, %v4116, %v4112
    %v4118 = vsel %vm910, %v4063, %v4054
    %v4119 = vsel %vm912, %v4072, %v4118
    %v4120 = vsel %vm914, %v4081, %v4119
    %v4121 = vsel %vm916, %v4090, %v4120
    %v4122 = vsel %vm918, %v4099, %v4121
    %v4123 = vsel %vm920, %v4108, %v4122
    %v4124 = vsel %vm922, %v4117, %v4123
    %v4126 = vsel %vm479, %v4124, -inf
    %4127 = vmax.xlane.f32.xlu0 %v4126
    %v4128 = vpop.xlane.xlu0 %4127
    %v4130 = vlaneseq
    %v4131 = vshrl.u32 %v4130, 7
    %v4132 = vsub.s32 0, %v4131
    %v4133 = vrot.slane %v4128, %v4132
    %v4134 = vlaneseq
    %v4135 = vshrl.u32 %v4134, 7
    %v4136 = vsub.s32 1, %v4135
    %v4137 = vrot.slane %v4128, %v4136
    %v4138 = vlaneseq
    %v4139 = vshrl.u32 %v4138, 7
    %v4140 = vsub.s32 2, %v4139
    %v4141 = vrot.slane %v4128, %v4140
    %v4142 = vlaneseq
    %v4143 = vshrl.u32 %v4142, 7
    %v4144 = vsub.s32 3, %v4143
    %v4145 = vrot.slane %v4128, %v4144
    %v4146 = vlaneseq
    %v4147 = vshrl.u32 %v4146, 7
    %v4148 = vsub.s32 4, %v4147
    %v4149 = vrot.slane %v4128, %v4148
    %v4150 = vlaneseq
    %v4151 = vshrl.u32 %v4150, 7
    %v4152 = vsub.s32 5, %v4151
    %v4153 = vrot.slane %v4128, %v4152
    %v4154 = vlaneseq
    %v4155 = vshrl.u32 %v4154, 7
    %v4156 = vsub.s32 6, %v4155
    %v4157 = vrot.slane %v4128, %v4156
    %v4158 = vlaneseq
    %v4159 = vshrl.u32 %v4158, 7
    %v4160 = vsub.s32 7, %v4159
    %v4161 = vrot.slane %v4128, %v4160
    %v4170 = vsub.f32 %v3966, %v4133
    %v4171 = vsub.f32 %v3967, %v4133
    %v4172 = vsub.f32 %v3968, %v4137
    %v4173 = vsub.f32 %v3969, %v4137
    %v4174 = vsub.f32 %v3970, %v4141
    %v4175 = vsub.f32 %v3971, %v4141
    %v4176 = vsub.f32 %v3972, %v4145
    %v4177 = vsub.f32 %v3973, %v4145
    %v4178 = vsub.f32 %v3974, %v4149
    %v4179 = vsub.f32 %v3975, %v4149
    %v4180 = vsub.f32 %v3976, %v4153
    %v4181 = vsub.f32 %v3977, %v4153
    %v4182 = vsub.f32 %v3978, %v4157
    %v4183 = vsub.f32 %v3979, %v4157
    %v4184 = vsub.f32 %v3980, %v4161
    %v4185 = vsub.f32 %v3981, %v4161
    %v4186 = vmul.f32 %v4170, 1.442695
    %v4187 = vpow.pop %v4186
    %v4188 = vmul.f32 %v4171, 1.442695
    %v4189 = vpow.pop %v4188
    %v4190 = vmul.f32 %v4172, 1.442695
    %v4191 = vpow.pop %v4190
    %v4192 = vmul.f32 %v4173, 1.442695
    %v4193 = vpow.pop %v4192
    %v4194 = vmul.f32 %v4174, 1.442695
    %v4195 = vpow.pop %v4194
    %v4196 = vmul.f32 %v4175, 1.442695
    %v4197 = vpow.pop %v4196
    %v4198 = vmul.f32 %v4176, 1.442695
    %v4199 = vpow.pop %v4198
    %v4200 = vmul.f32 %v4177, 1.442695
    %v4201 = vpow.pop %v4200
    %v4202 = vmul.f32 %v4178, 1.442695
    %v4203 = vpow.pop %v4202
    %v4204 = vmul.f32 %v4179, 1.442695
    %v4205 = vpow.pop %v4204
    %v4206 = vmul.f32 %v4180, 1.442695
    %v4207 = vpow.pop %v4206
    %v4208 = vmul.f32 %v4181, 1.442695
    %v4209 = vpow.pop %v4208
    %v4210 = vmul.f32 %v4182, 1.442695
    %v4211 = vpow.pop %v4210
    %v4212 = vmul.f32 %v4183, 1.442695
    %v4213 = vpow.pop %v4212
    %v4214 = vmul.f32 %v4184, 1.442695
    %v4215 = vpow.pop %v4214
    %v4216 = vmul.f32 %v4185, 1.442695
    %v4217 = vpow.pop %v4216
    %4234 = vset.pattern.permute.xlu0 0
    %4235 = vperm.xlu0 %4234, %v4187
    %v4236 = vpop.permute.xlu0 %4235
    %4237 = vset.pattern.permute.xlu0 0
    %4238 = vperm.xlu0 %4237, %v4189
    %v4239 = vpop.permute.xlu0 %4238
    %4240 = vset.pattern.permute.xlu0 0
    %4241 = vperm.xlu0 %4240, %v4191
    %v4242 = vpop.permute.xlu0 %4241
    %4243 = vset.pattern.permute.xlu0 0
    %4244 = vperm.xlu0 %4243, %v4193
    %v4245 = vpop.permute.xlu0 %4244
    %4246 = vset.pattern.permute.xlu0 0
    %4247 = vperm.xlu0 %4246, %v4195
    %v4248 = vpop.permute.xlu0 %4247
    %4249 = vset.pattern.permute.xlu0 0
    %4250 = vperm.xlu0 %4249, %v4197
    %v4251 = vpop.permute.xlu0 %4250
    %4252 = vset.pattern.permute.xlu0 0
    %4253 = vperm.xlu0 %4252, %v4199
    %v4254 = vpop.permute.xlu0 %4253
    %4255 = vset.pattern.permute.xlu0 0
    %4256 = vperm.xlu0 %4255, %v4201
    %v4257 = vpop.permute.xlu0 %4256
    %4258 = vset.pattern.permute.xlu0 0
    %4259 = vperm.xlu0 %4258, %v4203
    %v4260 = vpop.permute.xlu0 %4259
    %4261 = vset.pattern.permute.xlu0 0
    %4262 = vperm.xlu0 %4261, %v4205
    %v4263 = vpop.permute.xlu0 %4262
    %4264 = vset.pattern.permute.xlu0 0
    %4265 = vperm.xlu0 %4264, %v4207
    %v4266 = vpop.permute.xlu0 %4265
    %4267 = vset.pattern.permute.xlu0 0
    %4268 = vperm.xlu0 %4267, %v4209
    %v4269 = vpop.permute.xlu0 %4268
    %4270 = vset.pattern.permute.xlu0 0
    %4271 = vperm.xlu0 %4270, %v4211
    %v4272 = vpop.permute.xlu0 %4271
    %4273 = vset.pattern.permute.xlu0 0
    %4274 = vperm.xlu0 %4273, %v4213
    %v4275 = vpop.permute.xlu0 %4274
    %4276 = vset.pattern.permute.xlu0 0
    %4277 = vperm.xlu0 %4276, %v4215
    %v4278 = vpop.permute.xlu0 %4277
    %4279 = vset.pattern.permute.xlu0 0
    %4280 = vperm.xlu0 %4279, %v4217
    %v4281 = vpop.permute.xlu0 %4280
    %v4282 = vlaneseq
    %v4283 = vshrl.u32 %v4282, 7
    %v4284 = vsub.s32 %v835, %v4283
    %v4285 = vrot.slane %v4236, %v4284
    %v4286 = vlaneseq
    %v4287 = vshrl.u32 %v4286, 7
    %v4288 = vsub.s32 %v840, %v4287
    %v4289 = vrot.slane %v4239, %v4288
    %v4290 = vsel %vm845, %v4289, %v4285
    %v4291 = vlaneseq
    %v4292 = vshrl.u32 %v4291, 7
    %v4293 = vsub.s32 %v835, %v4292
    %v4294 = vrot.slane %v4242, %v4293
    %v4295 = vlaneseq
    %v4296 = vshrl.u32 %v4295, 7
    %v4297 = vsub.s32 %v840, %v4296
    %v4298 = vrot.slane %v4245, %v4297
    %v4299 = vsel %vm845, %v4298, %v4294
    %v4300 = vlaneseq
    %v4301 = vshrl.u32 %v4300, 7
    %v4302 = vsub.s32 %v835, %v4301
    %v4303 = vrot.slane %v4248, %v4302
    %v4304 = vlaneseq
    %v4305 = vshrl.u32 %v4304, 7
    %v4306 = vsub.s32 %v840, %v4305
    %v4307 = vrot.slane %v4251, %v4306
    %v4308 = vsel %vm845, %v4307, %v4303
    %v4309 = vlaneseq
    %v4310 = vshrl.u32 %v4309, 7
    %v4311 = vsub.s32 %v835, %v4310
    %v4312 = vrot.slane %v4254, %v4311
    %v4313 = vlaneseq
    %v4314 = vshrl.u32 %v4313, 7
    %v4315 = vsub.s32 %v840, %v4314
    %v4316 = vrot.slane %v4257, %v4315
    %v4317 = vsel %vm845, %v4316, %v4312
    %v4318 = vlaneseq
    %v4319 = vshrl.u32 %v4318, 7
    %v4320 = vsub.s32 %v835, %v4319
    %v4321 = vrot.slane %v4260, %v4320
    %v4322 = vlaneseq
    %v4323 = vshrl.u32 %v4322, 7
    %v4324 = vsub.s32 %v840, %v4323
    %v4325 = vrot.slane %v4263, %v4324
    %v4326 = vsel %vm845, %v4325, %v4321
    %v4327 = vlaneseq
    %v4328 = vshrl.u32 %v4327, 7
    %v4329 = vsub.s32 %v835, %v4328
    %v4330 = vrot.slane %v4266, %v4329
    %v4331 = vlaneseq
    %v4332 = vshrl.u32 %v4331, 7
    %v4333 = vsub.s32 %v840, %v4332
    %v4334 = vrot.slane %v4269, %v4333
    %v4335 = vsel %vm845, %v4334, %v4330
    %v4336 = vlaneseq
    %v4337 = vshrl.u32 %v4336, 7
    %v4338 = vsub.s32 %v835, %v4337
    %v4339 = vrot.slane %v4272, %v4338
    %v4340 = vlaneseq
    %v4341 = vshrl.u32 %v4340, 7
    %v4342 = vsub.s32 %v840, %v4341
    %v4343 = vrot.slane %v4275, %v4342
    %v4344 = vsel %vm845, %v4343, %v4339
    %v4345 = vlaneseq
    %v4346 = vshrl.u32 %v4345, 7
    %v4347 = vsub.s32 %v835, %v4346
    %v4348 = vrot.slane %v4278, %v4347
    %v4349 = vlaneseq
    %v4350 = vshrl.u32 %v4349, 7
    %v4351 = vsub.s32 %v840, %v4350
    %v4352 = vrot.slane %v4281, %v4351
    %v4353 = vsel %vm845, %v4352, %v4348
    %v4354 = vsel %vm910, %v4299, %v4290
    %v4355 = vsel %vm912, %v4308, %v4354
    %v4356 = vsel %vm914, %v4317, %v4355
    %v4357 = vsel %vm916, %v4326, %v4356
    %v4358 = vsel %vm918, %v4335, %v4357
    %v4359 = vsel %vm920, %v4344, %v4358
    %v4360 = vsel %vm922, %v4353, %v4359
    %v4362 = vsel %vm479, %v4360, 0.0
    %4363 = vadd.xlane.f32.xlu0 %v4362
    %v4364 = vpop.xlane.xlu0 %4363
    %v4365 = vrcp.pop %v4364
    %v4367 = vlaneseq
    %v4368 = vshrl.u32 %v4367, 7
    %v4369 = vsub.s32 0, %v4368
    %v4370 = vrot.slane %v4365, %v4369
    %v4371 = vlaneseq
    %v4372 = vshrl.u32 %v4371, 7
    %v4373 = vsub.s32 1, %v4372
    %v4374 = vrot.slane %v4365, %v4373
    %v4375 = vlaneseq
    %v4376 = vshrl.u32 %v4375, 7
    %v4377 = vsub.s32 2, %v4376
    %v4378 = vrot.slane %v4365, %v4377
    %v4379 = vlaneseq
    %v4380 = vshrl.u32 %v4379, 7
    %v4381 = vsub.s32 3, %v4380
    %v4382 = vrot.slane %v4365, %v4381
    %v4383 = vlaneseq
    %v4384 = vshrl.u32 %v4383, 7
    %v4385 = vsub.s32 4, %v4384
    %v4386 = vrot.slane %v4365, %v4385
    %v4387 = vlaneseq
    %v4388 = vshrl.u32 %v4387, 7
    %v4389 = vsub.s32 5, %v4388
    %v4390 = vrot.slane %v4365, %v4389
    %v4391 = vlaneseq
    %v4392 = vshrl.u32 %v4391, 7
    %v4393 = vsub.s32 6, %v4392
    %v4394 = vrot.slane %v4365, %v4393
    %v4395 = vlaneseq
    %v4396 = vshrl.u32 %v4395, 7
    %v4397 = vsub.s32 7, %v4396
    %v4398 = vrot.slane %v4365, %v4397
    %v4407 = vmul.f32 %v4187, %v4370
    %v4408 = vmul.f32 %v4189, %v4370
    %v4409 = vmul.f32 %v4191, %v4374
    %v4410 = vmul.f32 %v4193, %v4374
    %v4411 = vmul.f32 %v4195, %v4378
    %v4412 = vmul.f32 %v4197, %v4378
    %v4413 = vmul.f32 %v4199, %v4382
    %v4414 = vmul.f32 %v4201, %v4382
    %v4415 = vmul.f32 %v4203, %v4386
    %v4416 = vmul.f32 %v4205, %v4386
    %v4417 = vmul.f32 %v4207, %v4390
    %v4418 = vmul.f32 %v4209, %v4390
    %v4419 = vmul.f32 %v4211, %v4394
    %v4420 = vmul.f32 %v4213, %v4394
    %v4421 = vmul.f32 %v4215, %v4398
    %v4422 = vmul.f32 %v4217, %v4398
    %4424 = vset.pattern.permute.xlu0 0
    %4425 = vperm.xlu0 %4424, %v4407
    %v4426 = vpop.permute.xlu0 %4425
    %4429 = vset.pattern.permute.xlu0 0
    %4430 = vperm.xlu0 %4429, %v4408
    %v4431 = vpop.permute.xlu0 %4430
    %4434 = vset.pattern.permute.xlu0 0
    %4435 = vperm.xlu0 %4434, %v4409
    %v4436 = vpop.permute.xlu0 %4435
    %4439 = vset.pattern.permute.xlu0 0
    %4440 = vperm.xlu0 %4439, %v4410
    %v4441 = vpop.permute.xlu0 %4440
    %4444 = vset.pattern.permute.xlu0 0
    %4445 = vperm.xlu0 %4444, %v4411
    %v4446 = vpop.permute.xlu0 %4445
    %4449 = vset.pattern.permute.xlu0 0
    %4450 = vperm.xlu0 %4449, %v4412
    %v4451 = vpop.permute.xlu0 %4450
    %4454 = vset.pattern.permute.xlu0 0
    %4455 = vperm.xlu0 %4454, %v4413
    %v4456 = vpop.permute.xlu0 %4455
    %4459 = vset.pattern.permute.xlu0 0
    %4460 = vperm.xlu0 %4459, %v4414
    %v4461 = vpop.permute.xlu0 %4460
    %4464 = vset.pattern.permute.xlu0 0
    %4465 = vperm.xlu0 %4464, %v4415
    %v4466 = vpop.permute.xlu0 %4465
    %4469 = vset.pattern.permute.xlu0 0
    %4470 = vperm.xlu0 %4469, %v4416
    %v4471 = vpop.permute.xlu0 %4470
    %4474 = vset.pattern.permute.xlu0 0
    %4475 = vperm.xlu0 %4474, %v4417
    %v4476 = vpop.permute.xlu0 %4475
    %4479 = vset.pattern.permute.xlu0 0
    %4480 = vperm.xlu0 %4479, %v4418
    %v4481 = vpop.permute.xlu0 %4480
    %4484 = vset.pattern.permute.xlu0 0
    %4485 = vperm.xlu0 %4484, %v4419
    %v4486 = vpop.permute.xlu0 %4485
    %4489 = vset.pattern.permute.xlu0 0
    %4490 = vperm.xlu0 %4489, %v4420
    %v4491 = vpop.permute.xlu0 %4490
    %4494 = vset.pattern.permute.xlu0 0
    %4495 = vperm.xlu0 %4494, %v4421
    %v4496 = vpop.permute.xlu0 %4495
    %4499 = vset.pattern.permute.xlu0 0
    %4500 = vperm.xlu0 %4499, %v4422
    %v4501 = vpop.permute.xlu0 %4500
    %v4503 = vmul.f32 %v4426, %v1222
    %v4504 = vmul.f32 %v4431, %v1223
    %v4505 = vmul.f32 %v4436, %v1224
    %v4506 = vmul.f32 %v4441, %v1225
    %v4507 = vmul.f32 %v4446, %v1226
    %v4508 = vmul.f32 %v4451, %v1227
    %v4509 = vmul.f32 %v4456, %v1228
    %v4510 = vmul.f32 %v4461, %v1229
    %v4511 = vmul.f32 %v4466, %v1230
    %v4512 = vmul.f32 %v4471, %v1231
    %v4513 = vmul.f32 %v4476, %v1232
    %v4514 = vmul.f32 %v4481, %v1233
    %v4515 = vmul.f32 %v4486, %v1234
    %v4516 = vmul.f32 %v4491, %v1235
    %v4517 = vmul.f32 %v4496, %v1236
    %v4518 = vmul.f32 %v4501, %v1237
    %v4519 = vsel %vm73, %v4503, 0.0
    %v4520 = vsel %vm73, %v4504, 0.0
    %v4521 = vadd.f32 %v4519, %v4520
    %v4522 = vrot.slane %v4521, 4
    %v4523 = vadd.f32 %v4521, %v4522
    %v4524 = vrot.slane %v4523, 2
    %v4525 = vadd.f32 %v4523, %v4524
    %v4526 = vrot.slane %v4525, 1
    %v4527 = vadd.f32 %v4525, %v4526
    %v4528 = vsel %vm73, %v4505, 0.0
    %v4529 = vsel %vm73, %v4506, 0.0
    %v4530 = vadd.f32 %v4528, %v4529
    %v4531 = vrot.slane %v4530, 4
    %v4532 = vadd.f32 %v4530, %v4531
    %v4533 = vrot.slane %v4532, 2
    %v4534 = vadd.f32 %v4532, %v4533
    %v4535 = vrot.slane %v4534, 1
    %v4536 = vadd.f32 %v4534, %v4535
    %v4537 = vsel %vm73, %v4507, 0.0
    %v4538 = vsel %vm73, %v4508, 0.0
    %v4539 = vadd.f32 %v4537, %v4538
    %v4540 = vrot.slane %v4539, 4
    %v4541 = vadd.f32 %v4539, %v4540
    %v4542 = vrot.slane %v4541, 2
    %v4543 = vadd.f32 %v4541, %v4542
    %v4544 = vrot.slane %v4543, 1
    %v4545 = vadd.f32 %v4543, %v4544
    %v4546 = vsel %vm73, %v4509, 0.0
    %v4547 = vsel %vm73, %v4510, 0.0
    %v4548 = vadd.f32 %v4546, %v4547
    %v4549 = vrot.slane %v4548, 4
    %v4550 = vadd.f32 %v4548, %v4549
    %v4551 = vrot.slane %v4550, 2
    %v4552 = vadd.f32 %v4550, %v4551
    %v4553 = vrot.slane %v4552, 1
    %v4554 = vadd.f32 %v4552, %v4553
    %v4555 = vsel %vm73, %v4511, 0.0
    %v4556 = vsel %vm73, %v4512, 0.0
    %v4557 = vadd.f32 %v4555, %v4556
    %v4558 = vrot.slane %v4557, 4
    %v4559 = vadd.f32 %v4557, %v4558
    %v4560 = vrot.slane %v4559, 2
    %v4561 = vadd.f32 %v4559, %v4560
    %v4562 = vrot.slane %v4561, 1
    %v4563 = vadd.f32 %v4561, %v4562
    %v4564 = vsel %vm73, %v4513, 0.0
    %v4565 = vsel %vm73, %v4514, 0.0
    %v4566 = vadd.f32 %v4564, %v4565
    %v4567 = vrot.slane %v4566, 4
    %v4568 = vadd.f32 %v4566, %v4567
    %v4569 = vrot.slane %v4568, 2
    %v4570 = vadd.f32 %v4568, %v4569
    %v4571 = vrot.slane %v4570, 1
    %v4572 = vadd.f32 %v4570, %v4571
    %v4573 = vsel %vm73, %v4515, 0.0
    %v4574 = vsel %vm73, %v4516, 0.0
    %v4575 = vadd.f32 %v4573, %v4574
    %v4576 = vrot.slane %v4575, 4
    %v4577 = vadd.f32 %v4575, %v4576
    %v4578 = vrot.slane %v4577, 2
    %v4579 = vadd.f32 %v4577, %v4578
    %v4580 = vrot.slane %v4579, 1
    %v4581 = vadd.f32 %v4579, %v4580
    %v4582 = vsel %vm73, %v4517, 0.0
    %v4583 = vsel %vm73, %v4518, 0.0
    %v4584 = vadd.f32 %v4582, %v4583
    %v4585 = vrot.slane %v4584, 4
    %v4586 = vadd.f32 %v4584, %v4585
    %v4587 = vrot.slane %v4586, 2
    %v4588 = vadd.f32 %v4586, %v4587
    %v4589 = vrot.slane %v4588, 1
    %v4590 = vadd.f32 %v4588, %v4589
    %v4591 = vpack.c.bf16 %v4527, %v4527
    %v4592 = vpack.c.bf16 %v4536, %v4536
    %v4593 = vpack.c.bf16 %v4545, %v4545
    %v4594 = vpack.c.bf16 %v4554, %v4554
    %v4595 = vpack.c.bf16 %v4563, %v4563
    %v4596 = vpack.c.bf16 %v4572, %v4572
    %v4597 = vpack.c.bf16 %v4581, %v4581
    %v4598 = vpack.c.bf16 %v4590, %v4590
    %v4607 = vunpack.c.l.b16 %v4591
    %v4608 = vunpack.c.l.b16 %v4592
    %v4609 = vunpack.c.l.b16 %v4593
    %v4610 = vunpack.c.l.b16 %v4594
    %v4611 = vunpack.c.l.b16 %v4595
    %v4612 = vunpack.c.l.b16 %v4596
    %v4613 = vunpack.c.l.b16 %v4597
    %v4614 = vunpack.c.l.b16 %v4598
    %v4615 = vsel %vm910, %v4608, %v4607
    %v4616 = vsel %vm912, %v4609, %v4615
    %v4617 = vsel %vm914, %v4610, %v4616
    %v4618 = vsel %vm916, %v4611, %v4617
    %v4619 = vsel %vm918, %v4612, %v4618
    %v4620 = vsel %vm920, %v4613, %v4619
    %v4621 = vsel %vm922, %v4614, %v4620
    %v4622 = vpack.c.b16 %v4621, %v4621
    %v4624 = vsel %vm73, %v4622, 0
    %4626 = vmatprep.subr.bf16.mxu0 0
    %4627 = vmatpush1.bf16.msra.mxu0 0
    %4628 = vmatprep.subr.bf16.mxu0 0
    %4629 = vmatpush1.bf16.msra.mxu0 0
    %4630 = vmatprep.subr.bf16.mxu0 0
    %4631 = vmatpush1.bf16.msra.mxu0 0
    %4632 = vmatprep.subr.bf16.mxu0 0
    %4633 = vmatpush1.bf16.msra.mxu0 0
    %4634 = vmatprep.subr.bf16.mxu0 0
    %4635 = vmatpush1.bf16.msra.mxu0 0
    %4636 = vmatprep.subr.bf16.mxu0 0
    %4637 = vmatpush1.bf16.msra.mxu0 0
    %4638 = vmatprep.subr.bf16.mxu0 0
    %4639 = vmatpush1.bf16.msra.mxu0 %v70
    %4640 = vmatprep.subr.bf16.mxu0 0
    %4641 = vmatpush1.bf16.msra.mxu0 %v69
    %4642 = vmatprep.subr.bf16.mxu0 0
    %4643 = vmatpush2.bf16.msra.mxu0 0
    %4644 = vmatprep.subr.bf16.mxu0 0
    %4645 = vmatpush2.bf16.msra.mxu0 0
    %4646 = vmatprep.subr.bf16.mxu0 0
    %4647 = vmatpush2.bf16.msra.mxu0 0
    %4648 = vmatprep.subr.bf16.mxu0 0
    %4649 = vmatpush2.bf16.msra.mxu0 0
    %4650 = vmatprep.subr.bf16.mxu0 0
    %4651 = vmatpush2.bf16.msra.mxu0 0
    %4652 = vmatprep.subr.bf16.mxu0 0
    %4653 = vmatpush2.bf16.msra.mxu0 0
    %4654 = vmatprep.subr.bf16.mxu0 0
    %4655 = vmatpush2.bf16.msra.mxu0 0
    %4656 = vmatprep.subr.bf16.mxu0 0
    %4657 = vmatpush2.bf16.msra.mxu0 0
    %4658 = vmatprep.mubr.bf16.mxu0 0
    %4659 = vmatmul.mubr.bf16.gmra.mxu0 %v4624
    %v4660 = vpop.f32.mrf.mxu0
    %v4661 = vadd.f32 0.0, %v4660
    %v4662 = vpop.f32.mrf.mxu0
    %v4663 = vpop.f32.mrf.mxu0
    %v4664 = vpop.f32.mrf.mxu0
    %4665 = vdwg.mxu0
    %s4666 = scalar_lea.vmem %s1, 24
    %v4667 = vld [vmem:[%s4666] sm:$0xff]
    %4668 = vrot.lane.b32.xlu0 %v3759, 112
    %v4669 = vpop.permute.xlu0 %4668
    %v4671 = vadd.f32 %v4667, %v4669
    %4673 = vrot.lane.b32.xlu0 %v4661, 32
    %v4674 = vpop.permute.xlu0 %4673
    %v4676 = vadd.f32 %v4671, %v4674
    %4678 = vrot.lane.b32.xlu0 %v4676, 112
    %v4679 = vpop.permute.xlu0 %4678
    %v4681 = vmax.f32 %v4676, %v4679
    %v4682 = vsel 0, %v4681, %v3619
    %v4683 = vsel 0, %v4681, %v3620
    %v4684 = vsel 0, %v4681, %v3621
    %v4685 = vsel 1, %v4681, %v3622
    %v4686 = vsel 0, %v4681, %v3622
    %s4687 = scalar_lea.vmem %s0, 32
    %v4688 = vld [vmem:[%s4687] sm:$0xff]
    %v4689 = vadd.f32 %v4688, %v4661
    %v4690 = vadd.f32 %v4689, %v119
    %v4691 = vxor.u32 %v4690, 2147483648
    %v4692 = vmul.f32 %v4691, 1.442695
    %v4693 = vpow.pop %v4692
    %v4694 = vadd.f32 %v4693, 1.0
    %v4695 = vrcp.pop %v4694
    %v4696 = vmul.f32 1.0, %v4695
    %v4697 = vmul.f32 %v4696, %v130
    %4699 = vrot.lane.b32.xlu0 %v4697, 64
    %v4700 = vpop.permute.xlu0 %4699
    %v4702 = vadd.f32 %v4689, %v4700
    %v4703 = vtanh.pop %v4702
    %v4704 = vsub.f32 1.0, %v4696
    %4706 = vrot.lane.b32.xlu0 %v4703, 96
    %v4707 = vpop.permute.xlu0 %4706
    %v4709 = vmul.f32 %v4704, %v4707
    %v4710 = vmul.f32 %v4696, %v147
    %v4711 = vadd.f32 %v4709, %v4710
    %v4712 = vpack.c.bf16 %v4711, %v4711
    %4714 = vrot.lane.b32.xlu0 %v4712, 96
    %v4715 = vpop.permute.xlu0 %4714
    %v4717 = vsel %vm73, %v4715, 0
    %4719 = vmatprep.subr.bf16.mxu0 0
    %4720 = vmatpush1.bf16.msra.mxu0 0
    %4721 = vmatprep.subr.bf16.mxu0 0
    %4722 = vmatpush1.bf16.msra.mxu0 0
    %4723 = vmatprep.subr.bf16.mxu0 0
    %4724 = vmatpush1.bf16.msra.mxu0 0
    %4725 = vmatprep.subr.bf16.mxu0 0
    %4726 = vmatpush1.bf16.msra.mxu0 0
    %4727 = vmatprep.subr.bf16.mxu0 0
    %4728 = vmatpush1.bf16.msra.mxu0 0
    %4729 = vmatprep.subr.bf16.mxu0 0
    %4730 = vmatpush1.bf16.msra.mxu0 0
    %4731 = vmatprep.subr.bf16.mxu0 0
    %4732 = vmatpush1.bf16.msra.mxu0 %v175
    %4733 = vmatprep.subr.bf16.mxu0 0
    %4734 = vmatpush1.bf16.msra.mxu0 %v174
    %4735 = vmatprep.subr.bf16.mxu0 0
    %4736 = vmatpush2.bf16.msra.mxu0 0
    %4737 = vmatprep.subr.bf16.mxu0 0
    %4738 = vmatpush2.bf16.msra.mxu0 0
    %4739 = vmatprep.subr.bf16.mxu0 0
    %4740 = vmatpush2.bf16.msra.mxu0 0
    %4741 = vmatprep.subr.bf16.mxu0 0
    %4742 = vmatpush2.bf16.msra.mxu0 0
    %4743 = vmatprep.subr.bf16.mxu0 0
    %4744 = vmatpush2.bf16.msra.mxu0 0
    %4745 = vmatprep.subr.bf16.mxu0 0
    %4746 = vmatpush2.bf16.msra.mxu0 0
    %4747 = vmatprep.subr.bf16.mxu0 0
    %4748 = vmatpush2.bf16.msra.mxu0 0
    %4749 = vmatprep.subr.bf16.mxu0 0
    %4750 = vmatpush2.bf16.msra.mxu0 0
    %4751 = vmatprep.mubr.bf16.mxu0 0
    %4752 = vmatmul.mubr.bf16.gmra.mxu0 %v4717
    %v4753 = vpop.f32.mrf.mxu0
    %v4754 = vadd.f32 %v161, %v4753
    %v4755 = vpop.f32.mrf.mxu0
    %v4756 = vpop.f32.mrf.mxu0
    %v4757 = vpop.f32.mrf.mxu0
    %4758 = vdwg.mxu0
    %v4759 = vadd.f32 %v4754, %v222
    %v4760 = vxor.u32 %v4759, 2147483648
    %v4761 = vmul.f32 %v4760, 1.442695
    %v4762 = vpow.pop %v4761
    %v4763 = vadd.f32 %v4762, 1.0
    %v4764 = vrcp.pop %v4763
    %v4765 = vmul.f32 1.0, %v4764
    %v4766 = vmul.f32 %v4765, %v234
    %4768 = vrot.lane.b32.xlu0 %v4766, 64
    %v4769 = vpop.permute.xlu0 %4768
    %v4771 = vadd.f32 %v4754, %v4769
    %v4772 = vtanh.pop %v4771
    %v4773 = vsub.f32 1.0, %v4765
    %4775 = vrot.lane.b32.xlu0 %v4772, 96
    %v4776 = vpop.permute.xlu0 %4775
    %v4778 = vmul.f32 %v4773, %v4776
    %v4779 = vmul.f32 %v4765, %v251
    %v4780 = vadd.f32 %v4778, %v4779
    %v4781 = vpack.c.bf16 %v4780, %v4780
    %4783 = vrot.lane.b32.xlu0 %v4781, 96
    %v4784 = vpop.permute.xlu0 %4783
    %v4786 = vsel %vm73, %v4784, 0
    %4788 = vmatprep.subr.bf16.mxu0 0
    %4789 = vmatpush1.bf16.msra.mxu0 0
    %4790 = vmatprep.subr.bf16.mxu0 0
    %4791 = vmatpush1.bf16.msra.mxu0 0
    %4792 = vmatprep.subr.bf16.mxu0 0
    %4793 = vmatpush1.bf16.msra.mxu0 0
    %4794 = vmatprep.subr.bf16.mxu0 0
    %4795 = vmatpush1.bf16.msra.mxu0 0
    %4796 = vmatprep.subr.bf16.mxu0 0
    %4797 = vmatpush1.bf16.msra.mxu0 0
    %4798 = vmatprep.subr.bf16.mxu0 0
    %4799 = vmatpush1.bf16.msra.mxu0 0
    %4800 = vmatprep.subr.bf16.mxu0 0
    %4801 = vmatpush1.bf16.msra.mxu0 %v272
    %4802 = vmatprep.subr.bf16.mxu0 0
    %4803 = vmatpush1.bf16.msra.mxu0 %v271
    %4804 = vmatprep.subr.bf16.mxu0 0
    %4805 = vmatpush2.bf16.msra.mxu0 0
    %4806 = vmatprep.subr.bf16.mxu0 0
    %4807 = vmatpush2.bf16.msra.mxu0 0
    %4808 = vmatprep.subr.bf16.mxu0 0
    %4809 = vmatpush2.bf16.msra.mxu0 0
    %4810 = vmatprep.subr.bf16.mxu0 0
    %4811 = vmatpush2.bf16.msra.mxu0 0
    %4812 = vmatprep.subr.bf16.mxu0 0
    %4813 = vmatpush2.bf16.msra.mxu0 0
    %4814 = vmatprep.subr.bf16.mxu0 0
    %4815 = vmatpush2.bf16.msra.mxu0 0
    %4816 = vmatprep.subr.bf16.mxu0 0
    %4817 = vmatpush2.bf16.msra.mxu0 0
    %4818 = vmatprep.subr.bf16.mxu0 0
    %4819 = vmatpush2.bf16.msra.mxu0 0
    %4820 = vmatprep.mubr.bf16.mxu0 0
    %4821 = vmatmul.mubr.bf16.gmra.mxu0 %v4786
    %v4822 = vpop.f32.mrf.mxu0
    %v4823 = vadd.f32 0.0, %v4822
    %v4824 = vpop.f32.mrf.mxu0
    %v4825 = vpop.f32.mrf.mxu0
    %v4826 = vpop.f32.mrf.mxu0
    %4827 = vdwg.mxu0
    %v4829 = vcombine.high %v4823, %v4823
    %v4831 = vunpack.c.l.s4 1966171168
    %v4832 = vunpack.c.0.s8 %v4831
    %v4833 = vlaneseq
    %v4834 = vshrl.u32 %v4833, 7
    %v4835 = vsub.s32 %v4832, %v4834
    %v4836 = vrot.slane %v4823, %v4835
    %v4838 = vunpack.c.l.s4 1966171168
    %v4839 = vunpack.c.0.s8 %v4838
    %v4840 = vlaneseq
    %v4841 = vshrl.u32 %v4840, 7
    %v4842 = vsub.s32 %v4839, %v4841
    %v4843 = vrot.slane %v4829, %v4842
    %v4844 = vcombine.high %v4836, %v4836
    %v4845 = vcombine.high %v4843, %v4843
    %v4847 = vunpack.c.l.s4 1966171168
    %v4848 = vunpack.c.0.s8 %v4847
    %v4849 = vlaneseq
    %v4850 = vshrl.u32 %v4849, 7
    %v4851 = vsub.s32 %v4848, %v4850
    %v4852 = vrot.slane %v4836, %v4851
    %v4854 = vunpack.c.l.s4 1966171168
    %v4855 = vunpack.c.0.s8 %v4854
    %v4856 = vlaneseq
    %v4857 = vshrl.u32 %v4856, 7
    %v4858 = vsub.s32 %v4855, %v4857
    %v4859 = vrot.slane %v4843, %v4858
    %v4861 = vunpack.c.l.s4 1966171168
    %v4862 = vunpack.c.0.s8 %v4861
    %v4863 = vlaneseq
    %v4864 = vshrl.u32 %v4863, 7
    %v4865 = vsub.s32 %v4862, %v4864
    %v4866 = vrot.slane %v4844, %v4865
    %v4868 = vunpack.c.l.s4 1966171168
    %v4869 = vunpack.c.0.s8 %v4868
    %v4870 = vlaneseq
    %v4871 = vshrl.u32 %v4870, 7
    %v4872 = vsub.s32 %v4869, %v4871
    %v4873 = vrot.slane %v4845, %v4872
    %v4874 = vcombine.high %v4852, %v4852
    %v4875 = vcombine.high %v4859, %v4859
    %v4876 = vcombine.high %v4866, %v4866
    %v4877 = vcombine.high %v4873, %v4873
    %v4878 = vlaneseq
    %v4879 = vshrl.u32 %v4878, 7
    %v4880 = vsub.s32 0, %v4879
    %v4881 = vrot.slane %v4852, %v4880
    %v4882 = vlaneseq
    %v4883 = vshrl.u32 %v4882, 7
    %v4884 = vsub.s32 0, %v4883
    %v4885 = vrot.slane %v4866, %v4884
    %v4886 = vlaneseq
    %v4887 = vshrl.u32 %v4886, 7
    %v4888 = vsub.s32 0, %v4887
    %v4889 = vrot.slane %v4874, %v4888
    %v4890 = vlaneseq
    %v4891 = vshrl.u32 %v4890, 7
    %v4892 = vsub.s32 0, %v4891
    %v4893 = vrot.slane %v4876, %v4892
    %v4894 = vlaneseq
    %v4895 = vshrl.u32 %v4894, 7
    %v4896 = vsub.s32 0, %v4895
    %v4897 = vrot.slane %v4859, %v4896
    %v4898 = vlaneseq
    %v4899 = vshrl.u32 %v4898, 7
    %v4900 = vsub.s32 0, %v4899
    %v4901 = vrot.slane %v4873, %v4900
    %v4902 = vlaneseq
    %v4903 = vshrl.u32 %v4902, 7
    %v4904 = vsub.s32 0, %v4903
    %v4905 = vrot.slane %v4875, %v4904
    %v4906 = vlaneseq
    %v4907 = vshrl.u32 %v4906, 7
    %v4908 = vsub.s32 0, %v4907
    %v4909 = vrot.slane %v4877, %v4908
    %v4918 = vadd.f32 %v318, %v4881
    %v4919 = vadd.f32 %v319, %v4881
    %v4920 = vadd.f32 %v320, %v4885
    %v4921 = vadd.f32 %v321, %v4885
    %v4922 = vadd.f32 %v322, %v4889
    %v4923 = vadd.f32 %v323, %v4889
    %v4924 = vadd.f32 %v324, %v4893
    %v4925 = vadd.f32 %v325, %v4893
    %v4926 = vadd.f32 %v326, %v4897
    %v4927 = vadd.f32 %v327, %v4897
    %v4928 = vadd.f32 %v328, %v4901
    %v4929 = vadd.f32 %v329, %v4901
    %v4930 = vadd.f32 %v330, %v4905
    %v4931 = vadd.f32 %v331, %v4905
    %v4932 = vadd.f32 %v332, %v4909
    %v4933 = vadd.f32 %v333, %v4909
    %v4934 = vtanh.pop %v4918
    %v4935 = vtanh.pop %v4919
    %v4936 = vtanh.pop %v4920
    %v4937 = vtanh.pop %v4921
    %v4938 = vtanh.pop %v4922
    %v4939 = vtanh.pop %v4923
    %v4940 = vtanh.pop %v4924
    %v4941 = vtanh.pop %v4925
    %v4942 = vtanh.pop %v4926
    %v4943 = vtanh.pop %v4927
    %v4944 = vtanh.pop %v4928
    %v4945 = vtanh.pop %v4929
    %v4946 = vtanh.pop %v4930
    %v4947 = vtanh.pop %v4931
    %v4948 = vtanh.pop %v4932
    %v4949 = vtanh.pop %v4933
    %v4950 = vmul.f32 %v4934, %v461
    %v4951 = vmul.f32 %v4935, %v461
    %v4952 = vmul.f32 %v4936, %v461
    %v4953 = vmul.f32 %v4937, %v461
    %v4954 = vmul.f32 %v4938, %v461
    %v4955 = vmul.f32 %v4939, %v461
    %v4956 = vmul.f32 %v4940, %v461
    %v4957 = vmul.f32 %v4941, %v461
    %v4958 = vmul.f32 %v4942, %v461
    %v4959 = vmul.f32 %v4943, %v461
    %v4960 = vmul.f32 %v4944, %v461
    %v4961 = vmul.f32 %v4945, %v461
    %v4962 = vmul.f32 %v4946, %v461
    %v4963 = vmul.f32 %v4947, %v461
    %v4964 = vmul.f32 %v4948, %v461
    %v4965 = vmul.f32 %v4949, %v461
    %v4966 = vsel %vm479, %v4950, 0.0
    %4967 = vadd.xlane.f32.xlu0 %v4966
    %v4968 = vpop.xlane.xlu0 %4967
    %v4969 = vsel %vm479, %v4951, 0.0
    %4970 = vadd.xlane.f32.xlu0 %v4969
    %v4971 = vpop.xlane.xlu0 %4970
    %v4972 = vsel %vm479, %v4952, 0.0
    %4973 = vadd.xlane.f32.xlu0 %v4972
    %v4974 = vpop.xlane.xlu0 %4973
    %v4975 = vsel %vm479, %v4953, 0.0
    %4976 = vadd.xlane.f32.xlu0 %v4975
    %v4977 = vpop.xlane.xlu0 %4976
    %v4978 = vsel %vm479, %v4954, 0.0
    %4979 = vadd.xlane.f32.xlu0 %v4978
    %v4980 = vpop.xlane.xlu0 %4979
    %v4981 = vsel %vm479, %v4955, 0.0
    %4982 = vadd.xlane.f32.xlu0 %v4981
    %v4983 = vpop.xlane.xlu0 %4982
    %v4984 = vsel %vm479, %v4956, 0.0
    %4985 = vadd.xlane.f32.xlu0 %v4984
    %v4986 = vpop.xlane.xlu0 %4985
    %v4987 = vsel %vm479, %v4957, 0.0
    %4988 = vadd.xlane.f32.xlu0 %v4987
    %v4989 = vpop.xlane.xlu0 %4988
    %v4990 = vsel %vm479, %v4958, 0.0
    %4991 = vadd.xlane.f32.xlu0 %v4990
    %v4992 = vpop.xlane.xlu0 %4991
    %v4993 = vsel %vm479, %v4959, 0.0
    %4994 = vadd.xlane.f32.xlu0 %v4993
    %v4995 = vpop.xlane.xlu0 %4994
    %v4996 = vsel %vm479, %v4960, 0.0
    %4997 = vadd.xlane.f32.xlu0 %v4996
    %v4998 = vpop.xlane.xlu0 %4997
    %v4999 = vsel %vm479, %v4961, 0.0
    %5000 = vadd.xlane.f32.xlu0 %v4999
    %v5001 = vpop.xlane.xlu0 %5000
    %v5002 = vsel %vm479, %v4962, 0.0
    %5003 = vadd.xlane.f32.xlu0 %v5002
    %v5004 = vpop.xlane.xlu0 %5003
    %v5005 = vsel %vm479, %v4963, 0.0
    %5006 = vadd.xlane.f32.xlu0 %v5005
    %v5007 = vpop.xlane.xlu0 %5006
    %v5008 = vsel %vm479, %v4964, 0.0
    %5009 = vadd.xlane.f32.xlu0 %v5008
    %v5010 = vpop.xlane.xlu0 %5009
    %v5011 = vsel %vm479, %v4965, 0.0
    %5012 = vadd.xlane.f32.xlu0 %v5011
    %v5013 = vpop.xlane.xlu0 %5012
    %v5014 = vmul.f32 %v4968, %v535
    %v5015 = vmul.f32 %v4971, %v539
    %v5016 = vmul.f32 %v4974, %v546
    %v5017 = vmul.f32 %v4977, %v550
    %v5018 = vmul.f32 %v4980, %v557
    %v5019 = vmul.f32 %v4983, %v561
    %v5020 = vmul.f32 %v4986, %v568
    %v5021 = vmul.f32 %v4989, %v572
    %v5022 = vmul.f32 %v4992, %v579
    %v5023 = vmul.f32 %v4995, %v583
    %v5024 = vmul.f32 %v4998, %v590
    %v5025 = vmul.f32 %v5001, %v594
    %v5026 = vmul.f32 %v5004, %v601
    %v5027 = vmul.f32 %v5007, %v605
    %v5028 = vmul.f32 %v5010, %v612
    %v5029 = vmul.f32 %v5013, %v616
    %v5030 = vadd.f32 %v5014, %v656
    %v5031 = vadd.f32 %v5015, %v660
    %v5032 = vadd.f32 %v5016, %v667
    %v5033 = vadd.f32 %v5017, %v671
    %v5034 = vadd.f32 %v5018, %v678
    %v5035 = vadd.f32 %v5019, %v682
    %v5036 = vadd.f32 %v5020, %v689
    %v5037 = vadd.f32 %v5021, %v693
    %v5038 = vadd.f32 %v5022, %v700
    %v5039 = vadd.f32 %v5023, %v704
    %v5040 = vadd.f32 %v5024, %v711
    %v5041 = vadd.f32 %v5025, %v715
    %v5042 = vadd.f32 %v5026, %v722
    %v5043 = vadd.f32 %v5027, %v726
    %v5044 = vadd.f32 %v5028, %v733
    %v5045 = vadd.f32 %v5029, %v737
    %5062 = vset.pattern.permute.xlu0 0
    %5063 = vperm.xlu0 %5062, %v5030
    %v5064 = vpop.permute.xlu0 %5063
    %5065 = vset.pattern.permute.xlu0 0
    %5066 = vperm.xlu0 %5065, %v5031
    %v5067 = vpop.permute.xlu0 %5066
    %5068 = vset.pattern.permute.xlu0 0
    %5069 = vperm.xlu0 %5068, %v5032
    %v5070 = vpop.permute.xlu0 %5069
    %5071 = vset.pattern.permute.xlu0 0
    %5072 = vperm.xlu0 %5071, %v5033
    %v5073 = vpop.permute.xlu0 %5072
    %5074 = vset.pattern.permute.xlu0 0
    %5075 = vperm.xlu0 %5074, %v5034
    %v5076 = vpop.permute.xlu0 %5075
    %5077 = vset.pattern.permute.xlu0 0
    %5078 = vperm.xlu0 %5077, %v5035
    %v5079 = vpop.permute.xlu0 %5078
    %5080 = vset.pattern.permute.xlu0 0
    %5081 = vperm.xlu0 %5080, %v5036
    %v5082 = vpop.permute.xlu0 %5081
    %5083 = vset.pattern.permute.xlu0 0
    %5084 = vperm.xlu0 %5083, %v5037
    %v5085 = vpop.permute.xlu0 %5084
    %5086 = vset.pattern.permute.xlu0 0
    %5087 = vperm.xlu0 %5086, %v5038
    %v5088 = vpop.permute.xlu0 %5087
    %5089 = vset.pattern.permute.xlu0 0
    %5090 = vperm.xlu0 %5089, %v5039
    %v5091 = vpop.permute.xlu0 %5090
    %5092 = vset.pattern.permute.xlu0 0
    %5093 = vperm.xlu0 %5092, %v5040
    %v5094 = vpop.permute.xlu0 %5093
    %5095 = vset.pattern.permute.xlu0 0
    %5096 = vperm.xlu0 %5095, %v5041
    %v5097 = vpop.permute.xlu0 %5096
    %5098 = vset.pattern.permute.xlu0 0
    %5099 = vperm.xlu0 %5098, %v5042
    %v5100 = vpop.permute.xlu0 %5099
    %5101 = vset.pattern.permute.xlu0 0
    %5102 = vperm.xlu0 %5101, %v5043
    %v5103 = vpop.permute.xlu0 %5102
    %5104 = vset.pattern.permute.xlu0 0
    %5105 = vperm.xlu0 %5104, %v5044
    %v5106 = vpop.permute.xlu0 %5105
    %5107 = vset.pattern.permute.xlu0 0
    %5108 = vperm.xlu0 %5107, %v5045
    %v5109 = vpop.permute.xlu0 %5108
    %v5110 = vlaneseq
    %v5111 = vshrl.u32 %v5110, 7
    %v5112 = vsub.s32 %v835, %v5111
    %v5113 = vrot.slane %v5064, %v5112
    %v5114 = vlaneseq
    %v5115 = vshrl.u32 %v5114, 7
    %v5116 = vsub.s32 %v840, %v5115
    %v5117 = vrot.slane %v5067, %v5116
    %v5118 = vsel %vm845, %v5117, %v5113
    %v5119 = vlaneseq
    %v5120 = vshrl.u32 %v5119, 7
    %v5121 = vsub.s32 %v835, %v5120
    %v5122 = vrot.slane %v5070, %v5121
    %v5123 = vlaneseq
    %v5124 = vshrl.u32 %v5123, 7
    %v5125 = vsub.s32 %v840, %v5124
    %v5126 = vrot.slane %v5073, %v5125
    %v5127 = vsel %vm845, %v5126, %v5122
    %v5128 = vlaneseq
    %v5129 = vshrl.u32 %v5128, 7
    %v5130 = vsub.s32 %v835, %v5129
    %v5131 = vrot.slane %v5076, %v5130
    %v5132 = vlaneseq
    %v5133 = vshrl.u32 %v5132, 7
    %v5134 = vsub.s32 %v840, %v5133
    %v5135 = vrot.slane %v5079, %v5134
    %v5136 = vsel %vm845, %v5135, %v5131
    %v5137 = vlaneseq
    %v5138 = vshrl.u32 %v5137, 7
    %v5139 = vsub.s32 %v835, %v5138
    %v5140 = vrot.slane %v5082, %v5139
    %v5141 = vlaneseq
    %v5142 = vshrl.u32 %v5141, 7
    %v5143 = vsub.s32 %v840, %v5142
    %v5144 = vrot.slane %v5085, %v5143
    %v5145 = vsel %vm845, %v5144, %v5140
    %v5146 = vlaneseq
    %v5147 = vshrl.u32 %v5146, 7
    %v5148 = vsub.s32 %v835, %v5147
    %v5149 = vrot.slane %v5088, %v5148
    %v5150 = vlaneseq
    %v5151 = vshrl.u32 %v5150, 7
    %v5152 = vsub.s32 %v840, %v5151
    %v5153 = vrot.slane %v5091, %v5152
    %v5154 = vsel %vm845, %v5153, %v5149
    %v5155 = vlaneseq
    %v5156 = vshrl.u32 %v5155, 7
    %v5157 = vsub.s32 %v835, %v5156
    %v5158 = vrot.slane %v5094, %v5157
    %v5159 = vlaneseq
    %v5160 = vshrl.u32 %v5159, 7
    %v5161 = vsub.s32 %v840, %v5160
    %v5162 = vrot.slane %v5097, %v5161
    %v5163 = vsel %vm845, %v5162, %v5158
    %v5164 = vlaneseq
    %v5165 = vshrl.u32 %v5164, 7
    %v5166 = vsub.s32 %v835, %v5165
    %v5167 = vrot.slane %v5100, %v5166
    %v5168 = vlaneseq
    %v5169 = vshrl.u32 %v5168, 7
    %v5170 = vsub.s32 %v840, %v5169
    %v5171 = vrot.slane %v5103, %v5170
    %v5172 = vsel %vm845, %v5171, %v5167
    %v5173 = vlaneseq
    %v5174 = vshrl.u32 %v5173, 7
    %v5175 = vsub.s32 %v835, %v5174
    %v5176 = vrot.slane %v5106, %v5175
    %v5177 = vlaneseq
    %v5178 = vshrl.u32 %v5177, 7
    %v5179 = vsub.s32 %v840, %v5178
    %v5180 = vrot.slane %v5109, %v5179
    %v5181 = vsel %vm845, %v5180, %v5176
    %v5182 = vsel %vm910, %v5127, %v5118
    %v5183 = vsel %vm912, %v5136, %v5182
    %v5184 = vsel %vm914, %v5145, %v5183
    %v5185 = vsel %vm916, %v5154, %v5184
    %v5186 = vsel %vm918, %v5163, %v5185
    %v5187 = vsel %vm920, %v5172, %v5186
    %v5188 = vsel %vm922, %v5181, %v5187
    %v5190 = vsel %vm479, %v5188, -inf
    %5191 = vmax.xlane.f32.xlu0 %v5190
    %v5192 = vpop.xlane.xlu0 %5191
    %v5194 = vlaneseq
    %v5195 = vshrl.u32 %v5194, 7
    %v5196 = vsub.s32 0, %v5195
    %v5197 = vrot.slane %v5192, %v5196
    %v5198 = vlaneseq
    %v5199 = vshrl.u32 %v5198, 7
    %v5200 = vsub.s32 1, %v5199
    %v5201 = vrot.slane %v5192, %v5200
    %v5202 = vlaneseq
    %v5203 = vshrl.u32 %v5202, 7
    %v5204 = vsub.s32 2, %v5203
    %v5205 = vrot.slane %v5192, %v5204
    %v5206 = vlaneseq
    %v5207 = vshrl.u32 %v5206, 7
    %v5208 = vsub.s32 3, %v5207
    %v5209 = vrot.slane %v5192, %v5208
    %v5210 = vlaneseq
    %v5211 = vshrl.u32 %v5210, 7
    %v5212 = vsub.s32 4, %v5211
    %v5213 = vrot.slane %v5192, %v5212
    %v5214 = vlaneseq
    %v5215 = vshrl.u32 %v5214, 7
    %v5216 = vsub.s32 5, %v5215
    %v5217 = vrot.slane %v5192, %v5216
    %v5218 = vlaneseq
    %v5219 = vshrl.u32 %v5218, 7
    %v5220 = vsub.s32 6, %v5219
    %v5221 = vrot.slane %v5192, %v5220
    %v5222 = vlaneseq
    %v5223 = vshrl.u32 %v5222, 7
    %v5224 = vsub.s32 7, %v5223
    %v5225 = vrot.slane %v5192, %v5224
    %v5234 = vsub.f32 %v5030, %v5197
    %v5235 = vsub.f32 %v5031, %v5197
    %v5236 = vsub.f32 %v5032, %v5201
    %v5237 = vsub.f32 %v5033, %v5201
    %v5238 = vsub.f32 %v5034, %v5205
    %v5239 = vsub.f32 %v5035, %v5205
    %v5240 = vsub.f32 %v5036, %v5209
    %v5241 = vsub.f32 %v5037, %v5209
    %v5242 = vsub.f32 %v5038, %v5213
    %v5243 = vsub.f32 %v5039, %v5213
    %v5244 = vsub.f32 %v5040, %v5217
    %v5245 = vsub.f32 %v5041, %v5217
    %v5246 = vsub.f32 %v5042, %v5221
    %v5247 = vsub.f32 %v5043, %v5221
    %v5248 = vsub.f32 %v5044, %v5225
    %v5249 = vsub.f32 %v5045, %v5225
    %v5250 = vmul.f32 %v5234, 1.442695
    %v5251 = vpow.pop %v5250
    %v5252 = vmul.f32 %v5235, 1.442695
    %v5253 = vpow.pop %v5252
    %v5254 = vmul.f32 %v5236, 1.442695
    %v5255 = vpow.pop %v5254
    %v5256 = vmul.f32 %v5237, 1.442695
    %v5257 = vpow.pop %v5256
    %v5258 = vmul.f32 %v5238, 1.442695
    %v5259 = vpow.pop %v5258
    %v5260 = vmul.f32 %v5239, 1.442695
    %v5261 = vpow.pop %v5260
    %v5262 = vmul.f32 %v5240, 1.442695
    %v5263 = vpow.pop %v5262
    %v5264 = vmul.f32 %v5241, 1.442695
    %v5265 = vpow.pop %v5264
    %v5266 = vmul.f32 %v5242, 1.442695
    %v5267 = vpow.pop %v5266
    %v5268 = vmul.f32 %v5243, 1.442695
    %v5269 = vpow.pop %v5268
    %v5270 = vmul.f32 %v5244, 1.442695
    %v5271 = vpow.pop %v5270
    %v5272 = vmul.f32 %v5245, 1.442695
    %v5273 = vpow.pop %v5272
    %v5274 = vmul.f32 %v5246, 1.442695
    %v5275 = vpow.pop %v5274
    %v5276 = vmul.f32 %v5247, 1.442695
    %v5277 = vpow.pop %v5276
    %v5278 = vmul.f32 %v5248, 1.442695
    %v5279 = vpow.pop %v5278
    %v5280 = vmul.f32 %v5249, 1.442695
    %v5281 = vpow.pop %v5280
    %5298 = vset.pattern.permute.xlu0 0
    %5299 = vperm.xlu0 %5298, %v5251
    %v5300 = vpop.permute.xlu0 %5299
    %5301 = vset.pattern.permute.xlu0 0
    %5302 = vperm.xlu0 %5301, %v5253
    %v5303 = vpop.permute.xlu0 %5302
    %5304 = vset.pattern.permute.xlu0 0
    %5305 = vperm.xlu0 %5304, %v5255
    %v5306 = vpop.permute.xlu0 %5305
    %5307 = vset.pattern.permute.xlu0 0
    %5308 = vperm.xlu0 %5307, %v5257
    %v5309 = vpop.permute.xlu0 %5308
    %5310 = vset.pattern.permute.xlu0 0
    %5311 = vperm.xlu0 %5310, %v5259
    %v5312 = vpop.permute.xlu0 %5311
    %5313 = vset.pattern.permute.xlu0 0
    %5314 = vperm.xlu0 %5313, %v5261
    %v5315 = vpop.permute.xlu0 %5314
    %5316 = vset.pattern.permute.xlu0 0
    %5317 = vperm.xlu0 %5316, %v5263
    %v5318 = vpop.permute.xlu0 %5317
    %5319 = vset.pattern.permute.xlu0 0
    %5320 = vperm.xlu0 %5319, %v5265
    %v5321 = vpop.permute.xlu0 %5320
    %5322 = vset.pattern.permute.xlu0 0
    %5323 = vperm.xlu0 %5322, %v5267
    %v5324 = vpop.permute.xlu0 %5323
    %5325 = vset.pattern.permute.xlu0 0
    %5326 = vperm.xlu0 %5325, %v5269
    %v5327 = vpop.permute.xlu0 %5326
    %5328 = vset.pattern.permute.xlu0 0
    %5329 = vperm.xlu0 %5328, %v5271
    %v5330 = vpop.permute.xlu0 %5329
    %5331 = vset.pattern.permute.xlu0 0
    %5332 = vperm.xlu0 %5331, %v5273
    %v5333 = vpop.permute.xlu0 %5332
    %5334 = vset.pattern.permute.xlu0 0
    %5335 = vperm.xlu0 %5334, %v5275
    %v5336 = vpop.permute.xlu0 %5335
    %5337 = vset.pattern.permute.xlu0 0
    %5338 = vperm.xlu0 %5337, %v5277
    %v5339 = vpop.permute.xlu0 %5338
    %5340 = vset.pattern.permute.xlu0 0
    %5341 = vperm.xlu0 %5340, %v5279
    %v5342 = vpop.permute.xlu0 %5341
    %5343 = vset.pattern.permute.xlu0 0
    %5344 = vperm.xlu0 %5343, %v5281
    %v5345 = vpop.permute.xlu0 %5344
    %v5346 = vlaneseq
    %v5347 = vshrl.u32 %v5346, 7
    %v5348 = vsub.s32 %v835, %v5347
    %v5349 = vrot.slane %v5300, %v5348
    %v5350 = vlaneseq
    %v5351 = vshrl.u32 %v5350, 7
    %v5352 = vsub.s32 %v840, %v5351
    %v5353 = vrot.slane %v5303, %v5352
    %v5354 = vsel %vm845, %v5353, %v5349
    %v5355 = vlaneseq
    %v5356 = vshrl.u32 %v5355, 7
    %v5357 = vsub.s32 %v835, %v5356
    %v5358 = vrot.slane %v5306, %v5357
    %v5359 = vlaneseq
    %v5360 = vshrl.u32 %v5359, 7
    %v5361 = vsub.s32 %v840, %v5360
    %v5362 = vrot.slane %v5309, %v5361
    %v5363 = vsel %vm845, %v5362, %v5358
    %v5364 = vlaneseq
    %v5365 = vshrl.u32 %v5364, 7
    %v5366 = vsub.s32 %v835, %v5365
    %v5367 = vrot.slane %v5312, %v5366
    %v5368 = vlaneseq
    %v5369 = vshrl.u32 %v5368, 7
    %v5370 = vsub.s32 %v840, %v5369
    %v5371 = vrot.slane %v5315, %v5370
    %v5372 = vsel %vm845, %v5371, %v5367
    %v5373 = vlaneseq
    %v5374 = vshrl.u32 %v5373, 7
    %v5375 = vsub.s32 %v835, %v5374
    %v5376 = vrot.slane %v5318, %v5375
    %v5377 = vlaneseq
    %v5378 = vshrl.u32 %v5377, 7
    %v5379 = vsub.s32 %v840, %v5378
    %v5380 = vrot.slane %v5321, %v5379
    %v5381 = vsel %vm845, %v5380, %v5376
    %v5382 = vlaneseq
    %v5383 = vshrl.u32 %v5382, 7
    %v5384 = vsub.s32 %v835, %v5383
    %v5385 = vrot.slane %v5324, %v5384
    %v5386 = vlaneseq
    %v5387 = vshrl.u32 %v5386, 7
    %v5388 = vsub.s32 %v840, %v5387
    %v5389 = vrot.slane %v5327, %v5388
    %v5390 = vsel %vm845, %v5389, %v5385
    %v5391 = vlaneseq
    %v5392 = vshrl.u32 %v5391, 7
    %v5393 = vsub.s32 %v835, %v5392
    %v5394 = vrot.slane %v5330, %v5393
    %v5395 = vlaneseq
    %v5396 = vshrl.u32 %v5395, 7
    %v5397 = vsub.s32 %v840, %v5396
    %v5398 = vrot.slane %v5333, %v5397
    %v5399 = vsel %vm845, %v5398, %v5394
    %v5400 = vlaneseq
    %v5401 = vshrl.u32 %v5400, 7
    %v5402 = vsub.s32 %v835, %v5401
    %v5403 = vrot.slane %v5336, %v5402
    %v5404 = vlaneseq
    %v5405 = vshrl.u32 %v5404, 7
    %v5406 = vsub.s32 %v840, %v5405
    %v5407 = vrot.slane %v5339, %v5406
    %v5408 = vsel %vm845, %v5407, %v5403
    %v5409 = vlaneseq
    %v5410 = vshrl.u32 %v5409, 7
    %v5411 = vsub.s32 %v835, %v5410
    %v5412 = vrot.slane %v5342, %v5411
    %v5413 = vlaneseq
    %v5414 = vshrl.u32 %v5413, 7
    %v5415 = vsub.s32 %v840, %v5414
    %v5416 = vrot.slane %v5345, %v5415
    %v5417 = vsel %vm845, %v5416, %v5412
    %v5418 = vsel %vm910, %v5363, %v5354
    %v5419 = vsel %vm912, %v5372, %v5418
    %v5420 = vsel %vm914, %v5381, %v5419
    %v5421 = vsel %vm916, %v5390, %v5420
    %v5422 = vsel %vm918, %v5399, %v5421
    %v5423 = vsel %vm920, %v5408, %v5422
    %v5424 = vsel %vm922, %v5417, %v5423
    %v5426 = vsel %vm479, %v5424, 0.0
    %5427 = vadd.xlane.f32.xlu0 %v5426
    %v5428 = vpop.xlane.xlu0 %5427
    %v5429 = vrcp.pop %v5428
    %v5431 = vlaneseq
    %v5432 = vshrl.u32 %v5431, 7
    %v5433 = vsub.s32 0, %v5432
    %v5434 = vrot.slane %v5429, %v5433
    %v5435 = vlaneseq
    %v5436 = vshrl.u32 %v5435, 7
    %v5437 = vsub.s32 1, %v5436
    %v5438 = vrot.slane %v5429, %v5437
    %v5439 = vlaneseq
    %v5440 = vshrl.u32 %v5439, 7
    %v5441 = vsub.s32 2, %v5440
    %v5442 = vrot.slane %v5429, %v5441
    %v5443 = vlaneseq
    %v5444 = vshrl.u32 %v5443, 7
    %v5445 = vsub.s32 3, %v5444
    %v5446 = vrot.slane %v5429, %v5445
    %v5447 = vlaneseq
    %v5448 = vshrl.u32 %v5447, 7
    %v5449 = vsub.s32 4, %v5448
    %v5450 = vrot.slane %v5429, %v5449
    %v5451 = vlaneseq
    %v5452 = vshrl.u32 %v5451, 7
    %v5453 = vsub.s32 5, %v5452
    %v5454 = vrot.slane %v5429, %v5453
    %v5455 = vlaneseq
    %v5456 = vshrl.u32 %v5455, 7
    %v5457 = vsub.s32 6, %v5456
    %v5458 = vrot.slane %v5429, %v5457
    %v5459 = vlaneseq
    %v5460 = vshrl.u32 %v5459, 7
    %v5461 = vsub.s32 7, %v5460
    %v5462 = vrot.slane %v5429, %v5461
    %v5471 = vmul.f32 %v5251, %v5434
    %v5472 = vmul.f32 %v5253, %v5434
    %v5473 = vmul.f32 %v5255, %v5438
    %v5474 = vmul.f32 %v5257, %v5438
    %v5475 = vmul.f32 %v5259, %v5442
    %v5476 = vmul.f32 %v5261, %v5442
    %v5477 = vmul.f32 %v5263, %v5446
    %v5478 = vmul.f32 %v5265, %v5446
    %v5479 = vmul.f32 %v5267, %v5450
    %v5480 = vmul.f32 %v5269, %v5450
    %v5481 = vmul.f32 %v5271, %v5454
    %v5482 = vmul.f32 %v5273, %v5454
    %v5483 = vmul.f32 %v5275, %v5458
    %v5484 = vmul.f32 %v5277, %v5458
    %v5485 = vmul.f32 %v5279, %v5462
    %v5486 = vmul.f32 %v5281, %v5462
    %5488 = vset.pattern.permute.xlu0 0
    %5489 = vperm.xlu0 %5488, %v5471
    %v5490 = vpop.permute.xlu0 %5489
    %5493 = vset.pattern.permute.xlu0 0
    %5494 = vperm.xlu0 %5493, %v5472
    %v5495 = vpop.permute.xlu0 %5494
    %5498 = vset.pattern.permute.xlu0 0
    %5499 = vperm.xlu0 %5498, %v5473
    %v5500 = vpop.permute.xlu0 %5499
    %5503 = vset.pattern.permute.xlu0 0
    %5504 = vperm.xlu0 %5503, %v5474
    %v5505 = vpop.permute.xlu0 %5504
    %5508 = vset.pattern.permute.xlu0 0
    %5509 = vperm.xlu0 %5508, %v5475
    %v5510 = vpop.permute.xlu0 %5509
    %5513 = vset.pattern.permute.xlu0 0
    %5514 = vperm.xlu0 %5513, %v5476
    %v5515 = vpop.permute.xlu0 %5514
    %5518 = vset.pattern.permute.xlu0 0
    %5519 = vperm.xlu0 %5518, %v5477
    %v5520 = vpop.permute.xlu0 %5519
    %5523 = vset.pattern.permute.xlu0 0
    %5524 = vperm.xlu0 %5523, %v5478
    %v5525 = vpop.permute.xlu0 %5524
    %5528 = vset.pattern.permute.xlu0 0
    %5529 = vperm.xlu0 %5528, %v5479
    %v5530 = vpop.permute.xlu0 %5529
    %5533 = vset.pattern.permute.xlu0 0
    %5534 = vperm.xlu0 %5533, %v5480
    %v5535 = vpop.permute.xlu0 %5534
    %5538 = vset.pattern.permute.xlu0 0
    %5539 = vperm.xlu0 %5538, %v5481
    %v5540 = vpop.permute.xlu0 %5539
    %5543 = vset.pattern.permute.xlu0 0
    %5544 = vperm.xlu0 %5543, %v5482
    %v5545 = vpop.permute.xlu0 %5544
    %5548 = vset.pattern.permute.xlu0 0
    %5549 = vperm.xlu0 %5548, %v5483
    %v5550 = vpop.permute.xlu0 %5549
    %5553 = vset.pattern.permute.xlu0 0
    %5554 = vperm.xlu0 %5553, %v5484
    %v5555 = vpop.permute.xlu0 %5554
    %5558 = vset.pattern.permute.xlu0 0
    %5559 = vperm.xlu0 %5558, %v5485
    %v5560 = vpop.permute.xlu0 %5559
    %5563 = vset.pattern.permute.xlu0 0
    %5564 = vperm.xlu0 %5563, %v5486
    %v5565 = vpop.permute.xlu0 %5564
    %v5567 = vmul.f32 %v5490, %v1222
    %v5568 = vmul.f32 %v5495, %v1223
    %v5569 = vmul.f32 %v5500, %v1224
    %v5570 = vmul.f32 %v5505, %v1225
    %v5571 = vmul.f32 %v5510, %v1226
    %v5572 = vmul.f32 %v5515, %v1227
    %v5573 = vmul.f32 %v5520, %v1228
    %v5574 = vmul.f32 %v5525, %v1229
    %v5575 = vmul.f32 %v5530, %v1230
    %v5576 = vmul.f32 %v5535, %v1231
    %v5577 = vmul.f32 %v5540, %v1232
    %v5578 = vmul.f32 %v5545, %v1233
    %v5579 = vmul.f32 %v5550, %v1234
    %v5580 = vmul.f32 %v5555, %v1235
    %v5581 = vmul.f32 %v5560, %v1236
    %v5582 = vmul.f32 %v5565, %v1237
    %v5583 = vsel %vm73, %v5567, 0.0
    %v5584 = vsel %vm73, %v5568, 0.0
    %v5585 = vadd.f32 %v5583, %v5584
    %v5586 = vrot.slane %v5585, 4
    %v5587 = vadd.f32 %v5585, %v5586
    %v5588 = vrot.slane %v5587, 2
    %v5589 = vadd.f32 %v5587, %v5588
    %v5590 = vrot.slane %v5589, 1
    %v5591 = vadd.f32 %v5589, %v5590
    %v5592 = vsel %vm73, %v5569, 0.0
    %v5593 = vsel %vm73, %v5570, 0.0
    %v5594 = vadd.f32 %v5592, %v5593
    %v5595 = vrot.slane %v5594, 4
    %v5596 = vadd.f32 %v5594, %v5595
    %v5597 = vrot.slane %v5596, 2
    %v5598 = vadd.f32 %v5596, %v5597
    %v5599 = vrot.slane %v5598, 1
    %v5600 = vadd.f32 %v5598, %v5599
    %v5601 = vsel %vm73, %v5571, 0.0
    %v5602 = vsel %vm73, %v5572, 0.0
    %v5603 = vadd.f32 %v5601, %v5602
    %v5604 = vrot.slane %v5603, 4
    %v5605 = vadd.f32 %v5603, %v5604
    %v5606 = vrot.slane %v5605, 2
    %v5607 = vadd.f32 %v5605, %v5606
    %v5608 = vrot.slane %v5607, 1
    %v5609 = vadd.f32 %v5607, %v5608
    %v5610 = vsel %vm73, %v5573, 0.0
    %v5611 = vsel %vm73, %v5574, 0.0
    %v5612 = vadd.f32 %v5610, %v5611
    %v5613 = vrot.slane %v5612, 4
    %v5614 = vadd.f32 %v5612, %v5613
    %v5615 = vrot.slane %v5614, 2
    %v5616 = vadd.f32 %v5614, %v5615
    %v5617 = vrot.slane %v5616, 1
    %v5618 = vadd.f32 %v5616, %v5617
    %v5619 = vsel %vm73, %v5575, 0.0
    %v5620 = vsel %vm73, %v5576, 0.0
    %v5621 = vadd.f32 %v5619, %v5620
    %v5622 = vrot.slane %v5621, 4
    %v5623 = vadd.f32 %v5621, %v5622
    %v5624 = vrot.slane %v5623, 2
    %v5625 = vadd.f32 %v5623, %v5624
    %v5626 = vrot.slane %v5625, 1
    %v5627 = vadd.f32 %v5625, %v5626
    %v5628 = vsel %vm73, %v5577, 0.0
    %v5629 = vsel %vm73, %v5578, 0.0
    %v5630 = vadd.f32 %v5628, %v5629
    %v5631 = vrot.slane %v5630, 4
    %v5632 = vadd.f32 %v5630, %v5631
    %v5633 = vrot.slane %v5632, 2
    %v5634 = vadd.f32 %v5632, %v5633
    %v5635 = vrot.slane %v5634, 1
    %v5636 = vadd.f32 %v5634, %v5635
    %v5637 = vsel %vm73, %v5579, 0.0
    %v5638 = vsel %vm73, %v5580, 0.0
    %v5639 = vadd.f32 %v5637, %v5638
    %v5640 = vrot.slane %v5639, 4
    %v5641 = vadd.f32 %v5639, %v5640
    %v5642 = vrot.slane %v5641, 2
    %v5643 = vadd.f32 %v5641, %v5642
    %v5644 = vrot.slane %v5643, 1
    %v5645 = vadd.f32 %v5643, %v5644
    %v5646 = vsel %vm73, %v5581, 0.0
    %v5647 = vsel %vm73, %v5582, 0.0
    %v5648 = vadd.f32 %v5646, %v5647
    %v5649 = vrot.slane %v5648, 4
    %v5650 = vadd.f32 %v5648, %v5649
    %v5651 = vrot.slane %v5650, 2
    %v5652 = vadd.f32 %v5650, %v5651
    %v5653 = vrot.slane %v5652, 1
    %v5654 = vadd.f32 %v5652, %v5653
    %v5655 = vpack.c.bf16 %v5591, %v5591
    %v5656 = vpack.c.bf16 %v5600, %v5600
    %v5657 = vpack.c.bf16 %v5609, %v5609
    %v5658 = vpack.c.bf16 %v5618, %v5618
    %v5659 = vpack.c.bf16 %v5627, %v5627
    %v5660 = vpack.c.bf16 %v5636, %v5636
    %v5661 = vpack.c.bf16 %v5645, %v5645
    %v5662 = vpack.c.bf16 %v5654, %v5654
    %v5671 = vunpack.c.l.b16 %v5655
    %v5672 = vunpack.c.l.b16 %v5656
    %v5673 = vunpack.c.l.b16 %v5657
    %v5674 = vunpack.c.l.b16 %v5658
    %v5675 = vunpack.c.l.b16 %v5659
    %v5676 = vunpack.c.l.b16 %v5660
    %v5677 = vunpack.c.l.b16 %v5661
    %v5678 = vunpack.c.l.b16 %v5662
    %v5679 = vsel %vm910, %v5672, %v5671
    %v5680 = vsel %vm912, %v5673, %v5679
    %v5681 = vsel %vm914, %v5674, %v5680
    %v5682 = vsel %vm916, %v5675, %v5681
    %v5683 = vsel %vm918, %v5676, %v5682
    %v5684 = vsel %vm920, %v5677, %v5683
    %v5685 = vsel %vm922, %v5678, %v5684
    %v5686 = vpack.c.b16 %v5685, %v5685
    %v5688 = vsel %vm73, %v5686, 0
    %5690 = vmatprep.subr.bf16.mxu0 0
    %5691 = vmatpush1.bf16.msra.mxu0 0
    %5692 = vmatprep.subr.bf16.mxu0 0
    %5693 = vmatpush1.bf16.msra.mxu0 0
    %5694 = vmatprep.subr.bf16.mxu0 0
    %5695 = vmatpush1.bf16.msra.mxu0 0
    %5696 = vmatprep.subr.bf16.mxu0 0
    %5697 = vmatpush1.bf16.msra.mxu0 0
    %5698 = vmatprep.subr.bf16.mxu0 0
    %5699 = vmatpush1.bf16.msra.mxu0 0
    %5700 = vmatprep.subr.bf16.mxu0 0
    %5701 = vmatpush1.bf16.msra.mxu0 0
    %5702 = vmatprep.subr.bf16.mxu0 0
    %5703 = vmatpush1.bf16.msra.mxu0 %v70
    %5704 = vmatprep.subr.bf16.mxu0 0
    %5705 = vmatpush1.bf16.msra.mxu0 %v69
    %5706 = vmatprep.subr.bf16.mxu0 0
    %5707 = vmatpush2.bf16.msra.mxu0 0
    %5708 = vmatprep.subr.bf16.mxu0 0
    %5709 = vmatpush2.bf16.msra.mxu0 0
    %5710 = vmatprep.subr.bf16.mxu0 0
    %5711 = vmatpush2.bf16.msra.mxu0 0
    %5712 = vmatprep.subr.bf16.mxu0 0
    %5713 = vmatpush2.bf16.msra.mxu0 0
    %5714 = vmatprep.subr.bf16.mxu0 0
    %5715 = vmatpush2.bf16.msra.mxu0 0
    %5716 = vmatprep.subr.bf16.mxu0 0
    %5717 = vmatpush2.bf16.msra.mxu0 0
    %5718 = vmatprep.subr.bf16.mxu0 0
    %5719 = vmatpush2.bf16.msra.mxu0 0
    %5720 = vmatprep.subr.bf16.mxu0 0
    %5721 = vmatpush2.bf16.msra.mxu0 0
    %5722 = vmatprep.mubr.bf16.mxu0 0
    %5723 = vmatmul.mubr.bf16.gmra.mxu0 %v5688
    %v5724 = vpop.f32.mrf.mxu0
    %v5725 = vadd.f32 0.0, %v5724
    %v5726 = vpop.f32.mrf.mxu0
    %v5727 = vpop.f32.mrf.mxu0
    %v5728 = vpop.f32.mrf.mxu0
    %5729 = vdwg.mxu0
    %s5730 = scalar_lea.vmem %s1, 32
    %v5731 = vld [vmem:[%s5730] sm:$0xff]
    %5732 = vrot.lane.b32.xlu0 %v4823, 112
    %v5733 = vpop.permute.xlu0 %5732
    %v5735 = vadd.f32 %v5731, %v5733
    %5737 = vrot.lane.b32.xlu0 %v5725, 32
    %v5738 = vpop.permute.xlu0 %5737
    %v5740 = vadd.f32 %v5735, %v5738
    %5742 = vrot.lane.b32.xlu0 %v5740, 112
    %v5743 = vpop.permute.xlu0 %5742
    %v5745 = vmax.f32 %v5740, %v5743
    %v5746 = vsel 0, %v5745, %v4682
    %v5747 = vsel 0, %v5745, %v4683
    %v5748 = vsel 0, %v5745, %v4684
    %v5749 = vsel 0, %v5745, %v4685
    %v5750 = vsel 1, %v5745, %v4686
    %v5751 = vsel 0, %v5745, %v4686
    %s5752 = scalar_lea.vmem %s0, 40
    %v5753 = vld [vmem:[%s5752] sm:$0xff]
    %v5754 = vadd.f32 %v5753, %v5725
    %v5755 = vadd.f32 %v5754, %v119
    %v5756 = vxor.u32 %v5755, 2147483648
    %v5757 = vmul.f32 %v5756, 1.442695
    %v5758 = vpow.pop %v5757
    %v5759 = vadd.f32 %v5758, 1.0
    %v5760 = vrcp.pop %v5759
    %v5761 = vmul.f32 1.0, %v5760
    %v5762 = vmul.f32 %v5761, %v130
    %5764 = vrot.lane.b32.xlu0 %v5762, 64
    %v5765 = vpop.permute.xlu0 %5764
    %v5767 = vadd.f32 %v5754, %v5765
    %v5768 = vtanh.pop %v5767
    %v5769 = vsub.f32 1.0, %v5761
    %5771 = vrot.lane.b32.xlu0 %v5768, 96
    %v5772 = vpop.permute.xlu0 %5771
    %v5774 = vmul.f32 %v5769, %v5772
    %v5775 = vmul.f32 %v5761, %v147
    %v5776 = vadd.f32 %v5774, %v5775
    %v5777 = vpack.c.bf16 %v5776, %v5776
    %5779 = vrot.lane.b32.xlu0 %v5777, 96
    %v5780 = vpop.permute.xlu0 %5779
    %v5782 = vsel %vm73, %v5780, 0
    %5784 = vmatprep.subr.bf16.mxu0 0
    %5785 = vmatpush1.bf16.msra.mxu0 0
    %5786 = vmatprep.subr.bf16.mxu0 0
    %5787 = vmatpush1.bf16.msra.mxu0 0
    %5788 = vmatprep.subr.bf16.mxu0 0
    %5789 = vmatpush1.bf16.msra.mxu0 0
    %5790 = vmatprep.subr.bf16.mxu0 0
    %5791 = vmatpush1.bf16.msra.mxu0 0
    %5792 = vmatprep.subr.bf16.mxu0 0
    %5793 = vmatpush1.bf16.msra.mxu0 0
    %5794 = vmatprep.subr.bf16.mxu0 0
    %5795 = vmatpush1.bf16.msra.mxu0 0
    %5796 = vmatprep.subr.bf16.mxu0 0
    %5797 = vmatpush1.bf16.msra.mxu0 %v175
    %5798 = vmatprep.subr.bf16.mxu0 0
    %5799 = vmatpush1.bf16.msra.mxu0 %v174
    %5800 = vmatprep.subr.bf16.mxu0 0
    %5801 = vmatpush2.bf16.msra.mxu0 0
    %5802 = vmatprep.subr.bf16.mxu0 0
    %5803 = vmatpush2.bf16.msra.mxu0 0
    %5804 = vmatprep.subr.bf16.mxu0 0
    %5805 = vmatpush2.bf16.msra.mxu0 0
    %5806 = vmatprep.subr.bf16.mxu0 0
    %5807 = vmatpush2.bf16.msra.mxu0 0
    %5808 = vmatprep.subr.bf16.mxu0 0
    %5809 = vmatpush2.bf16.msra.mxu0 0
    %5810 = vmatprep.subr.bf16.mxu0 0
    %5811 = vmatpush2.bf16.msra.mxu0 0
    %5812 = vmatprep.subr.bf16.mxu0 0
    %5813 = vmatpush2.bf16.msra.mxu0 0
    %5814 = vmatprep.subr.bf16.mxu0 0
    %5815 = vmatpush2.bf16.msra.mxu0 0
    %5816 = vmatprep.mubr.bf16.mxu0 0
    %5817 = vmatmul.mubr.bf16.gmra.mxu0 %v5782
    %v5818 = vpop.f32.mrf.mxu0
    %v5819 = vadd.f32 %v161, %v5818
    %v5820 = vpop.f32.mrf.mxu0
    %v5821 = vpop.f32.mrf.mxu0
    %v5822 = vpop.f32.mrf.mxu0
    %5823 = vdwg.mxu0
    %v5824 = vadd.f32 %v5819, %v222
    %v5825 = vxor.u32 %v5824, 2147483648
    %v5826 = vmul.f32 %v5825, 1.442695
    %v5827 = vpow.pop %v5826
    %v5828 = vadd.f32 %v5827, 1.0
    %v5829 = vrcp.pop %v5828
    %v5830 = vmul.f32 1.0, %v5829
    %v5831 = vmul.f32 %v5830, %v234
    %5833 = vrot.lane.b32.xlu0 %v5831, 64
    %v5834 = vpop.permute.xlu0 %5833
    %v5836 = vadd.f32 %v5819, %v5834
    %v5837 = vtanh.pop %v5836
    %v5838 = vsub.f32 1.0, %v5830
    %5840 = vrot.lane.b32.xlu0 %v5837, 96
    %v5841 = vpop.permute.xlu0 %5840
    %v5843 = vmul.f32 %v5838, %v5841
    %v5844 = vmul.f32 %v5830, %v251
    %v5845 = vadd.f32 %v5843, %v5844
    %v5846 = vpack.c.bf16 %v5845, %v5845
    %5848 = vrot.lane.b32.xlu0 %v5846, 96
    %v5849 = vpop.permute.xlu0 %5848
    %v5851 = vsel %vm73, %v5849, 0
    %5853 = vmatprep.subr.bf16.mxu0 0
    %5854 = vmatpush1.bf16.msra.mxu0 0
    %5855 = vmatprep.subr.bf16.mxu0 0
    %5856 = vmatpush1.bf16.msra.mxu0 0
    %5857 = vmatprep.subr.bf16.mxu0 0
    %5858 = vmatpush1.bf16.msra.mxu0 0
    %5859 = vmatprep.subr.bf16.mxu0 0
    %5860 = vmatpush1.bf16.msra.mxu0 0
    %5861 = vmatprep.subr.bf16.mxu0 0
    %5862 = vmatpush1.bf16.msra.mxu0 0
    %5863 = vmatprep.subr.bf16.mxu0 0
    %5864 = vmatpush1.bf16.msra.mxu0 0
    %5865 = vmatprep.subr.bf16.mxu0 0
    %5866 = vmatpush1.bf16.msra.mxu0 %v272
    %5867 = vmatprep.subr.bf16.mxu0 0
    %5868 = vmatpush1.bf16.msra.mxu0 %v271
    %5869 = vmatprep.subr.bf16.mxu0 0
    %5870 = vmatpush2.bf16.msra.mxu0 0
    %5871 = vmatprep.subr.bf16.mxu0 0
    %5872 = vmatpush2.bf16.msra.mxu0 0
    %5873 = vmatprep.subr.bf16.mxu0 0
    %5874 = vmatpush2.bf16.msra.mxu0 0
    %5875 = vmatprep.subr.bf16.mxu0 0
    %5876 = vmatpush2.bf16.msra.mxu0 0
    %5877 = vmatprep.subr.bf16.mxu0 0
    %5878 = vmatpush2.bf16.msra.mxu0 0
    %5879 = vmatprep.subr.bf16.mxu0 0
    %5880 = vmatpush2.bf16.msra.mxu0 0
    %5881 = vmatprep.subr.bf16.mxu0 0
    %5882 = vmatpush2.bf16.msra.mxu0 0
    %5883 = vmatprep.subr.bf16.mxu0 0
    %5884 = vmatpush2.bf16.msra.mxu0 0
    %5885 = vmatprep.mubr.bf16.mxu0 0
    %5886 = vmatmul.mubr.bf16.gmra.mxu0 %v5851
    %v5887 = vpop.f32.mrf.mxu0
    %v5888 = vadd.f32 0.0, %v5887
    %v5889 = vpop.f32.mrf.mxu0
    %v5890 = vpop.f32.mrf.mxu0
    %v5891 = vpop.f32.mrf.mxu0
    %5892 = vdwg.mxu0
    %v5894 = vcombine.high %v5888, %v5888
    %v5896 = vunpack.c.l.s4 1966171168
    %v5897 = vunpack.c.0.s8 %v5896
    %v5898 = vlaneseq
    %v5899 = vshrl.u32 %v5898, 7
    %v5900 = vsub.s32 %v5897, %v5899
    %v5901 = vrot.slane %v5888, %v5900
    %v5903 = vunpack.c.l.s4 1966171168
    %v5904 = vunpack.c.0.s8 %v5903
    %v5905 = vlaneseq
    %v5906 = vshrl.u32 %v5905, 7
    %v5907 = vsub.s32 %v5904, %v5906
    %v5908 = vrot.slane %v5894, %v5907
    %v5909 = vcombine.high %v5901, %v5901
    %v5910 = vcombine.high %v5908, %v5908
    %v5912 = vunpack.c.l.s4 1966171168
    %v5913 = vunpack.c.0.s8 %v5912
    %v5914 = vlaneseq
    %v5915 = vshrl.u32 %v5914, 7
    %v5916 = vsub.s32 %v5913, %v5915
    %v5917 = vrot.slane %v5901, %v5916
    %v5919 = vunpack.c.l.s4 1966171168
    %v5920 = vunpack.c.0.s8 %v5919
    %v5921 = vlaneseq
    %v5922 = vshrl.u32 %v5921, 7
    %v5923 = vsub.s32 %v5920, %v5922
    %v5924 = vrot.slane %v5908, %v5923
    %v5926 = vunpack.c.l.s4 1966171168
    %v5927 = vunpack.c.0.s8 %v5926
    %v5928 = vlaneseq
    %v5929 = vshrl.u32 %v5928, 7
    %v5930 = vsub.s32 %v5927, %v5929
    %v5931 = vrot.slane %v5909, %v5930
    %v5933 = vunpack.c.l.s4 1966171168
    %v5934 = vunpack.c.0.s8 %v5933
    %v5935 = vlaneseq
    %v5936 = vshrl.u32 %v5935, 7
    %v5937 = vsub.s32 %v5934, %v5936
    %v5938 = vrot.slane %v5910, %v5937
    %v5939 = vcombine.high %v5917, %v5917
    %v5940 = vcombine.high %v5924, %v5924
    %v5941 = vcombine.high %v5931, %v5931
    %v5942 = vcombine.high %v5938, %v5938
    %v5943 = vlaneseq
    %v5944 = vshrl.u32 %v5943, 7
    %v5945 = vsub.s32 0, %v5944
    %v5946 = vrot.slane %v5917, %v5945
    %v5947 = vlaneseq
    %v5948 = vshrl.u32 %v5947, 7
    %v5949 = vsub.s32 0, %v5948
    %v5950 = vrot.slane %v5931, %v5949
    %v5951 = vlaneseq
    %v5952 = vshrl.u32 %v5951, 7
    %v5953 = vsub.s32 0, %v5952
    %v5954 = vrot.slane %v5939, %v5953
    %v5955 = vlaneseq
    %v5956 = vshrl.u32 %v5955, 7
    %v5957 = vsub.s32 0, %v5956
    %v5958 = vrot.slane %v5941, %v5957
    %v5959 = vlaneseq
    %v5960 = vshrl.u32 %v5959, 7
    %v5961 = vsub.s32 0, %v5960
    %v5962 = vrot.slane %v5924, %v5961
    %v5963 = vlaneseq
    %v5964 = vshrl.u32 %v5963, 7
    %v5965 = vsub.s32 0, %v5964
    %v5966 = vrot.slane %v5938, %v5965
    %v5967 = vlaneseq
    %v5968 = vshrl.u32 %v5967, 7
    %v5969 = vsub.s32 0, %v5968
    %v5970 = vrot.slane %v5940, %v5969
    %v5971 = vlaneseq
    %v5972 = vshrl.u32 %v5971, 7
    %v5973 = vsub.s32 0, %v5972
    %v5974 = vrot.slane %v5942, %v5973
    %v5983 = vadd.f32 %v318, %v5946
    %v5984 = vadd.f32 %v319, %v5946
    %v5985 = vadd.f32 %v320, %v5950
    %v5986 = vadd.f32 %v321, %v5950
    %v5987 = vadd.f32 %v322, %v5954
    %v5988 = vadd.f32 %v323, %v5954
    %v5989 = vadd.f32 %v324, %v5958
    %v5990 = vadd.f32 %v325, %v5958
    %v5991 = vadd.f32 %v326, %v5962
    %v5992 = vadd.f32 %v327, %v5962
    %v5993 = vadd.f32 %v328, %v5966
    %v5994 = vadd.f32 %v329, %v5966
    %v5995 = vadd.f32 %v330, %v5970
    %v5996 = vadd.f32 %v331, %v5970
    %v5997 = vadd.f32 %v332, %v5974
    %v5998 = vadd.f32 %v333, %v5974
    %v5999 = vtanh.pop %v5983
    %v6000 = vtanh.pop %v5984
    %v6001 = vtanh.pop %v5985
    %v6002 = vtanh.pop %v5986
    %v6003 = vtanh.pop %v5987
    %v6004 = vtanh.pop %v5988
    %v6005 = vtanh.pop %v5989
    %v6006 = vtanh.pop %v5990
    %v6007 = vtanh.pop %v5991
    %v6008 = vtanh.pop %v5992
    %v6009 = vtanh.pop %v5993
    %v6010 = vtanh.pop %v5994
    %v6011 = vtanh.pop %v5995
    %v6012 = vtanh.pop %v5996
    %v6013 = vtanh.pop %v5997
    %v6014 = vtanh.pop %v5998
    %v6015 = vmul.f32 %v5999, %v461
    %v6016 = vmul.f32 %v6000, %v461
    %v6017 = vmul.f32 %v6001, %v461
    %v6018 = vmul.f32 %v6002, %v461
    %v6019 = vmul.f32 %v6003, %v461
    %v6020 = vmul.f32 %v6004, %v461
    %v6021 = vmul.f32 %v6005, %v461
    %v6022 = vmul.f32 %v6006, %v461
    %v6023 = vmul.f32 %v6007, %v461
    %v6024 = vmul.f32 %v6008, %v461
    %v6025 = vmul.f32 %v6009, %v461
    %v6026 = vmul.f32 %v6010, %v461
    %v6027 = vmul.f32 %v6011, %v461
    %v6028 = vmul.f32 %v6012, %v461
    %v6029 = vmul.f32 %v6013, %v461
    %v6030 = vmul.f32 %v6014, %v461
    %v6031 = vsel %vm479, %v6015, 0.0
    %6032 = vadd.xlane.f32.xlu0 %v6031
    %v6033 = vpop.xlane.xlu0 %6032
    %v6034 = vsel %vm479, %v6016, 0.0
    %6035 = vadd.xlane.f32.xlu0 %v6034
    %v6036 = vpop.xlane.xlu0 %6035
    %v6037 = vsel %vm479, %v6017, 0.0
    %6038 = vadd.xlane.f32.xlu0 %v6037
    %v6039 = vpop.xlane.xlu0 %6038
    %v6040 = vsel %vm479, %v6018, 0.0
    %6041 = vadd.xlane.f32.xlu0 %v6040
    %v6042 = vpop.xlane.xlu0 %6041
    %v6043 = vsel %vm479, %v6019, 0.0
    %6044 = vadd.xlane.f32.xlu0 %v6043
    %v6045 = vpop.xlane.xlu0 %6044
    %v6046 = vsel %vm479, %v6020, 0.0
    %6047 = vadd.xlane.f32.xlu0 %v6046
    %v6048 = vpop.xlane.xlu0 %6047
    %v6049 = vsel %vm479, %v6021, 0.0
    %6050 = vadd.xlane.f32.xlu0 %v6049
    %v6051 = vpop.xlane.xlu0 %6050
    %v6052 = vsel %vm479, %v6022, 0.0
    %6053 = vadd.xlane.f32.xlu0 %v6052
    %v6054 = vpop.xlane.xlu0 %6053
    %v6055 = vsel %vm479, %v6023, 0.0
    %6056 = vadd.xlane.f32.xlu0 %v6055
    %v6057 = vpop.xlane.xlu0 %6056
    %v6058 = vsel %vm479, %v6024, 0.0
    %6059 = vadd.xlane.f32.xlu0 %v6058
    %v6060 = vpop.xlane.xlu0 %6059
    %v6061 = vsel %vm479, %v6025, 0.0
    %6062 = vadd.xlane.f32.xlu0 %v6061
    %v6063 = vpop.xlane.xlu0 %6062
    %v6064 = vsel %vm479, %v6026, 0.0
    %6065 = vadd.xlane.f32.xlu0 %v6064
    %v6066 = vpop.xlane.xlu0 %6065
    %v6067 = vsel %vm479, %v6027, 0.0
    %6068 = vadd.xlane.f32.xlu0 %v6067
    %v6069 = vpop.xlane.xlu0 %6068
    %v6070 = vsel %vm479, %v6028, 0.0
    %6071 = vadd.xlane.f32.xlu0 %v6070
    %v6072 = vpop.xlane.xlu0 %6071
    %v6073 = vsel %vm479, %v6029, 0.0
    %6074 = vadd.xlane.f32.xlu0 %v6073
    %v6075 = vpop.xlane.xlu0 %6074
    %v6076 = vsel %vm479, %v6030, 0.0
    %6077 = vadd.xlane.f32.xlu0 %v6076
    %v6078 = vpop.xlane.xlu0 %6077
    %v6079 = vmul.f32 %v6033, %v535
    %v6080 = vmul.f32 %v6036, %v539
    %v6081 = vmul.f32 %v6039, %v546
    %v6082 = vmul.f32 %v6042, %v550
    %v6083 = vmul.f32 %v6045, %v557
    %v6084 = vmul.f32 %v6048, %v561
    %v6085 = vmul.f32 %v6051, %v568
    %v6086 = vmul.f32 %v6054, %v572
    %v6087 = vmul.f32 %v6057, %v579
    %v6088 = vmul.f32 %v6060, %v583
    %v6089 = vmul.f32 %v6063, %v590
    %v6090 = vmul.f32 %v6066, %v594
    %v6091 = vmul.f32 %v6069, %v601
    %v6092 = vmul.f32 %v6072, %v605
    %v6093 = vmul.f32 %v6075, %v612
    %v6094 = vmul.f32 %v6078, %v616
    %v6095 = vadd.f32 %v6079, %v656
    %v6096 = vadd.f32 %v6080, %v660
    %v6097 = vadd.f32 %v6081, %v667
    %v6098 = vadd.f32 %v6082, %v671
    %v6099 = vadd.f32 %v6083, %v678
    %v6100 = vadd.f32 %v6084, %v682
    %v6101 = vadd.f32 %v6085, %v689
    %v6102 = vadd.f32 %v6086, %v693
    %v6103 = vadd.f32 %v6087, %v700
    %v6104 = vadd.f32 %v6088, %v704
    %v6105 = vadd.f32 %v6089, %v711
    %v6106 = vadd.f32 %v6090, %v715
    %v6107 = vadd.f32 %v6091, %v722
    %v6108 = vadd.f32 %v6092, %v726
    %v6109 = vadd.f32 %v6093, %v733
    %v6110 = vadd.f32 %v6094, %v737
    %6127 = vset.pattern.permute.xlu0 0
    %6128 = vperm.xlu0 %6127, %v6095
    %v6129 = vpop.permute.xlu0 %6128
    %6130 = vset.pattern.permute.xlu0 0
    %6131 = vperm.xlu0 %6130, %v6096
    %v6132 = vpop.permute.xlu0 %6131
    %6133 = vset.pattern.permute.xlu0 0
    %6134 = vperm.xlu0 %6133, %v6097
    %v6135 = vpop.permute.xlu0 %6134
    %6136 = vset.pattern.permute.xlu0 0
    %6137 = vperm.xlu0 %6136, %v6098
    %v6138 = vpop.permute.xlu0 %6137
    %6139 = vset.pattern.permute.xlu0 0
    %6140 = vperm.xlu0 %6139, %v6099
    %v6141 = vpop.permute.xlu0 %6140
    %6142 = vset.pattern.permute.xlu0 0
    %6143 = vperm.xlu0 %6142, %v6100
    %v6144 = vpop.permute.xlu0 %6143
    %6145 = vset.pattern.permute.xlu0 0
    %6146 = vperm.xlu0 %6145, %v6101
    %v6147 = vpop.permute.xlu0 %6146
    %6148 = vset.pattern.permute.xlu0 0
    %6149 = vperm.xlu0 %6148, %v6102
    %v6150 = vpop.permute.xlu0 %6149
    %6151 = vset.pattern.permute.xlu0 0
    %6152 = vperm.xlu0 %6151, %v6103
    %v6153 = vpop.permute.xlu0 %6152
    %6154 = vset.pattern.permute.xlu0 0
    %6155 = vperm.xlu0 %6154, %v6104
    %v6156 = vpop.permute.xlu0 %6155
    %6157 = vset.pattern.permute.xlu0 0
    %6158 = vperm.xlu0 %6157, %v6105
    %v6159 = vpop.permute.xlu0 %6158
    %6160 = vset.pattern.permute.xlu0 0
    %6161 = vperm.xlu0 %6160, %v6106
    %v6162 = vpop.permute.xlu0 %6161
    %6163 = vset.pattern.permute.xlu0 0
    %6164 = vperm.xlu0 %6163, %v6107
    %v6165 = vpop.permute.xlu0 %6164
    %6166 = vset.pattern.permute.xlu0 0
    %6167 = vperm.xlu0 %6166, %v6108
    %v6168 = vpop.permute.xlu0 %6167
    %6169 = vset.pattern.permute.xlu0 0
    %6170 = vperm.xlu0 %6169, %v6109
    %v6171 = vpop.permute.xlu0 %6170
    %6172 = vset.pattern.permute.xlu0 0
    %6173 = vperm.xlu0 %6172, %v6110
    %v6174 = vpop.permute.xlu0 %6173
    %v6175 = vlaneseq
    %v6176 = vshrl.u32 %v6175, 7
    %v6177 = vsub.s32 %v835, %v6176
    %v6178 = vrot.slane %v6129, %v6177
    %v6179 = vlaneseq
    %v6180 = vshrl.u32 %v6179, 7
    %v6181 = vsub.s32 %v840, %v6180
    %v6182 = vrot.slane %v6132, %v6181
    %v6183 = vsel %vm845, %v6182, %v6178
    %v6184 = vlaneseq
    %v6185 = vshrl.u32 %v6184, 7
    %v6186 = vsub.s32 %v835, %v6185
    %v6187 = vrot.slane %v6135, %v6186
    %v6188 = vlaneseq
    %v6189 = vshrl.u32 %v6188, 7
    %v6190 = vsub.s32 %v840, %v6189
    %v6191 = vrot.slane %v6138, %v6190
    %v6192 = vsel %vm845, %v6191, %v6187
    %v6193 = vlaneseq
    %v6194 = vshrl.u32 %v6193, 7
    %v6195 = vsub.s32 %v835, %v6194
    %v6196 = vrot.slane %v6141, %v6195
    %v6197 = vlaneseq
    %v6198 = vshrl.u32 %v6197, 7
    %v6199 = vsub.s32 %v840, %v6198
    %v6200 = vrot.slane %v6144, %v6199
    %v6201 = vsel %vm845, %v6200, %v6196
    %v6202 = vlaneseq
    %v6203 = vshrl.u32 %v6202, 7
    %v6204 = vsub.s32 %v835, %v6203
    %v6205 = vrot.slane %v6147, %v6204
    %v6206 = vlaneseq
    %v6207 = vshrl.u32 %v6206, 7
    %v6208 = vsub.s32 %v840, %v6207
    %v6209 = vrot.slane %v6150, %v6208
    %v6210 = vsel %vm845, %v6209, %v6205
    %v6211 = vlaneseq
    %v6212 = vshrl.u32 %v6211, 7
    %v6213 = vsub.s32 %v835, %v6212
    %v6214 = vrot.slane %v6153, %v6213
    %v6215 = vlaneseq
    %v6216 = vshrl.u32 %v6215, 7
    %v6217 = vsub.s32 %v840, %v6216
    %v6218 = vrot.slane %v6156, %v6217
    %v6219 = vsel %vm845, %v6218, %v6214
    %v6220 = vlaneseq
    %v6221 = vshrl.u32 %v6220, 7
    %v6222 = vsub.s32 %v835, %v6221
    %v6223 = vrot.slane %v6159, %v6222
    %v6224 = vlaneseq
    %v6225 = vshrl.u32 %v6224, 7
    %v6226 = vsub.s32 %v840, %v6225
    %v6227 = vrot.slane %v6162, %v6226
    %v6228 = vsel %vm845, %v6227, %v6223
    %v6229 = vlaneseq
    %v6230 = vshrl.u32 %v6229, 7
    %v6231 = vsub.s32 %v835, %v6230
    %v6232 = vrot.slane %v6165, %v6231
    %v6233 = vlaneseq
    %v6234 = vshrl.u32 %v6233, 7
    %v6235 = vsub.s32 %v840, %v6234
    %v6236 = vrot.slane %v6168, %v6235
    %v6237 = vsel %vm845, %v6236, %v6232
    %v6238 = vlaneseq
    %v6239 = vshrl.u32 %v6238, 7
    %v6240 = vsub.s32 %v835, %v6239
    %v6241 = vrot.slane %v6171, %v6240
    %v6242 = vlaneseq
    %v6243 = vshrl.u32 %v6242, 7
    %v6244 = vsub.s32 %v840, %v6243
    %v6245 = vrot.slane %v6174, %v6244
    %v6246 = vsel %vm845, %v6245, %v6241
    %v6247 = vsel %vm910, %v6192, %v6183
    %v6248 = vsel %vm912, %v6201, %v6247
    %v6249 = vsel %vm914, %v6210, %v6248
    %v6250 = vsel %vm916, %v6219, %v6249
    %v6251 = vsel %vm918, %v6228, %v6250
    %v6252 = vsel %vm920, %v6237, %v6251
    %v6253 = vsel %vm922, %v6246, %v6252
    %v6255 = vsel %vm479, %v6253, -inf
    %6256 = vmax.xlane.f32.xlu0 %v6255
    %v6257 = vpop.xlane.xlu0 %6256
    %v6259 = vlaneseq
    %v6260 = vshrl.u32 %v6259, 7
    %v6261 = vsub.s32 0, %v6260
    %v6262 = vrot.slane %v6257, %v6261
    %v6263 = vlaneseq
    %v6264 = vshrl.u32 %v6263, 7
    %v6265 = vsub.s32 1, %v6264
    %v6266 = vrot.slane %v6257, %v6265
    %v6267 = vlaneseq
    %v6268 = vshrl.u32 %v6267, 7
    %v6269 = vsub.s32 2, %v6268
    %v6270 = vrot.slane %v6257, %v6269
    %v6271 = vlaneseq
    %v6272 = vshrl.u32 %v6271, 7
    %v6273 = vsub.s32 3, %v6272
    %v6274 = vrot.slane %v6257, %v6273
    %v6275 = vlaneseq
    %v6276 = vshrl.u32 %v6275, 7
    %v6277 = vsub.s32 4, %v6276
    %v6278 = vrot.slane %v6257, %v6277
    %v6279 = vlaneseq
    %v6280 = vshrl.u32 %v6279, 7
    %v6281 = vsub.s32 5, %v6280
    %v6282 = vrot.slane %v6257, %v6281
    %v6283 = vlaneseq
    %v6284 = vshrl.u32 %v6283, 7
    %v6285 = vsub.s32 6, %v6284
    %v6286 = vrot.slane %v6257, %v6285
    %v6287 = vlaneseq
    %v6288 = vshrl.u32 %v6287, 7
    %v6289 = vsub.s32 7, %v6288
    %v6290 = vrot.slane %v6257, %v6289
    %v6299 = vsub.f32 %v6095, %v6262
    %v6300 = vsub.f32 %v6096, %v6262
    %v6301 = vsub.f32 %v6097, %v6266
    %v6302 = vsub.f32 %v6098, %v6266
    %v6303 = vsub.f32 %v6099, %v6270
    %v6304 = vsub.f32 %v6100, %v6270
    %v6305 = vsub.f32 %v6101, %v6274
    %v6306 = vsub.f32 %v6102, %v6274
    %v6307 = vsub.f32 %v6103, %v6278
    %v6308 = vsub.f32 %v6104, %v6278
    %v6309 = vsub.f32 %v6105, %v6282
    %v6310 = vsub.f32 %v6106, %v6282
    %v6311 = vsub.f32 %v6107, %v6286
    %v6312 = vsub.f32 %v6108, %v6286
    %v6313 = vsub.f32 %v6109, %v6290
    %v6314 = vsub.f32 %v6110, %v6290
    %v6315 = vmul.f32 %v6299, 1.442695
    %v6316 = vpow.pop %v6315
    %v6317 = vmul.f32 %v6300, 1.442695
    %v6318 = vpow.pop %v6317
    %v6319 = vmul.f32 %v6301, 1.442695
    %v6320 = vpow.pop %v6319
    %v6321 = vmul.f32 %v6302, 1.442695
    %v6322 = vpow.pop %v6321
    %v6323 = vmul.f32 %v6303, 1.442695
    %v6324 = vpow.pop %v6323
    %v6325 = vmul.f32 %v6304, 1.442695
    %v6326 = vpow.pop %v6325
    %v6327 = vmul.f32 %v6305, 1.442695
    %v6328 = vpow.pop %v6327
    %v6329 = vmul.f32 %v6306, 1.442695
    %v6330 = vpow.pop %v6329
    %v6331 = vmul.f32 %v6307, 1.442695
    %v6332 = vpow.pop %v6331
    %v6333 = vmul.f32 %v6308, 1.442695
    %v6334 = vpow.pop %v6333
    %v6335 = vmul.f32 %v6309, 1.442695
    %v6336 = vpow.pop %v6335
    %v6337 = vmul.f32 %v6310, 1.442695
    %v6338 = vpow.pop %v6337
    %v6339 = vmul.f32 %v6311, 1.442695
    %v6340 = vpow.pop %v6339
    %v6341 = vmul.f32 %v6312, 1.442695
    %v6342 = vpow.pop %v6341
    %v6343 = vmul.f32 %v6313, 1.442695
    %v6344 = vpow.pop %v6343
    %v6345 = vmul.f32 %v6314, 1.442695
    %v6346 = vpow.pop %v6345
    %6363 = vset.pattern.permute.xlu0 0
    %6364 = vperm.xlu0 %6363, %v6316
    %v6365 = vpop.permute.xlu0 %6364
    %6366 = vset.pattern.permute.xlu0 0
    %6367 = vperm.xlu0 %6366, %v6318
    %v6368 = vpop.permute.xlu0 %6367
    %6369 = vset.pattern.permute.xlu0 0
    %6370 = vperm.xlu0 %6369, %v6320
    %v6371 = vpop.permute.xlu0 %6370
    %6372 = vset.pattern.permute.xlu0 0
    %6373 = vperm.xlu0 %6372, %v6322
    %v6374 = vpop.permute.xlu0 %6373
    %6375 = vset.pattern.permute.xlu0 0
    %6376 = vperm.xlu0 %6375, %v6324
    %v6377 = vpop.permute.xlu0 %6376
    %6378 = vset.pattern.permute.xlu0 0
    %6379 = vperm.xlu0 %6378, %v6326
    %v6380 = vpop.permute.xlu0 %6379
    %6381 = vset.pattern.permute.xlu0 0
    %6382 = vperm.xlu0 %6381, %v6328
    %v6383 = vpop.permute.xlu0 %6382
    %6384 = vset.pattern.permute.xlu0 0
    %6385 = vperm.xlu0 %6384, %v6330
    %v6386 = vpop.permute.xlu0 %6385
    %6387 = vset.pattern.permute.xlu0 0
    %6388 = vperm.xlu0 %6387, %v6332
    %v6389 = vpop.permute.xlu0 %6388
    %6390 = vset.pattern.permute.xlu0 0
    %6391 = vperm.xlu0 %6390, %v6334
    %v6392 = vpop.permute.xlu0 %6391
    %6393 = vset.pattern.permute.xlu0 0
    %6394 = vperm.xlu0 %6393, %v6336
    %v6395 = vpop.permute.xlu0 %6394
    %6396 = vset.pattern.permute.xlu0 0
    %6397 = vperm.xlu0 %6396, %v6338
    %v6398 = vpop.permute.xlu0 %6397
    %6399 = vset.pattern.permute.xlu0 0
    %6400 = vperm.xlu0 %6399, %v6340
    %v6401 = vpop.permute.xlu0 %6400
    %6402 = vset.pattern.permute.xlu0 0
    %6403 = vperm.xlu0 %6402, %v6342
    %v6404 = vpop.permute.xlu0 %6403
    %6405 = vset.pattern.permute.xlu0 0
    %6406 = vperm.xlu0 %6405, %v6344
    %v6407 = vpop.permute.xlu0 %6406
    %6408 = vset.pattern.permute.xlu0 0
    %6409 = vperm.xlu0 %6408, %v6346
    %v6410 = vpop.permute.xlu0 %6409
    %v6411 = vlaneseq
    %v6412 = vshrl.u32 %v6411, 7
    %v6413 = vsub.s32 %v835, %v6412
    %v6414 = vrot.slane %v6365, %v6413
    %v6415 = vlaneseq
    %v6416 = vshrl.u32 %v6415, 7
    %v6417 = vsub.s32 %v840, %v6416
    %v6418 = vrot.slane %v6368, %v6417
    %v6419 = vsel %vm845, %v6418, %v6414
    %v6420 = vlaneseq
    %v6421 = vshrl.u32 %v6420, 7
    %v6422 = vsub.s32 %v835, %v6421
    %v6423 = vrot.slane %v6371, %v6422
    %v6424 = vlaneseq
    %v6425 = vshrl.u32 %v6424, 7
    %v6426 = vsub.s32 %v840, %v6425
    %v6427 = vrot.slane %v6374, %v6426
    %v6428 = vsel %vm845, %v6427, %v6423
    %v6429 = vlaneseq
    %v6430 = vshrl.u32 %v6429, 7
    %v6431 = vsub.s32 %v835, %v6430
    %v6432 = vrot.slane %v6377, %v6431
    %v6433 = vlaneseq
    %v6434 = vshrl.u32 %v6433, 7
    %v6435 = vsub.s32 %v840, %v6434
    %v6436 = vrot.slane %v6380, %v6435
    %v6437 = vsel %vm845, %v6436, %v6432
    %v6438 = vlaneseq
    %v6439 = vshrl.u32 %v6438, 7
    %v6440 = vsub.s32 %v835, %v6439
    %v6441 = vrot.slane %v6383, %v6440
    %v6442 = vlaneseq
    %v6443 = vshrl.u32 %v6442, 7
    %v6444 = vsub.s32 %v840, %v6443
    %v6445 = vrot.slane %v6386, %v6444
    %v6446 = vsel %vm845, %v6445, %v6441
    %v6447 = vlaneseq
    %v6448 = vshrl.u32 %v6447, 7
    %v6449 = vsub.s32 %v835, %v6448
    %v6450 = vrot.slane %v6389, %v6449
    %v6451 = vlaneseq
    %v6452 = vshrl.u32 %v6451, 7
    %v6453 = vsub.s32 %v840, %v6452
    %v6454 = vrot.slane %v6392, %v6453
    %v6455 = vsel %vm845, %v6454, %v6450
    %v6456 = vlaneseq
    %v6457 = vshrl.u32 %v6456, 7
    %v6458 = vsub.s32 %v835, %v6457
    %v6459 = vrot.slane %v6395, %v6458
    %v6460 = vlaneseq
    %v6461 = vshrl.u32 %v6460, 7
    %v6462 = vsub.s32 %v840, %v6461
    %v6463 = vrot.slane %v6398, %v6462
    %v6464 = vsel %vm845, %v6463, %v6459
    %v6465 = vlaneseq
    %v6466 = vshrl.u32 %v6465, 7
    %v6467 = vsub.s32 %v835, %v6466
    %v6468 = vrot.slane %v6401, %v6467
    %v6469 = vlaneseq
    %v6470 = vshrl.u32 %v6469, 7
    %v6471 = vsub.s32 %v840, %v6470
    %v6472 = vrot.slane %v6404, %v6471
    %v6473 = vsel %vm845, %v6472, %v6468
    %v6474 = vlaneseq
    %v6475 = vshrl.u32 %v6474, 7
    %v6476 = vsub.s32 %v835, %v6475
    %v6477 = vrot.slane %v6407, %v6476
    %v6478 = vlaneseq
    %v6479 = vshrl.u32 %v6478, 7
    %v6480 = vsub.s32 %v840, %v6479
    %v6481 = vrot.slane %v6410, %v6480
    %v6482 = vsel %vm845, %v6481, %v6477
    %v6483 = vsel %vm910, %v6428, %v6419
    %v6484 = vsel %vm912, %v6437, %v6483
    %v6485 = vsel %vm914, %v6446, %v6484
    %v6486 = vsel %vm916, %v6455, %v6485
    %v6487 = vsel %vm918, %v6464, %v6486
    %v6488 = vsel %vm920, %v6473, %v6487
    %v6489 = vsel %vm922, %v6482, %v6488
    %v6491 = vsel %vm479, %v6489, 0.0
    %6492 = vadd.xlane.f32.xlu0 %v6491
    %v6493 = vpop.xlane.xlu0 %6492
    %v6494 = vrcp.pop %v6493
    %v6496 = vlaneseq
    %v6497 = vshrl.u32 %v6496, 7
    %v6498 = vsub.s32 0, %v6497
    %v6499 = vrot.slane %v6494, %v6498
    %v6500 = vlaneseq
    %v6501 = vshrl.u32 %v6500, 7
    %v6502 = vsub.s32 1, %v6501
    %v6503 = vrot.slane %v6494, %v6502
    %v6504 = vlaneseq
    %v6505 = vshrl.u32 %v6504, 7
    %v6506 = vsub.s32 2, %v6505
    %v6507 = vrot.slane %v6494, %v6506
    %v6508 = vlaneseq
    %v6509 = vshrl.u32 %v6508, 7
    %v6510 = vsub.s32 3, %v6509
    %v6511 = vrot.slane %v6494, %v6510
    %v6512 = vlaneseq
    %v6513 = vshrl.u32 %v6512, 7
    %v6514 = vsub.s32 4, %v6513
    %v6515 = vrot.slane %v6494, %v6514
    %v6516 = vlaneseq
    %v6517 = vshrl.u32 %v6516, 7
    %v6518 = vsub.s32 5, %v6517
    %v6519 = vrot.slane %v6494, %v6518
    %v6520 = vlaneseq
    %v6521 = vshrl.u32 %v6520, 7
    %v6522 = vsub.s32 6, %v6521
    %v6523 = vrot.slane %v6494, %v6522
    %v6524 = vlaneseq
    %v6525 = vshrl.u32 %v6524, 7
    %v6526 = vsub.s32 7, %v6525
    %v6527 = vrot.slane %v6494, %v6526
    %v6536 = vmul.f32 %v6316, %v6499
    %v6537 = vmul.f32 %v6318, %v6499
    %v6538 = vmul.f32 %v6320, %v6503
    %v6539 = vmul.f32 %v6322, %v6503
    %v6540 = vmul.f32 %v6324, %v6507
    %v6541 = vmul.f32 %v6326, %v6507
    %v6542 = vmul.f32 %v6328, %v6511
    %v6543 = vmul.f32 %v6330, %v6511
    %v6544 = vmul.f32 %v6332, %v6515
    %v6545 = vmul.f32 %v6334, %v6515
    %v6546 = vmul.f32 %v6336, %v6519
    %v6547 = vmul.f32 %v6338, %v6519
    %v6548 = vmul.f32 %v6340, %v6523
    %v6549 = vmul.f32 %v6342, %v6523
    %v6550 = vmul.f32 %v6344, %v6527
    %v6551 = vmul.f32 %v6346, %v6527
    %6553 = vset.pattern.permute.xlu0 0
    %6554 = vperm.xlu0 %6553, %v6536
    %v6555 = vpop.permute.xlu0 %6554
    %6558 = vset.pattern.permute.xlu0 0
    %6559 = vperm.xlu0 %6558, %v6537
    %v6560 = vpop.permute.xlu0 %6559
    %6563 = vset.pattern.permute.xlu0 0
    %6564 = vperm.xlu0 %6563, %v6538
    %v6565 = vpop.permute.xlu0 %6564
    %6568 = vset.pattern.permute.xlu0 0
    %6569 = vperm.xlu0 %6568, %v6539
    %v6570 = vpop.permute.xlu0 %6569
    %6573 = vset.pattern.permute.xlu0 0
    %6574 = vperm.xlu0 %6573, %v6540
    %v6575 = vpop.permute.xlu0 %6574
    %6578 = vset.pattern.permute.xlu0 0
    %6579 = vperm.xlu0 %6578, %v6541
    %v6580 = vpop.permute.xlu0 %6579
    %6583 = vset.pattern.permute.xlu0 0
    %6584 = vperm.xlu0 %6583, %v6542
    %v6585 = vpop.permute.xlu0 %6584
    %6588 = vset.pattern.permute.xlu0 0
    %6589 = vperm.xlu0 %6588, %v6543
    %v6590 = vpop.permute.xlu0 %6589
    %6593 = vset.pattern.permute.xlu0 0
    %6594 = vperm.xlu0 %6593, %v6544
    %v6595 = vpop.permute.xlu0 %6594
    %6598 = vset.pattern.permute.xlu0 0
    %6599 = vperm.xlu0 %6598, %v6545
    %v6600 = vpop.permute.xlu0 %6599
    %6603 = vset.pattern.permute.xlu0 0
    %6604 = vperm.xlu0 %6603, %v6546
    %v6605 = vpop.permute.xlu0 %6604
    %6608 = vset.pattern.permute.xlu0 0
    %6609 = vperm.xlu0 %6608, %v6547
    %v6610 = vpop.permute.xlu0 %6609
    %6613 = vset.pattern.permute.xlu0 0
    %6614 = vperm.xlu0 %6613, %v6548
    %v6615 = vpop.permute.xlu0 %6614
    %6618 = vset.pattern.permute.xlu0 0
    %6619 = vperm.xlu0 %6618, %v6549
    %v6620 = vpop.permute.xlu0 %6619
    %6623 = vset.pattern.permute.xlu0 0
    %6624 = vperm.xlu0 %6623, %v6550
    %v6625 = vpop.permute.xlu0 %6624
    %6628 = vset.pattern.permute.xlu0 0
    %6629 = vperm.xlu0 %6628, %v6551
    %v6630 = vpop.permute.xlu0 %6629
    %v6632 = vmul.f32 %v6555, %v1222
    %v6633 = vmul.f32 %v6560, %v1223
    %v6634 = vmul.f32 %v6565, %v1224
    %v6635 = vmul.f32 %v6570, %v1225
    %v6636 = vmul.f32 %v6575, %v1226
    %v6637 = vmul.f32 %v6580, %v1227
    %v6638 = vmul.f32 %v6585, %v1228
    %v6639 = vmul.f32 %v6590, %v1229
    %v6640 = vmul.f32 %v6595, %v1230
    %v6641 = vmul.f32 %v6600, %v1231
    %v6642 = vmul.f32 %v6605, %v1232
    %v6643 = vmul.f32 %v6610, %v1233
    %v6644 = vmul.f32 %v6615, %v1234
    %v6645 = vmul.f32 %v6620, %v1235
    %v6646 = vmul.f32 %v6625, %v1236
    %v6647 = vmul.f32 %v6630, %v1237
    %v6648 = vsel %vm73, %v6632, 0.0
    %v6649 = vsel %vm73, %v6633, 0.0
    %v6650 = vadd.f32 %v6648, %v6649
    %v6651 = vrot.slane %v6650, 4
    %v6652 = vadd.f32 %v6650, %v6651
    %v6653 = vrot.slane %v6652, 2
    %v6654 = vadd.f32 %v6652, %v6653
    %v6655 = vrot.slane %v6654, 1
    %v6656 = vadd.f32 %v6654, %v6655
    %v6657 = vsel %vm73, %v6634, 0.0
    %v6658 = vsel %vm73, %v6635, 0.0
    %v6659 = vadd.f32 %v6657, %v6658
    %v6660 = vrot.slane %v6659, 4
    %v6661 = vadd.f32 %v6659, %v6660
    %v6662 = vrot.slane %v6661, 2
    %v6663 = vadd.f32 %v6661, %v6662
    %v6664 = vrot.slane %v6663, 1
    %v6665 = vadd.f32 %v6663, %v6664
    %v6666 = vsel %vm73, %v6636, 0.0
    %v6667 = vsel %vm73, %v6637, 0.0
    %v6668 = vadd.f32 %v6666, %v6667
    %v6669 = vrot.slane %v6668, 4
    %v6670 = vadd.f32 %v6668, %v6669
    %v6671 = vrot.slane %v6670, 2
    %v6672 = vadd.f32 %v6670, %v6671
    %v6673 = vrot.slane %v6672, 1
    %v6674 = vadd.f32 %v6672, %v6673
    %v6675 = vsel %vm73, %v6638, 0.0
    %v6676 = vsel %vm73, %v6639, 0.0
    %v6677 = vadd.f32 %v6675, %v6676
    %v6678 = vrot.slane %v6677, 4
    %v6679 = vadd.f32 %v6677, %v6678
    %v6680 = vrot.slane %v6679, 2
    %v6681 = vadd.f32 %v6679, %v6680
    %v6682 = vrot.slane %v6681, 1
    %v6683 = vadd.f32 %v6681, %v6682
    %v6684 = vsel %vm73, %v6640, 0.0
    %v6685 = vsel %vm73, %v6641, 0.0
    %v6686 = vadd.f32 %v6684, %v6685
    %v6687 = vrot.slane %v6686, 4
    %v6688 = vadd.f32 %v6686, %v6687
    %v6689 = vrot.slane %v6688, 2
    %v6690 = vadd.f32 %v6688, %v6689
    %v6691 = vrot.slane %v6690, 1
    %v6692 = vadd.f32 %v6690, %v6691
    %v6693 = vsel %vm73, %v6642, 0.0
    %v6694 = vsel %vm73, %v6643, 0.0
    %v6695 = vadd.f32 %v6693, %v6694
    %v6696 = vrot.slane %v6695, 4
    %v6697 = vadd.f32 %v6695, %v6696
    %v6698 = vrot.slane %v6697, 2
    %v6699 = vadd.f32 %v6697, %v6698
    %v6700 = vrot.slane %v6699, 1
    %v6701 = vadd.f32 %v6699, %v6700
    %v6702 = vsel %vm73, %v6644, 0.0
    %v6703 = vsel %vm73, %v6645, 0.0
    %v6704 = vadd.f32 %v6702, %v6703
    %v6705 = vrot.slane %v6704, 4
    %v6706 = vadd.f32 %v6704, %v6705
    %v6707 = vrot.slane %v6706, 2
    %v6708 = vadd.f32 %v6706, %v6707
    %v6709 = vrot.slane %v6708, 1
    %v6710 = vadd.f32 %v6708, %v6709
    %v6711 = vsel %vm73, %v6646, 0.0
    %v6712 = vsel %vm73, %v6647, 0.0
    %v6713 = vadd.f32 %v6711, %v6712
    %v6714 = vrot.slane %v6713, 4
    %v6715 = vadd.f32 %v6713, %v6714
    %v6716 = vrot.slane %v6715, 2
    %v6717 = vadd.f32 %v6715, %v6716
    %v6718 = vrot.slane %v6717, 1
    %v6719 = vadd.f32 %v6717, %v6718
    %v6720 = vpack.c.bf16 %v6656, %v6656
    %v6721 = vpack.c.bf16 %v6665, %v6665
    %v6722 = vpack.c.bf16 %v6674, %v6674
    %v6723 = vpack.c.bf16 %v6683, %v6683
    %v6724 = vpack.c.bf16 %v6692, %v6692
    %v6725 = vpack.c.bf16 %v6701, %v6701
    %v6726 = vpack.c.bf16 %v6710, %v6710
    %v6727 = vpack.c.bf16 %v6719, %v6719
    %v6736 = vunpack.c.l.b16 %v6720
    %v6737 = vunpack.c.l.b16 %v6721
    %v6738 = vunpack.c.l.b16 %v6722
    %v6739 = vunpack.c.l.b16 %v6723
    %v6740 = vunpack.c.l.b16 %v6724
    %v6741 = vunpack.c.l.b16 %v6725
    %v6742 = vunpack.c.l.b16 %v6726
    %v6743 = vunpack.c.l.b16 %v6727
    %v6744 = vsel %vm910, %v6737, %v6736
    %v6745 = vsel %vm912, %v6738, %v6744
    %v6746 = vsel %vm914, %v6739, %v6745
    %v6747 = vsel %vm916, %v6740, %v6746
    %v6748 = vsel %vm918, %v6741, %v6747
    %v6749 = vsel %vm920, %v6742, %v6748
    %v6750 = vsel %vm922, %v6743, %v6749
    %v6751 = vpack.c.b16 %v6750, %v6750
    %v6753 = vsel %vm73, %v6751, 0
    %6755 = vmatprep.subr.bf16.mxu0 0
    %6756 = vmatpush1.bf16.msra.mxu0 0
    %6757 = vmatprep.subr.bf16.mxu0 0
    %6758 = vmatpush1.bf16.msra.mxu0 0
    %6759 = vmatprep.subr.bf16.mxu0 0
    %6760 = vmatpush1.bf16.msra.mxu0 0
    %6761 = vmatprep.subr.bf16.mxu0 0
    %6762 = vmatpush1.bf16.msra.mxu0 0
    %6763 = vmatprep.subr.bf16.mxu0 0
    %6764 = vmatpush1.bf16.msra.mxu0 0
    %6765 = vmatprep.subr.bf16.mxu0 0
    %6766 = vmatpush1.bf16.msra.mxu0 0
    %6767 = vmatprep.subr.bf16.mxu0 0
    %6768 = vmatpush1.bf16.msra.mxu0 %v70
    %6769 = vmatprep.subr.bf16.mxu0 0
    %6770 = vmatpush1.bf16.msra.mxu0 %v69
    %6771 = vmatprep.subr.bf16.mxu0 0
    %6772 = vmatpush2.bf16.msra.mxu0 0
    %6773 = vmatprep.subr.bf16.mxu0 0
    %6774 = vmatpush2.bf16.msra.mxu0 0
    %6775 = vmatprep.subr.bf16.mxu0 0
    %6776 = vmatpush2.bf16.msra.mxu0 0
    %6777 = vmatprep.subr.bf16.mxu0 0
    %6778 = vmatpush2.bf16.msra.mxu0 0
    %6779 = vmatprep.subr.bf16.mxu0 0
    %6780 = vmatpush2.bf16.msra.mxu0 0
    %6781 = vmatprep.subr.bf16.mxu0 0
    %6782 = vmatpush2.bf16.msra.mxu0 0
    %6783 = vmatprep.subr.bf16.mxu0 0
    %6784 = vmatpush2.bf16.msra.mxu0 0
    %6785 = vmatprep.subr.bf16.mxu0 0
    %6786 = vmatpush2.bf16.msra.mxu0 0
    %6787 = vmatprep.mubr.bf16.mxu0 0
    %6788 = vmatmul.mubr.bf16.gmra.mxu0 %v6753
    %v6789 = vpop.f32.mrf.mxu0
    %v6790 = vadd.f32 0.0, %v6789
    %v6791 = vpop.f32.mrf.mxu0
    %v6792 = vpop.f32.mrf.mxu0
    %v6793 = vpop.f32.mrf.mxu0
    %6794 = vdwg.mxu0
    %s6795 = scalar_lea.vmem %s1, 40
    %v6796 = vld [vmem:[%s6795] sm:$0xff]
    %6797 = vrot.lane.b32.xlu0 %v5888, 112
    %v6798 = vpop.permute.xlu0 %6797
    %v6800 = vadd.f32 %v6796, %v6798
    %6802 = vrot.lane.b32.xlu0 %v6790, 32
    %v6803 = vpop.permute.xlu0 %6802
    %v6805 = vadd.f32 %v6800, %v6803
    %6807 = vrot.lane.b32.xlu0 %v6805, 112
    %v6808 = vpop.permute.xlu0 %6807
    %v6810 = vmax.f32 %v6805, %v6808
    %v6811 = vsel 0, %v6810, %v5746
    %v6812 = vsel 0, %v6810, %v5747
    %v6813 = vsel 0, %v6810, %v5748
    %v6814 = vsel 0, %v6810, %v5749
    %v6815 = vsel 0, %v6810, %v5750
    %v6816 = vsel 1, %v6810, %v5751
    %6818 = vrot.lane.b32.xlu0 %v5776, 96
    %v6819 = vpop.permute.xlu0 %6818
    %6821 = vst.msk [vmem:[#allocation4] sm:$0xff] %vm73, %v6819
    %6823 = vrot.lane.b32.xlu0 %v5845, 96
    %v6824 = vpop.permute.xlu0 %6823
    %s6826 = scalar_lea.vmem [#allocation4], 8
    %6827 = vst.msk [vmem:[%s6826] sm:$0xff] %vm73, %v6824
    %v6828 = vlaneseq
    %v6829 = vshrl.u32 %v6828, 7
    %v6830 = vsub.s32 %v835, %v6829
    %v6831 = vrot.slane %v6555, %v6830
    %v6832 = vlaneseq
    %v6833 = vshrl.u32 %v6832, 7
    %v6834 = vsub.s32 %v840, %v6833
    %v6835 = vrot.slane %v6560, %v6834
    %v6836 = vsel %vm845, %v6835, %v6831
    %v6837 = vlaneseq
    %v6838 = vshrl.u32 %v6837, 7
    %v6839 = vsub.s32 %v835, %v6838
    %v6840 = vrot.slane %v6565, %v6839
    %v6841 = vlaneseq
    %v6842 = vshrl.u32 %v6841, 7
    %v6843 = vsub.s32 %v840, %v6842
    %v6844 = vrot.slane %v6570, %v6843
    %v6845 = vsel %vm845, %v6844, %v6840
    %v6846 = vlaneseq
    %v6847 = vshrl.u32 %v6846, 7
    %v6848 = vsub.s32 %v835, %v6847
    %v6849 = vrot.slane %v6575, %v6848
    %v6850 = vlaneseq
    %v6851 = vshrl.u32 %v6850, 7
    %v6852 = vsub.s32 %v840, %v6851
    %v6853 = vrot.slane %v6580, %v6852
    %v6854 = vsel %vm845, %v6853, %v6849
    %v6855 = vlaneseq
    %v6856 = vshrl.u32 %v6855, 7
    %v6857 = vsub.s32 %v835, %v6856
    %v6858 = vrot.slane %v6585, %v6857
    %v6859 = vlaneseq
    %v6860 = vshrl.u32 %v6859, 7
    %v6861 = vsub.s32 %v840, %v6860
    %v6862 = vrot.slane %v6590, %v6861
    %v6863 = vsel %vm845, %v6862, %v6858
    %v6864 = vlaneseq
    %v6865 = vshrl.u32 %v6864, 7
    %v6866 = vsub.s32 %v835, %v6865
    %v6867 = vrot.slane %v6595, %v6866
    %v6868 = vlaneseq
    %v6869 = vshrl.u32 %v6868, 7
    %v6870 = vsub.s32 %v840, %v6869
    %v6871 = vrot.slane %v6600, %v6870
    %v6872 = vsel %vm845, %v6871, %v6867
    %v6873 = vlaneseq
    %v6874 = vshrl.u32 %v6873, 7
    %v6875 = vsub.s32 %v835, %v6874
    %v6876 = vrot.slane %v6605, %v6875
    %v6877 = vlaneseq
    %v6878 = vshrl.u32 %v6877, 7
    %v6879 = vsub.s32 %v840, %v6878
    %v6880 = vrot.slane %v6610, %v6879
    %v6881 = vsel %vm845, %v6880, %v6876
    %v6882 = vlaneseq
    %v6883 = vshrl.u32 %v6882, 7
    %v6884 = vsub.s32 %v835, %v6883
    %v6885 = vrot.slane %v6615, %v6884
    %v6886 = vlaneseq
    %v6887 = vshrl.u32 %v6886, 7
    %v6888 = vsub.s32 %v840, %v6887
    %v6889 = vrot.slane %v6620, %v6888
    %v6890 = vsel %vm845, %v6889, %v6885
    %v6891 = vlaneseq
    %v6892 = vshrl.u32 %v6891, 7
    %v6893 = vsub.s32 %v835, %v6892
    %v6894 = vrot.slane %v6625, %v6893
    %v6895 = vlaneseq
    %v6896 = vshrl.u32 %v6895, 7
    %v6897 = vsub.s32 %v840, %v6896
    %v6898 = vrot.slane %v6630, %v6897
    %v6899 = vsel %vm845, %v6898, %v6894
    %v6900 = vsel %vm910, %v6845, %v6836
    %v6901 = vsel %vm912, %v6854, %v6900
    %v6902 = vsel %vm914, %v6863, %v6901
    %v6903 = vsel %vm916, %v6872, %v6902
    %v6904 = vsel %vm918, %v6881, %v6903
    %v6905 = vsel %vm920, %v6890, %v6904
    %v6906 = vsel %vm922, %v6899, %v6905
    %6908 = vst.msk [vmem:[#allocation6] sm:$0xff] %vm479, %v6906
    %v6917 = vsel %vm910, %v6665, %v6656
    %v6918 = vsel %vm912, %v6674, %v6917
    %v6919 = vsel %vm914, %v6683, %v6918
    %v6920 = vsel %vm916, %v6692, %v6919
    %v6921 = vsel %vm918, %v6701, %v6920
    %v6922 = vsel %vm920, %v6710, %v6921
    %v6923 = vsel %vm922, %v6719, %v6922
    %6925 = vst.msk [vmem:[#allocation7] sm:$0xff] %vm73, %v6923
    %6926 = vst.msk [vmem:[#allocation2] sm:$0xff] %vm479, %v6811
    %6927 = vst.msk [vmem:[#allocation2 + $0x8] sm:$0xff] %vm479, %v6812
    %6928 = vst.msk [vmem:[#allocation2 + $0x10] sm:$0xff] %vm479, %v6813
    %6929 = vst.msk [vmem:[#allocation2 + $0x18] sm:$0xff] %vm479, %v6814
    %6930 = vst.msk [vmem:[#allocation2 + $0x20] sm:$0xff] %vm479, %v6815
    %6931 = vst.msk [vmem:[#allocation2 + $0x28] sm:$0xff] %vm479, %v6816
    // Predicated region
    $region54: #{edit_att_decoder_forward.3} parent=1 // pred_check
      _
    $region55: #{edit_att_decoder_forward.3} parent=1 // pred_check_branch
      %6933 = sbr.rel (0) target = $region57
    $region56: #{edit_att_decoder_forward.3} parent=1 // pred_region
      %s6935 = ssub.s32 768, 768
      %6936 = vsyncadd [#allocation3], %s6935
      %s6937 = sshll.u32 [#allocation2], 4
      %s6938 = int_to_ptr.vmem [resolvable:$true] %s6937
      %6943 = dma.vmem_to_hbm [thread:$0]  %s6938, 768, %s13, [#allocation3], 128, 128, 8
    $region57: #{edit_att_decoder_forward.3} parent=1 // pred_fallthru
      _
    // Predicated region
    $region58: #{edit_att_decoder_forward.3} parent=1 // pred_check
      _
    $region59: #{edit_att_decoder_forward.3} parent=1 // pred_check_branch
      %6945 = sbr.rel (0) target = $region61
    $region60: #{edit_att_decoder_forward.3} parent=1 // pred_region
      %s6947 = ssub.s32 256, 256
      %6948 = vsyncadd [#allocation5], %s6947
      %s6949 = sshll.u32 [#allocation4], 4
      %s6950 = int_to_ptr.vmem [resolvable:$true] %s6949
      %6955 = dma.vmem_to_hbm [thread:$0]  %s6950, 256, %s14, [#allocation5], 128, 128, 8
    $region61: #{edit_att_decoder_forward.3} parent=1 // pred_fallthru
      _
    // Predicated region
    $region62: #{edit_att_decoder_forward.3} parent=1 // pred_check
      _
    $region63: #{edit_att_decoder_forward.3} parent=1 // pred_check_branch
      %6957 = sbr.rel (0) target = $region65
    $region64: #{edit_att_decoder_forward.3} parent=1 // pred_region
      %s6959 = ssub.s32 128, 128
      %6960 = vsyncadd [#allocation5], %s6959
      %s6962 = sshll.u32 [#allocation6], 4
      %s6963 = int_to_ptr.vmem [resolvable:$true] %s6962
      %6965 = dma.vmem_to_hbm [thread:$0]  %s6963, 128, %s15, [#allocation5]
    $region65: #{edit_att_decoder_forward.3} parent=1 // pred_fallthru
      _
    // Predicated region
    $region66: #{edit_att_decoder_forward.3} parent=1 // pred_check
      _
    $region67: #{edit_att_decoder_forward.3} parent=1 // pred_check_branch
      %6967 = sbr.rel (0) target = $region69
    $region68: #{edit_att_decoder_forward.3} parent=1 // pred_region
      %s6969 = ssub.s32 128, 128
      %6970 = vsyncadd [#allocation8], %s6969
      %s6972 = sshll.u32 [#allocation7], 4
      %s6973 = int_to_ptr.vmem [resolvable:$true] %s6972
      %6975 = dma.vmem_to_hbm [thread:$0]  %s6973, 128, %s16, [#allocation8]
    $region69: #{edit_att_decoder_forward.3} parent=1 // pred_fallthru
      _
    // Predicated region
    $region70: #{edit_att_decoder_forward.3} parent=1 // pred_check
      _
    $region71: #{edit_att_decoder_forward.3} parent=1 // pred_check_branch
      %6977 = sbr.rel (0) target = $region73
    $region72: #{edit_att_decoder_forward.3} parent=1 // pred_region
      %6978 = dma.done [#allocation3], 768
    $region73: #{edit_att_decoder_forward.3} parent=1 // pred_fallthru
      _
    // Predicated region
    $region74: #{edit_att_decoder_forward.3} parent=1 // pred_check
      _
    $region75: #{edit_att_decoder_forward.3} parent=1 // pred_check_branch
      %6980 = sbr.rel (0) target = $region77
    $region76: #{edit_att_decoder_forward.3} parent=1 // pred_region
      %6981 = dma.done [#allocation5], 256
    $region77: #{edit_att_decoder_forward.3} parent=1 // pred_fallthru
      _
    // Predicated region
    $region78: #{edit_att_decoder_forward.3} parent=1 // pred_check
      _
    $region79: #{edit_att_decoder_forward.3} parent=1 // pred_check_branch
      %6983 = sbr.rel (0) target = $region81
    $region80: #{edit_att_decoder_forward.3} parent=1 // pred_region
      %6984 = dma.done [#allocation5], 128
    $region81: #{edit_att_decoder_forward.3} parent=1 // pred_fallthru
      _
    // Predicated region
    $region82: #{edit_att_decoder_forward.3} parent=1 // pred_check
      _
    $region83: #{edit_att_decoder_forward.3} parent=1 // pred_check_branch
      %6986 = sbr.rel (0) target = $region85
    $region84: #{edit_att_decoder_forward.3} parent=1 // pred_region
      %6987 = dma.done [#allocation8], 128
    $region85: #{edit_att_decoder_forward.3} parent=1 // pred_fallthru
      _
    %6988 = vsyncpa [#allocation3], 1
    %6989 = vsyncpa [#allocation5], 1
    %6990 = vsyncpa [#allocation8], 1

</llo_original>
